<compile_context>
chip_gen: v5e
topology: v5e:2x2
jax: 0.10.0
libtpu: 0.0.40
codegen_flags: <defaults>
</compile_context>

<pallas_src>
import jax
import jax.numpy as jnp
import numpy as np
from jax import lax
from jax.experimental import pallas as pl
from jax.experimental.pallas import tpu as pltpu

T = 28    # sequence length (image rows)
I = 28    # input size per step (image cols)
H = 64    # logical LSTM hidden size
O = 10    # output classes

IP = 128  # padded input size   (lane-aligned K for the big input matmul)
HP = 128  # padded hidden size  (each gate slice = one lane-dense 128 chunk)
OP = 128  # padded output size  (unmasked lane-dense store)


def lstm_kernel(x_ref, wih_ref, whh_ref, b_ref, wout_ref, bout_ref,
                out_ref, gx_ref):
    """One batch tile of the whole forward.

    x_ref   : (T, BT, IP)  bf16  time-major batch tile
    wih_ref : (IP, 4*HP)   bf16  W_ih^T, zero-padded, PyTorch gate order i,f,g,o
    whh_ref : (HP, 4*HP)   bf16  W_hh^T, zero-padded
    b_ref   : (1, 4*HP)    f32   b_ih + b_hh, zero-padded
    wout_ref: (HP, OP)     bf16  W_out^T, zero-padded
    bout_ref: (1, OP)      f32   b_out, zero-padded
    out_ref : (BT, OP)     f32
    gx_ref  : (T*BT, 4*HP) f32   VMEM scratch: input projection for all steps
    """
    BT = out_ref.shape[0]

    # Input projection for all timesteps as ONE bf16 MXU matmul (f32 accum),
    # bias folded in once.  Collapsing (T, BT, IP) -> (T*BT, IP) is layout
    # trivial since BT is a multiple of 16 (whole bf16 sublane tiles).
    x2d = x_ref[...].reshape(T * BT, IP)
    gx_ref[...] = (jnp.dot(x2d, wih_ref[...],
                           preferred_element_type=jnp.float32)
                   + b_ref[...])

    h = jnp.zeros((BT, HP), jnp.float32)
    c = jnp.zeros((BT, HP), jnp.float32)

    # Static, fully-unrolled recurrence (T=28).  All slices are static and
    # (8,128)/(16,128)-aligned; only the (BT,128)@(128,512) bf16 dot plus the
    # f32 gate math sits on the serial critical path.  W_hh is read from its
    # VMEM ref each step (never hoisted into registers).
    for t in range(T):
        g = gx_ref[t * BT:(t + 1) * BT, :] + jnp.dot(
            h.astype(jnp.bfloat16), whh_ref[...],
            preferred_element_type=jnp.float32)                 # (BT, 4*HP) f32
        i_g = jax.nn.sigmoid(g[:, 0 * HP:1 * HP])
        f_g = jax.nn.sigmoid(g[:, 1 * HP:2 * HP])
        g_g = jnp.tanh(g[:, 2 * HP:3 * HP])
        o_g = jax.nn.sigmoid(g[:, 3 * HP:4 * HP])
        c = f_g * c + i_g * g_g
        h = o_g * jnp.tanh(c)

    # Final projection: out = Linear(r_out[:, -1, :]); lane-dense (BT,128) store.
    out_ref[...] = (jnp.dot(h.astype(jnp.bfloat16), wout_ref[...],
                            preferred_element_type=jnp.float32)
                    + bout_ref[...]).astype(out_ref.dtype)


def mnist_rnn_forward(x, padded_params, bp_tile=128):
    """x: anything reshapable to (-1, 28, 28) (e.g. (B, 1, 28, 28))."""
    x = x.reshape(-1, T, I).astype(jnp.float32)
    B = x.shape[0]

    # bf16 packs 16 rows per vreg sublane group -> pad batch to a multiple of
    # 16, then round up to a whole number of batch tiles.
    BP = max(16, ((B + 15) // 16) * 16)
    bp_tile = min(bp_tile, BP)
    BP = ((BP + bp_tile - 1) // bp_tile) * bp_tile

    wih_p, whh_p, b_p, wout_p, bout_p = padded_params

    # Pad batch + input dim, cast to bf16, go time-major: (T, BP, IP).
    xp = jnp.zeros((BP, T, IP), jnp.bfloat16).at[:B, :, :I].set(
        x.astype(jnp.bfloat16))
    xp = jnp.transpose(xp, (1, 0, 2))

    out = pl.pallas_call(
        lstm_kernel,
        out_shape=jax.ShapeDtypeStruct((BP, OP), jnp.float32),
        grid_spec=pltpu.PrefetchScalarGridSpec(
            num_scalar_prefetch=0,
            grid=(BP // bp_tile,),
            in_specs=[
                pl.BlockSpec((T, bp_tile, IP), lambda bi: (0, bi, 0)),
                pl.BlockSpec((IP, 4 * HP), lambda bi: (0, 0)),
                pl.BlockSpec((HP, 4 * HP), lambda bi: (0, 0)),
                pl.BlockSpec((1, 4 * HP), lambda bi: (0, 0)),
                pl.BlockSpec((HP, OP), lambda bi: (0, 0)),
                pl.BlockSpec((1, OP), lambda bi: (0, 0)),
            ],
            out_specs=pl.BlockSpec((bp_tile, OP), lambda bi: (bi, 0)),
            scratch_shapes=[pltpu.VMEM((T * bp_tile, 4 * HP), jnp.float32)],
        ),
        compiler_params=pltpu.CompilerParams(
            dimension_semantics=("parallel",),
        ),
    )(xp, wih_p, whh_p, b_p, wout_p, bout_p)

    return out[:B, :O]


def init_params(key):
    """Raw PyTorch-shaped parameters (uniform +-1/sqrt(H))."""
    ks = jax.random.split(key, 6)
    s = 1.0 / np.sqrt(H)
    w_ih = jax.random.uniform(ks[0], (4 * H, I), jnp.float32, -s, s)   # (4H, I)
    w_hh = jax.random.uniform(ks[1], (4 * H, H), jnp.float32, -s, s)   # (4H, H)
    b_ih = jax.random.uniform(ks[2], (4 * H,), jnp.float32, -s, s)
    b_hh = jax.random.uniform(ks[3], (4 * H,), jnp.float32, -s, s)
    w_out = jax.random.uniform(ks[4], (O, H), jnp.float32, -s, s)      # (10, 64)
    b_out = jax.random.uniform(ks[5], (O,), jnp.float32, -s, s)
    return (w_ih, w_hh, b_ih, b_hh, w_out, b_out)


def pad_params(raw):
    """Transpose + gate-wise zero-pad to the lane-aligned kernel layout.

    Matmul operands are cast to bf16 (MXU rate); biases stay f32 (VPU adds)."""
    w_ih, w_hh, b_ih, b_hh, w_out, b_out = raw
    b = b_ih + b_hh

    wih_p = jnp.zeros((IP, 4 * HP), jnp.float32)
    whh_p = jnp.zeros((HP, 4 * HP), jnp.float32)
    b_p = jnp.zeros((1, 4 * HP), jnp.float32)
    for k in range(4):                              # PyTorch gate order i,f,g,o
        wih_p = wih_p.at[:I, k * HP:k * HP + H].set(w_ih[k * H:(k + 1) * H, :].T)
        whh_p = whh_p.at[:H, k * HP:k * HP + H].set(w_hh[k * H:(k + 1) * H, :].T)
        b_p = b_p.at[0, k * HP:k * HP + H].set(b[k * H:(k + 1) * H])

    wout_p = jnp.zeros((HP, OP), jnp.float32).at[:H, :O].set(w_out.T)
    bout_p = jnp.zeros((1, OP), jnp.float32).at[0, :O].set(b_out)

    return (wih_p.astype(jnp.bfloat16), whh_p.astype(jnp.bfloat16), b_p,
            wout_p.astype(jnp.bfloat16), bout_p)


def reference_forward(x, raw_params):
    """Pure-JAX f32 reference of the PyTorch forward (unpadded)."""
    w_ih, w_hh, b_ih, b_hh, w_out, b_out = raw_params
    x = x.reshape(-1, T, I).astype(jnp.float32)
    B = x.shape[0]
    wih_t, whh_t = w_ih.T, w_hh.T
    b = (b_ih + b_hh)[None, :]

    def step(carry, x_t):
        h, c = carry
        g = x_t @ wih_t + h @ whh_t + b
        i = jax.nn.sigmoid(g[:, 0 * H:1 * H])
        f = jax.nn.sigmoid(g[:, 1 * H:2 * H])
        gg = jnp.tanh(g[:, 2 * H:3 * H])
        o = jax.nn.sigmoid(g[:, 3 * H:4 * H])
        c = f * c + i * gg
        h = o * jnp.tanh(c)
        return (h, c), None

    h0 = jnp.zeros((B, H), jnp.float32)
    c0 = jnp.zeros((B, H), jnp.float32)
    (h_last, _), _ = lax.scan(step, (h0, c0), jnp.swapaxes(x, 0, 1))
    return h_last @ w_out.T + b_out[None, :]


if __name__ == "__main__":
    key = jax.random.PRNGKey(0)
    k_param, k_x = jax.random.split(key)

    raw_params = init_params(k_param)
    padded_params = pad_params(raw_params)

    # MNIST-style input: (batch=2, 1, 28, 28); forward does x.view(-1, 28, 28).
    x = jax.random.normal(k_x, (2, 1, 28, 28), jnp.float32)

    out = jax.block_until_ready(mnist_rnn_forward(x, padded_params))
    ref = jax.block_until_ready(reference_forward(x, raw_params))

    assert out.shape == (2, 10)
    # bf16 matmul operands (f32 accumulation) -> relaxed tolerance vs f32 ref.
    np.testing.assert_allclose(np.asarray(out), np.asarray(ref),
                               rtol=2e-2, atol=2e-2)
    print("KERNEL_OK")
</pallas_src>

<mosaic_0001>
module attributes {stable_mosaic.version = 11 : i64} {
  func.func @lstm_kernel(%arg0: i32, %arg1: memref<28x16x128xbf16, #tpu.memory_space<vmem>>, %arg2: memref<128x512xbf16, #tpu.memory_space<vmem>>, %arg3: memref<128x512xbf16, #tpu.memory_space<vmem>>, %arg4: memref<1x512xf32, #tpu.memory_space<vmem>>, %arg5: memref<128x128xbf16, #tpu.memory_space<vmem>>, %arg6: memref<1x128xf32, #tpu.memory_space<vmem>>, %arg7: memref<16x128xf32, #tpu.memory_space<vmem>>, %arg8: memref<448x512xf32, #tpu.memory_space<vmem>>) attributes {dimension_semantics = [#tpu.dimension_semantics<parallel>], iteration_bounds = array<i64: 1>, scalar_prefetch = 0 : i64, scratch_operands = 1 : i64, tpu.core_type = #tpu.core_type<tc>, window_params = [{transform_indices = @transform_0, window_bounds = array<i64: 28, 16, 128>}, {pipeline_mode = #tpu.pipeline_mode<synchronous>, transform_indices = @transform_1, window_bounds = array<i64: 128, 512>}, {pipeline_mode = #tpu.pipeline_mode<synchronous>, transform_indices = @transform_2, window_bounds = array<i64: 128, 512>}, {pipeline_mode = #tpu.pipeline_mode<synchronous>, transform_indices = @transform_3, window_bounds = array<i64: 1, 512>}, {pipeline_mode = #tpu.pipeline_mode<synchronous>, transform_indices = @transform_4, window_bounds = array<i64: 128, 128>}, {pipeline_mode = #tpu.pipeline_mode<synchronous>, transform_indices = @transform_5, window_bounds = array<i64: 1, 128>}, {transform_indices = @transform_6, window_bounds = array<i64: 16, 128>}]} {
    %c0 = arith.constant 0 : index
    %c0_0 = arith.constant 0 : index
    %c0_1 = arith.constant 0 : index
    %0 = vector.load %arg1[%c0, %c0_0, %c0_1] : memref<28x16x128xbf16, #tpu.memory_space<vmem>>, vector<28x16x128xbf16>
    %1 = vector.shape_cast %0 : vector<28x16x128xbf16> to vector<448x128xbf16>
    %c0_2 = arith.constant 0 : index
    %c0_3 = arith.constant 0 : index
    %2 = vector.load %arg2[%c0_2, %c0_3] : memref<128x512xbf16, #tpu.memory_space<vmem>>, vector<128x512xbf16>
    %cst = arith.constant dense<0.000000e+00> : vector<448x512xf32>
    %3 = tpu.matmul %1, %2, %cst {dimension_numbers = #tpu.dot_dimension_numbers<[1], [0], [0], [1], [0, 0, 1, 1], [], []>} : vector<448x128xbf16>, vector<128x512xbf16>, vector<448x512xf32> -> vector<448x512xf32>
    %c0_4 = arith.constant 0 : index
    %c0_5 = arith.constant 0 : index
    %4 = vector.load %arg4[%c0_4, %c0_5] : memref<1x512xf32, #tpu.memory_space<vmem>>, vector<1x512xf32>
    %5 = vector.broadcast %4 : vector<1x512xf32> to vector<448x512xf32>
    %6 = arith.addf %3, %5 : vector<448x512xf32>
    %c0_6 = arith.constant 0 : index
    %c0_7 = arith.constant 0 : index
    %7 = vector.load %arg8[%c0_6, %c0_7] : memref<448x512xf32, #tpu.memory_space<vmem>>, vector<448x512xf32>
    tpu.vector_store %arg8[%c0_6, %c0_7], %6 {strides = array<i32>} : memref<448x512xf32, #tpu.memory_space<vmem>>, vector<448x512xf32>,
    %cst_8 = arith.constant 0.000000e+00 : f32
    %8 = vector.broadcast %cst_8 : f32 to vector<16x128xf32>
    %cst_9 = arith.constant 0.000000e+00 : f32
    %9 = vector.broadcast %cst_9 : f32 to vector<16x128xf32>
    %c0_10 = arith.constant 0 : index
    %c0_11 = arith.constant 0 : index
    %10 = vector.load %arg8[%c0_10, %c0_11] : memref<448x512xf32, #tpu.memory_space<vmem>>, vector<16x512xf32>
    %11 = arith.truncf %8 : vector<16x128xf32> to vector<16x128xbf16>
    %c0_12 = arith.constant 0 : index
    %c0_13 = arith.constant 0 : index
    %12 = vector.load %arg3[%c0_12, %c0_13] : memref<128x512xbf16, #tpu.memory_space<vmem>>, vector<128x512xbf16>
    %cst_14 = arith.constant dense<0.000000e+00> : vector<16x512xf32>
    %13 = tpu.matmul %11, %12, %cst_14 {dimension_numbers = #tpu.dot_dimension_numbers<[1], [0], [0], [1], [0, 0, 1, 1], [], []>} : vector<16x128xbf16>, vector<128x512xbf16>, vector<16x512xf32> -> vector<16x512xf32>
    %14 = arith.addf %10, %13 : vector<16x512xf32>
    %15 = vector.extract_strided_slice %14 {offsets = [0, 0], sizes = [16, 128], strides = [1, 1]} : vector<16x512xf32> to vector<16x128xf32>
    %16 = arith.negf %15 : vector<16x128xf32>
    %17 = math.exp %16 : vector<16x128xf32>
    %cst_15 = arith.constant 1.000000e+00 : f32
    %18 = vector.broadcast %cst_15 : f32 to vector<16x128xf32>
    %19 = arith.addf %18, %17 : vector<16x128xf32>
    %20 = arith.divf %18, %19 : vector<16x128xf32>
    %21 = vector.extract_strided_slice %14 {offsets = [0, 128], sizes = [16, 128], strides = [1, 1]} : vector<16x512xf32> to vector<16x128xf32>
    %22 = arith.negf %21 : vector<16x128xf32>
    %23 = math.exp %22 : vector<16x128xf32>
    %cst_16 = arith.constant 1.000000e+00 : f32
    %24 = vector.broadcast %cst_16 : f32 to vector<16x128xf32>
    %25 = arith.addf %24, %23 : vector<16x128xf32>
    %26 = arith.divf %24, %25 : vector<16x128xf32>
    %27 = vector.extract_strided_slice %14 {offsets = [0, 256], sizes = [16, 128], strides = [1, 1]} : vector<16x512xf32> to vector<16x128xf32>
    %28 = math.tanh %27 : vector<16x128xf32>
    %29 = vector.extract_strided_slice %14 {offsets = [0, 384], sizes = [16, 128], strides = [1, 1]} : vector<16x512xf32> to vector<16x128xf32>
    %30 = arith.negf %29 : vector<16x128xf32>
    %31 = math.exp %30 : vector<16x128xf32>
    %cst_17 = arith.constant 1.000000e+00 : f32
    %32 = vector.broadcast %cst_17 : f32 to vector<16x128xf32>
    %33 = arith.addf %32, %31 : vector<16x128xf32>
    %34 = arith.divf %32, %33 : vector<16x128xf32>
    %35 = arith.mulf %26, %9 : vector<16x128xf32>
    %36 = arith.mulf %20, %28 : vector<16x128xf32>
    %37 = arith.addf %35, %36 : vector<16x128xf32>
    %38 = math.tanh %37 : vector<16x128xf32>
    %39 = arith.mulf %34, %38 : vector<16x128xf32>
    %c16 = arith.constant 16 : index
    %c0_18 = arith.constant 0 : index
    %40 = vector.load %arg8[%c16, %c0_18] : memref<448x512xf32, #tpu.memory_space<vmem>>, vector<16x512xf32>
    %41 = arith.truncf %39 : vector<16x128xf32> to vector<16x128xbf16>
    %c0_19 = arith.constant 0 : index
    %c0_20 = arith.constant 0 : index
    %42 = vector.load %arg3[%c0_19, %c0_20] : memref<128x512xbf16, #tpu.memory_space<vmem>>, vector<128x512xbf16>
    %cst_21 = arith.constant dense<0.000000e+00> : vector<16x512xf32>
    %43 = tpu.matmul %41, %42, %cst_21 {dimension_numbers = #tpu.dot_dimension_numbers<[1], [0], [0], [1], [0, 0, 1, 1], [], []>} : vector<16x128xbf16>, vector<128x512xbf16>, vector<16x512xf32> -> vector<16x512xf32>
    %44 = arith.addf %40, %43 : vector<16x512xf32>
    %45 = vector.extract_strided_slice %44 {offsets = [0, 0], sizes = [16, 128], strides = [1, 1]} : vector<16x512xf32> to vector<16x128xf32>
    %46 = arith.negf %45 : vector<16x128xf32>
    %47 = math.exp %46 : vector<16x128xf32>
    %cst_22 = arith.constant 1.000000e+00 : f32
    %48 = vector.broadcast %cst_22 : f32 to vector<16x128xf32>
    %49 = arith.addf %48, %47 : vector<16x128xf32>
    %50 = arith.divf %48, %49 : vector<16x128xf32>
    %51 = vector.extract_strided_slice %44 {offsets = [0, 128], sizes = [16, 128], strides = [1, 1]} : vector<16x512xf32> to vector<16x128xf32>
    %52 = arith.negf %51 : vector<16x128xf32>
    %53 = math.exp %52 : vector<16x128xf32>
    %cst_23 = arith.constant 1.000000e+00 : f32
    %54 = vector.broadcast %cst_23 : f32 to vector<16x128xf32>
    %55 = arith.addf %54, %53 : vector<16x128xf32>
    %56 = arith.divf %54, %55 : vector<16x128xf32>
    %57 = vector.extract_strided_slice %44 {offsets = [0, 256], sizes = [16, 128], strides = [1, 1]} : vector<16x512xf32> to vector<16x128xf32>
    %58 = math.tanh %57 : vector<16x128xf32>
    %59 = vector.extract_strided_slice %44 {offsets = [0, 384], sizes = [16, 128], strides = [1, 1]} : vector<16x512xf32> to vector<16x128xf32>
    %60 = arith.negf %59 : vector<16x128xf32>
    %61 = math.exp %60 : vector<16x128xf32>
    %cst_24 = arith.constant 1.000000e+00 : f32
    %62 = vector.broadcast %cst_24 : f32 to vector<16x128xf32>
    %63 = arith.addf %62, %61 : vector<16x128xf32>
    %64 = arith.divf %62, %63 : vector<16x128xf32>
    %65 = arith.mulf %56, %37 : vector<16x128xf32>
    %66 = arith.mulf %50, %58 : vector<16x128xf32>
    %67 = arith.addf %65, %66 : vector<16x128xf32>
    %68 = math.tanh %67 : vector<16x128xf32>
    %69 = arith.mulf %64, %68 : vector<16x128xf32>
    %c32 = arith.constant 32 : index
    %c0_25 = arith.constant 0 : index
    %70 = vector.load %arg8[%c32, %c0_25] : memref<448x512xf32, #tpu.memory_space<vmem>>, vector<16x512xf32>
    %71 = arith.truncf %69 : vector<16x128xf32> to vector<16x128xbf16>
    %c0_26 = arith.constant 0 : index
    %c0_27 = arith.constant 0 : index
    %72 = vector.load %arg3[%c0_26, %c0_27] : memref<128x512xbf16, #tpu.memory_space<vmem>>, vector<128x512xbf16>
    %cst_28 = arith.constant dense<0.000000e+00> : vector<16x512xf32>
    %73 = tpu.matmul %71, %72, %cst_28 {dimension_numbers = #tpu.dot_dimension_numbers<[1], [0], [0], [1], [0, 0, 1, 1], [], []>} : vector<16x128xbf16>, vector<128x512xbf16>, vector<16x512xf32> -> vector<16x512xf32>
    %74 = arith.addf %70, %73 : vector<16x512xf32>
    %75 = vector.extract_strided_slice %74 {offsets = [0, 0], sizes = [16, 128], strides = [1, 1]} : vector<16x512xf32> to vector<16x128xf32>
    %76 = arith.negf %75 : vector<16x128xf32>
    %77 = math.exp %76 : vector<16x128xf32>
    %cst_29 = arith.constant 1.000000e+00 : f32
    %78 = vector.broadcast %cst_29 : f32 to vector<16x128xf32>
    %79 = arith.addf %78, %77 : vector<16x128xf32>
    %80 = arith.divf %78, %79 : vector<16x128xf32>
    %81 = vector.extract_strided_slice %74 {offsets = [0, 128], sizes = [16, 128], strides = [1, 1]} : vector<16x512xf32> to vector<16x128xf32>
    %82 = arith.negf %81 : vector<16x128xf32>
    %83 = math.exp %82 : vector<16x128xf32>
    %cst_30 = arith.constant 1.000000e+00 : f32
    %84 = vector.broadcast %cst_30 : f32 to vector<16x128xf32>
    %85 = arith.addf %84, %83 : vector<16x128xf32>
    %86 = arith.divf %84, %85 : vector<16x128xf32>
    %87 = vector.extract_strided_slice %74 {offsets = [0, 256], sizes = [16, 128], strides = [1, 1]} : vector<16x512xf32> to vector<16x128xf32>
    %88 = math.tanh %87 : vector<16x128xf32>
    %89 = vector.extract_strided_slice %74 {offsets = [0, 384], sizes = [16, 128], strides = [1, 1]} : vector<16x512xf32> to vector<16x128xf32>
    %90 = arith.negf %89 : vector<16x128xf32>
    %91 = math.exp %90 : vector<16x128xf32>
    %cst_31 = arith.constant 1.000000e+00 : f32
    %92 = vector.broadcast %cst_31 : f32 to vector<16x128xf32>
    %93 = arith.addf %92, %91 : vector<16x128xf32>
    %94 = arith.divf %92, %93 : vector<16x128xf32>
    %95 = arith.mulf %86, %67 : vector<16x128xf32>
    %96 = arith.mulf %80, %88 : vector<16x128xf32>
    %97 = arith.addf %95, %96 : vector<16x128xf32>
    %98 = math.tanh %97 : vector<16x128xf32>
    %99 = arith.mulf %94, %98 : vector<16x128xf32>
    %c48 = arith.constant 48 : index
    %c0_32 = arith.constant 0 : index
    %100 = vector.load %arg8[%c48, %c0_32] : memref<448x512xf32, #tpu.memory_space<vmem>>, vector<16x512xf32>
    %101 = arith.truncf %99 : vector<16x128xf32> to vector<16x128xbf16>
    %c0_33 = arith.constant 0 : index
    %c0_34 = arith.constant 0 : index
    %102 = vector.load %arg3[%c0_33, %c0_34] : memref<128x512xbf16, #tpu.memory_space<vmem>>, vector<128x512xbf16>
    %cst_35 = arith.constant dense<0.000000e+00> : vector<16x512xf32>
    %103 = tpu.matmul %101, %102, %cst_35 {dimension_numbers = #tpu.dot_dimension_numbers<[1], [0], [0], [1], [0, 0, 1, 1], [], []>} : vector<16x128xbf16>, vector<128x512xbf16>, vector<16x512xf32> -> vector<16x512xf32>
    %104 = arith.addf %100, %103 : vector<16x512xf32>
    %105 = vector.extract_strided_slice %104 {offsets = [0, 0], sizes = [16, 128], strides = [1, 1]} : vector<16x512xf32> to vector<16x128xf32>
    %106 = arith.negf %105 : vector<16x128xf32>
    %107 = math.exp %106 : vector<16x128xf32>
    %cst_36 = arith.constant 1.000000e+00 : f32
    %108 = vector.broadcast %cst_36 : f32 to vector<16x128xf32>
    %109 = arith.addf %108, %107 : vector<16x128xf32>
    %110 = arith.divf %108, %109 : vector<16x128xf32>
    %111 = vector.extract_strided_slice %104 {offsets = [0, 128], sizes = [16, 128], strides = [1, 1]} : vector<16x512xf32> to vector<16x128xf32>
    %112 = arith.negf %111 : vector<16x128xf32>
    %113 = math.exp %112 : vector<16x128xf32>
    %cst_37 = arith.constant 1.000000e+00 : f32
    %114 = vector.broadcast %cst_37 : f32 to vector<16x128xf32>
    %115 = arith.addf %114, %113 : vector<16x128xf32>
    %116 = arith.divf %114, %115 : vector<16x128xf32>
    %117 = vector.extract_strided_slice %104 {offsets = [0, 256], sizes = [16, 128], strides = [1, 1]} : vector<16x512xf32> to vector<16x128xf32>
    %118 = math.tanh %117 : vector<16x128xf32>
    %119 = vector.extract_strided_slice %104 {offsets = [0, 384], sizes = [16, 128], strides = [1, 1]} : vector<16x512xf32> to vector<16x128xf32>
    %120 = arith.negf %119 : vector<16x128xf32>
    %121 = math.exp %120 : vector<16x128xf32>
    %cst_38 = arith.constant 1.000000e+00 : f32
    %122 = vector.broadcast %cst_38 : f32 to vector<16x128xf32>
    %123 = arith.addf %122, %121 : vector<16x128xf32>
    %124 = arith.divf %122, %123 : vector<16x128xf32>
    %125 = arith.mulf %116, %97 : vector<16x128xf32>
    %126 = arith.mulf %110, %118 : vector<16x128xf32>
    %127 = arith.addf %125, %126 : vector<16x128xf32>
    %128 = math.tanh %127 : vector<16x128xf32>
    %129 = arith.mulf %124, %128 : vector<16x128xf32>
    %c64 = arith.constant 64 : index
    %c0_39 = arith.constant 0 : index
    %130 = vector.load %arg8[%c64, %c0_39] : memref<448x512xf32, #tpu.memory_space<vmem>>, vector<16x512xf32>
    %131 = arith.truncf %129 : vector<16x128xf32> to vector<16x128xbf16>
    %c0_40 = arith.constant 0 : index
    %c0_41 = arith.constant 0 : index
    %132 = vector.load %arg3[%c0_40, %c0_41] : memref<128x512xbf16, #tpu.memory_space<vmem>>, vector<128x512xbf16>
    %cst_42 = arith.constant dense<0.000000e+00> : vector<16x512xf32>
    %133 = tpu.matmul %131, %132, %cst_42 {dimension_numbers = #tpu.dot_dimension_numbers<[1], [0], [0], [1], [0, 0, 1, 1], [], []>} : vector<16x128xbf16>, vector<128x512xbf16>, vector<16x512xf32> -> vector<16x512xf32>
    %134 = arith.addf %130, %133 : vector<16x512xf32>
    %135 = vector.extract_strided_slice %134 {offsets = [0, 0], sizes = [16, 128], strides = [1, 1]} : vector<16x512xf32> to vector<16x128xf32>
    %136 = arith.negf %135 : vector<16x128xf32>
    %137 = math.exp %136 : vector<16x128xf32>
    %cst_43 = arith.constant 1.000000e+00 : f32
    %138 = vector.broadcast %cst_43 : f32 to vector<16x128xf32>
    %139 = arith.addf %138, %137 : vector<16x128xf32>
    %140 = arith.divf %138, %139 : vector<16x128xf32>
    %141 = vector.extract_strided_slice %134 {offsets = [0, 128], sizes = [16, 128], strides = [1, 1]} : vector<16x512xf32> to vector<16x128xf32>
    %142 = arith.negf %141 : vector<16x128xf32>
    %143 = math.exp %142 : vector<16x128xf32>
    %cst_44 = arith.constant 1.000000e+00 : f32
    %144 = vector.broadcast %cst_44 : f32 to vector<16x128xf32>
    %145 = arith.addf %144, %143 : vector<16x128xf32>
    %146 = arith.divf %144, %145 : vector<16x128xf32>
    %147 = vector.extract_strided_slice %134 {offsets = [0, 256], sizes = [16, 128], strides = [1, 1]} : vector<16x512xf32> to vector<16x128xf32>
    %148 = math.tanh %147 : vector<16x128xf32>
    %149 = vector.extract_strided_slice %134 {offsets = [0, 384], sizes = [16, 128], strides = [1, 1]} : vector<16x512xf32> to vector<16x128xf32>
    %150 = arith.negf %149 : vector<16x128xf32>
    %151 = math.exp %150 : vector<16x128xf32>
    %cst_45 = arith.constant 1.000000e+00 : f32
    %152 = vector.broadcast %cst_45 : f32 to vector<16x128xf32>
    %153 = arith.addf %152, %151 : vector<16x128xf32>
    %154 = arith.divf %152, %153 : vector<16x128xf32>
    %155 = arith.mulf %146, %127 : vector<16x128xf32>
    %156 = arith.mulf %140, %148 : vector<16x128xf32>
    %157 = arith.addf %155, %156 : vector<16x128xf32>
    %158 = math.tanh %157 : vector<16x128xf32>
    %159 = arith.mulf %154, %158 : vector<16x128xf32>
    %c80 = arith.constant 80 : index
    %c0_46 = arith.constant 0 : index
    %160 = vector.load %arg8[%c80, %c0_46] : memref<448x512xf32, #tpu.memory_space<vmem>>, vector<16x512xf32>
    %161 = arith.truncf %159 : vector<16x128xf32> to vector<16x128xbf16>
    %c0_47 = arith.constant 0 : index
    %c0_48 = arith.constant 0 : index
    %162 = vector.load %arg3[%c0_47, %c0_48] : memref<128x512xbf16, #tpu.memory_space<vmem>>, vector<128x512xbf16>
    %cst_49 = arith.constant dense<0.000000e+00> : vector<16x512xf32>
    %163 = tpu.matmul %161, %162, %cst_49 {dimension_numbers = #tpu.dot_dimension_numbers<[1], [0], [0], [1], [0, 0, 1, 1], [], []>} : vector<16x128xbf16>, vector<128x512xbf16>, vector<16x512xf32> -> vector<16x512xf32>
    %164 = arith.addf %160, %163 : vector<16x512xf32>
    %165 = vector.extract_strided_slice %164 {offsets = [0, 0], sizes = [16, 128], strides = [1, 1]} : vector<16x512xf32> to vector<16x128xf32>
    %166 = arith.negf %165 : vector<16x128xf32>
    %167 = math.exp %166 : vector<16x128xf32>
    %cst_50 = arith.constant 1.000000e+00 : f32
    %168 = vector.broadcast %cst_50 : f32 to vector<16x128xf32>
    %169 = arith.addf %168, %167 : vector<16x128xf32>
    %170 = arith.divf %168, %169 : vector<16x128xf32>
    %171 = vector.extract_strided_slice %164 {offsets = [0, 128], sizes = [16, 128], strides = [1, 1]} : vector<16x512xf32> to vector<16x128xf32>
    %172 = arith.negf %171 : vector<16x128xf32>
    %173 = math.exp %172 : vector<16x128xf32>
    %cst_51 = arith.constant 1.000000e+00 : f32
    %174 = vector.broadcast %cst_51 : f32 to vector<16x128xf32>
    %175 = arith.addf %174, %173 : vector<16x128xf32>
    %176 = arith.divf %174, %175 : vector<16x128xf32>
    %177 = vector.extract_strided_slice %164 {offsets = [0, 256], sizes = [16, 128], strides = [1, 1]} : vector<16x512xf32> to vector<16x128xf32>
    %178 = math.tanh %177 : vector<16x128xf32>
    %179 = vector.extract_strided_slice %164 {offsets = [0, 384], sizes = [16, 128], strides = [1, 1]} : vector<16x512xf32> to vector<16x128xf32>
    %180 = arith.negf %179 : vector<16x128xf32>
    %181 = math.exp %180 : vector<16x128xf32>
    %cst_52 = arith.constant 1.000000e+00 : f32
    %182 = vector.broadcast %cst_52 : f32 to vector<16x128xf32>
    %183 = arith.addf %182, %181 : vector<16x128xf32>
    %184 = arith.divf %182, %183 : vector<16x128xf32>
    %185 = arith.mulf %176, %157 : vector<16x128xf32>
    %186 = arith.mulf %170, %178 : vector<16x128xf32>
    %187 = arith.addf %185, %186 : vector<16x128xf32>
    %188 = math.tanh %187 : vector<16x128xf32>
    %189 = arith.mulf %184, %188 : vector<16x128xf32>
    %c96 = arith.constant 96 : index
    %c0_53 = arith.constant 0 : index
    %190 = vector.load %arg8[%c96, %c0_53] : memref<448x512xf32, #tpu.memory_space<vmem>>, vector<16x512xf32>
    %191 = arith.truncf %189 : vector<16x128xf32> to vector<16x128xbf16>
    %c0_54 = arith.constant 0 : index
    %c0_55 = arith.constant 0 : index
    %192 = vector.load %arg3[%c0_54, %c0_55] : memref<128x512xbf16, #tpu.memory_space<vmem>>, vector<128x512xbf16>
    %cst_56 = arith.constant dense<0.000000e+00> : vector<16x512xf32>
    %193 = tpu.matmul %191, %192, %cst_56 {dimension_numbers = #tpu.dot_dimension_numbers<[1], [0], [0], [1], [0, 0, 1, 1], [], []>} : vector<16x128xbf16>, vector<128x512xbf16>, vector<16x512xf32> -> vector<16x512xf32>
    %194 = arith.addf %190, %193 : vector<16x512xf32>
    %195 = vector.extract_strided_slice %194 {offsets = [0, 0], sizes = [16, 128], strides = [1, 1]} : vector<16x512xf32> to vector<16x128xf32>
    %196 = arith.negf %195 : vector<16x128xf32>
    %197 = math.exp %196 : vector<16x128xf32>
    %cst_57 = arith.constant 1.000000e+00 : f32
    %198 = vector.broadcast %cst_57 : f32 to vector<16x128xf32>
    %199 = arith.addf %198, %197 : vector<16x128xf32>
    %200 = arith.divf %198, %199 : vector<16x128xf32>
    %201 = vector.extract_strided_slice %194 {offsets = [0, 128], sizes = [16, 128], strides = [1, 1]} : vector<16x512xf32> to vector<16x128xf32>
    %202 = arith.negf %201 : vector<16x128xf32>
    %203 = math.exp %202 : vector<16x128xf32>
    %cst_58 = arith.constant 1.000000e+00 : f32
    %204 = vector.broadcast %cst_58 : f32 to vector<16x128xf32>
    %205 = arith.addf %204, %203 : vector<16x128xf32>
    %206 = arith.divf %204, %205 : vector<16x128xf32>
    %207 = vector.extract_strided_slice %194 {offsets = [0, 256], sizes = [16, 128], strides = [1, 1]} : vector<16x512xf32> to vector<16x128xf32>
    %208 = math.tanh %207 : vector<16x128xf32>
    %209 = vector.extract_strided_slice %194 {offsets = [0, 384], sizes = [16, 128], strides = [1, 1]} : vector<16x512xf32> to vector<16x128xf32>
    %210 = arith.negf %209 : vector<16x128xf32>
    %211 = math.exp %210 : vector<16x128xf32>
    %cst_59 = arith.constant 1.000000e+00 : f32
    %212 = vector.broadcast %cst_59 : f32 to vector<16x128xf32>
    %213 = arith.addf %212, %211 : vector<16x128xf32>
    %214 = arith.divf %212, %213 : vector<16x128xf32>
    %215 = arith.mulf %206, %187 : vector<16x128xf32>
    %216 = arith.mulf %200, %208 : vector<16x128xf32>
    %217 = arith.addf %215, %216 : vector<16x128xf32>
    %218 = math.tanh %217 : vector<16x128xf32>
    %219 = arith.mulf %214, %218 : vector<16x128xf32>
    %c112 = arith.constant 112 : index
    %c0_60 = arith.constant 0 : index
    %220 = vector.load %arg8[%c112, %c0_60] : memref<448x512xf32, #tpu.memory_space<vmem>>, vector<16x512xf32>
    %221 = arith.truncf %219 : vector<16x128xf32> to vector<16x128xbf16>
    %c0_61 = arith.constant 0 : index
    %c0_62 = arith.constant 0 : index
    %222 = vector.load %arg3[%c0_61, %c0_62] : memref<128x512xbf16, #tpu.memory_space<vmem>>, vector<128x512xbf16>
    %cst_63 = arith.constant dense<0.000000e+00> : vector<16x512xf32>
    %223 = tpu.matmul %221, %222, %cst_63 {dimension_numbers = #tpu.dot_dimension_numbers<[1], [0], [0], [1], [0, 0, 1, 1], [], []>} : vector<16x128xbf16>, vector<128x512xbf16>, vector<16x512xf32> -> vector<16x512xf32>
    %224 = arith.addf %220, %223 : vector<16x512xf32>
    %225 = vector.extract_strided_slice %224 {offsets = [0, 0], sizes = [16, 128], strides = [1, 1]} : vector<16x512xf32> to vector<16x128xf32>
    %226 = arith.negf %225 : vector<16x128xf32>
    %227 = math.exp %226 : vector<16x128xf32>
    %cst_64 = arith.constant 1.000000e+00 : f32
    %228 = vector.broadcast %cst_64 : f32 to vector<16x128xf32>
    %229 = arith.addf %228, %227 : vector<16x128xf32>
    %230 = arith.divf %228, %229 : vector<16x128xf32>
    %231 = vector.extract_strided_slice %224 {offsets = [0, 128], sizes = [16, 128], strides = [1, 1]} : vector<16x512xf32> to vector<16x128xf32>
    %232 = arith.negf %231 : vector<16x128xf32>
    %233 = math.exp %232 : vector<16x128xf32>
    %cst_65 = arith.constant 1.000000e+00 : f32
    %234 = vector.broadcast %cst_65 : f32 to vector<16x128xf32>
    %235 = arith.addf %234, %233 : vector<16x128xf32>
    %236 = arith.divf %234, %235 : vector<16x128xf32>
    %237 = vector.extract_strided_slice %224 {offsets = [0, 256], sizes = [16, 128], strides = [1, 1]} : vector<16x512xf32> to vector<16x128xf32>
    %238 = math.tanh %237 : vector<16x128xf32>
    %239 = vector.extract_strided_slice %224 {offsets = [0, 384], sizes = [16, 128], strides = [1, 1]} : vector<16x512xf32> to vector<16x128xf32>
    %240 = arith.negf %239 : vector<16x128xf32>
    %241 = math.exp %240 : vector<16x128xf32>
    %cst_66 = arith.constant 1.000000e+00 : f32
    %242 = vector.broadcast %cst_66 : f32 to vector<16x128xf32>
    %243 = arith.addf %242, %241 : vector<16x128xf32>
    %244 = arith.divf %242, %243 : vector<16x128xf32>
    %245 = arith.mulf %236, %217 : vector<16x128xf32>
    %246 = arith.mulf %230, %238 : vector<16x128xf32>
    %247 = arith.addf %245, %246 : vector<16x128xf32>
    %248 = math.tanh %247 : vector<16x128xf32>
    %249 = arith.mulf %244, %248 : vector<16x128xf32>
    %c128 = arith.constant 128 : index
    %c0_67 = arith.constant 0 : index
    %250 = vector.load %arg8[%c128, %c0_67] : memref<448x512xf32, #tpu.memory_space<vmem>>, vector<16x512xf32>
    %251 = arith.truncf %249 : vector<16x128xf32> to vector<16x128xbf16>
    %c0_68 = arith.constant 0 : index
    %c0_69 = arith.constant 0 : index
    %252 = vector.load %arg3[%c0_68, %c0_69] : memref<128x512xbf16, #tpu.memory_space<vmem>>, vector<128x512xbf16>
    %cst_70 = arith.constant dense<0.000000e+00> : vector<16x512xf32>
    %253 = tpu.matmul %251, %252, %cst_70 {dimension_numbers = #tpu.dot_dimension_numbers<[1], [0], [0], [1], [0, 0, 1, 1], [], []>} : vector<16x128xbf16>, vector<128x512xbf16>, vector<16x512xf32> -> vector<16x512xf32>
    %254 = arith.addf %250, %253 : vector<16x512xf32>
    %255 = vector.extract_strided_slice %254 {offsets = [0, 0], sizes = [16, 128], strides = [1, 1]} : vector<16x512xf32> to vector<16x128xf32>
    %256 = arith.negf %255 : vector<16x128xf32>
    %257 = math.exp %256 : vector<16x128xf32>
    %cst_71 = arith.constant 1.000000e+00 : f32
    %258 = vector.broadcast %cst_71 : f32 to vector<16x128xf32>
    %259 = arith.addf %258, %257 : vector<16x128xf32>
    %260 = arith.divf %258, %259 : vector<16x128xf32>
    %261 = vector.extract_strided_slice %254 {offsets = [0, 128], sizes = [16, 128], strides = [1, 1]} : vector<16x512xf32> to vector<16x128xf32>
    %262 = arith.negf %261 : vector<16x128xf32>
    %263 = math.exp %262 : vector<16x128xf32>
    %cst_72 = arith.constant 1.000000e+00 : f32
    %264 = vector.broadcast %cst_72 : f32 to vector<16x128xf32>
    %265 = arith.addf %264, %263 : vector<16x128xf32>
    %266 = arith.divf %264, %265 : vector<16x128xf32>
    %267 = vector.extract_strided_slice %254 {offsets = [0, 256], sizes = [16, 128], strides = [1, 1]} : vector<16x512xf32> to vector<16x128xf32>
    %268 = math.tanh %267 : vector<16x128xf32>
    %269 = vector.extract_strided_slice %254 {offsets = [0, 384], sizes = [16, 128], strides = [1, 1]} : vector<16x512xf32> to vector<16x128xf32>
    %270 = arith.negf %269 : vector<16x128xf32>
    %271 = math.exp %270 : vector<16x128xf32>
    %cst_73 = arith.constant 1.000000e+00 : f32
    %272 = vector.broadcast %cst_73 : f32 to vector<16x128xf32>
    %273 = arith.addf %272, %271 : vector<16x128xf32>
    %274 = arith.divf %272, %273 : vector<16x128xf32>
    %275 = arith.mulf %266, %247 : vector<16x128xf32>
    %276 = arith.mulf %260, %268 : vector<16x128xf32>
    %277 = arith.addf %275, %276 : vector<16x128xf32>
    %278 = math.tanh %277 : vector<16x128xf32>
    %279 = arith.mulf %274, %278 : vector<16x128xf32>
    %c144 = arith.constant 144 : index
    %c0_74 = arith.constant 0 : index
    %280 = vector.load %arg8[%c144, %c0_74] : memref<448x512xf32, #tpu.memory_space<vmem>>, vector<16x512xf32>
    %281 = arith.truncf %279 : vector<16x128xf32> to vector<16x128xbf16>
    %c0_75 = arith.constant 0 : index
    %c0_76 = arith.constant 0 : index
    %282 = vector.load %arg3[%c0_75, %c0_76] : memref<128x512xbf16, #tpu.memory_space<vmem>>, vector<128x512xbf16>
    %cst_77 = arith.constant dense<0.000000e+00> : vector<16x512xf32>
    %283 = tpu.matmul %281, %282, %cst_77 {dimension_numbers = #tpu.dot_dimension_numbers<[1], [0], [0], [1], [0, 0, 1, 1], [], []>} : vector<16x128xbf16>, vector<128x512xbf16>, vector<16x512xf32> -> vector<16x512xf32>
    %284 = arith.addf %280, %283 : vector<16x512xf32>
    %285 = vector.extract_strided_slice %284 {offsets = [0, 0], sizes = [16, 128], strides = [1, 1]} : vector<16x512xf32> to vector<16x128xf32>
    %286 = arith.negf %285 : vector<16x128xf32>
    %287 = math.exp %286 : vector<16x128xf32>
    %cst_78 = arith.constant 1.000000e+00 : f32
    %288 = vector.broadcast %cst_78 : f32 to vector<16x128xf32>
    %289 = arith.addf %288, %287 : vector<16x128xf32>
    %290 = arith.divf %288, %289 : vector<16x128xf32>
    %291 = vector.extract_strided_slice %284 {offsets = [0, 128], sizes = [16, 128], strides = [1, 1]} : vector<16x512xf32> to vector<16x128xf32>
    %292 = arith.negf %291 : vector<16x128xf32>
    %293 = math.exp %292 : vector<16x128xf32>
    %cst_79 = arith.constant 1.000000e+00 : f32
    %294 = vector.broadcast %cst_79 : f32 to vector<16x128xf32>
    %295 = arith.addf %294, %293 : vector<16x128xf32>
    %296 = arith.divf %294, %295 : vector<16x128xf32>
    %297 = vector.extract_strided_slice %284 {offsets = [0, 256], sizes = [16, 128], strides = [1, 1]} : vector<16x512xf32> to vector<16x128xf32>
    %298 = math.tanh %297 : vector<16x128xf32>
    %299 = vector.extract_strided_slice %284 {offsets = [0, 384], sizes = [16, 128], strides = [1, 1]} : vector<16x512xf32> to vector<16x128xf32>
    %300 = arith.negf %299 : vector<16x128xf32>
    %301 = math.exp %300 : vector<16x128xf32>
    %cst_80 = arith.constant 1.000000e+00 : f32
    %302 = vector.broadcast %cst_80 : f32 to vector<16x128xf32>
    %303 = arith.addf %302, %301 : vector<16x128xf32>
    %304 = arith.divf %302, %303 : vector<16x128xf32>
    %305 = arith.mulf %296, %277 : vector<16x128xf32>
    %306 = arith.mulf %290, %298 : vector<16x128xf32>
    %307 = arith.addf %305, %306 : vector<16x128xf32>
    %308 = math.tanh %307 : vector<16x128xf32>
    %309 = arith.mulf %304, %308 : vector<16x128xf32>
    %c160 = arith.constant 160 : index
    %c0_81 = arith.constant 0 : index
    %310 = vector.load %arg8[%c160, %c0_81] : memref<448x512xf32, #tpu.memory_space<vmem>>, vector<16x512xf32>
    %311 = arith.truncf %309 : vector<16x128xf32> to vector<16x128xbf16>
    %c0_82 = arith.constant 0 : index
    %c0_83 = arith.constant 0 : index
    %312 = vector.load %arg3[%c0_82, %c0_83] : memref<128x512xbf16, #tpu.memory_space<vmem>>, vector<128x512xbf16>
    %cst_84 = arith.constant dense<0.000000e+00> : vector<16x512xf32>
    %313 = tpu.matmul %311, %312, %cst_84 {dimension_numbers = #tpu.dot_dimension_numbers<[1], [0], [0], [1], [0, 0, 1, 1], [], []>} : vector<16x128xbf16>, vector<128x512xbf16>, vector<16x512xf32> -> vector<16x512xf32>
    %314 = arith.addf %310, %313 : vector<16x512xf32>
    %315 = vector.extract_strided_slice %314 {offsets = [0, 0], sizes = [16, 128], strides = [1, 1]} : vector<16x512xf32> to vector<16x128xf32>
    %316 = arith.negf %315 : vector<16x128xf32>
    %317 = math.exp %316 : vector<16x128xf32>
    %cst_85 = arith.constant 1.000000e+00 : f32
    %318 = vector.broadcast %cst_85 : f32 to vector<16x128xf32>
    %319 = arith.addf %318, %317 : vector<16x128xf32>
    %320 = arith.divf %318, %319 : vector<16x128xf32>
    %321 = vector.extract_strided_slice %314 {offsets = [0, 128], sizes = [16, 128], strides = [1, 1]} : vector<16x512xf32> to vector<16x128xf32>
    %322 = arith.negf %321 : vector<16x128xf32>
    %323 = math.exp %322 : vector<16x128xf32>
    %cst_86 = arith.constant 1.000000e+00 : f32
    %324 = vector.broadcast %cst_86 : f32 to vector<16x128xf32>
    %325 = arith.addf %324, %323 : vector<16x128xf32>
    %326 = arith.divf %324, %325 : vector<16x128xf32>
    %327 = vector.extract_strided_slice %314 {offsets = [0, 256], sizes = [16, 128], strides = [1, 1]} : vector<16x512xf32> to vector<16x128xf32>
    %328 = math.tanh %327 : vector<16x128xf32>
    %329 = vector.extract_strided_slice %314 {offsets = [0, 384], sizes = [16, 128], strides = [1, 1]} : vector<16x512xf32> to vector<16x128xf32>
    %330 = arith.negf %329 : vector<16x128xf32>
    %331 = math.exp %330 : vector<16x128xf32>
    %cst_87 = arith.constant 1.000000e+00 : f32
    %332 = vector.broadcast %cst_87 : f32 to vector<16x128xf32>
    %333 = arith.addf %332, %331 : vector<16x128xf32>
    %334 = arith.divf %332, %333 : vector<16x128xf32>
    %335 = arith.mulf %326, %307 : vector<16x128xf32>
    %336 = arith.mulf %320, %328 : vector<16x128xf32>
    %337 = arith.addf %335, %336 : vector<16x128xf32>
    %338 = math.tanh %337 : vector<16x128xf32>
    %339 = arith.mulf %334, %338 : vector<16x128xf32>
    %c176 = arith.constant 176 : index
    %c0_88 = arith.constant 0 : index
    %340 = vector.load %arg8[%c176, %c0_88] : memref<448x512xf32, #tpu.memory_space<vmem>>, vector<16x512xf32>
    %341 = arith.truncf %339 : vector<16x128xf32> to vector<16x128xbf16>
    %c0_89 = arith.constant 0 : index
    %c0_90 = arith.constant 0 : index
    %342 = vector.load %arg3[%c0_89, %c0_90] : memref<128x512xbf16, #tpu.memory_space<vmem>>, vector<128x512xbf16>
    %cst_91 = arith.constant dense<0.000000e+00> : vector<16x512xf32>
    %343 = tpu.matmul %341, %342, %cst_91 {dimension_numbers = #tpu.dot_dimension_numbers<[1], [0], [0], [1], [0, 0, 1, 1], [], []>} : vector<16x128xbf16>, vector<128x512xbf16>, vector<16x512xf32> -> vector<16x512xf32>
    %344 = arith.addf %340, %343 : vector<16x512xf32>
    %345 = vector.extract_strided_slice %344 {offsets = [0, 0], sizes = [16, 128], strides = [1, 1]} : vector<16x512xf32> to vector<16x128xf32>
    %346 = arith.negf %345 : vector<16x128xf32>
    %347 = math.exp %346 : vector<16x128xf32>
    %cst_92 = arith.constant 1.000000e+00 : f32
    %348 = vector.broadcast %cst_92 : f32 to vector<16x128xf32>
    %349 = arith.addf %348, %347 : vector<16x128xf32>
    %350 = arith.divf %348, %349 : vector<16x128xf32>
    %351 = vector.extract_strided_slice %344 {offsets = [0, 128], sizes = [16, 128], strides = [1, 1]} : vector<16x512xf32> to vector<16x128xf32>
    %352 = arith.negf %351 : vector<16x128xf32>
    %353 = math.exp %352 : vector<16x128xf32>
    %cst_93 = arith.constant 1.000000e+00 : f32
    %354 = vector.broadcast %cst_93 : f32 to vector<16x128xf32>
    %355 = arith.addf %354, %353 : vector<16x128xf32>
    %356 = arith.divf %354, %355 : vector<16x128xf32>
    %357 = vector.extract_strided_slice %344 {offsets = [0, 256], sizes = [16, 128], strides = [1, 1]} : vector<16x512xf32> to vector<16x128xf32>
    %358 = math.tanh %357 : vector<16x128xf32>
    %359 = vector.extract_strided_slice %344 {offsets = [0, 384], sizes = [16, 128], strides = [1, 1]} : vector<16x512xf32> to vector<16x128xf32>
    %360 = arith.negf %359 : vector<16x128xf32>
    %361 = math.exp %360 : vector<16x128xf32>
    %cst_94 = arith.constant 1.000000e+00 : f32
    %362 = vector.broadcast %cst_94 : f32 to vector<16x128xf32>
    %363 = arith.addf %362, %361 : vector<16x128xf32>
    %364 = arith.divf %362, %363 : vector<16x128xf32>
    %365 = arith.mulf %356, %337 : vector<16x128xf32>
    %366 = arith.mulf %350, %358 : vector<16x128xf32>
    %367 = arith.addf %365, %366 : vector<16x128xf32>
    %368 = math.tanh %367 : vector<16x128xf32>
    %369 = arith.mulf %364, %368 : vector<16x128xf32>
    %c192 = arith.constant 192 : index
    %c0_95 = arith.constant 0 : index
    %370 = vector.load %arg8[%c192, %c0_95] : memref<448x512xf32, #tpu.memory_space<vmem>>, vector<16x512xf32>
    %371 = arith.truncf %369 : vector<16x128xf32> to vector<16x128xbf16>
    %c0_96 = arith.constant 0 : index
    %c0_97 = arith.constant 0 : index
    %372 = vector.load %arg3[%c0_96, %c0_97] : memref<128x512xbf16, #tpu.memory_space<vmem>>, vector<128x512xbf16>
    %cst_98 = arith.constant dense<0.000000e+00> : vector<16x512xf32>
    %373 = tpu.matmul %371, %372, %cst_98 {dimension_numbers = #tpu.dot_dimension_numbers<[1], [0], [0], [1], [0, 0, 1, 1], [], []>} : vector<16x128xbf16>, vector<128x512xbf16>, vector<16x512xf32> -> vector<16x512xf32>
    %374 = arith.addf %370, %373 : vector<16x512xf32>
    %375 = vector.extract_strided_slice %374 {offsets = [0, 0], sizes = [16, 128], strides = [1, 1]} : vector<16x512xf32> to vector<16x128xf32>
    %376 = arith.negf %375 : vector<16x128xf32>
    %377 = math.exp %376 : vector<16x128xf32>
    %cst_99 = arith.constant 1.000000e+00 : f32
    %378 = vector.broadcast %cst_99 : f32 to vector<16x128xf32>
    %379 = arith.addf %378, %377 : vector<16x128xf32>
    %380 = arith.divf %378, %379 : vector<16x128xf32>
    %381 = vector.extract_strided_slice %374 {offsets = [0, 128], sizes = [16, 128], strides = [1, 1]} : vector<16x512xf32> to vector<16x128xf32>
    %382 = arith.negf %381 : vector<16x128xf32>
    %383 = math.exp %382 : vector<16x128xf32>
    %cst_100 = arith.constant 1.000000e+00 : f32
    %384 = vector.broadcast %cst_100 : f32 to vector<16x128xf32>
    %385 = arith.addf %384, %383 : vector<16x128xf32>
    %386 = arith.divf %384, %385 : vector<16x128xf32>
    %387 = vector.extract_strided_slice %374 {offsets = [0, 256], sizes = [16, 128], strides = [1, 1]} : vector<16x512xf32> to vector<16x128xf32>
    %388 = math.tanh %387 : vector<16x128xf32>
    %389 = vector.extract_strided_slice %374 {offsets = [0, 384], sizes = [16, 128], strides = [1, 1]} : vector<16x512xf32> to vector<16x128xf32>
    %390 = arith.negf %389 : vector<16x128xf32>
    %391 = math.exp %390 : vector<16x128xf32>
    %cst_101 = arith.constant 1.000000e+00 : f32
    %392 = vector.broadcast %cst_101 : f32 to vector<16x128xf32>
    %393 = arith.addf %392, %391 : vector<16x128xf32>
    %394 = arith.divf %392, %393 : vector<16x128xf32>
    %395 = arith.mulf %386, %367 : vector<16x128xf32>
    %396 = arith.mulf %380, %388 : vector<16x128xf32>
    %397 = arith.addf %395, %396 : vector<16x128xf32>
    %398 = math.tanh %397 : vector<16x128xf32>
    %399 = arith.mulf %394, %398 : vector<16x128xf32>
    %c208 = arith.constant 208 : index
    %c0_102 = arith.constant 0 : index
    %400 = vector.load %arg8[%c208, %c0_102] : memref<448x512xf32, #tpu.memory_space<vmem>>, vector<16x512xf32>
    %401 = arith.truncf %399 : vector<16x128xf32> to vector<16x128xbf16>
    %c0_103 = arith.constant 0 : index
    %c0_104 = arith.constant 0 : index
    %402 = vector.load %arg3[%c0_103, %c0_104] : memref<128x512xbf16, #tpu.memory_space<vmem>>, vector<128x512xbf16>
    %cst_105 = arith.constant dense<0.000000e+00> : vector<16x512xf32>
    %403 = tpu.matmul %401, %402, %cst_105 {dimension_numbers = #tpu.dot_dimension_numbers<[1], [0], [0], [1], [0, 0, 1, 1], [], []>} : vector<16x128xbf16>, vector<128x512xbf16>, vector<16x512xf32> -> vector<16x512xf32>
    %404 = arith.addf %400, %403 : vector<16x512xf32>
    %405 = vector.extract_strided_slice %404 {offsets = [0, 0], sizes = [16, 128], strides = [1, 1]} : vector<16x512xf32> to vector<16x128xf32>
    %406 = arith.negf %405 : vector<16x128xf32>
    %407 = math.exp %406 : vector<16x128xf32>
    %cst_106 = arith.constant 1.000000e+00 : f32
    %408 = vector.broadcast %cst_106 : f32 to vector<16x128xf32>
    %409 = arith.addf %408, %407 : vector<16x128xf32>
    %410 = arith.divf %408, %409 : vector<16x128xf32>
    %411 = vector.extract_strided_slice %404 {offsets = [0, 128], sizes = [16, 128], strides = [1, 1]} : vector<16x512xf32> to vector<16x128xf32>
    %412 = arith.negf %411 : vector<16x128xf32>
    %413 = math.exp %412 : vector<16x128xf32>
    %cst_107 = arith.constant 1.000000e+00 : f32
    %414 = vector.broadcast %cst_107 : f32 to vector<16x128xf32>
    %415 = arith.addf %414, %413 : vector<16x128xf32>
    %416 = arith.divf %414, %415 : vector<16x128xf32>
    %417 = vector.extract_strided_slice %404 {offsets = [0, 256], sizes = [16, 128], strides = [1, 1]} : vector<16x512xf32> to vector<16x128xf32>
    %418 = math.tanh %417 : vector<16x128xf32>
    %419 = vector.extract_strided_slice %404 {offsets = [0, 384], sizes = [16, 128], strides = [1, 1]} : vector<16x512xf32> to vector<16x128xf32>
    %420 = arith.negf %419 : vector<16x128xf32>
    %421 = math.exp %420 : vector<16x128xf32>
    %cst_108 = arith.constant 1.000000e+00 : f32
    %422 = vector.broadcast %cst_108 : f32 to vector<16x128xf32>
    %423 = arith.addf %422, %421 : vector<16x128xf32>
    %424 = arith.divf %422, %423 : vector<16x128xf32>
    %425 = arith.mulf %416, %397 : vector<16x128xf32>
    %426 = arith.mulf %410, %418 : vector<16x128xf32>
    %427 = arith.addf %425, %426 : vector<16x128xf32>
    %428 = math.tanh %427 : vector<16x128xf32>
    %429 = arith.mulf %424, %428 : vector<16x128xf32>
    %c224 = arith.constant 224 : index
    %c0_109 = arith.constant 0 : index
    %430 = vector.load %arg8[%c224, %c0_109] : memref<448x512xf32, #tpu.memory_space<vmem>>, vector<16x512xf32>
    %431 = arith.truncf %429 : vector<16x128xf32> to vector<16x128xbf16>
    %c0_110 = arith.constant 0 : index
    %c0_111 = arith.constant 0 : index
    %432 = vector.load %arg3[%c0_110, %c0_111] : memref<128x512xbf16, #tpu.memory_space<vmem>>, vector<128x512xbf16>
    %cst_112 = arith.constant dense<0.000000e+00> : vector<16x512xf32>
    %433 = tpu.matmul %431, %432, %cst_112 {dimension_numbers = #tpu.dot_dimension_numbers<[1], [0], [0], [1], [0, 0, 1, 1], [], []>} : vector<16x128xbf16>, vector<128x512xbf16>, vector<16x512xf32> -> vector<16x512xf32>
    %434 = arith.addf %430, %433 : vector<16x512xf32>
    %435 = vector.extract_strided_slice %434 {offsets = [0, 0], sizes = [16, 128], strides = [1, 1]} : vector<16x512xf32> to vector<16x128xf32>
    %436 = arith.negf %435 : vector<16x128xf32>
    %437 = math.exp %436 : vector<16x128xf32>
    %cst_113 = arith.constant 1.000000e+00 : f32
    %438 = vector.broadcast %cst_113 : f32 to vector<16x128xf32>
    %439 = arith.addf %438, %437 : vector<16x128xf32>
    %440 = arith.divf %438, %439 : vector<16x128xf32>
    %441 = vector.extract_strided_slice %434 {offsets = [0, 128], sizes = [16, 128], strides = [1, 1]} : vector<16x512xf32> to vector<16x128xf32>
    %442 = arith.negf %441 : vector<16x128xf32>
    %443 = math.exp %442 : vector<16x128xf32>
    %cst_114 = arith.constant 1.000000e+00 : f32
    %444 = vector.broadcast %cst_114 : f32 to vector<16x128xf32>
    %445 = arith.addf %444, %443 : vector<16x128xf32>
    %446 = arith.divf %444, %445 : vector<16x128xf32>
    %447 = vector.extract_strided_slice %434 {offsets = [0, 256], sizes = [16, 128], strides = [1, 1]} : vector<16x512xf32> to vector<16x128xf32>
    %448 = math.tanh %447 : vector<16x128xf32>
    %449 = vector.extract_strided_slice %434 {offsets = [0, 384], sizes = [16, 128], strides = [1, 1]} : vector<16x512xf32> to vector<16x128xf32>
    %450 = arith.negf %449 : vector<16x128xf32>
    %451 = math.exp %450 : vector<16x128xf32>
    %cst_115 = arith.constant 1.000000e+00 : f32
    %452 = vector.broadcast %cst_115 : f32 to vector<16x128xf32>
    %453 = arith.addf %452, %451 : vector<16x128xf32>
    %454 = arith.divf %452, %453 : vector<16x128xf32>
    %455 = arith.mulf %446, %427 : vector<16x128xf32>
    %456 = arith.mulf %440, %448 : vector<16x128xf32>
    %457 = arith.addf %455, %456 : vector<16x128xf32>
    %458 = math.tanh %457 : vector<16x128xf32>
    %459 = arith.mulf %454, %458 : vector<16x128xf32>
    %c240 = arith.constant 240 : index
    %c0_116 = arith.constant 0 : index
    %460 = vector.load %arg8[%c240, %c0_116] : memref<448x512xf32, #tpu.memory_space<vmem>>, vector<16x512xf32>
    %461 = arith.truncf %459 : vector<16x128xf32> to vector<16x128xbf16>
    %c0_117 = arith.constant 0 : index
    %c0_118 = arith.constant 0 : index
    %462 = vector.load %arg3[%c0_117, %c0_118] : memref<128x512xbf16, #tpu.memory_space<vmem>>, vector<128x512xbf16>
    %cst_119 = arith.constant dense<0.000000e+00> : vector<16x512xf32>
    %463 = tpu.matmul %461, %462, %cst_119 {dimension_numbers = #tpu.dot_dimension_numbers<[1], [0], [0], [1], [0, 0, 1, 1], [], []>} : vector<16x128xbf16>, vector<128x512xbf16>, vector<16x512xf32> -> vector<16x512xf32>
    %464 = arith.addf %460, %463 : vector<16x512xf32>
    %465 = vector.extract_strided_slice %464 {offsets = [0, 0], sizes = [16, 128], strides = [1, 1]} : vector<16x512xf32> to vector<16x128xf32>
    %466 = arith.negf %465 : vector<16x128xf32>
    %467 = math.exp %466 : vector<16x128xf32>
    %cst_120 = arith.constant 1.000000e+00 : f32
    %468 = vector.broadcast %cst_120 : f32 to vector<16x128xf32>
    %469 = arith.addf %468, %467 : vector<16x128xf32>
    %470 = arith.divf %468, %469 : vector<16x128xf32>
    %471 = vector.extract_strided_slice %464 {offsets = [0, 128], sizes = [16, 128], strides = [1, 1]} : vector<16x512xf32> to vector<16x128xf32>
    %472 = arith.negf %471 : vector<16x128xf32>
    %473 = math.exp %472 : vector<16x128xf32>
    %cst_121 = arith.constant 1.000000e+00 : f32
    %474 = vector.broadcast %cst_121 : f32 to vector<16x128xf32>
    %475 = arith.addf %474, %473 : vector<16x128xf32>
    %476 = arith.divf %474, %475 : vector<16x128xf32>
    %477 = vector.extract_strided_slice %464 {offsets = [0, 256], sizes = [16, 128], strides = [1, 1]} : vector<16x512xf32> to vector<16x128xf32>
    %478 = math.tanh %477 : vector<16x128xf32>
    %479 = vector.extract_strided_slice %464 {offsets = [0, 384], sizes = [16, 128], strides = [1, 1]} : vector<16x512xf32> to vector<16x128xf32>
    %480 = arith.negf %479 : vector<16x128xf32>
    %481 = math.exp %480 : vector<16x128xf32>
    %cst_122 = arith.constant 1.000000e+00 : f32
    %482 = vector.broadcast %cst_122 : f32 to vector<16x128xf32>
    %483 = arith.addf %482, %481 : vector<16x128xf32>
    %484 = arith.divf %482, %483 : vector<16x128xf32>
    %485 = arith.mulf %476, %457 : vector<16x128xf32>
    %486 = arith.mulf %470, %478 : vector<16x128xf32>
    %487 = arith.addf %485, %486 : vector<16x128xf32>
    %488 = math.tanh %487 : vector<16x128xf32>
    %489 = arith.mulf %484, %488 : vector<16x128xf32>
    %c256 = arith.constant 256 : index
    %c0_123 = arith.constant 0 : index
    %490 = vector.load %arg8[%c256, %c0_123] : memref<448x512xf32, #tpu.memory_space<vmem>>, vector<16x512xf32>
    %491 = arith.truncf %489 : vector<16x128xf32> to vector<16x128xbf16>
    %c0_124 = arith.constant 0 : index
    %c0_125 = arith.constant 0 : index
    %492 = vector.load %arg3[%c0_124, %c0_125] : memref<128x512xbf16, #tpu.memory_space<vmem>>, vector<128x512xbf16>
    %cst_126 = arith.constant dense<0.000000e+00> : vector<16x512xf32>
    %493 = tpu.matmul %491, %492, %cst_126 {dimension_numbers = #tpu.dot_dimension_numbers<[1], [0], [0], [1], [0, 0, 1, 1], [], []>} : vector<16x128xbf16>, vector<128x512xbf16>, vector<16x512xf32> -> vector<16x512xf32>
    %494 = arith.addf %490, %493 : vector<16x512xf32>
    %495 = vector.extract_strided_slice %494 {offsets = [0, 0], sizes = [16, 128], strides = [1, 1]} : vector<16x512xf32> to vector<16x128xf32>
    %496 = arith.negf %495 : vector<16x128xf32>
    %497 = math.exp %496 : vector<16x128xf32>
    %cst_127 = arith.constant 1.000000e+00 : f32
    %498 = vector.broadcast %cst_127 : f32 to vector<16x128xf32>
    %499 = arith.addf %498, %497 : vector<16x128xf32>
    %500 = arith.divf %498, %499 : vector<16x128xf32>
    %501 = vector.extract_strided_slice %494 {offsets = [0, 128], sizes = [16, 128], strides = [1, 1]} : vector<16x512xf32> to vector<16x128xf32>
    %502 = arith.negf %501 : vector<16x128xf32>
    %503 = math.exp %502 : vector<16x128xf32>
    %cst_128 = arith.constant 1.000000e+00 : f32
    %504 = vector.broadcast %cst_128 : f32 to vector<16x128xf32>
    %505 = arith.addf %504, %503 : vector<16x128xf32>
    %506 = arith.divf %504, %505 : vector<16x128xf32>
    %507 = vector.extract_strided_slice %494 {offsets = [0, 256], sizes = [16, 128], strides = [1, 1]} : vector<16x512xf32> to vector<16x128xf32>
    %508 = math.tanh %507 : vector<16x128xf32>
    %509 = vector.extract_strided_slice %494 {offsets = [0, 384], sizes = [16, 128], strides = [1, 1]} : vector<16x512xf32> to vector<16x128xf32>
    %510 = arith.negf %509 : vector<16x128xf32>
    %511 = math.exp %510 : vector<16x128xf32>
    %cst_129 = arith.constant 1.000000e+00 : f32
    %512 = vector.broadcast %cst_129 : f32 to vector<16x128xf32>
    %513 = arith.addf %512, %511 : vector<16x128xf32>
    %514 = arith.divf %512, %513 : vector<16x128xf32>
    %515 = arith.mulf %506, %487 : vector<16x128xf32>
    %516 = arith.mulf %500, %508 : vector<16x128xf32>
    %517 = arith.addf %515, %516 : vector<16x128xf32>
    %518 = math.tanh %517 : vector<16x128xf32>
    %519 = arith.mulf %514, %518 : vector<16x128xf32>
    %c272 = arith.constant 272 : index
    %c0_130 = arith.constant 0 : index
    %520 = vector.load %arg8[%c272, %c0_130] : memref<448x512xf32, #tpu.memory_space<vmem>>, vector<16x512xf32>
    %521 = arith.truncf %519 : vector<16x128xf32> to vector<16x128xbf16>
    %c0_131 = arith.constant 0 : index
    %c0_132 = arith.constant 0 : index
    %522 = vector.load %arg3[%c0_131, %c0_132] : memref<128x512xbf16, #tpu.memory_space<vmem>>, vector<128x512xbf16>
    %cst_133 = arith.constant dense<0.000000e+00> : vector<16x512xf32>
    %523 = tpu.matmul %521, %522, %cst_133 {dimension_numbers = #tpu.dot_dimension_numbers<[1], [0], [0], [1], [0, 0, 1, 1], [], []>} : vector<16x128xbf16>, vector<128x512xbf16>, vector<16x512xf32> -> vector<16x512xf32>
    %524 = arith.addf %520, %523 : vector<16x512xf32>
    %525 = vector.extract_strided_slice %524 {offsets = [0, 0], sizes = [16, 128], strides = [1, 1]} : vector<16x512xf32> to vector<16x128xf32>
    %526 = arith.negf %525 : vector<16x128xf32>
    %527 = math.exp %526 : vector<16x128xf32>
    %cst_134 = arith.constant 1.000000e+00 : f32
    %528 = vector.broadcast %cst_134 : f32 to vector<16x128xf32>
    %529 = arith.addf %528, %527 : vector<16x128xf32>
    %530 = arith.divf %528, %529 : vector<16x128xf32>
    %531 = vector.extract_strided_slice %524 {offsets = [0, 128], sizes = [16, 128], strides = [1, 1]} : vector<16x512xf32> to vector<16x128xf32>
    %532 = arith.negf %531 : vector<16x128xf32>
    %533 = math.exp %532 : vector<16x128xf32>
    %cst_135 = arith.constant 1.000000e+00 : f32
    %534 = vector.broadcast %cst_135 : f32 to vector<16x128xf32>
    %535 = arith.addf %534, %533 : vector<16x128xf32>
    %536 = arith.divf %534, %535 : vector<16x128xf32>
    %537 = vector.extract_strided_slice %524 {offsets = [0, 256], sizes = [16, 128], strides = [1, 1]} : vector<16x512xf32> to vector<16x128xf32>
    %538 = math.tanh %537 : vector<16x128xf32>
    %539 = vector.extract_strided_slice %524 {offsets = [0, 384], sizes = [16, 128], strides = [1, 1]} : vector<16x512xf32> to vector<16x128xf32>
    %540 = arith.negf %539 : vector<16x128xf32>
    %541 = math.exp %540 : vector<16x128xf32>
    %cst_136 = arith.constant 1.000000e+00 : f32
    %542 = vector.broadcast %cst_136 : f32 to vector<16x128xf32>
    %543 = arith.addf %542, %541 : vector<16x128xf32>
    %544 = arith.divf %542, %543 : vector<16x128xf32>
    %545 = arith.mulf %536, %517 : vector<16x128xf32>
    %546 = arith.mulf %530, %538 : vector<16x128xf32>
    %547 = arith.addf %545, %546 : vector<16x128xf32>
    %548 = math.tanh %547 : vector<16x128xf32>
    %549 = arith.mulf %544, %548 : vector<16x128xf32>
    %c288 = arith.constant 288 : index
    %c0_137 = arith.constant 0 : index
    %550 = vector.load %arg8[%c288, %c0_137] : memref<448x512xf32, #tpu.memory_space<vmem>>, vector<16x512xf32>
    %551 = arith.truncf %549 : vector<16x128xf32> to vector<16x128xbf16>
    %c0_138 = arith.constant 0 : index
    %c0_139 = arith.constant 0 : index
    %552 = vector.load %arg3[%c0_138, %c0_139] : memref<128x512xbf16, #tpu.memory_space<vmem>>, vector<128x512xbf16>
    %cst_140 = arith.constant dense<0.000000e+00> : vector<16x512xf32>
    %553 = tpu.matmul %551, %552, %cst_140 {dimension_numbers = #tpu.dot_dimension_numbers<[1], [0], [0], [1], [0, 0, 1, 1], [], []>} : vector<16x128xbf16>, vector<128x512xbf16>, vector<16x512xf32> -> vector<16x512xf32>
    %554 = arith.addf %550, %553 : vector<16x512xf32>
    %555 = vector.extract_strided_slice %554 {offsets = [0, 0], sizes = [16, 128], strides = [1, 1]} : vector<16x512xf32> to vector<16x128xf32>
    %556 = arith.negf %555 : vector<16x128xf32>
    %557 = math.exp %556 : vector<16x128xf32>
    %cst_141 = arith.constant 1.000000e+00 : f32
    %558 = vector.broadcast %cst_141 : f32 to vector<16x128xf32>
    %559 = arith.addf %558, %557 : vector<16x128xf32>
    %560 = arith.divf %558, %559 : vector<16x128xf32>
    %561 = vector.extract_strided_slice %554 {offsets = [0, 128], sizes = [16, 128], strides = [1, 1]} : vector<16x512xf32> to vector<16x128xf32>
    %562 = arith.negf %561 : vector<16x128xf32>
    %563 = math.exp %562 : vector<16x128xf32>
    %cst_142 = arith.constant 1.000000e+00 : f32
    %564 = vector.broadcast %cst_142 : f32 to vector<16x128xf32>
    %565 = arith.addf %564, %563 : vector<16x128xf32>
    %566 = arith.divf %564, %565 : vector<16x128xf32>
    %567 = vector.extract_strided_slice %554 {offsets = [0, 256], sizes = [16, 128], strides = [1, 1]} : vector<16x512xf32> to vector<16x128xf32>
    %568 = math.tanh %567 : vector<16x128xf32>
    %569 = vector.extract_strided_slice %554 {offsets = [0, 384], sizes = [16, 128], strides = [1, 1]} : vector<16x512xf32> to vector<16x128xf32>
    %570 = arith.negf %569 : vector<16x128xf32>
    %571 = math.exp %570 : vector<16x128xf32>
    %cst_143 = arith.constant 1.000000e+00 : f32
    %572 = vector.broadcast %cst_143 : f32 to vector<16x128xf32>
    %573 = arith.addf %572, %571 : vector<16x128xf32>
    %574 = arith.divf %572, %573 : vector<16x128xf32>
    %575 = arith.mulf %566, %547 : vector<16x128xf32>
    %576 = arith.mulf %560, %568 : vector<16x128xf32>
    %577 = arith.addf %575, %576 : vector<16x128xf32>
    %578 = math.tanh %577 : vector<16x128xf32>
    %579 = arith.mulf %574, %578 : vector<16x128xf32>
    %c304 = arith.constant 304 : index
    %c0_144 = arith.constant 0 : index
    %580 = vector.load %arg8[%c304, %c0_144] : memref<448x512xf32, #tpu.memory_space<vmem>>, vector<16x512xf32>
    %581 = arith.truncf %579 : vector<16x128xf32> to vector<16x128xbf16>
    %c0_145 = arith.constant 0 : index
    %c0_146 = arith.constant 0 : index
    %582 = vector.load %arg3[%c0_145, %c0_146] : memref<128x512xbf16, #tpu.memory_space<vmem>>, vector<128x512xbf16>
    %cst_147 = arith.constant dense<0.000000e+00> : vector<16x512xf32>
    %583 = tpu.matmul %581, %582, %cst_147 {dimension_numbers = #tpu.dot_dimension_numbers<[1], [0], [0], [1], [0, 0, 1, 1], [], []>} : vector<16x128xbf16>, vector<128x512xbf16>, vector<16x512xf32> -> vector<16x512xf32>
    %584 = arith.addf %580, %583 : vector<16x512xf32>
    %585 = vector.extract_strided_slice %584 {offsets = [0, 0], sizes = [16, 128], strides = [1, 1]} : vector<16x512xf32> to vector<16x128xf32>
    %586 = arith.negf %585 : vector<16x128xf32>
    %587 = math.exp %586 : vector<16x128xf32>
    %cst_148 = arith.constant 1.000000e+00 : f32
    %588 = vector.broadcast %cst_148 : f32 to vector<16x128xf32>
    %589 = arith.addf %588, %587 : vector<16x128xf32>
    %590 = arith.divf %588, %589 : vector<16x128xf32>
    %591 = vector.extract_strided_slice %584 {offsets = [0, 128], sizes = [16, 128], strides = [1, 1]} : vector<16x512xf32> to vector<16x128xf32>
    %592 = arith.negf %591 : vector<16x128xf32>
    %593 = math.exp %592 : vector<16x128xf32>
    %cst_149 = arith.constant 1.000000e+00 : f32
    %594 = vector.broadcast %cst_149 : f32 to vector<16x128xf32>
    %595 = arith.addf %594, %593 : vector<16x128xf32>
    %596 = arith.divf %594, %595 : vector<16x128xf32>
    %597 = vector.extract_strided_slice %584 {offsets = [0, 256], sizes = [16, 128], strides = [1, 1]} : vector<16x512xf32> to vector<16x128xf32>
    %598 = math.tanh %597 : vector<16x128xf32>
    %599 = vector.extract_strided_slice %584 {offsets = [0, 384], sizes = [16, 128], strides = [1, 1]} : vector<16x512xf32> to vector<16x128xf32>
    %600 = arith.negf %599 : vector<16x128xf32>
    %601 = math.exp %600 : vector<16x128xf32>
    %cst_150 = arith.constant 1.000000e+00 : f32
    %602 = vector.broadcast %cst_150 : f32 to vector<16x128xf32>
    %603 = arith.addf %602, %601 : vector<16x128xf32>
    %604 = arith.divf %602, %603 : vector<16x128xf32>
    %605 = arith.mulf %596, %577 : vector<16x128xf32>
    %606 = arith.mulf %590, %598 : vector<16x128xf32>
    %607 = arith.addf %605, %606 : vector<16x128xf32>
    %608 = math.tanh %607 : vector<16x128xf32>
    %609 = arith.mulf %604, %608 : vector<16x128xf32>
    %c320 = arith.constant 320 : index
    %c0_151 = arith.constant 0 : index
    %610 = vector.load %arg8[%c320, %c0_151] : memref<448x512xf32, #tpu.memory_space<vmem>>, vector<16x512xf32>
    %611 = arith.truncf %609 : vector<16x128xf32> to vector<16x128xbf16>
    %c0_152 = arith.constant 0 : index
    %c0_153 = arith.constant 0 : index
    %612 = vector.load %arg3[%c0_152, %c0_153] : memref<128x512xbf16, #tpu.memory_space<vmem>>, vector<128x512xbf16>
    %cst_154 = arith.constant dense<0.000000e+00> : vector<16x512xf32>
    %613 = tpu.matmul %611, %612, %cst_154 {dimension_numbers = #tpu.dot_dimension_numbers<[1], [0], [0], [1], [0, 0, 1, 1], [], []>} : vector<16x128xbf16>, vector<128x512xbf16>, vector<16x512xf32> -> vector<16x512xf32>
    %614 = arith.addf %610, %613 : vector<16x512xf32>
    %615 = vector.extract_strided_slice %614 {offsets = [0, 0], sizes = [16, 128], strides = [1, 1]} : vector<16x512xf32> to vector<16x128xf32>
    %616 = arith.negf %615 : vector<16x128xf32>
    %617 = math.exp %616 : vector<16x128xf32>
    %cst_155 = arith.constant 1.000000e+00 : f32
    %618 = vector.broadcast %cst_155 : f32 to vector<16x128xf32>
    %619 = arith.addf %618, %617 : vector<16x128xf32>
    %620 = arith.divf %618, %619 : vector<16x128xf32>
    %621 = vector.extract_strided_slice %614 {offsets = [0, 128], sizes = [16, 128], strides = [1, 1]} : vector<16x512xf32> to vector<16x128xf32>
    %622 = arith.negf %621 : vector<16x128xf32>
    %623 = math.exp %622 : vector<16x128xf32>
    %cst_156 = arith.constant 1.000000e+00 : f32
    %624 = vector.broadcast %cst_156 : f32 to vector<16x128xf32>
    %625 = arith.addf %624, %623 : vector<16x128xf32>
    %626 = arith.divf %624, %625 : vector<16x128xf32>
    %627 = vector.extract_strided_slice %614 {offsets = [0, 256], sizes = [16, 128], strides = [1, 1]} : vector<16x512xf32> to vector<16x128xf32>
    %628 = math.tanh %627 : vector<16x128xf32>
    %629 = vector.extract_strided_slice %614 {offsets = [0, 384], sizes = [16, 128], strides = [1, 1]} : vector<16x512xf32> to vector<16x128xf32>
    %630 = arith.negf %629 : vector<16x128xf32>
    %631 = math.exp %630 : vector<16x128xf32>
    %cst_157 = arith.constant 1.000000e+00 : f32
    %632 = vector.broadcast %cst_157 : f32 to vector<16x128xf32>
    %633 = arith.addf %632, %631 : vector<16x128xf32>
    %634 = arith.divf %632, %633 : vector<16x128xf32>
    %635 = arith.mulf %626, %607 : vector<16x128xf32>
    %636 = arith.mulf %620, %628 : vector<16x128xf32>
    %637 = arith.addf %635, %636 : vector<16x128xf32>
    %638 = math.tanh %637 : vector<16x128xf32>
    %639 = arith.mulf %634, %638 : vector<16x128xf32>
    %c336 = arith.constant 336 : index
    %c0_158 = arith.constant 0 : index
    %640 = vector.load %arg8[%c336, %c0_158] : memref<448x512xf32, #tpu.memory_space<vmem>>, vector<16x512xf32>
    %641 = arith.truncf %639 : vector<16x128xf32> to vector<16x128xbf16>
    %c0_159 = arith.constant 0 : index
    %c0_160 = arith.constant 0 : index
    %642 = vector.load %arg3[%c0_159, %c0_160] : memref<128x512xbf16, #tpu.memory_space<vmem>>, vector<128x512xbf16>
    %cst_161 = arith.constant dense<0.000000e+00> : vector<16x512xf32>
    %643 = tpu.matmul %641, %642, %cst_161 {dimension_numbers = #tpu.dot_dimension_numbers<[1], [0], [0], [1], [0, 0, 1, 1], [], []>} : vector<16x128xbf16>, vector<128x512xbf16>, vector<16x512xf32> -> vector<16x512xf32>
    %644 = arith.addf %640, %643 : vector<16x512xf32>
    %645 = vector.extract_strided_slice %644 {offsets = [0, 0], sizes = [16, 128], strides = [1, 1]} : vector<16x512xf32> to vector<16x128xf32>
    %646 = arith.negf %645 : vector<16x128xf32>
    %647 = math.exp %646 : vector<16x128xf32>
    %cst_162 = arith.constant 1.000000e+00 : f32
    %648 = vector.broadcast %cst_162 : f32 to vector<16x128xf32>
    %649 = arith.addf %648, %647 : vector<16x128xf32>
    %650 = arith.divf %648, %649 : vector<16x128xf32>
    %651 = vector.extract_strided_slice %644 {offsets = [0, 128], sizes = [16, 128], strides = [1, 1]} : vector<16x512xf32> to vector<16x128xf32>
    %652 = arith.negf %651 : vector<16x128xf32>
    %653 = math.exp %652 : vector<16x128xf32>
    %cst_163 = arith.constant 1.000000e+00 : f32
    %654 = vector.broadcast %cst_163 : f32 to vector<16x128xf32>
    %655 = arith.addf %654, %653 : vector<16x128xf32>
    %656 = arith.divf %654, %655 : vector<16x128xf32>
    %657 = vector.extract_strided_slice %644 {offsets = [0, 256], sizes = [16, 128], strides = [1, 1]} : vector<16x512xf32> to vector<16x128xf32>
    %658 = math.tanh %657 : vector<16x128xf32>
    %659 = vector.extract_strided_slice %644 {offsets = [0, 384], sizes = [16, 128], strides = [1, 1]} : vector<16x512xf32> to vector<16x128xf32>
    %660 = arith.negf %659 : vector<16x128xf32>
    %661 = math.exp %660 : vector<16x128xf32>
    %cst_164 = arith.constant 1.000000e+00 : f32
    %662 = vector.broadcast %cst_164 : f32 to vector<16x128xf32>
    %663 = arith.addf %662, %661 : vector<16x128xf32>
    %664 = arith.divf %662, %663 : vector<16x128xf32>
    %665 = arith.mulf %656, %637 : vector<16x128xf32>
    %666 = arith.mulf %650, %658 : vector<16x128xf32>
    %667 = arith.addf %665, %666 : vector<16x128xf32>
    %668 = math.tanh %667 : vector<16x128xf32>
    %669 = arith.mulf %664, %668 : vector<16x128xf32>
    %c352 = arith.constant 352 : index
    %c0_165 = arith.constant 0 : index
    %670 = vector.load %arg8[%c352, %c0_165] : memref<448x512xf32, #tpu.memory_space<vmem>>, vector<16x512xf32>
    %671 = arith.truncf %669 : vector<16x128xf32> to vector<16x128xbf16>
    %c0_166 = arith.constant 0 : index
    %c0_167 = arith.constant 0 : index
    %672 = vector.load %arg3[%c0_166, %c0_167] : memref<128x512xbf16, #tpu.memory_space<vmem>>, vector<128x512xbf16>
    %cst_168 = arith.constant dense<0.000000e+00> : vector<16x512xf32>
    %673 = tpu.matmul %671, %672, %cst_168 {dimension_numbers = #tpu.dot_dimension_numbers<[1], [0], [0], [1], [0, 0, 1, 1], [], []>} : vector<16x128xbf16>, vector<128x512xbf16>, vector<16x512xf32> -> vector<16x512xf32>
    %674 = arith.addf %670, %673 : vector<16x512xf32>
    %675 = vector.extract_strided_slice %674 {offsets = [0, 0], sizes = [16, 128], strides = [1, 1]} : vector<16x512xf32> to vector<16x128xf32>
    %676 = arith.negf %675 : vector<16x128xf32>
    %677 = math.exp %676 : vector<16x128xf32>
    %cst_169 = arith.constant 1.000000e+00 : f32
    %678 = vector.broadcast %cst_169 : f32 to vector<16x128xf32>
    %679 = arith.addf %678, %677 : vector<16x128xf32>
    %680 = arith.divf %678, %679 : vector<16x128xf32>
    %681 = vector.extract_strided_slice %674 {offsets = [0, 128], sizes = [16, 128], strides = [1, 1]} : vector<16x512xf32> to vector<16x128xf32>
    %682 = arith.negf %681 : vector<16x128xf32>
    %683 = math.exp %682 : vector<16x128xf32>
    %cst_170 = arith.constant 1.000000e+00 : f32
    %684 = vector.broadcast %cst_170 : f32 to vector<16x128xf32>
    %685 = arith.addf %684, %683 : vector<16x128xf32>
    %686 = arith.divf %684, %685 : vector<16x128xf32>
    %687 = vector.extract_strided_slice %674 {offsets = [0, 256], sizes = [16, 128], strides = [1, 1]} : vector<16x512xf32> to vector<16x128xf32>
    %688 = math.tanh %687 : vector<16x128xf32>
    %689 = vector.extract_strided_slice %674 {offsets = [0, 384], sizes = [16, 128], strides = [1, 1]} : vector<16x512xf32> to vector<16x128xf32>
    %690 = arith.negf %689 : vector<16x128xf32>
    %691 = math.exp %690 : vector<16x128xf32>
    %cst_171 = arith.constant 1.000000e+00 : f32
    %692 = vector.broadcast %cst_171 : f32 to vector<16x128xf32>
    %693 = arith.addf %692, %691 : vector<16x128xf32>
    %694 = arith.divf %692, %693 : vector<16x128xf32>
    %695 = arith.mulf %686, %667 : vector<16x128xf32>
    %696 = arith.mulf %680, %688 : vector<16x128xf32>
    %697 = arith.addf %695, %696 : vector<16x128xf32>
    %698 = math.tanh %697 : vector<16x128xf32>
    %699 = arith.mulf %694, %698 : vector<16x128xf32>
    %c368 = arith.constant 368 : index
    %c0_172 = arith.constant 0 : index
    %700 = vector.load %arg8[%c368, %c0_172] : memref<448x512xf32, #tpu.memory_space<vmem>>, vector<16x512xf32>
    %701 = arith.truncf %699 : vector<16x128xf32> to vector<16x128xbf16>
    %c0_173 = arith.constant 0 : index
    %c0_174 = arith.constant 0 : index
    %702 = vector.load %arg3[%c0_173, %c0_174] : memref<128x512xbf16, #tpu.memory_space<vmem>>, vector<128x512xbf16>
    %cst_175 = arith.constant dense<0.000000e+00> : vector<16x512xf32>
    %703 = tpu.matmul %701, %702, %cst_175 {dimension_numbers = #tpu.dot_dimension_numbers<[1], [0], [0], [1], [0, 0, 1, 1], [], []>} : vector<16x128xbf16>, vector<128x512xbf16>, vector<16x512xf32> -> vector<16x512xf32>
    %704 = arith.addf %700, %703 : vector<16x512xf32>
    %705 = vector.extract_strided_slice %704 {offsets = [0, 0], sizes = [16, 128], strides = [1, 1]} : vector<16x512xf32> to vector<16x128xf32>
    %706 = arith.negf %705 : vector<16x128xf32>
    %707 = math.exp %706 : vector<16x128xf32>
    %cst_176 = arith.constant 1.000000e+00 : f32
    %708 = vector.broadcast %cst_176 : f32 to vector<16x128xf32>
    %709 = arith.addf %708, %707 : vector<16x128xf32>
    %710 = arith.divf %708, %709 : vector<16x128xf32>
    %711 = vector.extract_strided_slice %704 {offsets = [0, 128], sizes = [16, 128], strides = [1, 1]} : vector<16x512xf32> to vector<16x128xf32>
    %712 = arith.negf %711 : vector<16x128xf32>
    %713 = math.exp %712 : vector<16x128xf32>
    %cst_177 = arith.constant 1.000000e+00 : f32
    %714 = vector.broadcast %cst_177 : f32 to vector<16x128xf32>
    %715 = arith.addf %714, %713 : vector<16x128xf32>
    %716 = arith.divf %714, %715 : vector<16x128xf32>
    %717 = vector.extract_strided_slice %704 {offsets = [0, 256], sizes = [16, 128], strides = [1, 1]} : vector<16x512xf32> to vector<16x128xf32>
    %718 = math.tanh %717 : vector<16x128xf32>
    %719 = vector.extract_strided_slice %704 {offsets = [0, 384], sizes = [16, 128], strides = [1, 1]} : vector<16x512xf32> to vector<16x128xf32>
    %720 = arith.negf %719 : vector<16x128xf32>
    %721 = math.exp %720 : vector<16x128xf32>
    %cst_178 = arith.constant 1.000000e+00 : f32
    %722 = vector.broadcast %cst_178 : f32 to vector<16x128xf32>
    %723 = arith.addf %722, %721 : vector<16x128xf32>
    %724 = arith.divf %722, %723 : vector<16x128xf32>
    %725 = arith.mulf %716, %697 : vector<16x128xf32>
    %726 = arith.mulf %710, %718 : vector<16x128xf32>
    %727 = arith.addf %725, %726 : vector<16x128xf32>
    %728 = math.tanh %727 : vector<16x128xf32>
    %729 = arith.mulf %724, %728 : vector<16x128xf32>
    %c384 = arith.constant 384 : index
    %c0_179 = arith.constant 0 : index
    %730 = vector.load %arg8[%c384, %c0_179] : memref<448x512xf32, #tpu.memory_space<vmem>>, vector<16x512xf32>
    %731 = arith.truncf %729 : vector<16x128xf32> to vector<16x128xbf16>
    %c0_180 = arith.constant 0 : index
    %c0_181 = arith.constant 0 : index
    %732 = vector.load %arg3[%c0_180, %c0_181] : memref<128x512xbf16, #tpu.memory_space<vmem>>, vector<128x512xbf16>
    %cst_182 = arith.constant dense<0.000000e+00> : vector<16x512xf32>
    %733 = tpu.matmul %731, %732, %cst_182 {dimension_numbers = #tpu.dot_dimension_numbers<[1], [0], [0], [1], [0, 0, 1, 1], [], []>} : vector<16x128xbf16>, vector<128x512xbf16>, vector<16x512xf32> -> vector<16x512xf32>
    %734 = arith.addf %730, %733 : vector<16x512xf32>
    %735 = vector.extract_strided_slice %734 {offsets = [0, 0], sizes = [16, 128], strides = [1, 1]} : vector<16x512xf32> to vector<16x128xf32>
    %736 = arith.negf %735 : vector<16x128xf32>
    %737 = math.exp %736 : vector<16x128xf32>
    %cst_183 = arith.constant 1.000000e+00 : f32
    %738 = vector.broadcast %cst_183 : f32 to vector<16x128xf32>
    %739 = arith.addf %738, %737 : vector<16x128xf32>
    %740 = arith.divf %738, %739 : vector<16x128xf32>
    %741 = vector.extract_strided_slice %734 {offsets = [0, 128], sizes = [16, 128], strides = [1, 1]} : vector<16x512xf32> to vector<16x128xf32>
    %742 = arith.negf %741 : vector<16x128xf32>
    %743 = math.exp %742 : vector<16x128xf32>
    %cst_184 = arith.constant 1.000000e+00 : f32
    %744 = vector.broadcast %cst_184 : f32 to vector<16x128xf32>
    %745 = arith.addf %744, %743 : vector<16x128xf32>
    %746 = arith.divf %744, %745 : vector<16x128xf32>
    %747 = vector.extract_strided_slice %734 {offsets = [0, 256], sizes = [16, 128], strides = [1, 1]} : vector<16x512xf32> to vector<16x128xf32>
    %748 = math.tanh %747 : vector<16x128xf32>
    %749 = vector.extract_strided_slice %734 {offsets = [0, 384], sizes = [16, 128], strides = [1, 1]} : vector<16x512xf32> to vector<16x128xf32>
    %750 = arith.negf %749 : vector<16x128xf32>
    %751 = math.exp %750 : vector<16x128xf32>
    %cst_185 = arith.constant 1.000000e+00 : f32
    %752 = vector.broadcast %cst_185 : f32 to vector<16x128xf32>
    %753 = arith.addf %752, %751 : vector<16x128xf32>
    %754 = arith.divf %752, %753 : vector<16x128xf32>
    %755 = arith.mulf %746, %727 : vector<16x128xf32>
    %756 = arith.mulf %740, %748 : vector<16x128xf32>
    %757 = arith.addf %755, %756 : vector<16x128xf32>
    %758 = math.tanh %757 : vector<16x128xf32>
    %759 = arith.mulf %754, %758 : vector<16x128xf32>
    %c400 = arith.constant 400 : index
    %c0_186 = arith.constant 0 : index
    %760 = vector.load %arg8[%c400, %c0_186] : memref<448x512xf32, #tpu.memory_space<vmem>>, vector<16x512xf32>
    %761 = arith.truncf %759 : vector<16x128xf32> to vector<16x128xbf16>
    %c0_187 = arith.constant 0 : index
    %c0_188 = arith.constant 0 : index
    %762 = vector.load %arg3[%c0_187, %c0_188] : memref<128x512xbf16, #tpu.memory_space<vmem>>, vector<128x512xbf16>
    %cst_189 = arith.constant dense<0.000000e+00> : vector<16x512xf32>
    %763 = tpu.matmul %761, %762, %cst_189 {dimension_numbers = #tpu.dot_dimension_numbers<[1], [0], [0], [1], [0, 0, 1, 1], [], []>} : vector<16x128xbf16>, vector<128x512xbf16>, vector<16x512xf32> -> vector<16x512xf32>
    %764 = arith.addf %760, %763 : vector<16x512xf32>
    %765 = vector.extract_strided_slice %764 {offsets = [0, 0], sizes = [16, 128], strides = [1, 1]} : vector<16x512xf32> to vector<16x128xf32>
    %766 = arith.negf %765 : vector<16x128xf32>
    %767 = math.exp %766 : vector<16x128xf32>
    %cst_190 = arith.constant 1.000000e+00 : f32
    %768 = vector.broadcast %cst_190 : f32 to vector<16x128xf32>
    %769 = arith.addf %768, %767 : vector<16x128xf32>
    %770 = arith.divf %768, %769 : vector<16x128xf32>
    %771 = vector.extract_strided_slice %764 {offsets = [0, 128], sizes = [16, 128], strides = [1, 1]} : vector<16x512xf32> to vector<16x128xf32>
    %772 = arith.negf %771 : vector<16x128xf32>
    %773 = math.exp %772 : vector<16x128xf32>
    %cst_191 = arith.constant 1.000000e+00 : f32
    %774 = vector.broadcast %cst_191 : f32 to vector<16x128xf32>
    %775 = arith.addf %774, %773 : vector<16x128xf32>
    %776 = arith.divf %774, %775 : vector<16x128xf32>
    %777 = vector.extract_strided_slice %764 {offsets = [0, 256], sizes = [16, 128], strides = [1, 1]} : vector<16x512xf32> to vector<16x128xf32>
    %778 = math.tanh %777 : vector<16x128xf32>
    %779 = vector.extract_strided_slice %764 {offsets = [0, 384], sizes = [16, 128], strides = [1, 1]} : vector<16x512xf32> to vector<16x128xf32>
    %780 = arith.negf %779 : vector<16x128xf32>
    %781 = math.exp %780 : vector<16x128xf32>
    %cst_192 = arith.constant 1.000000e+00 : f32
    %782 = vector.broadcast %cst_192 : f32 to vector<16x128xf32>
    %783 = arith.addf %782, %781 : vector<16x128xf32>
    %784 = arith.divf %782, %783 : vector<16x128xf32>
    %785 = arith.mulf %776, %757 : vector<16x128xf32>
    %786 = arith.mulf %770, %778 : vector<16x128xf32>
    %787 = arith.addf %785, %786 : vector<16x128xf32>
    %788 = math.tanh %787 : vector<16x128xf32>
    %789 = arith.mulf %784, %788 : vector<16x128xf32>
    %c416 = arith.constant 416 : index
    %c0_193 = arith.constant 0 : index
    %790 = vector.load %arg8[%c416, %c0_193] : memref<448x512xf32, #tpu.memory_space<vmem>>, vector<16x512xf32>
    %791 = arith.truncf %789 : vector<16x128xf32> to vector<16x128xbf16>
    %c0_194 = arith.constant 0 : index
    %c0_195 = arith.constant 0 : index
    %792 = vector.load %arg3[%c0_194, %c0_195] : memref<128x512xbf16, #tpu.memory_space<vmem>>, vector<128x512xbf16>
    %cst_196 = arith.constant dense<0.000000e+00> : vector<16x512xf32>
    %793 = tpu.matmul %791, %792, %cst_196 {dimension_numbers = #tpu.dot_dimension_numbers<[1], [0], [0], [1], [0, 0, 1, 1], [], []>} : vector<16x128xbf16>, vector<128x512xbf16>, vector<16x512xf32> -> vector<16x512xf32>
    %794 = arith.addf %790, %793 : vector<16x512xf32>
    %795 = vector.extract_strided_slice %794 {offsets = [0, 0], sizes = [16, 128], strides = [1, 1]} : vector<16x512xf32> to vector<16x128xf32>
    %796 = arith.negf %795 : vector<16x128xf32>
    %797 = math.exp %796 : vector<16x128xf32>
    %cst_197 = arith.constant 1.000000e+00 : f32
    %798 = vector.broadcast %cst_197 : f32 to vector<16x128xf32>
    %799 = arith.addf %798, %797 : vector<16x128xf32>
    %800 = arith.divf %798, %799 : vector<16x128xf32>
    %801 = vector.extract_strided_slice %794 {offsets = [0, 128], sizes = [16, 128], strides = [1, 1]} : vector<16x512xf32> to vector<16x128xf32>
    %802 = arith.negf %801 : vector<16x128xf32>
    %803 = math.exp %802 : vector<16x128xf32>
    %cst_198 = arith.constant 1.000000e+00 : f32
    %804 = vector.broadcast %cst_198 : f32 to vector<16x128xf32>
    %805 = arith.addf %804, %803 : vector<16x128xf32>
    %806 = arith.divf %804, %805 : vector<16x128xf32>
    %807 = vector.extract_strided_slice %794 {offsets = [0, 256], sizes = [16, 128], strides = [1, 1]} : vector<16x512xf32> to vector<16x128xf32>
    %808 = math.tanh %807 : vector<16x128xf32>
    %809 = vector.extract_strided_slice %794 {offsets = [0, 384], sizes = [16, 128], strides = [1, 1]} : vector<16x512xf32> to vector<16x128xf32>
    %810 = arith.negf %809 : vector<16x128xf32>
    %811 = math.exp %810 : vector<16x128xf32>
    %cst_199 = arith.constant 1.000000e+00 : f32
    %812 = vector.broadcast %cst_199 : f32 to vector<16x128xf32>
    %813 = arith.addf %812, %811 : vector<16x128xf32>
    %814 = arith.divf %812, %813 : vector<16x128xf32>
    %815 = arith.mulf %806, %787 : vector<16x128xf32>
    %816 = arith.mulf %800, %808 : vector<16x128xf32>
    %817 = arith.addf %815, %816 : vector<16x128xf32>
    %818 = math.tanh %817 : vector<16x128xf32>
    %819 = arith.mulf %814, %818 : vector<16x128xf32>
    %c432 = arith.constant 432 : index
    %c0_200 = arith.constant 0 : index
    %820 = vector.load %arg8[%c432, %c0_200] : memref<448x512xf32, #tpu.memory_space<vmem>>, vector<16x512xf32>
    %821 = arith.truncf %819 : vector<16x128xf32> to vector<16x128xbf16>
    %c0_201 = arith.constant 0 : index
    %c0_202 = arith.constant 0 : index
    %822 = vector.load %arg3[%c0_201, %c0_202] : memref<128x512xbf16, #tpu.memory_space<vmem>>, vector<128x512xbf16>
    %cst_203 = arith.constant dense<0.000000e+00> : vector<16x512xf32>
    %823 = tpu.matmul %821, %822, %cst_203 {dimension_numbers = #tpu.dot_dimension_numbers<[1], [0], [0], [1], [0, 0, 1, 1], [], []>} : vector<16x128xbf16>, vector<128x512xbf16>, vector<16x512xf32> -> vector<16x512xf32>
    %824 = arith.addf %820, %823 : vector<16x512xf32>
    %825 = vector.extract_strided_slice %824 {offsets = [0, 0], sizes = [16, 128], strides = [1, 1]} : vector<16x512xf32> to vector<16x128xf32>
    %826 = arith.negf %825 : vector<16x128xf32>
    %827 = math.exp %826 : vector<16x128xf32>
    %cst_204 = arith.constant 1.000000e+00 : f32
    %828 = vector.broadcast %cst_204 : f32 to vector<16x128xf32>
    %829 = arith.addf %828, %827 : vector<16x128xf32>
    %830 = arith.divf %828, %829 : vector<16x128xf32>
    %831 = vector.extract_strided_slice %824 {offsets = [0, 128], sizes = [16, 128], strides = [1, 1]} : vector<16x512xf32> to vector<16x128xf32>
    %832 = arith.negf %831 : vector<16x128xf32>
    %833 = math.exp %832 : vector<16x128xf32>
    %cst_205 = arith.constant 1.000000e+00 : f32
    %834 = vector.broadcast %cst_205 : f32 to vector<16x128xf32>
    %835 = arith.addf %834, %833 : vector<16x128xf32>
    %836 = arith.divf %834, %835 : vector<16x128xf32>
    %837 = vector.extract_strided_slice %824 {offsets = [0, 256], sizes = [16, 128], strides = [1, 1]} : vector<16x512xf32> to vector<16x128xf32>
    %838 = math.tanh %837 : vector<16x128xf32>
    %839 = vector.extract_strided_slice %824 {offsets = [0, 384], sizes = [16, 128], strides = [1, 1]} : vector<16x512xf32> to vector<16x128xf32>
    %840 = arith.negf %839 : vector<16x128xf32>
    %841 = math.exp %840 : vector<16x128xf32>
    %cst_206 = arith.constant 1.000000e+00 : f32
    %842 = vector.broadcast %cst_206 : f32 to vector<16x128xf32>
    %843 = arith.addf %842, %841 : vector<16x128xf32>
    %844 = arith.divf %842, %843 : vector<16x128xf32>
    %845 = arith.mulf %836, %817 : vector<16x128xf32>
    %846 = arith.mulf %830, %838 : vector<16x128xf32>
    %847 = arith.addf %845, %846 : vector<16x128xf32>
    %848 = math.tanh %847 : vector<16x128xf32>
    %849 = arith.mulf %844, %848 : vector<16x128xf32>
    %850 = arith.truncf %849 : vector<16x128xf32> to vector<16x128xbf16>
    %c0_207 = arith.constant 0 : index
    %c0_208 = arith.constant 0 : index
    %851 = vector.load %arg5[%c0_207, %c0_208] : memref<128x128xbf16, #tpu.memory_space<vmem>>, vector<128x128xbf16>
    %cst_209 = arith.constant dense<0.000000e+00> : vector<16x128xf32>
    %852 = tpu.matmul %850, %851, %cst_209 {dimension_numbers = #tpu.dot_dimension_numbers<[1], [0], [0], [1], [0, 0, 1, 1], [], []>} : vector<16x128xbf16>, vector<128x128xbf16>, vector<16x128xf32> -> vector<16x128xf32>
    %c0_210 = arith.constant 0 : index
    %c0_211 = arith.constant 0 : index
    %853 = vector.load %arg6[%c0_210, %c0_211] : memref<1x128xf32, #tpu.memory_space<vmem>>, vector<1x128xf32>
    %854 = vector.broadcast %853 : vector<1x128xf32> to vector<16x128xf32>
    %855 = arith.addf %852, %854 : vector<16x128xf32>
    %c0_212 = arith.constant 0 : index
    %c0_213 = arith.constant 0 : index
    %856 = vector.load %arg7[%c0_212, %c0_213] : memref<16x128xf32, #tpu.memory_space<vmem>>, vector<16x128xf32>
    tpu.vector_store %arg7[%c0_212, %c0_213], %855 {strides = array<i32>} : memref<16x128xf32, #tpu.memory_space<vmem>>, vector<16x128xf32>,
    return
  }
  func.func @transform_0(%arg0: i32) -> (i32, i32, i32) {
    %c0_i32 = arith.constant 0 : i32
    %c0_i32_0 = arith.constant 0 : i32
    %c0_i32_1 = arith.constant 0 : i32
    return %c0_i32, %arg0, %c0_i32_0 : i32, i32, i32
  }
  func.func @transform_1(%arg0: i32) -> (i32, i32) {
    %c0_i32 = arith.constant 0 : i32
    %c0_i32_0 = arith.constant 0 : i32
    %c0_i32_1 = arith.constant 0 : i32
    return %c0_i32, %c0_i32_0 : i32, i32
  }
  func.func @transform_2(%arg0: i32) -> (i32, i32) {
    %c0_i32 = arith.constant 0 : i32
    %c0_i32_0 = arith.constant 0 : i32
    %c0_i32_1 = arith.constant 0 : i32
    return %c0_i32, %c0_i32_0 : i32, i32
  }
  func.func @transform_3(%arg0: i32) -> (i32, i32) {
    %c0_i32 = arith.constant 0 : i32
    %c0_i32_0 = arith.constant 0 : i32
    %c0_i32_1 = arith.constant 0 : i32
    return %c0_i32, %c0_i32_0 : i32, i32
  }
  func.func @transform_4(%arg0: i32) -> (i32, i32) {
    %c0_i32 = arith.constant 0 : i32
    %c0_i32_0 = arith.constant 0 : i32
    %c0_i32_1 = arith.constant 0 : i32
    return %c0_i32, %c0_i32_0 : i32, i32
  }
  func.func @transform_5(%arg0: i32) -> (i32, i32) {
    %c0_i32 = arith.constant 0 : i32
    %c0_i32_0 = arith.constant 0 : i32
    %c0_i32_1 = arith.constant 0 : i32
    return %c0_i32, %c0_i32_0 : i32, i32
  }
  func.func @transform_6(%arg0: i32) -> (i32, i32) {
    %c0_i32 = arith.constant 0 : i32
    %c0_i32_0 = arith.constant 0 : i32
    return %arg0, %c0_i32 : i32, i32
  }
}

</mosaic_0001>

<llo_original>
// kernel: tpu_custom_call.1
$region0: #{tpu_custom_call.1}
  #allocation0 [shape = 'u32[]', space=smem, size = 0x4, offset = 0x4, fixed_abs, tag = 'smem constant byte address 0x4 - core index']
  #allocation1 [shape = 'u32[72,128]{1,0:T(1,128)}', space=vmem, size = 0x9000, scoped, tag = 'internal scratch']
  #allocation2 [shape = 'f32[448,512]{1,0:T(8,128)}', space=vmem, size = 0xe0000, scoped, tag = 'scratch operand']
  %s0 = inlined_call_operand.hbm [shape: bf16[28,16,128], index: 0, kind: input, shape index: {}]
  %s1 = inlined_call_operand.hbm [shape: bf16[128,512], index: 1, kind: input, shape index: {}]
  %s2 = inlined_call_operand.hbm [shape: bf16[128,512], index: 2, kind: input, shape index: {}]
  %s3 = inlined_call_operand.hbm [shape: f32[1,512], index: 3, kind: input, shape index: {}]
  %s4 = inlined_call_operand.hbm [shape: bf16[128,128], index: 4, kind: input, shape index: {}]
  %s5 = inlined_call_operand.vmem [shape: f32[1,128], index: 5, kind: input, shape index: {}]
  %s6 = inlined_call_operand.hbm [shape: f32[16,128], index: 6, kind: output, shape index: {}]
  %s7 = sld [smem:[#allocation0]]
  $region54: #{tpu_custom_call.1} parent=0
    _
  %s9 = ssub.s32 1, %s7
  %s10 = scalar_select 0, %s9, %s7
  $region1: #{tpu_custom_call.1} parent=0
    #allocation3 [shape = 'u8[114688]{0}', space=vmem, size = 0x1c000, scoped, tag = 'input window, operand 0, single buffered']
    #allocation4 [shape = 's32[1]{0}', space=sflag, size = 0x4, scoped, tag = 'scoped memory for tpu_custom_call.1']
    #allocation5 [shape = 's32[1]{0}', space=sflag, size = 0x4, scoped, tag = 'scoped memory for tpu_custom_call.1']
    #allocation6 [shape = 'u8[131072]{0}', space=vmem, size = 0x20000, scoped, tag = 'input window, operand 1, single buffered']
    #allocation7 [shape = 's32[1]{0}', space=sflag, size = 0x4, scoped, tag = 'scoped memory for tpu_custom_call.1']
    #allocation8 [shape = 'u8[131072]{0}', space=vmem, size = 0x20000, scoped, tag = 'input window, operand 2, single buffered']
    #allocation9 [shape = 'u8[2048]{0}', space=vmem, size = 0x800, scoped, tag = 'input window, operand 3, single buffered']
    #allocation10 [shape = 's32[1]{0}', space=sflag, size = 0x4, scoped, tag = 'scoped memory for tpu_custom_call.1']
    #allocation11 [shape = 'u8[32768]{0}', space=vmem, size = 0x8000, scoped, tag = 'input window, operand 4, single buffered']
    #allocation12 [shape = 'u8[8192]{0}', space=vmem, size = 0x2000, scoped, tag = 'output window, operand 0, single buffered']
    %11 = vsyncpa [#allocation4], 0
    %12 = vsyncpa [#allocation7], 0
    %13 = vsyncpa [#allocation10], 0
    %14 = vsyncpa [#allocation5], 0
    // Predicated region
    $region2: #{tpu_custom_call.1} parent=1 // pred_check
      _
    $region3: #{tpu_custom_call.1} parent=1 // pred_check_branch
      %16 = sbr.rel (0) target = $region5
    $region4: #{tpu_custom_call.1} parent=1 // pred_region
      %18 = vsyncadd [#allocation4], 0
      %s19 = sshll.u32 %s0, 4
      %s20 = int_to_ptr.hbm [resolvable:$true] %s19
      %s21 = sshll.u32 [#allocation3], 4
      %s22 = int_to_ptr.vmem [resolvable:$true] %s21
      %27 = dma.hbm_to_vmem [thread:$0]  %s20, 3584, %s22, [#allocation4], 64, 64, 4
    $region5: #{tpu_custom_call.1} parent=1 // pred_fallthru
      _
    // Predicated region
    $region6: #{tpu_custom_call.1} parent=1 // pred_check
      _
    $region7: #{tpu_custom_call.1} parent=1 // pred_check_branch
      %29 = sbr.rel (0) target = $region9
    $region8: #{tpu_custom_call.1} parent=1 // pred_region
      %31 = vsyncadd [#allocation7], 0
      %s32 = sshll.u32 %s1, 4
      %s33 = int_to_ptr.hbm [resolvable:$true] %s32
      %s34 = sshll.u32 [#allocation6], 4
      %s35 = int_to_ptr.vmem [resolvable:$true] %s34
      %40 = dma.hbm_to_vmem [thread:$0]  %s33, 4096, %s35, [#allocation7], 256, 256, 16
    $region9: #{tpu_custom_call.1} parent=1 // pred_fallthru
      _
    // Predicated region
    $region10: #{tpu_custom_call.1} parent=1 // pred_check
      _
    $region11: #{tpu_custom_call.1} parent=1 // pred_check_branch
      %42 = sbr.rel (0) target = $region13
    $region12: #{tpu_custom_call.1} parent=1 // pred_region
      %44 = vsyncadd [#allocation7], 0
      %s45 = sshll.u32 %s2, 4
      %s46 = int_to_ptr.hbm [resolvable:$true] %s45
      %s47 = sshll.u32 [#allocation8], 4
      %s48 = int_to_ptr.vmem [resolvable:$true] %s47
      %53 = dma.hbm_to_vmem [thread:$0]  %s46, 4096, %s48, [#allocation7], 256, 256, 16
    $region13: #{tpu_custom_call.1} parent=1 // pred_fallthru
      _
    // Predicated region
    $region14: #{tpu_custom_call.1} parent=1 // pred_check
      _
    $region15: #{tpu_custom_call.1} parent=1 // pred_check_branch
      %55 = sbr.rel (0) target = $region17
    $region16: #{tpu_custom_call.1} parent=1 // pred_region
      %57 = vsyncadd [#allocation10], 0
      %s59 = sshll.u32 %s3, 4
      %s60 = int_to_ptr.hbm [resolvable:$true] %s59
      %s61 = sshll.u32 [#allocation9], 4
      %s62 = int_to_ptr.vmem [resolvable:$true] %s61
      %64 = dma.hbm_to_vmem [thread:$0]  %s60, 64, %s62, [#allocation10]
    $region17: #{tpu_custom_call.1} parent=1 // pred_fallthru
      _
    // Predicated region
    $region18: #{tpu_custom_call.1} parent=1 // pred_check
      _
    $region19: #{tpu_custom_call.1} parent=1 // pred_check_branch
      %66 = sbr.rel (0) target = $region21
    $region20: #{tpu_custom_call.1} parent=1 // pred_region
      %68 = vsyncadd [#allocation10], 0
      %s69 = sshll.u32 %s4, 4
      %s70 = int_to_ptr.hbm [resolvable:$true] %s69
      %s71 = sshll.u32 [#allocation11], 4
      %s72 = int_to_ptr.vmem [resolvable:$true] %s71
      %77 = dma.hbm_to_vmem [thread:$0]  %s70, 1024, %s72, [#allocation10], 64, 64, 4
    $region21: #{tpu_custom_call.1} parent=1 // pred_fallthru
      _
    // Predicated region
    $region22: #{tpu_custom_call.1} parent=1 // pred_check
      _
    $region23: #{tpu_custom_call.1} parent=1 // pred_check_branch
      %79 = sbr.rel (0) target = $region25
    $region24: #{tpu_custom_call.1} parent=1 // pred_region
      _
    $region25: #{tpu_custom_call.1} parent=1 // pred_fallthru
      _
    // Predicated region
    $region26: #{tpu_custom_call.1} parent=1 // pred_check
      _
    $region27: #{tpu_custom_call.1} parent=1 // pred_check_branch
      %81 = sbr.rel (0) target = $region29
    $region28: #{tpu_custom_call.1} parent=1 // pred_region
      %83 = dma.done [#allocation4], 3584
    $region29: #{tpu_custom_call.1} parent=1 // pred_fallthru
      _
    // Predicated region
    $region30: #{tpu_custom_call.1} parent=1 // pred_check
      _
    $region31: #{tpu_custom_call.1} parent=1 // pred_check_branch
      %85 = sbr.rel (0) target = $region33
    $region32: #{tpu_custom_call.1} parent=1 // pred_region
      %87 = dma.done [#allocation7], 4096
    $region33: #{tpu_custom_call.1} parent=1 // pred_fallthru
      _
    // Predicated region
    $region34: #{tpu_custom_call.1} parent=1 // pred_check
      _
    $region35: #{tpu_custom_call.1} parent=1 // pred_check_branch
      %89 = sbr.rel (0) target = $region37
    $region36: #{tpu_custom_call.1} parent=1 // pred_region
      %91 = dma.done [#allocation7], 4096
    $region37: #{tpu_custom_call.1} parent=1 // pred_fallthru
      _
    // Predicated region
    $region38: #{tpu_custom_call.1} parent=1 // pred_check
      _
    $region39: #{tpu_custom_call.1} parent=1 // pred_check_branch
      %93 = sbr.rel (0) target = $region41
    $region40: #{tpu_custom_call.1} parent=1 // pred_region
      %95 = dma.done [#allocation10], 64
    $region41: #{tpu_custom_call.1} parent=1 // pred_fallthru
      _
    // Predicated region
    $region42: #{tpu_custom_call.1} parent=1 // pred_check
      _
    $region43: #{tpu_custom_call.1} parent=1 // pred_check_branch
      %97 = sbr.rel (0) target = $region45
    $region44: #{tpu_custom_call.1} parent=1 // pred_region
      %99 = dma.done [#allocation10], 1024
    $region45: #{tpu_custom_call.1} parent=1 // pred_fallthru
      _
    %v101 = vld [vmem:[#allocation3] sm:$0xf]
    %v102 = vld [vmem:[#allocation3 + $0x4] sm:$0xf]
    %v103 = vld [vmem:[#allocation3 + $0x8] sm:$0xf]
    %v104 = vld [vmem:[#allocation3 + $0xc] sm:$0xf]
    %v105 = vld [vmem:[#allocation3 + $0x10] sm:$0xf]
    %v106 = vld [vmem:[#allocation3 + $0x14] sm:$0xf]
    %v107 = vld [vmem:[#allocation3 + $0x18] sm:$0xf]
    %v108 = vld [vmem:[#allocation3 + $0x1c] sm:$0xf]
    %v109 = vld [vmem:[#allocation3 + $0x20] sm:$0xf]
    %v110 = vld [vmem:[#allocation3 + $0x24] sm:$0xf]
    %v111 = vld [vmem:[#allocation3 + $0x28] sm:$0xf]
    %v112 = vld [vmem:[#allocation3 + $0x2c] sm:$0xf]
    %v113 = vld [vmem:[#allocation3 + $0x30] sm:$0xf]
    %v114 = vld [vmem:[#allocation3 + $0x34] sm:$0xf]
    %v115 = vld [vmem:[#allocation3 + $0x38] sm:$0xf]
    %v116 = vld [vmem:[#allocation3 + $0x3c] sm:$0xf]
    %v117 = vld [vmem:[#allocation3 + $0x40] sm:$0xf]
    %v118 = vld [vmem:[#allocation3 + $0x44] sm:$0xf]
    %v119 = vld [vmem:[#allocation3 + $0x48] sm:$0xf]
    %v120 = vld [vmem:[#allocation3 + $0x4c] sm:$0xf]
    %v121 = vld [vmem:[#allocation3 + $0x50] sm:$0xf]
    %v122 = vld [vmem:[#allocation3 + $0x54] sm:$0xf]
    %v123 = vld [vmem:[#allocation3 + $0x58] sm:$0xf]
    %v124 = vld [vmem:[#allocation3 + $0x5c] sm:$0xf]
    %v125 = vld [vmem:[#allocation3 + $0x60] sm:$0xf]
    %v126 = vld [vmem:[#allocation3 + $0x64] sm:$0xf]
    %v127 = vld [vmem:[#allocation3 + $0x68] sm:$0xf]
    %v128 = vld [vmem:[#allocation3 + $0x6c] sm:$0xf]
    %v129 = vld [vmem:[#allocation3 + $0x70] sm:$0xf]
    %v130 = vld [vmem:[#allocation3 + $0x74] sm:$0xf]
    %v131 = vld [vmem:[#allocation3 + $0x78] sm:$0xf]
    %v132 = vld [vmem:[#allocation3 + $0x7c] sm:$0xf]
    %v133 = vld [vmem:[#allocation3 + $0x80] sm:$0xf]
    %v134 = vld [vmem:[#allocation3 + $0x84] sm:$0xf]
    %v135 = vld [vmem:[#allocation3 + $0x88] sm:$0xf]
    %v136 = vld [vmem:[#allocation3 + $0x8c] sm:$0xf]
    %v137 = vld [vmem:[#allocation3 + $0x90] sm:$0xf]
    %v138 = vld [vmem:[#allocation3 + $0x94] sm:$0xf]
    %v139 = vld [vmem:[#allocation3 + $0x98] sm:$0xf]
    %v140 = vld [vmem:[#allocation3 + $0x9c] sm:$0xf]
    %v141 = vld [vmem:[#allocation3 + $0xa0] sm:$0xf]
    %v142 = vld [vmem:[#allocation3 + $0xa4] sm:$0xf]
    %v143 = vld [vmem:[#allocation3 + $0xa8] sm:$0xf]
    %v144 = vld [vmem:[#allocation3 + $0xac] sm:$0xf]
    %v145 = vld [vmem:[#allocation3 + $0xb0] sm:$0xf]
    %v146 = vld [vmem:[#allocation3 + $0xb4] sm:$0xf]
    %v147 = vld [vmem:[#allocation3 + $0xb8] sm:$0xf]
    %v148 = vld [vmem:[#allocation3 + $0xbc] sm:$0xf]
    %v149 = vld [vmem:[#allocation3 + $0xc0] sm:$0xf]
    %v150 = vld [vmem:[#allocation3 + $0xc4] sm:$0xf]
    %v151 = vld [vmem:[#allocation3 + $0xc8] sm:$0xf]
    %v152 = vld [vmem:[#allocation3 + $0xcc] sm:$0xf]
    %v153 = vld [vmem:[#allocation3 + $0xd0] sm:$0xf]
    %v154 = vld [vmem:[#allocation3 + $0xd4] sm:$0xf]
    %v155 = vld [vmem:[#allocation3 + $0xd8] sm:$0xf]
    %v156 = vld [vmem:[#allocation3 + $0xdc] sm:$0xf]
    %v157 = vld [vmem:[#allocation6] sm:$0xff]
    %v158 = vld [vmem:[#allocation6 + $0x8] sm:$0xff]
    %v159 = vld [vmem:[#allocation6 + $0x10] sm:$0xff]
    %v160 = vld [vmem:[#allocation6 + $0x18] sm:$0xff]
    %v161 = vld [vmem:[#allocation6 + $0x20] sm:$0xff]
    %v162 = vld [vmem:[#allocation6 + $0x28] sm:$0xff]
    %v163 = vld [vmem:[#allocation6 + $0x30] sm:$0xff]
    %v164 = vld [vmem:[#allocation6 + $0x38] sm:$0xff]
    %v165 = vld [vmem:[#allocation6 + $0x40] sm:$0xff]
    %v166 = vld [vmem:[#allocation6 + $0x48] sm:$0xff]
    %v167 = vld [vmem:[#allocation6 + $0x50] sm:$0xff]
    %v168 = vld [vmem:[#allocation6 + $0x58] sm:$0xff]
    %v169 = vld [vmem:[#allocation6 + $0x60] sm:$0xff]
    %v170 = vld [vmem:[#allocation6 + $0x68] sm:$0xff]
    %v171 = vld [vmem:[#allocation6 + $0x70] sm:$0xff]
    %v172 = vld [vmem:[#allocation6 + $0x78] sm:$0xff]
    %v173 = vld [vmem:[#allocation6 + $0x80] sm:$0xff]
    %v174 = vld [vmem:[#allocation6 + $0x88] sm:$0xff]
    %v175 = vld [vmem:[#allocation6 + $0x90] sm:$0xff]
    %v176 = vld [vmem:[#allocation6 + $0x98] sm:$0xff]
    %v177 = vld [vmem:[#allocation6 + $0xa0] sm:$0xff]
    %v178 = vld [vmem:[#allocation6 + $0xa8] sm:$0xff]
    %v179 = vld [vmem:[#allocation6 + $0xb0] sm:$0xff]
    %v180 = vld [vmem:[#allocation6 + $0xb8] sm:$0xff]
    %v181 = vld [vmem:[#allocation6 + $0xc0] sm:$0xff]
    %v182 = vld [vmem:[#allocation6 + $0xc8] sm:$0xff]
    %v183 = vld [vmem:[#allocation6 + $0xd0] sm:$0xff]
    %v184 = vld [vmem:[#allocation6 + $0xd8] sm:$0xff]
    %v185 = vld [vmem:[#allocation6 + $0xe0] sm:$0xff]
    %v186 = vld [vmem:[#allocation6 + $0xe8] sm:$0xff]
    %v187 = vld [vmem:[#allocation6 + $0xf0] sm:$0xff]
    %v188 = vld [vmem:[#allocation6 + $0xf8] sm:$0xff]
    %v189 = vld [vmem:[#allocation9] sm:$0xf]
    %v191 = vperm.slane %v189, 0
    %v192 = vperm.slane %v189, 1
    %v193 = vperm.slane %v189, 2
    %v194 = vperm.slane %v189, 3
    %v255 = vunpack.c.l.b16 %v101
    %v256 = vunpack.c.l.b16 %v102
    %v257 = vunpack.c.l.b16 %v103
    %v258 = vunpack.c.l.b16 %v104
    %v259 = vunpack.c.l.b16 %v105
    %v260 = vunpack.c.l.b16 %v106
    %v261 = vunpack.c.l.b16 %v107
    %v262 = vunpack.c.l.b16 %v108
    %v263 = vunpack.c.l.b16 %v109
    %v264 = vunpack.c.l.b16 %v110
    %v265 = vunpack.c.l.b16 %v111
    %v266 = vunpack.c.l.b16 %v112
    %v267 = vunpack.c.l.b16 %v113
    %v268 = vunpack.c.l.b16 %v114
    %v269 = vunpack.c.l.b16 %v115
    %v270 = vunpack.c.l.b16 %v116
    %v271 = vunpack.c.l.b16 %v117
    %v272 = vunpack.c.l.b16 %v118
    %v273 = vunpack.c.l.b16 %v119
    %v274 = vunpack.c.l.b16 %v120
    %v275 = vunpack.c.l.b16 %v121
    %v276 = vunpack.c.l.b16 %v122
    %v277 = vunpack.c.l.b16 %v123
    %v278 = vunpack.c.l.b16 %v124
    %v279 = vunpack.c.l.b16 %v125
    %v280 = vunpack.c.l.b16 %v126
    %v281 = vunpack.c.l.b16 %v127
    %v282 = vunpack.c.l.b16 %v128
    %v283 = vunpack.c.l.b16 %v129
    %v284 = vunpack.c.l.b16 %v130
    %v285 = vunpack.c.l.b16 %v131
    %v286 = vunpack.c.l.b16 %v132
    %v287 = vunpack.c.l.b16 %v133
    %v288 = vunpack.c.l.b16 %v134
    %v289 = vunpack.c.l.b16 %v135
    %v290 = vunpack.c.l.b16 %v136
    %v291 = vunpack.c.l.b16 %v137
    %v292 = vunpack.c.l.b16 %v138
    %v293 = vunpack.c.l.b16 %v139
    %v294 = vunpack.c.l.b16 %v140
    %v295 = vunpack.c.l.b16 %v141
    %v296 = vunpack.c.l.b16 %v142
    %v297 = vunpack.c.l.b16 %v143
    %v298 = vunpack.c.l.b16 %v144
    %v299 = vunpack.c.l.b16 %v145
    %v300 = vunpack.c.l.b16 %v146
    %v301 = vunpack.c.l.b16 %v147
    %v302 = vunpack.c.l.b16 %v148
    %v303 = vunpack.c.l.b16 %v149
    %v304 = vunpack.c.l.b16 %v150
    %v305 = vunpack.c.l.b16 %v151
    %v306 = vunpack.c.l.b16 %v152
    %v307 = vunpack.c.l.b16 %v153
    %v308 = vunpack.c.l.b16 %v154
    %v309 = vunpack.c.l.b16 %v155
    %v310 = vunpack.c.l.b16 %v156
    %v311 = vpack.c.b16 %v256, %v255
    %v312 = vpack.c.b16 %v258, %v257
    %v313 = vpack.c.b16 %v260, %v259
    %v314 = vpack.c.b16 %v262, %v261
    %v315 = vpack.c.b16 %v264, %v263
    %v316 = vpack.c.b16 %v266, %v265
    %v317 = vpack.c.b16 %v268, %v267
    %v318 = vpack.c.b16 %v270, %v269
    %v319 = vpack.c.b16 %v272, %v271
    %v320 = vpack.c.b16 %v274, %v273
    %v321 = vpack.c.b16 %v276, %v275
    %v322 = vpack.c.b16 %v278, %v277
    %v323 = vpack.c.b16 %v280, %v279
    %v324 = vpack.c.b16 %v282, %v281
    %v325 = vpack.c.b16 %v284, %v283
    %v326 = vpack.c.b16 %v286, %v285
    %v327 = vpack.c.b16 %v288, %v287
    %v328 = vpack.c.b16 %v290, %v289
    %v329 = vpack.c.b16 %v292, %v291
    %v330 = vpack.c.b16 %v294, %v293
    %v331 = vpack.c.b16 %v296, %v295
    %v332 = vpack.c.b16 %v298, %v297
    %v333 = vpack.c.b16 %v300, %v299
    %v334 = vpack.c.b16 %v302, %v301
    %v335 = vpack.c.b16 %v304, %v303
    %v336 = vpack.c.b16 %v306, %v305
    %v337 = vpack.c.b16 %v308, %v307
    %v338 = vpack.c.b16 %v310, %v309
    %v399 = vunpack.c.l.b16 %v157
    %v400 = vunpack.c.h.b16 %v157
    %v401 = vunpack.c.l.b16 %v158
    %v402 = vunpack.c.h.b16 %v158
    %v403 = vunpack.c.l.b16 %v159
    %v404 = vunpack.c.h.b16 %v159
    %v405 = vunpack.c.l.b16 %v160
    %v406 = vunpack.c.h.b16 %v160
    %v407 = vunpack.c.l.b16 %v161
    %v408 = vunpack.c.h.b16 %v161
    %v409 = vunpack.c.l.b16 %v162
    %v410 = vunpack.c.h.b16 %v162
    %v411 = vunpack.c.l.b16 %v163
    %v412 = vunpack.c.h.b16 %v163
    %v413 = vunpack.c.l.b16 %v164
    %v414 = vunpack.c.h.b16 %v164
    %v415 = vunpack.c.l.b16 %v165
    %v416 = vunpack.c.h.b16 %v165
    %v417 = vunpack.c.l.b16 %v166
    %v418 = vunpack.c.h.b16 %v166
    %v419 = vunpack.c.l.b16 %v167
    %v420 = vunpack.c.h.b16 %v167
    %v421 = vunpack.c.l.b16 %v168
    %v422 = vunpack.c.h.b16 %v168
    %v423 = vunpack.c.l.b16 %v169
    %v424 = vunpack.c.h.b16 %v169
    %v425 = vunpack.c.l.b16 %v170
    %v426 = vunpack.c.h.b16 %v170
    %v427 = vunpack.c.l.b16 %v171
    %v428 = vunpack.c.h.b16 %v171
    %v429 = vunpack.c.l.b16 %v172
    %v430 = vunpack.c.h.b16 %v172
    %v431 = vunpack.c.l.b16 %v173
    %v432 = vunpack.c.h.b16 %v173
    %v433 = vunpack.c.l.b16 %v174
    %v434 = vunpack.c.h.b16 %v174
    %v435 = vunpack.c.l.b16 %v175
    %v436 = vunpack.c.h.b16 %v175
    %v437 = vunpack.c.l.b16 %v176
    %v438 = vunpack.c.h.b16 %v176
    %v439 = vunpack.c.l.b16 %v177
    %v440 = vunpack.c.h.b16 %v177
    %v441 = vunpack.c.l.b16 %v178
    %v442 = vunpack.c.h.b16 %v178
    %v443 = vunpack.c.l.b16 %v179
    %v444 = vunpack.c.h.b16 %v179
    %v445 = vunpack.c.l.b16 %v180
    %v446 = vunpack.c.h.b16 %v180
    %v447 = vunpack.c.l.b16 %v181
    %v448 = vunpack.c.h.b16 %v181
    %v449 = vunpack.c.l.b16 %v182
    %v450 = vunpack.c.h.b16 %v182
    %v451 = vunpack.c.l.b16 %v183
    %v452 = vunpack.c.h.b16 %v183
    %v453 = vunpack.c.l.b16 %v184
    %v454 = vunpack.c.h.b16 %v184
    %v455 = vunpack.c.l.b16 %v185
    %v456 = vunpack.c.h.b16 %v185
    %v457 = vunpack.c.l.b16 %v186
    %v458 = vunpack.c.h.b16 %v186
    %v459 = vunpack.c.l.b16 %v187
    %v460 = vunpack.c.h.b16 %v187
    %v461 = vunpack.c.l.b16 %v188
    %v462 = vunpack.c.h.b16 %v188
    %v463 = vpack.c.b16 %v403, %v399
    %v464 = vpack.c.b16 %v404, %v400
    %v465 = vpack.c.b16 %v405, %v401
    %v466 = vpack.c.b16 %v406, %v402
    %v467 = vpack.c.b16 %v411, %v407
    %v468 = vpack.c.b16 %v412, %v408
    %v469 = vpack.c.b16 %v413, %v409
    %v470 = vpack.c.b16 %v414, %v410
    %v471 = vpack.c.b16 %v419, %v415
    %v472 = vpack.c.b16 %v420, %v416
    %v473 = vpack.c.b16 %v421, %v417
    %v474 = vpack.c.b16 %v422, %v418
    %v475 = vpack.c.b16 %v427, %v423
    %v476 = vpack.c.b16 %v428, %v424
    %v477 = vpack.c.b16 %v429, %v425
    %v478 = vpack.c.b16 %v430, %v426
    %v479 = vpack.c.b16 %v435, %v431
    %v480 = vpack.c.b16 %v436, %v432
    %v481 = vpack.c.b16 %v437, %v433
    %v482 = vpack.c.b16 %v438, %v434
    %v483 = vpack.c.b16 %v443, %v439
    %v484 = vpack.c.b16 %v444, %v440
    %v485 = vpack.c.b16 %v445, %v441
    %v486 = vpack.c.b16 %v446, %v442
    %v487 = vpack.c.b16 %v451, %v447
    %v488 = vpack.c.b16 %v452, %v448
    %v489 = vpack.c.b16 %v453, %v449
    %v490 = vpack.c.b16 %v454, %v450
    %v491 = vpack.c.b16 %v459, %v455
    %v492 = vpack.c.b16 %v460, %v456
    %v493 = vpack.c.b16 %v461, %v457
    %v494 = vpack.c.b16 %v462, %v458
    %527 = vmatpush.bf16.msra.mxu0 %v491
    %528 = vmatpush.bf16.msra.mxu0 %v487
    %529 = vmatpush.bf16.msra.mxu0 %v483
    %530 = vmatpush.bf16.msra.mxu0 %v479
    %531 = vmatpush.bf16.msra.mxu0 %v475
    %532 = vmatpush.bf16.msra.mxu0 %v471
    %533 = vmatpush.bf16.msra.mxu0 %v467
    %534 = vmatpush.bf16.msra.mxu0 %v463
    %535 = vmatmul.bf16.gmra.mxu0 %v311
    %v536 = vpop.f32.mrf.mxu0
    %v537 = vadd.f32 %v191, %v536
    %v538 = vpop.f32.mrf.mxu0
    %v539 = vadd.f32 %v191, %v538
    %540 = vmatmul.bf16.gmra.mxu0 %v312
    %v541 = vpop.f32.mrf.mxu0
    %v542 = vadd.f32 %v191, %v541
    %v543 = vpop.f32.mrf.mxu0
    %v544 = vadd.f32 %v191, %v543
    %545 = vmatmul.bf16.gmra.mxu0 %v313
    %v546 = vpop.f32.mrf.mxu0
    %v547 = vadd.f32 %v191, %v546
    %v548 = vpop.f32.mrf.mxu0
    %v549 = vadd.f32 %v191, %v548
    %550 = vmatmul.bf16.gmra.mxu0 %v314
    %v551 = vpop.f32.mrf.mxu0
    %v552 = vadd.f32 %v191, %v551
    %v553 = vpop.f32.mrf.mxu0
    %v554 = vadd.f32 %v191, %v553
    %555 = vmatmul.bf16.gmra.mxu0 %v315
    %v556 = vpop.f32.mrf.mxu0
    %v557 = vadd.f32 %v191, %v556
    %v558 = vpop.f32.mrf.mxu0
    %v559 = vadd.f32 %v191, %v558
    %560 = vmatmul.bf16.gmra.mxu0 %v316
    %v561 = vpop.f32.mrf.mxu0
    %v562 = vadd.f32 %v191, %v561
    %v563 = vpop.f32.mrf.mxu0
    %v564 = vadd.f32 %v191, %v563
    %565 = vmatmul.bf16.gmra.mxu0 %v317
    %v566 = vpop.f32.mrf.mxu0
    %v567 = vadd.f32 %v191, %v566
    %v568 = vpop.f32.mrf.mxu0
    %v569 = vadd.f32 %v191, %v568
    %570 = vmatmul.bf16.gmra.mxu0 %v318
    %v571 = vpop.f32.mrf.mxu0
    %v572 = vadd.f32 %v191, %v571
    %v573 = vpop.f32.mrf.mxu0
    %v574 = vadd.f32 %v191, %v573
    %575 = vmatmul.bf16.gmra.mxu0 %v319
    %v576 = vpop.f32.mrf.mxu0
    %v577 = vadd.f32 %v191, %v576
    %v578 = vpop.f32.mrf.mxu0
    %v579 = vadd.f32 %v191, %v578
    %580 = vmatmul.bf16.gmra.mxu0 %v320
    %v581 = vpop.f32.mrf.mxu0
    %v582 = vadd.f32 %v191, %v581
    %v583 = vpop.f32.mrf.mxu0
    %v584 = vadd.f32 %v191, %v583
    %585 = vmatmul.bf16.gmra.mxu0 %v321
    %v586 = vpop.f32.mrf.mxu0
    %v587 = vadd.f32 %v191, %v586
    %v588 = vpop.f32.mrf.mxu0
    %v589 = vadd.f32 %v191, %v588
    %590 = vmatmul.bf16.gmra.mxu0 %v322
    %v591 = vpop.f32.mrf.mxu0
    %v592 = vadd.f32 %v191, %v591
    %v593 = vpop.f32.mrf.mxu0
    %v594 = vadd.f32 %v191, %v593
    %595 = vmatmul.bf16.gmra.mxu0 %v323
    %v596 = vpop.f32.mrf.mxu0
    %v597 = vadd.f32 %v191, %v596
    %v598 = vpop.f32.mrf.mxu0
    %v599 = vadd.f32 %v191, %v598
    %600 = vmatmul.bf16.gmra.mxu0 %v324
    %v601 = vpop.f32.mrf.mxu0
    %v602 = vadd.f32 %v191, %v601
    %v603 = vpop.f32.mrf.mxu0
    %v604 = vadd.f32 %v191, %v603
    %605 = vmatmul.bf16.gmra.mxu0 %v325
    %v606 = vpop.f32.mrf.mxu0
    %v607 = vadd.f32 %v191, %v606
    %v608 = vpop.f32.mrf.mxu0
    %v609 = vadd.f32 %v191, %v608
    %610 = vmatmul.bf16.gmra.mxu0 %v326
    %v611 = vpop.f32.mrf.mxu0
    %v612 = vadd.f32 %v191, %v611
    %v613 = vpop.f32.mrf.mxu0
    %v614 = vadd.f32 %v191, %v613
    %615 = vmatmul.bf16.gmra.mxu0 %v327
    %v616 = vpop.f32.mrf.mxu0
    %v617 = vadd.f32 %v191, %v616
    %v618 = vpop.f32.mrf.mxu0
    %v619 = vadd.f32 %v191, %v618
    %620 = vmatmul.bf16.gmra.mxu0 %v328
    %v621 = vpop.f32.mrf.mxu0
    %v622 = vadd.f32 %v191, %v621
    %v623 = vpop.f32.mrf.mxu0
    %v624 = vadd.f32 %v191, %v623
    %625 = vmatmul.bf16.gmra.mxu0 %v329
    %v626 = vpop.f32.mrf.mxu0
    %v627 = vadd.f32 %v191, %v626
    %v628 = vpop.f32.mrf.mxu0
    %v629 = vadd.f32 %v191, %v628
    %630 = vmatmul.bf16.gmra.mxu0 %v330
    %v631 = vpop.f32.mrf.mxu0
    %v632 = vadd.f32 %v191, %v631
    %v633 = vpop.f32.mrf.mxu0
    %v634 = vadd.f32 %v191, %v633
    %635 = vmatmul.bf16.gmra.mxu0 %v331
    %v636 = vpop.f32.mrf.mxu0
    %v637 = vadd.f32 %v191, %v636
    %v638 = vpop.f32.mrf.mxu0
    %v639 = vadd.f32 %v191, %v638
    %640 = vmatmul.bf16.gmra.mxu0 %v332
    %v641 = vpop.f32.mrf.mxu0
    %v642 = vadd.f32 %v191, %v641
    %v643 = vpop.f32.mrf.mxu0
    %v644 = vadd.f32 %v191, %v643
    %645 = vmatmul.bf16.gmra.mxu0 %v333
    %v646 = vpop.f32.mrf.mxu0
    %v647 = vadd.f32 %v191, %v646
    %v648 = vpop.f32.mrf.mxu0
    %v649 = vadd.f32 %v191, %v648
    %650 = vmatmul.bf16.gmra.mxu0 %v334
    %v651 = vpop.f32.mrf.mxu0
    %v652 = vadd.f32 %v191, %v651
    %v653 = vpop.f32.mrf.mxu0
    %v654 = vadd.f32 %v191, %v653
    %655 = vmatmul.bf16.gmra.mxu0 %v335
    %v656 = vpop.f32.mrf.mxu0
    %v657 = vadd.f32 %v191, %v656
    %v658 = vpop.f32.mrf.mxu0
    %v659 = vadd.f32 %v191, %v658
    %660 = vmatmul.bf16.gmra.mxu0 %v336
    %v661 = vpop.f32.mrf.mxu0
    %v662 = vadd.f32 %v191, %v661
    %v663 = vpop.f32.mrf.mxu0
    %v664 = vadd.f32 %v191, %v663
    %665 = vmatmul.bf16.gmra.mxu0 %v337
    %v666 = vpop.f32.mrf.mxu0
    %v667 = vadd.f32 %v191, %v666
    %v668 = vpop.f32.mrf.mxu0
    %v669 = vadd.f32 %v191, %v668
    %670 = vmatmul.bf16.gmra.mxu0 %v338
    %v671 = vpop.f32.mrf.mxu0
    %v672 = vadd.f32 %v191, %v671
    %v673 = vpop.f32.mrf.mxu0
    %v674 = vadd.f32 %v191, %v673
    %675 = vdwg.mxu0
    %676 = vmatpush.bf16.msra.mxu0 %v492
    %677 = vmatpush.bf16.msra.mxu0 %v488
    %678 = vmatpush.bf16.msra.mxu0 %v484
    %679 = vmatpush.bf16.msra.mxu0 %v480
    %680 = vmatpush.bf16.msra.mxu0 %v476
    %681 = vmatpush.bf16.msra.mxu0 %v472
    %682 = vmatpush.bf16.msra.mxu0 %v468
    %683 = vmatpush.bf16.msra.mxu0 %v464
    %684 = vmatmul.bf16.gmra.mxu0 %v311
    %v685 = vpop.f32.mrf.mxu0
    %v686 = vadd.f32 %v192, %v685
    %v687 = vpop.f32.mrf.mxu0
    %v688 = vadd.f32 %v192, %v687
    %689 = vmatmul.bf16.gmra.mxu0 %v312
    %v690 = vpop.f32.mrf.mxu0
    %v691 = vadd.f32 %v192, %v690
    %v692 = vpop.f32.mrf.mxu0
    %v693 = vadd.f32 %v192, %v692
    %694 = vmatmul.bf16.gmra.mxu0 %v313
    %v695 = vpop.f32.mrf.mxu0
    %v696 = vadd.f32 %v192, %v695
    %v697 = vpop.f32.mrf.mxu0
    %v698 = vadd.f32 %v192, %v697
    %699 = vmatmul.bf16.gmra.mxu0 %v314
    %v700 = vpop.f32.mrf.mxu0
    %v701 = vadd.f32 %v192, %v700
    %v702 = vpop.f32.mrf.mxu0
    %v703 = vadd.f32 %v192, %v702
    %704 = vmatmul.bf16.gmra.mxu0 %v315
    %v705 = vpop.f32.mrf.mxu0
    %v706 = vadd.f32 %v192, %v705
    %v707 = vpop.f32.mrf.mxu0
    %v708 = vadd.f32 %v192, %v707
    %709 = vmatmul.bf16.gmra.mxu0 %v316
    %v710 = vpop.f32.mrf.mxu0
    %v711 = vadd.f32 %v192, %v710
    %v712 = vpop.f32.mrf.mxu0
    %v713 = vadd.f32 %v192, %v712
    %714 = vmatmul.bf16.gmra.mxu0 %v317
    %v715 = vpop.f32.mrf.mxu0
    %v716 = vadd.f32 %v192, %v715
    %v717 = vpop.f32.mrf.mxu0
    %v718 = vadd.f32 %v192, %v717
    %719 = vmatmul.bf16.gmra.mxu0 %v318
    %v720 = vpop.f32.mrf.mxu0
    %v721 = vadd.f32 %v192, %v720
    %v722 = vpop.f32.mrf.mxu0
    %v723 = vadd.f32 %v192, %v722
    %724 = vmatmul.bf16.gmra.mxu0 %v319
    %v725 = vpop.f32.mrf.mxu0
    %v726 = vadd.f32 %v192, %v725
    %v727 = vpop.f32.mrf.mxu0
    %v728 = vadd.f32 %v192, %v727
    %729 = vmatmul.bf16.gmra.mxu0 %v320
    %v730 = vpop.f32.mrf.mxu0
    %v731 = vadd.f32 %v192, %v730
    %v732 = vpop.f32.mrf.mxu0
    %v733 = vadd.f32 %v192, %v732
    %734 = vmatmul.bf16.gmra.mxu0 %v321
    %v735 = vpop.f32.mrf.mxu0
    %v736 = vadd.f32 %v192, %v735
    %v737 = vpop.f32.mrf.mxu0
    %v738 = vadd.f32 %v192, %v737
    %739 = vmatmul.bf16.gmra.mxu0 %v322
    %v740 = vpop.f32.mrf.mxu0
    %v741 = vadd.f32 %v192, %v740
    %v742 = vpop.f32.mrf.mxu0
    %v743 = vadd.f32 %v192, %v742
    %744 = vmatmul.bf16.gmra.mxu0 %v323
    %v745 = vpop.f32.mrf.mxu0
    %v746 = vadd.f32 %v192, %v745
    %v747 = vpop.f32.mrf.mxu0
    %v748 = vadd.f32 %v192, %v747
    %749 = vmatmul.bf16.gmra.mxu0 %v324
    %v750 = vpop.f32.mrf.mxu0
    %v751 = vadd.f32 %v192, %v750
    %v752 = vpop.f32.mrf.mxu0
    %v753 = vadd.f32 %v192, %v752
    %754 = vmatmul.bf16.gmra.mxu0 %v325
    %v755 = vpop.f32.mrf.mxu0
    %v756 = vadd.f32 %v192, %v755
    %v757 = vpop.f32.mrf.mxu0
    %v758 = vadd.f32 %v192, %v757
    %759 = vmatmul.bf16.gmra.mxu0 %v326
    %v760 = vpop.f32.mrf.mxu0
    %v761 = vadd.f32 %v192, %v760
    %v762 = vpop.f32.mrf.mxu0
    %v763 = vadd.f32 %v192, %v762
    %764 = vmatmul.bf16.gmra.mxu0 %v327
    %v765 = vpop.f32.mrf.mxu0
    %v766 = vadd.f32 %v192, %v765
    %v767 = vpop.f32.mrf.mxu0
    %v768 = vadd.f32 %v192, %v767
    %769 = vmatmul.bf16.gmra.mxu0 %v328
    %v770 = vpop.f32.mrf.mxu0
    %v771 = vadd.f32 %v192, %v770
    %v772 = vpop.f32.mrf.mxu0
    %v773 = vadd.f32 %v192, %v772
    %774 = vmatmul.bf16.gmra.mxu0 %v329
    %v775 = vpop.f32.mrf.mxu0
    %v776 = vadd.f32 %v192, %v775
    %v777 = vpop.f32.mrf.mxu0
    %v778 = vadd.f32 %v192, %v777
    %779 = vmatmul.bf16.gmra.mxu0 %v330
    %v780 = vpop.f32.mrf.mxu0
    %v781 = vadd.f32 %v192, %v780
    %v782 = vpop.f32.mrf.mxu0
    %v783 = vadd.f32 %v192, %v782
    %784 = vmatmul.bf16.gmra.mxu0 %v331
    %v785 = vpop.f32.mrf.mxu0
    %v786 = vadd.f32 %v192, %v785
    %v787 = vpop.f32.mrf.mxu0
    %v788 = vadd.f32 %v192, %v787
    %789 = vmatmul.bf16.gmra.mxu0 %v332
    %v790 = vpop.f32.mrf.mxu0
    %v791 = vadd.f32 %v192, %v790
    %v792 = vpop.f32.mrf.mxu0
    %v793 = vadd.f32 %v192, %v792
    %794 = vmatmul.bf16.gmra.mxu0 %v333
    %v795 = vpop.f32.mrf.mxu0
    %v796 = vadd.f32 %v192, %v795
    %v797 = vpop.f32.mrf.mxu0
    %v798 = vadd.f32 %v192, %v797
    %799 = vmatmul.bf16.gmra.mxu0 %v334
    %v800 = vpop.f32.mrf.mxu0
    %v801 = vadd.f32 %v192, %v800
    %v802 = vpop.f32.mrf.mxu0
    %v803 = vadd.f32 %v192, %v802
    %804 = vmatmul.bf16.gmra.mxu0 %v335
    %v805 = vpop.f32.mrf.mxu0
    %v806 = vadd.f32 %v192, %v805
    %v807 = vpop.f32.mrf.mxu0
    %v808 = vadd.f32 %v192, %v807
    %809 = vmatmul.bf16.gmra.mxu0 %v336
    %v810 = vpop.f32.mrf.mxu0
    %v811 = vadd.f32 %v192, %v810
    %v812 = vpop.f32.mrf.mxu0
    %v813 = vadd.f32 %v192, %v812
    %814 = vmatmul.bf16.gmra.mxu0 %v337
    %v815 = vpop.f32.mrf.mxu0
    %v816 = vadd.f32 %v192, %v815
    %v817 = vpop.f32.mrf.mxu0
    %v818 = vadd.f32 %v192, %v817
    %819 = vmatmul.bf16.gmra.mxu0 %v338
    %v820 = vpop.f32.mrf.mxu0
    %v821 = vadd.f32 %v192, %v820
    %v822 = vpop.f32.mrf.mxu0
    %v823 = vadd.f32 %v192, %v822
    %824 = vdwg.mxu0
    %825 = vmatpush.bf16.msra.mxu0 %v493
    %826 = vmatpush.bf16.msra.mxu0 %v489
    %827 = vmatpush.bf16.msra.mxu0 %v485
    %828 = vmatpush.bf16.msra.mxu0 %v481
    %829 = vmatpush.bf16.msra.mxu0 %v477
    %830 = vmatpush.bf16.msra.mxu0 %v473
    %831 = vmatpush.bf16.msra.mxu0 %v469
    %832 = vmatpush.bf16.msra.mxu0 %v465
    %833 = vmatmul.bf16.gmra.mxu0 %v311
    %v834 = vpop.f32.mrf.mxu0
    %v835 = vadd.f32 %v193, %v834
    %v836 = vpop.f32.mrf.mxu0
    %v837 = vadd.f32 %v193, %v836
    %838 = vmatmul.bf16.gmra.mxu0 %v312
    %v839 = vpop.f32.mrf.mxu0
    %v840 = vadd.f32 %v193, %v839
    %v841 = vpop.f32.mrf.mxu0
    %v842 = vadd.f32 %v193, %v841
    %843 = vmatmul.bf16.gmra.mxu0 %v313
    %v844 = vpop.f32.mrf.mxu0
    %v845 = vadd.f32 %v193, %v844
    %v846 = vpop.f32.mrf.mxu0
    %v847 = vadd.f32 %v193, %v846
    %848 = vmatmul.bf16.gmra.mxu0 %v314
    %v849 = vpop.f32.mrf.mxu0
    %v850 = vadd.f32 %v193, %v849
    %v851 = vpop.f32.mrf.mxu0
    %v852 = vadd.f32 %v193, %v851
    %853 = vmatmul.bf16.gmra.mxu0 %v315
    %v854 = vpop.f32.mrf.mxu0
    %v855 = vadd.f32 %v193, %v854
    %v856 = vpop.f32.mrf.mxu0
    %v857 = vadd.f32 %v193, %v856
    %858 = vmatmul.bf16.gmra.mxu0 %v316
    %v859 = vpop.f32.mrf.mxu0
    %v860 = vadd.f32 %v193, %v859
    %v861 = vpop.f32.mrf.mxu0
    %v862 = vadd.f32 %v193, %v861
    %863 = vmatmul.bf16.gmra.mxu0 %v317
    %v864 = vpop.f32.mrf.mxu0
    %v865 = vadd.f32 %v193, %v864
    %v866 = vpop.f32.mrf.mxu0
    %v867 = vadd.f32 %v193, %v866
    %868 = vmatmul.bf16.gmra.mxu0 %v318
    %v869 = vpop.f32.mrf.mxu0
    %v870 = vadd.f32 %v193, %v869
    %v871 = vpop.f32.mrf.mxu0
    %v872 = vadd.f32 %v193, %v871
    %873 = vmatmul.bf16.gmra.mxu0 %v319
    %v874 = vpop.f32.mrf.mxu0
    %v875 = vadd.f32 %v193, %v874
    %v876 = vpop.f32.mrf.mxu0
    %v877 = vadd.f32 %v193, %v876
    %878 = vmatmul.bf16.gmra.mxu0 %v320
    %v879 = vpop.f32.mrf.mxu0
    %v880 = vadd.f32 %v193, %v879
    %v881 = vpop.f32.mrf.mxu0
    %v882 = vadd.f32 %v193, %v881
    %883 = vmatmul.bf16.gmra.mxu0 %v321
    %v884 = vpop.f32.mrf.mxu0
    %v885 = vadd.f32 %v193, %v884
    %v886 = vpop.f32.mrf.mxu0
    %v887 = vadd.f32 %v193, %v886
    %888 = vmatmul.bf16.gmra.mxu0 %v322
    %v889 = vpop.f32.mrf.mxu0
    %v890 = vadd.f32 %v193, %v889
    %v891 = vpop.f32.mrf.mxu0
    %v892 = vadd.f32 %v193, %v891
    %893 = vmatmul.bf16.gmra.mxu0 %v323
    %v894 = vpop.f32.mrf.mxu0
    %v895 = vadd.f32 %v193, %v894
    %v896 = vpop.f32.mrf.mxu0
    %v897 = vadd.f32 %v193, %v896
    %898 = vmatmul.bf16.gmra.mxu0 %v324
    %v899 = vpop.f32.mrf.mxu0
    %v900 = vadd.f32 %v193, %v899
    %v901 = vpop.f32.mrf.mxu0
    %v902 = vadd.f32 %v193, %v901
    %903 = vmatmul.bf16.gmra.mxu0 %v325
    %v904 = vpop.f32.mrf.mxu0
    %v905 = vadd.f32 %v193, %v904
    %v906 = vpop.f32.mrf.mxu0
    %v907 = vadd.f32 %v193, %v906
    %908 = vmatmul.bf16.gmra.mxu0 %v326
    %v909 = vpop.f32.mrf.mxu0
    %v910 = vadd.f32 %v193, %v909
    %v911 = vpop.f32.mrf.mxu0
    %v912 = vadd.f32 %v193, %v911
    %913 = vmatmul.bf16.gmra.mxu0 %v327
    %v914 = vpop.f32.mrf.mxu0
    %v915 = vadd.f32 %v193, %v914
    %v916 = vpop.f32.mrf.mxu0
    %v917 = vadd.f32 %v193, %v916
    %918 = vmatmul.bf16.gmra.mxu0 %v328
    %v919 = vpop.f32.mrf.mxu0
    %v920 = vadd.f32 %v193, %v919
    %v921 = vpop.f32.mrf.mxu0
    %v922 = vadd.f32 %v193, %v921
    %923 = vmatmul.bf16.gmra.mxu0 %v329
    %v924 = vpop.f32.mrf.mxu0
    %v925 = vadd.f32 %v193, %v924
    %v926 = vpop.f32.mrf.mxu0
    %v927 = vadd.f32 %v193, %v926
    %928 = vmatmul.bf16.gmra.mxu0 %v330
    %v929 = vpop.f32.mrf.mxu0
    %v930 = vadd.f32 %v193, %v929
    %v931 = vpop.f32.mrf.mxu0
    %v932 = vadd.f32 %v193, %v931
    %933 = vmatmul.bf16.gmra.mxu0 %v331
    %v934 = vpop.f32.mrf.mxu0
    %v935 = vadd.f32 %v193, %v934
    %v936 = vpop.f32.mrf.mxu0
    %v937 = vadd.f32 %v193, %v936
    %938 = vmatmul.bf16.gmra.mxu0 %v332
    %v939 = vpop.f32.mrf.mxu0
    %v940 = vadd.f32 %v193, %v939
    %v941 = vpop.f32.mrf.mxu0
    %v942 = vadd.f32 %v193, %v941
    %943 = vmatmul.bf16.gmra.mxu0 %v333
    %v944 = vpop.f32.mrf.mxu0
    %v945 = vadd.f32 %v193, %v944
    %v946 = vpop.f32.mrf.mxu0
    %v947 = vadd.f32 %v193, %v946
    %948 = vmatmul.bf16.gmra.mxu0 %v334
    %v949 = vpop.f32.mrf.mxu0
    %v950 = vadd.f32 %v193, %v949
    %v951 = vpop.f32.mrf.mxu0
    %v952 = vadd.f32 %v193, %v951
    %953 = vmatmul.bf16.gmra.mxu0 %v335
    %v954 = vpop.f32.mrf.mxu0
    %v955 = vadd.f32 %v193, %v954
    %v956 = vpop.f32.mrf.mxu0
    %v957 = vadd.f32 %v193, %v956
    %958 = vmatmul.bf16.gmra.mxu0 %v336
    %v959 = vpop.f32.mrf.mxu0
    %v960 = vadd.f32 %v193, %v959
    %v961 = vpop.f32.mrf.mxu0
    %v962 = vadd.f32 %v193, %v961
    %963 = vmatmul.bf16.gmra.mxu0 %v337
    %v964 = vpop.f32.mrf.mxu0
    %v965 = vadd.f32 %v193, %v964
    %v966 = vpop.f32.mrf.mxu0
    %v967 = vadd.f32 %v193, %v966
    %968 = vmatmul.bf16.gmra.mxu0 %v338
    %v969 = vpop.f32.mrf.mxu0
    %v970 = vadd.f32 %v193, %v969
    %v971 = vpop.f32.mrf.mxu0
    %v972 = vadd.f32 %v193, %v971
    %973 = vdwg.mxu0
    %974 = vmatpush.bf16.msra.mxu0 %v494
    %975 = vmatpush.bf16.msra.mxu0 %v490
    %976 = vmatpush.bf16.msra.mxu0 %v486
    %977 = vmatpush.bf16.msra.mxu0 %v482
    %978 = vmatpush.bf16.msra.mxu0 %v478
    %979 = vmatpush.bf16.msra.mxu0 %v474
    %980 = vmatpush.bf16.msra.mxu0 %v470
    %981 = vmatpush.bf16.msra.mxu0 %v466
    %982 = vmatmul.bf16.gmra.mxu0 %v311
    %v983 = vpop.f32.mrf.mxu0
    %v984 = vadd.f32 %v194, %v983
    %v985 = vpop.f32.mrf.mxu0
    %v986 = vadd.f32 %v194, %v985
    %987 = vmatmul.bf16.gmra.mxu0 %v312
    %v988 = vpop.f32.mrf.mxu0
    %v989 = vadd.f32 %v194, %v988
    %v990 = vpop.f32.mrf.mxu0
    %v991 = vadd.f32 %v194, %v990
    %992 = vmatmul.bf16.gmra.mxu0 %v313
    %v993 = vpop.f32.mrf.mxu0
    %v994 = vadd.f32 %v194, %v993
    %v995 = vpop.f32.mrf.mxu0
    %v996 = vadd.f32 %v194, %v995
    %997 = vmatmul.bf16.gmra.mxu0 %v314
    %v998 = vpop.f32.mrf.mxu0
    %v999 = vadd.f32 %v194, %v998
    %v1000 = vpop.f32.mrf.mxu0
    %v1001 = vadd.f32 %v194, %v1000
    %1002 = vmatmul.bf16.gmra.mxu0 %v315
    %v1003 = vpop.f32.mrf.mxu0
    %v1004 = vadd.f32 %v194, %v1003
    %v1005 = vpop.f32.mrf.mxu0
    %v1006 = vadd.f32 %v194, %v1005
    %1007 = vmatmul.bf16.gmra.mxu0 %v316
    %v1008 = vpop.f32.mrf.mxu0
    %v1009 = vadd.f32 %v194, %v1008
    %v1010 = vpop.f32.mrf.mxu0
    %v1011 = vadd.f32 %v194, %v1010
    %1012 = vmatmul.bf16.gmra.mxu0 %v317
    %v1013 = vpop.f32.mrf.mxu0
    %v1014 = vadd.f32 %v194, %v1013
    %v1015 = vpop.f32.mrf.mxu0
    %v1016 = vadd.f32 %v194, %v1015
    %1017 = vmatmul.bf16.gmra.mxu0 %v318
    %v1018 = vpop.f32.mrf.mxu0
    %v1019 = vadd.f32 %v194, %v1018
    %v1020 = vpop.f32.mrf.mxu0
    %v1021 = vadd.f32 %v194, %v1020
    %1022 = vmatmul.bf16.gmra.mxu0 %v319
    %v1023 = vpop.f32.mrf.mxu0
    %v1024 = vadd.f32 %v194, %v1023
    %v1025 = vpop.f32.mrf.mxu0
    %v1026 = vadd.f32 %v194, %v1025
    %1027 = vmatmul.bf16.gmra.mxu0 %v320
    %v1028 = vpop.f32.mrf.mxu0
    %v1029 = vadd.f32 %v194, %v1028
    %v1030 = vpop.f32.mrf.mxu0
    %v1031 = vadd.f32 %v194, %v1030
    %1032 = vmatmul.bf16.gmra.mxu0 %v321
    %v1033 = vpop.f32.mrf.mxu0
    %v1034 = vadd.f32 %v194, %v1033
    %v1035 = vpop.f32.mrf.mxu0
    %v1036 = vadd.f32 %v194, %v1035
    %1037 = vmatmul.bf16.gmra.mxu0 %v322
    %v1038 = vpop.f32.mrf.mxu0
    %v1039 = vadd.f32 %v194, %v1038
    %v1040 = vpop.f32.mrf.mxu0
    %v1041 = vadd.f32 %v194, %v1040
    %1042 = vmatmul.bf16.gmra.mxu0 %v323
    %v1043 = vpop.f32.mrf.mxu0
    %v1044 = vadd.f32 %v194, %v1043
    %v1045 = vpop.f32.mrf.mxu0
    %v1046 = vadd.f32 %v194, %v1045
    %1047 = vmatmul.bf16.gmra.mxu0 %v324
    %v1048 = vpop.f32.mrf.mxu0
    %v1049 = vadd.f32 %v194, %v1048
    %v1050 = vpop.f32.mrf.mxu0
    %v1051 = vadd.f32 %v194, %v1050
    %1052 = vmatmul.bf16.gmra.mxu0 %v325
    %v1053 = vpop.f32.mrf.mxu0
    %v1054 = vadd.f32 %v194, %v1053
    %v1055 = vpop.f32.mrf.mxu0
    %v1056 = vadd.f32 %v194, %v1055
    %1057 = vmatmul.bf16.gmra.mxu0 %v326
    %v1058 = vpop.f32.mrf.mxu0
    %v1059 = vadd.f32 %v194, %v1058
    %v1060 = vpop.f32.mrf.mxu0
    %v1061 = vadd.f32 %v194, %v1060
    %1062 = vmatmul.bf16.gmra.mxu0 %v327
    %v1063 = vpop.f32.mrf.mxu0
    %v1064 = vadd.f32 %v194, %v1063
    %v1065 = vpop.f32.mrf.mxu0
    %v1066 = vadd.f32 %v194, %v1065
    %1067 = vmatmul.bf16.gmra.mxu0 %v328
    %v1068 = vpop.f32.mrf.mxu0
    %v1069 = vadd.f32 %v194, %v1068
    %v1070 = vpop.f32.mrf.mxu0
    %v1071 = vadd.f32 %v194, %v1070
    %1072 = vmatmul.bf16.gmra.mxu0 %v329
    %v1073 = vpop.f32.mrf.mxu0
    %v1074 = vadd.f32 %v194, %v1073
    %v1075 = vpop.f32.mrf.mxu0
    %v1076 = vadd.f32 %v194, %v1075
    %1077 = vmatmul.bf16.gmra.mxu0 %v330
    %v1078 = vpop.f32.mrf.mxu0
    %v1079 = vadd.f32 %v194, %v1078
    %v1080 = vpop.f32.mrf.mxu0
    %v1081 = vadd.f32 %v194, %v1080
    %1082 = vmatmul.bf16.gmra.mxu0 %v331
    %v1083 = vpop.f32.mrf.mxu0
    %v1084 = vadd.f32 %v194, %v1083
    %v1085 = vpop.f32.mrf.mxu0
    %v1086 = vadd.f32 %v194, %v1085
    %1087 = vmatmul.bf16.gmra.mxu0 %v332
    %v1088 = vpop.f32.mrf.mxu0
    %v1089 = vadd.f32 %v194, %v1088
    %v1090 = vpop.f32.mrf.mxu0
    %v1091 = vadd.f32 %v194, %v1090
    %1092 = vmatmul.bf16.gmra.mxu0 %v333
    %v1093 = vpop.f32.mrf.mxu0
    %v1094 = vadd.f32 %v194, %v1093
    %v1095 = vpop.f32.mrf.mxu0
    %v1096 = vadd.f32 %v194, %v1095
    %1097 = vmatmul.bf16.gmra.mxu0 %v334
    %v1098 = vpop.f32.mrf.mxu0
    %v1099 = vadd.f32 %v194, %v1098
    %v1100 = vpop.f32.mrf.mxu0
    %v1101 = vadd.f32 %v194, %v1100
    %1102 = vmatmul.bf16.gmra.mxu0 %v335
    %v1103 = vpop.f32.mrf.mxu0
    %v1104 = vadd.f32 %v194, %v1103
    %v1105 = vpop.f32.mrf.mxu0
    %v1106 = vadd.f32 %v194, %v1105
    %1107 = vmatmul.bf16.gmra.mxu0 %v336
    %v1108 = vpop.f32.mrf.mxu0
    %v1109 = vadd.f32 %v194, %v1108
    %v1110 = vpop.f32.mrf.mxu0
    %v1111 = vadd.f32 %v194, %v1110
    %1112 = vmatmul.bf16.gmra.mxu0 %v337
    %v1113 = vpop.f32.mrf.mxu0
    %v1114 = vadd.f32 %v194, %v1113
    %v1115 = vpop.f32.mrf.mxu0
    %v1116 = vadd.f32 %v194, %v1115
    %1117 = vmatmul.bf16.gmra.mxu0 %v338
    %v1118 = vpop.f32.mrf.mxu0
    %v1119 = vadd.f32 %v194, %v1118
    %v1120 = vpop.f32.mrf.mxu0
    %v1121 = vadd.f32 %v194, %v1120
    %1122 = vdwg.mxu0
    %1123 = vst [vmem:[#allocation2] sm:$0xff] %v537
    %1124 = vst [vmem:[#allocation2 + $0x8] sm:$0xff] %v686
    %1125 = vst [vmem:[#allocation2 + $0x10] sm:$0xff] %v835
    %1126 = vst [vmem:[#allocation2 + $0x18] sm:$0xff] %v984
    %1127 = vst [vmem:[#allocation2 + $0x20] sm:$0xff] %v539
    %1128 = vst [vmem:[#allocation2 + $0x28] sm:$0xff] %v688
    %1129 = vst [vmem:[#allocation2 + $0x30] sm:$0xff] %v837
    %1130 = vst [vmem:[#allocation2 + $0x38] sm:$0xff] %v986
    %1131 = vst [vmem:[#allocation2 + $0x40] sm:$0xff] %v542
    %1132 = vst [vmem:[#allocation2 + $0x48] sm:$0xff] %v691
    %1133 = vst [vmem:[#allocation2 + $0x50] sm:$0xff] %v840
    %1134 = vst [vmem:[#allocation2 + $0x58] sm:$0xff] %v989
    %1135 = vst [vmem:[#allocation2 + $0x60] sm:$0xff] %v544
    %1136 = vst [vmem:[#allocation2 + $0x68] sm:$0xff] %v693
    %1137 = vst [vmem:[#allocation2 + $0x70] sm:$0xff] %v842
    %1138 = vst [vmem:[#allocation2 + $0x78] sm:$0xff] %v991
    %1139 = vst [vmem:[#allocation2 + $0x80] sm:$0xff] %v547
    %1140 = vst [vmem:[#allocation2 + $0x88] sm:$0xff] %v696
    %1141 = vst [vmem:[#allocation2 + $0x90] sm:$0xff] %v845
    %1142 = vst [vmem:[#allocation2 + $0x98] sm:$0xff] %v994
    %1143 = vst [vmem:[#allocation2 + $0xa0] sm:$0xff] %v549
    %1144 = vst [vmem:[#allocation2 + $0xa8] sm:$0xff] %v698
    %1145 = vst [vmem:[#allocation2 + $0xb0] sm:$0xff] %v847
    %1146 = vst [vmem:[#allocation2 + $0xb8] sm:$0xff] %v996
    %1147 = vst [vmem:[#allocation2 + $0xc0] sm:$0xff] %v552
    %1148 = vst [vmem:[#allocation2 + $0xc8] sm:$0xff] %v701
    %1149 = vst [vmem:[#allocation2 + $0xd0] sm:$0xff] %v850
    %1150 = vst [vmem:[#allocation2 + $0xd8] sm:$0xff] %v999
    %1151 = vst [vmem:[#allocation2 + $0xe0] sm:$0xff] %v554
    %1152 = vst [vmem:[#allocation2 + $0xe8] sm:$0xff] %v703
    %1153 = vst [vmem:[#allocation2 + $0xf0] sm:$0xff] %v852
    %1154 = vst [vmem:[#allocation2 + $0xf8] sm:$0xff] %v1001
    %1155 = vst [vmem:[#allocation2 + $0x100] sm:$0xff] %v557
    %1156 = vst [vmem:[#allocation2 + $0x108] sm:$0xff] %v706
    %1157 = vst [vmem:[#allocation2 + $0x110] sm:$0xff] %v855
    %1158 = vst [vmem:[#allocation2 + $0x118] sm:$0xff] %v1004
    %1159 = vst [vmem:[#allocation2 + $0x120] sm:$0xff] %v559
    %1160 = vst [vmem:[#allocation2 + $0x128] sm:$0xff] %v708
    %1161 = vst [vmem:[#allocation2 + $0x130] sm:$0xff] %v857
    %1162 = vst [vmem:[#allocation2 + $0x138] sm:$0xff] %v1006
    %1163 = vst [vmem:[#allocation2 + $0x140] sm:$0xff] %v562
    %1164 = vst [vmem:[#allocation2 + $0x148] sm:$0xff] %v711
    %1165 = vst [vmem:[#allocation2 + $0x150] sm:$0xff] %v860
    %1166 = vst [vmem:[#allocation2 + $0x158] sm:$0xff] %v1009
    %1167 = vst [vmem:[#allocation2 + $0x160] sm:$0xff] %v564
    %1168 = vst [vmem:[#allocation2 + $0x168] sm:$0xff] %v713
    %1169 = vst [vmem:[#allocation2 + $0x170] sm:$0xff] %v862
    %1170 = vst [vmem:[#allocation2 + $0x178] sm:$0xff] %v1011
    %1171 = vst [vmem:[#allocation2 + $0x180] sm:$0xff] %v567
    %1172 = vst [vmem:[#allocation2 + $0x188] sm:$0xff] %v716
    %1173 = vst [vmem:[#allocation2 + $0x190] sm:$0xff] %v865
    %1174 = vst [vmem:[#allocation2 + $0x198] sm:$0xff] %v1014
    %1175 = vst [vmem:[#allocation2 + $0x1a0] sm:$0xff] %v569
    %1176 = vst [vmem:[#allocation2 + $0x1a8] sm:$0xff] %v718
    %1177 = vst [vmem:[#allocation2 + $0x1b0] sm:$0xff] %v867
    %1178 = vst [vmem:[#allocation2 + $0x1b8] sm:$0xff] %v1016
    %1179 = vst [vmem:[#allocation2 + $0x1c0] sm:$0xff] %v572
    %1180 = vst [vmem:[#allocation2 + $0x1c8] sm:$0xff] %v721
    %1181 = vst [vmem:[#allocation2 + $0x1d0] sm:$0xff] %v870
    %1182 = vst [vmem:[#allocation2 + $0x1d8] sm:$0xff] %v1019
    %1183 = vst [vmem:[#allocation2 + $0x1e0] sm:$0xff] %v574
    %1184 = vst [vmem:[#allocation2 + $0x1e8] sm:$0xff] %v723
    %1185 = vst [vmem:[#allocation2 + $0x1f0] sm:$0xff] %v872
    %1186 = vst [vmem:[#allocation2 + $0x1f8] sm:$0xff] %v1021
    %1187 = vst [vmem:[#allocation2 + $0x200] sm:$0xff] %v577
    %1188 = vst [vmem:[#allocation2 + $0x208] sm:$0xff] %v726
    %1189 = vst [vmem:[#allocation2 + $0x210] sm:$0xff] %v875
    %1190 = vst [vmem:[#allocation2 + $0x218] sm:$0xff] %v1024
    %1191 = vst [vmem:[#allocation2 + $0x220] sm:$0xff] %v579
    %1192 = vst [vmem:[#allocation2 + $0x228] sm:$0xff] %v728
    %1193 = vst [vmem:[#allocation2 + $0x230] sm:$0xff] %v877
    %1194 = vst [vmem:[#allocation2 + $0x238] sm:$0xff] %v1026
    %1195 = vst [vmem:[#allocation2 + $0x240] sm:$0xff] %v582
    %1196 = vst [vmem:[#allocation2 + $0x248] sm:$0xff] %v731
    %1197 = vst [vmem:[#allocation2 + $0x250] sm:$0xff] %v880
    %1198 = vst [vmem:[#allocation2 + $0x258] sm:$0xff] %v1029
    %1199 = vst [vmem:[#allocation2 + $0x260] sm:$0xff] %v584
    %1200 = vst [vmem:[#allocation2 + $0x268] sm:$0xff] %v733
    %1201 = vst [vmem:[#allocation2 + $0x270] sm:$0xff] %v882
    %1202 = vst [vmem:[#allocation2 + $0x278] sm:$0xff] %v1031
    %1203 = vst [vmem:[#allocation2 + $0x280] sm:$0xff] %v587
    %1204 = vst [vmem:[#allocation2 + $0x288] sm:$0xff] %v736
    %1205 = vst [vmem:[#allocation2 + $0x290] sm:$0xff] %v885
    %1206 = vst [vmem:[#allocation2 + $0x298] sm:$0xff] %v1034
    %1207 = vst [vmem:[#allocation2 + $0x2a0] sm:$0xff] %v589
    %1208 = vst [vmem:[#allocation2 + $0x2a8] sm:$0xff] %v738
    %1209 = vst [vmem:[#allocation2 + $0x2b0] sm:$0xff] %v887
    %1210 = vst [vmem:[#allocation2 + $0x2b8] sm:$0xff] %v1036
    %1211 = vst [vmem:[#allocation2 + $0x2c0] sm:$0xff] %v592
    %1212 = vst [vmem:[#allocation2 + $0x2c8] sm:$0xff] %v741
    %1213 = vst [vmem:[#allocation2 + $0x2d0] sm:$0xff] %v890
    %1214 = vst [vmem:[#allocation2 + $0x2d8] sm:$0xff] %v1039
    %1215 = vst [vmem:[#allocation2 + $0x2e0] sm:$0xff] %v594
    %1216 = vst [vmem:[#allocation2 + $0x2e8] sm:$0xff] %v743
    %1217 = vst [vmem:[#allocation2 + $0x2f0] sm:$0xff] %v892
    %1218 = vst [vmem:[#allocation2 + $0x2f8] sm:$0xff] %v1041
    %1219 = vst [vmem:[#allocation2 + $0x300] sm:$0xff] %v597
    %1220 = vst [vmem:[#allocation2 + $0x308] sm:$0xff] %v746
    %1221 = vst [vmem:[#allocation2 + $0x310] sm:$0xff] %v895
    %1222 = vst [vmem:[#allocation2 + $0x318] sm:$0xff] %v1044
    %1223 = vst [vmem:[#allocation2 + $0x320] sm:$0xff] %v599
    %1224 = vst [vmem:[#allocation2 + $0x328] sm:$0xff] %v748
    %1225 = vst [vmem:[#allocation2 + $0x330] sm:$0xff] %v897
    %1226 = vst [vmem:[#allocation2 + $0x338] sm:$0xff] %v1046
    %1227 = vst [vmem:[#allocation2 + $0x340] sm:$0xff] %v602
    %1228 = vst [vmem:[#allocation2 + $0x348] sm:$0xff] %v751
    %1229 = vst [vmem:[#allocation2 + $0x350] sm:$0xff] %v900
    %1230 = vst [vmem:[#allocation2 + $0x358] sm:$0xff] %v1049
    %1231 = vst [vmem:[#allocation2 + $0x360] sm:$0xff] %v604
    %1232 = vst [vmem:[#allocation2 + $0x368] sm:$0xff] %v753
    %1233 = vst [vmem:[#allocation2 + $0x370] sm:$0xff] %v902
    %1234 = vst [vmem:[#allocation2 + $0x378] sm:$0xff] %v1051
    %1235 = vst [vmem:[#allocation2 + $0x380] sm:$0xff] %v607
    %1236 = vst [vmem:[#allocation2 + $0x388] sm:$0xff] %v756
    %1237 = vst [vmem:[#allocation2 + $0x390] sm:$0xff] %v905
    %1238 = vst [vmem:[#allocation2 + $0x398] sm:$0xff] %v1054
    %1239 = vst [vmem:[#allocation2 + $0x3a0] sm:$0xff] %v609
    %1240 = vst [vmem:[#allocation2 + $0x3a8] sm:$0xff] %v758
    %1241 = vst [vmem:[#allocation2 + $0x3b0] sm:$0xff] %v907
    %1242 = vst [vmem:[#allocation2 + $0x3b8] sm:$0xff] %v1056
    %1243 = vst [vmem:[#allocation2 + $0x3c0] sm:$0xff] %v612
    %1244 = vst [vmem:[#allocation2 + $0x3c8] sm:$0xff] %v761
    %1245 = vst [vmem:[#allocation2 + $0x3d0] sm:$0xff] %v910
    %1246 = vst [vmem:[#allocation2 + $0x3d8] sm:$0xff] %v1059
    %1247 = vst [vmem:[#allocation2 + $0x3e0] sm:$0xff] %v614
    %1248 = vst [vmem:[#allocation2 + $0x3e8] sm:$0xff] %v763
    %1249 = vst [vmem:[#allocation2 + $0x3f0] sm:$0xff] %v912
    %1250 = vst [vmem:[#allocation2 + $0x3f8] sm:$0xff] %v1061
    %1251 = vst [vmem:[#allocation2 + $0x400] sm:$0xff] %v617
    %1252 = vst [vmem:[#allocation2 + $0x408] sm:$0xff] %v766
    %1253 = vst [vmem:[#allocation2 + $0x410] sm:$0xff] %v915
    %1254 = vst [vmem:[#allocation2 + $0x418] sm:$0xff] %v1064
    %1255 = vst [vmem:[#allocation2 + $0x420] sm:$0xff] %v619
    %1256 = vst [vmem:[#allocation2 + $0x428] sm:$0xff] %v768
    %1257 = vst [vmem:[#allocation2 + $0x430] sm:$0xff] %v917
    %1258 = vst [vmem:[#allocation2 + $0x438] sm:$0xff] %v1066
    %1259 = vst [vmem:[#allocation2 + $0x440] sm:$0xff] %v622
    %1260 = vst [vmem:[#allocation2 + $0x448] sm:$0xff] %v771
    %1261 = vst [vmem:[#allocation2 + $0x450] sm:$0xff] %v920
    %1262 = vst [vmem:[#allocation2 + $0x458] sm:$0xff] %v1069
    %1263 = vst [vmem:[#allocation2 + $0x460] sm:$0xff] %v624
    %1264 = vst [vmem:[#allocation2 + $0x468] sm:$0xff] %v773
    %1265 = vst [vmem:[#allocation2 + $0x470] sm:$0xff] %v922
    %1266 = vst [vmem:[#allocation2 + $0x478] sm:$0xff] %v1071
    %1267 = vst [vmem:[#allocation2 + $0x480] sm:$0xff] %v627
    %1268 = vst [vmem:[#allocation2 + $0x488] sm:$0xff] %v776
    %1269 = vst [vmem:[#allocation2 + $0x490] sm:$0xff] %v925
    %1270 = vst [vmem:[#allocation2 + $0x498] sm:$0xff] %v1074
    %1271 = vst [vmem:[#allocation2 + $0x4a0] sm:$0xff] %v629
    %1272 = vst [vmem:[#allocation2 + $0x4a8] sm:$0xff] %v778
    %1273 = vst [vmem:[#allocation2 + $0x4b0] sm:$0xff] %v927
    %1274 = vst [vmem:[#allocation2 + $0x4b8] sm:$0xff] %v1076
    %1275 = vst [vmem:[#allocation2 + $0x4c0] sm:$0xff] %v632
    %1276 = vst [vmem:[#allocation2 + $0x4c8] sm:$0xff] %v781
    %1277 = vst [vmem:[#allocation2 + $0x4d0] sm:$0xff] %v930
    %1278 = vst [vmem:[#allocation2 + $0x4d8] sm:$0xff] %v1079
    %1279 = vst [vmem:[#allocation2 + $0x4e0] sm:$0xff] %v634
    %1280 = vst [vmem:[#allocation2 + $0x4e8] sm:$0xff] %v783
    %1281 = vst [vmem:[#allocation2 + $0x4f0] sm:$0xff] %v932
    %1282 = vst [vmem:[#allocation2 + $0x4f8] sm:$0xff] %v1081
    %1283 = vst [vmem:[#allocation2 + $0x500] sm:$0xff] %v637
    %1284 = vst [vmem:[#allocation2 + $0x508] sm:$0xff] %v786
    %1285 = vst [vmem:[#allocation2 + $0x510] sm:$0xff] %v935
    %1286 = vst [vmem:[#allocation2 + $0x518] sm:$0xff] %v1084
    %1287 = vst [vmem:[#allocation2 + $0x520] sm:$0xff] %v639
    %1288 = vst [vmem:[#allocation2 + $0x528] sm:$0xff] %v788
    %1289 = vst [vmem:[#allocation2 + $0x530] sm:$0xff] %v937
    %1290 = vst [vmem:[#allocation2 + $0x538] sm:$0xff] %v1086
    %1291 = vst [vmem:[#allocation2 + $0x540] sm:$0xff] %v642
    %1292 = vst [vmem:[#allocation2 + $0x548] sm:$0xff] %v791
    %1293 = vst [vmem:[#allocation2 + $0x550] sm:$0xff] %v940
    %1294 = vst [vmem:[#allocation2 + $0x558] sm:$0xff] %v1089
    %1295 = vst [vmem:[#allocation2 + $0x560] sm:$0xff] %v644
    %1296 = vst [vmem:[#allocation2 + $0x568] sm:$0xff] %v793
    %1297 = vst [vmem:[#allocation2 + $0x570] sm:$0xff] %v942
    %1298 = vst [vmem:[#allocation2 + $0x578] sm:$0xff] %v1091
    %1299 = vst [vmem:[#allocation2 + $0x580] sm:$0xff] %v647
    %1300 = vst [vmem:[#allocation2 + $0x588] sm:$0xff] %v796
    %1301 = vst [vmem:[#allocation2 + $0x590] sm:$0xff] %v945
    %1302 = vst [vmem:[#allocation2 + $0x598] sm:$0xff] %v1094
    %1303 = vst [vmem:[#allocation2 + $0x5a0] sm:$0xff] %v649
    %1304 = vst [vmem:[#allocation2 + $0x5a8] sm:$0xff] %v798
    %1305 = vst [vmem:[#allocation2 + $0x5b0] sm:$0xff] %v947
    %1306 = vst [vmem:[#allocation2 + $0x5b8] sm:$0xff] %v1096
    %1307 = vst [vmem:[#allocation2 + $0x5c0] sm:$0xff] %v652
    %1308 = vst [vmem:[#allocation2 + $0x5c8] sm:$0xff] %v801
    %1309 = vst [vmem:[#allocation2 + $0x5d0] sm:$0xff] %v950
    %1310 = vst [vmem:[#allocation2 + $0x5d8] sm:$0xff] %v1099
    %1311 = vst [vmem:[#allocation2 + $0x5e0] sm:$0xff] %v654
    %1312 = vst [vmem:[#allocation2 + $0x5e8] sm:$0xff] %v803
    %1313 = vst [vmem:[#allocation2 + $0x5f0] sm:$0xff] %v952
    %1314 = vst [vmem:[#allocation2 + $0x5f8] sm:$0xff] %v1101
    %1315 = vst [vmem:[#allocation2 + $0x600] sm:$0xff] %v657
    %1316 = vst [vmem:[#allocation2 + $0x608] sm:$0xff] %v806
    %1317 = vst [vmem:[#allocation2 + $0x610] sm:$0xff] %v955
    %1318 = vst [vmem:[#allocation2 + $0x618] sm:$0xff] %v1104
    %1319 = vst [vmem:[#allocation2 + $0x620] sm:$0xff] %v659
    %1320 = vst [vmem:[#allocation2 + $0x628] sm:$0xff] %v808
    %1321 = vst [vmem:[#allocation2 + $0x630] sm:$0xff] %v957
    %1322 = vst [vmem:[#allocation2 + $0x638] sm:$0xff] %v1106
    %1323 = vst [vmem:[#allocation2 + $0x640] sm:$0xff] %v662
    %1324 = vst [vmem:[#allocation2 + $0x648] sm:$0xff] %v811
    %1325 = vst [vmem:[#allocation2 + $0x650] sm:$0xff] %v960
    %1326 = vst [vmem:[#allocation2 + $0x658] sm:$0xff] %v1109
    %1327 = vst [vmem:[#allocation2 + $0x660] sm:$0xff] %v664
    %1328 = vst [vmem:[#allocation2 + $0x668] sm:$0xff] %v813
    %1329 = vst [vmem:[#allocation2 + $0x670] sm:$0xff] %v962
    %1330 = vst [vmem:[#allocation2 + $0x678] sm:$0xff] %v1111
    %1331 = vst [vmem:[#allocation2 + $0x680] sm:$0xff] %v667
    %1332 = vst [vmem:[#allocation2 + $0x688] sm:$0xff] %v816
    %1333 = vst [vmem:[#allocation2 + $0x690] sm:$0xff] %v965
    %1334 = vst [vmem:[#allocation2 + $0x698] sm:$0xff] %v1114
    %1335 = vst [vmem:[#allocation2 + $0x6a0] sm:$0xff] %v669
    %1336 = vst [vmem:[#allocation2 + $0x6a8] sm:$0xff] %v818
    %1337 = vst [vmem:[#allocation2 + $0x6b0] sm:$0xff] %v967
    %1338 = vst [vmem:[#allocation2 + $0x6b8] sm:$0xff] %v1116
    %1339 = vst [vmem:[#allocation2 + $0x6c0] sm:$0xff] %v672
    %1340 = vst [vmem:[#allocation2 + $0x6c8] sm:$0xff] %v821
    %1341 = vst [vmem:[#allocation2 + $0x6d0] sm:$0xff] %v970
    %1342 = vst [vmem:[#allocation2 + $0x6d8] sm:$0xff] %v1119
    %1343 = vst [vmem:[#allocation2 + $0x6e0] sm:$0xff] %v674
    %1344 = vst [vmem:[#allocation2 + $0x6e8] sm:$0xff] %v823
    %1345 = vst [vmem:[#allocation2 + $0x6f0] sm:$0xff] %v972
    %1346 = vst [vmem:[#allocation2 + $0x6f8] sm:$0xff] %v1121
    %v1347 = vld [vmem:[#allocation2] sm:$0xff]
    %v1348 = vld [vmem:[#allocation2 + $0x8] sm:$0xff]
    %v1349 = vld [vmem:[#allocation2 + $0x10] sm:$0xff]
    %v1350 = vld [vmem:[#allocation2 + $0x18] sm:$0xff]
    %v1351 = vld [vmem:[#allocation2 + $0x20] sm:$0xff]
    %v1352 = vld [vmem:[#allocation2 + $0x28] sm:$0xff]
    %v1353 = vld [vmem:[#allocation2 + $0x30] sm:$0xff]
    %v1354 = vld [vmem:[#allocation2 + $0x38] sm:$0xff]
    %v1355 = vld [vmem:[#allocation8] sm:$0xff]
    %v1356 = vld [vmem:[#allocation8 + $0x8] sm:$0xff]
    %v1357 = vld [vmem:[#allocation8 + $0x10] sm:$0xff]
    %v1358 = vld [vmem:[#allocation8 + $0x18] sm:$0xff]
    %v1359 = vld [vmem:[#allocation8 + $0x20] sm:$0xff]
    %v1360 = vld [vmem:[#allocation8 + $0x28] sm:$0xff]
    %v1361 = vld [vmem:[#allocation8 + $0x30] sm:$0xff]
    %v1362 = vld [vmem:[#allocation8 + $0x38] sm:$0xff]
    %v1363 = vld [vmem:[#allocation8 + $0x40] sm:$0xff]
    %v1364 = vld [vmem:[#allocation8 + $0x48] sm:$0xff]
    %v1365 = vld [vmem:[#allocation8 + $0x50] sm:$0xff]
    %v1366 = vld [vmem:[#allocation8 + $0x58] sm:$0xff]
    %v1367 = vld [vmem:[#allocation8 + $0x60] sm:$0xff]
    %v1368 = vld [vmem:[#allocation8 + $0x68] sm:$0xff]
    %v1369 = vld [vmem:[#allocation8 + $0x70] sm:$0xff]
    %v1370 = vld [vmem:[#allocation8 + $0x78] sm:$0xff]
    %v1371 = vld [vmem:[#allocation8 + $0x80] sm:$0xff]
    %v1372 = vld [vmem:[#allocation8 + $0x88] sm:$0xff]
    %v1373 = vld [vmem:[#allocation8 + $0x90] sm:$0xff]
    %v1374 = vld [vmem:[#allocation8 + $0x98] sm:$0xff]
    %v1375 = vld [vmem:[#allocation8 + $0xa0] sm:$0xff]
    %v1376 = vld [vmem:[#allocation8 + $0xa8] sm:$0xff]
    %v1377 = vld [vmem:[#allocation8 + $0xb0] sm:$0xff]
    %v1378 = vld [vmem:[#allocation8 + $0xb8] sm:$0xff]
    %v1379 = vld [vmem:[#allocation8 + $0xc0] sm:$0xff]
    %v1380 = vld [vmem:[#allocation8 + $0xc8] sm:$0xff]
    %v1381 = vld [vmem:[#allocation8 + $0xd0] sm:$0xff]
    %v1382 = vld [vmem:[#allocation8 + $0xd8] sm:$0xff]
    %v1383 = vld [vmem:[#allocation8 + $0xe0] sm:$0xff]
    %v1384 = vld [vmem:[#allocation8 + $0xe8] sm:$0xff]
    %v1385 = vld [vmem:[#allocation8 + $0xf0] sm:$0xff]
    %v1386 = vld [vmem:[#allocation8 + $0xf8] sm:$0xff]
    %v1419 = vunpack.c.l.b16 %v1355
    %v1420 = vunpack.c.h.b16 %v1355
    %v1421 = vunpack.c.l.b16 %v1356
    %v1422 = vunpack.c.h.b16 %v1356
    %v1423 = vunpack.c.l.b16 %v1357
    %v1424 = vunpack.c.h.b16 %v1357
    %v1425 = vunpack.c.l.b16 %v1358
    %v1426 = vunpack.c.h.b16 %v1358
    %v1427 = vunpack.c.l.b16 %v1359
    %v1428 = vunpack.c.h.b16 %v1359
    %v1429 = vunpack.c.l.b16 %v1360
    %v1430 = vunpack.c.h.b16 %v1360
    %v1431 = vunpack.c.l.b16 %v1361
    %v1432 = vunpack.c.h.b16 %v1361
    %v1433 = vunpack.c.l.b16 %v1362
    %v1434 = vunpack.c.h.b16 %v1362
    %v1435 = vunpack.c.l.b16 %v1363
    %v1436 = vunpack.c.h.b16 %v1363
    %v1437 = vunpack.c.l.b16 %v1364
    %v1438 = vunpack.c.h.b16 %v1364
    %v1439 = vunpack.c.l.b16 %v1365
    %v1440 = vunpack.c.h.b16 %v1365
    %v1441 = vunpack.c.l.b16 %v1366
    %v1442 = vunpack.c.h.b16 %v1366
    %v1443 = vunpack.c.l.b16 %v1367
    %v1444 = vunpack.c.h.b16 %v1367
    %v1445 = vunpack.c.l.b16 %v1368
    %v1446 = vunpack.c.h.b16 %v1368
    %v1447 = vunpack.c.l.b16 %v1369
    %v1448 = vunpack.c.h.b16 %v1369
    %v1449 = vunpack.c.l.b16 %v1370
    %v1450 = vunpack.c.h.b16 %v1370
    %v1451 = vunpack.c.l.b16 %v1371
    %v1452 = vunpack.c.h.b16 %v1371
    %v1453 = vunpack.c.l.b16 %v1372
    %v1454 = vunpack.c.h.b16 %v1372
    %v1455 = vunpack.c.l.b16 %v1373
    %v1456 = vunpack.c.h.b16 %v1373
    %v1457 = vunpack.c.l.b16 %v1374
    %v1458 = vunpack.c.h.b16 %v1374
    %v1459 = vunpack.c.l.b16 %v1375
    %v1460 = vunpack.c.h.b16 %v1375
    %v1461 = vunpack.c.l.b16 %v1376
    %v1462 = vunpack.c.h.b16 %v1376
    %v1463 = vunpack.c.l.b16 %v1377
    %v1464 = vunpack.c.h.b16 %v1377
    %v1465 = vunpack.c.l.b16 %v1378
    %v1466 = vunpack.c.h.b16 %v1378
    %v1467 = vunpack.c.l.b16 %v1379
    %v1468 = vunpack.c.h.b16 %v1379
    %v1469 = vunpack.c.l.b16 %v1380
    %v1470 = vunpack.c.h.b16 %v1380
    %v1471 = vunpack.c.l.b16 %v1381
    %v1472 = vunpack.c.h.b16 %v1381
    %v1473 = vunpack.c.l.b16 %v1382
    %v1474 = vunpack.c.h.b16 %v1382
    %v1475 = vunpack.c.l.b16 %v1383
    %v1476 = vunpack.c.h.b16 %v1383
    %v1477 = vunpack.c.l.b16 %v1384
    %v1478 = vunpack.c.h.b16 %v1384
    %v1479 = vunpack.c.l.b16 %v1385
    %v1480 = vunpack.c.h.b16 %v1385
    %v1481 = vunpack.c.l.b16 %v1386
    %v1482 = vunpack.c.h.b16 %v1386
    %v1483 = vpack.c.b16 %v1423, %v1419
    %v1484 = vpack.c.b16 %v1424, %v1420
    %v1485 = vpack.c.b16 %v1425, %v1421
    %v1486 = vpack.c.b16 %v1426, %v1422
    %v1487 = vpack.c.b16 %v1431, %v1427
    %v1488 = vpack.c.b16 %v1432, %v1428
    %v1489 = vpack.c.b16 %v1433, %v1429
    %v1490 = vpack.c.b16 %v1434, %v1430
    %v1491 = vpack.c.b16 %v1439, %v1435
    %v1492 = vpack.c.b16 %v1440, %v1436
    %v1493 = vpack.c.b16 %v1441, %v1437
    %v1494 = vpack.c.b16 %v1442, %v1438
    %v1495 = vpack.c.b16 %v1447, %v1443
    %v1496 = vpack.c.b16 %v1448, %v1444
    %v1497 = vpack.c.b16 %v1449, %v1445
    %v1498 = vpack.c.b16 %v1450, %v1446
    %v1499 = vpack.c.b16 %v1455, %v1451
    %v1500 = vpack.c.b16 %v1456, %v1452
    %v1501 = vpack.c.b16 %v1457, %v1453
    %v1502 = vpack.c.b16 %v1458, %v1454
    %v1503 = vpack.c.b16 %v1463, %v1459
    %v1504 = vpack.c.b16 %v1464, %v1460
    %v1505 = vpack.c.b16 %v1465, %v1461
    %v1506 = vpack.c.b16 %v1466, %v1462
    %v1507 = vpack.c.b16 %v1471, %v1467
    %v1508 = vpack.c.b16 %v1472, %v1468
    %v1509 = vpack.c.b16 %v1473, %v1469
    %v1510 = vpack.c.b16 %v1474, %v1470
    %v1511 = vpack.c.b16 %v1479, %v1475
    %v1512 = vpack.c.b16 %v1480, %v1476
    %v1513 = vpack.c.b16 %v1481, %v1477
    %v1514 = vpack.c.b16 %v1482, %v1478
    %1547 = vmatpush.bf16.msra.mxu0 %v1511
    %1548 = vmatpush.bf16.msra.mxu0 %v1507
    %1549 = vmatpush.bf16.msra.mxu0 %v1503
    %1550 = vmatpush.bf16.msra.mxu0 %v1499
    %1551 = vmatpush.bf16.msra.mxu0 %v1495
    %1552 = vmatpush.bf16.msra.mxu0 %v1491
    %1553 = vmatpush.bf16.msra.mxu0 %v1487
    %1554 = vmatpush.bf16.msra.mxu0 %v1483
    %1555 = vmatmul.bf16.gmra.mxu0 0
    %v1556 = vpop.f32.mrf.mxu0
    %v1557 = vadd.f32 0.0, %v1556
    %v1558 = vpop.f32.mrf.mxu0
    %v1559 = vadd.f32 0.0, %v1558
    %1560 = vdwg.mxu0
    %1561 = vmatpush.bf16.msra.mxu0 %v1512
    %1562 = vmatpush.bf16.msra.mxu0 %v1508
    %1563 = vmatpush.bf16.msra.mxu0 %v1504
    %1564 = vmatpush.bf16.msra.mxu0 %v1500
    %1565 = vmatpush.bf16.msra.mxu0 %v1496
    %1566 = vmatpush.bf16.msra.mxu0 %v1492
    %1567 = vmatpush.bf16.msra.mxu0 %v1488
    %1568 = vmatpush.bf16.msra.mxu0 %v1484
    %1569 = vmatmul.bf16.gmra.mxu0 0
    %v1570 = vpop.f32.mrf.mxu0
    %v1571 = vadd.f32 0.0, %v1570
    %v1572 = vpop.f32.mrf.mxu0
    %v1573 = vadd.f32 0.0, %v1572
    %1574 = vdwg.mxu0
    %1575 = vmatpush.bf16.msra.mxu0 %v1513
    %1576 = vmatpush.bf16.msra.mxu0 %v1509
    %1577 = vmatpush.bf16.msra.mxu0 %v1505
    %1578 = vmatpush.bf16.msra.mxu0 %v1501
    %1579 = vmatpush.bf16.msra.mxu0 %v1497
    %1580 = vmatpush.bf16.msra.mxu0 %v1493
    %1581 = vmatpush.bf16.msra.mxu0 %v1489
    %1582 = vmatpush.bf16.msra.mxu0 %v1485
    %1583 = vmatmul.bf16.gmra.mxu0 0
    %v1584 = vpop.f32.mrf.mxu0
    %v1585 = vadd.f32 0.0, %v1584
    %v1586 = vpop.f32.mrf.mxu0
    %v1587 = vadd.f32 0.0, %v1586
    %1588 = vdwg.mxu0
    %1589 = vmatpush.bf16.msra.mxu0 %v1514
    %1590 = vmatpush.bf16.msra.mxu0 %v1510
    %1591 = vmatpush.bf16.msra.mxu0 %v1506
    %1592 = vmatpush.bf16.msra.mxu0 %v1502
    %1593 = vmatpush.bf16.msra.mxu0 %v1498
    %1594 = vmatpush.bf16.msra.mxu0 %v1494
    %1595 = vmatpush.bf16.msra.mxu0 %v1490
    %1596 = vmatpush.bf16.msra.mxu0 %v1486
    %1597 = vmatmul.bf16.gmra.mxu0 0
    %v1598 = vpop.f32.mrf.mxu0
    %v1599 = vadd.f32 0.0, %v1598
    %v1600 = vpop.f32.mrf.mxu0
    %v1601 = vadd.f32 0.0, %v1600
    %1602 = vdwg.mxu0
    %v1603 = vadd.f32 %v1347, %v1557
    %v1604 = vadd.f32 %v1348, %v1571
    %v1605 = vadd.f32 %v1349, %v1585
    %v1606 = vadd.f32 %v1350, %v1599
    %v1607 = vadd.f32 %v1351, %v1559
    %v1608 = vadd.f32 %v1352, %v1573
    %v1609 = vadd.f32 %v1353, %v1587
    %v1610 = vadd.f32 %v1354, %v1601
    %v1611 = vxor.u32 %v1603, 2147483648
    %v1612 = vxor.u32 %v1607, 2147483648
    %v1613 = vmul.f32 %v1611, 1.442695
    %v1614 = vpow.pop %v1613
    %v1615 = vmul.f32 %v1612, 1.442695
    %v1616 = vpow.pop %v1615
    %v1617 = vadd.f32 %v1614, 1.0
    %v1618 = vadd.f32 %v1616, 1.0
    %v1619 = vrcp.pop %v1617
    %v1620 = vmul.f32 %v1617, %v1619
    %v1621 = vsub.f32 1.0, %v1620
    %v1622 = vmul.f32 %v1619, %v1621
    %v1623 = vadd.f32 %v1619, %v1622
    %vm1624 = vweird.f32 %v1617
    %vm1625 = vweird.f32 %v1619
    %vm1626 = vmor %vm1624, %vm1625
    %v1627 = vsel %vm1626, %v1619, %v1623
    %v1628 = vand.u32 2147483647, %v1617
    %vm1629 = vcmp.eq.f32.partialorder %v1628, 8.507059e+37
    %v1630 = vand.u32 %v1617, 2147483648
    %v1631 = vor.u32 1.1754944e-38, %v1630
    %v1632 = vsel %vm1629, %v1631, %v1627
    %v1633 = vmul.f32 1.0, %v1632
    %v1634 = vrcp.pop %v1618
    %v1635 = vmul.f32 %v1618, %v1634
    %v1636 = vsub.f32 1.0, %v1635
    %v1637 = vmul.f32 %v1634, %v1636
    %v1638 = vadd.f32 %v1634, %v1637
    %vm1639 = vweird.f32 %v1618
    %vm1640 = vweird.f32 %v1634
    %vm1641 = vmor %vm1639, %vm1640
    %v1642 = vsel %vm1641, %v1634, %v1638
    %v1643 = vand.u32 2147483647, %v1618
    %vm1644 = vcmp.eq.f32.partialorder %v1643, 8.507059e+37
    %v1645 = vand.u32 %v1618, 2147483648
    %v1646 = vor.u32 1.1754944e-38, %v1645
    %v1647 = vsel %vm1644, %v1646, %v1642
    %v1648 = vmul.f32 1.0, %v1647
    %v1649 = vxor.u32 %v1604, 2147483648
    %v1650 = vxor.u32 %v1608, 2147483648
    %v1651 = vmul.f32 %v1649, 1.442695
    %v1652 = vpow.pop %v1651
    %v1653 = vmul.f32 %v1650, 1.442695
    %v1654 = vpow.pop %v1653
    %v1655 = vadd.f32 %v1652, 1.0
    %v1656 = vadd.f32 %v1654, 1.0
    %v1657 = vrcp.pop %v1655
    %v1658 = vmul.f32 %v1655, %v1657
    %v1659 = vsub.f32 1.0, %v1658
    %v1660 = vmul.f32 %v1657, %v1659
    %v1661 = vadd.f32 %v1657, %v1660
    %vm1662 = vweird.f32 %v1655
    %vm1663 = vweird.f32 %v1657
    %vm1664 = vmor %vm1662, %vm1663
    %v1665 = vsel %vm1664, %v1657, %v1661
    %v1666 = vand.u32 2147483647, %v1655
    %vm1667 = vcmp.eq.f32.partialorder %v1666, 8.507059e+37
    %v1668 = vand.u32 %v1655, 2147483648
    %v1669 = vor.u32 1.1754944e-38, %v1668
    %v1670 = vsel %vm1667, %v1669, %v1665
    %v1671 = vmul.f32 1.0, %v1670
    %v1672 = vrcp.pop %v1656
    %v1673 = vmul.f32 %v1656, %v1672
    %v1674 = vsub.f32 1.0, %v1673
    %v1675 = vmul.f32 %v1672, %v1674
    %v1676 = vadd.f32 %v1672, %v1675
    %vm1677 = vweird.f32 %v1656
    %vm1678 = vweird.f32 %v1672
    %vm1679 = vmor %vm1677, %vm1678
    %v1680 = vsel %vm1679, %v1672, %v1676
    %v1681 = vand.u32 2147483647, %v1656
    %vm1682 = vcmp.eq.f32.partialorder %v1681, 8.507059e+37
    %v1683 = vand.u32 %v1656, 2147483648
    %v1684 = vor.u32 1.1754944e-38, %v1683
    %v1685 = vsel %vm1682, %v1684, %v1680
    %v1686 = vmul.f32 1.0, %v1685
    %v1687 = vtanh.pop %v1605
    %v1688 = vtanh.pop %v1609
    %v1689 = vxor.u32 %v1606, 2147483648
    %v1690 = vxor.u32 %v1610, 2147483648
    %v1691 = vmul.f32 %v1689, 1.442695
    %v1692 = vpow.pop %v1691
    %v1693 = vmul.f32 %v1690, 1.442695
    %v1694 = vpow.pop %v1693
    %v1695 = vadd.f32 %v1692, 1.0
    %v1696 = vadd.f32 %v1694, 1.0
    %v1697 = vrcp.pop %v1695
    %v1698 = vmul.f32 %v1695, %v1697
    %v1699 = vsub.f32 1.0, %v1698
    %v1700 = vmul.f32 %v1697, %v1699
    %v1701 = vadd.f32 %v1697, %v1700
    %vm1702 = vweird.f32 %v1695
    %vm1703 = vweird.f32 %v1697
    %vm1704 = vmor %vm1702, %vm1703
    %v1705 = vsel %vm1704, %v1697, %v1701
    %v1706 = vand.u32 2147483647, %v1695
    %vm1707 = vcmp.eq.f32.partialorder %v1706, 8.507059e+37
    %v1708 = vand.u32 %v1695, 2147483648
    %v1709 = vor.u32 1.1754944e-38, %v1708
    %v1710 = vsel %vm1707, %v1709, %v1705
    %v1711 = vmul.f32 1.0, %v1710
    %v1712 = vrcp.pop %v1696
    %v1713 = vmul.f32 %v1696, %v1712
    %v1714 = vsub.f32 1.0, %v1713
    %v1715 = vmul.f32 %v1712, %v1714
    %v1716 = vadd.f32 %v1712, %v1715
    %vm1717 = vweird.f32 %v1696
    %vm1718 = vweird.f32 %v1712
    %vm1719 = vmor %vm1717, %vm1718
    %v1720 = vsel %vm1719, %v1712, %v1716
    %v1721 = vand.u32 2147483647, %v1696
    %vm1722 = vcmp.eq.f32.partialorder %v1721, 8.507059e+37
    %v1723 = vand.u32 %v1696, 2147483648
    %v1724 = vor.u32 1.1754944e-38, %v1723
    %v1725 = vsel %vm1722, %v1724, %v1720
    %v1726 = vmul.f32 1.0, %v1725
    %v1727 = vmul.f32 %v1671, 0.0
    %v1728 = vmul.f32 %v1686, 0.0
    %v1729 = vmul.f32 %v1633, %v1687
    %v1730 = vmul.f32 %v1648, %v1688
    %v1731 = vadd.f32 %v1727, %v1729
    %v1732 = vadd.f32 %v1728, %v1730
    %v1733 = vtanh.pop %v1731
    %v1734 = vtanh.pop %v1732
    %v1735 = vmul.f32 %v1711, %v1733
    %v1736 = vmul.f32 %v1726, %v1734
    %v1737 = vld [vmem:[#allocation2 + $0x40] sm:$0xff]
    %v1738 = vld [vmem:[#allocation2 + $0x48] sm:$0xff]
    %v1739 = vld [vmem:[#allocation2 + $0x50] sm:$0xff]
    %v1740 = vld [vmem:[#allocation2 + $0x58] sm:$0xff]
    %v1741 = vld [vmem:[#allocation2 + $0x60] sm:$0xff]
    %v1742 = vld [vmem:[#allocation2 + $0x68] sm:$0xff]
    %v1743 = vld [vmem:[#allocation2 + $0x70] sm:$0xff]
    %v1744 = vld [vmem:[#allocation2 + $0x78] sm:$0xff]
    %v1745 = vpack.c.bf16 %v1736, %v1735
    %1746 = vmatpush.bf16.msra.mxu0 %v1511
    %1747 = vmatpush.bf16.msra.mxu0 %v1507
    %1748 = vmatpush.bf16.msra.mxu0 %v1503
    %1749 = vmatpush.bf16.msra.mxu0 %v1499
    %1750 = vmatpush.bf16.msra.mxu0 %v1495
    %1751 = vmatpush.bf16.msra.mxu0 %v1491
    %1752 = vmatpush.bf16.msra.mxu0 %v1487
    %1753 = vmatpush.bf16.msra.mxu0 %v1483
    %1754 = vmatmul.bf16.gmra.mxu0 %v1745
    %v1755 = vpop.f32.mrf.mxu0
    %v1756 = vadd.f32 0.0, %v1755
    %v1757 = vpop.f32.mrf.mxu0
    %v1758 = vadd.f32 0.0, %v1757
    %1759 = vdwg.mxu0
    %1760 = vmatpush.bf16.msra.mxu0 %v1512
    %1761 = vmatpush.bf16.msra.mxu0 %v1508
    %1762 = vmatpush.bf16.msra.mxu0 %v1504
    %1763 = vmatpush.bf16.msra.mxu0 %v1500
    %1764 = vmatpush.bf16.msra.mxu0 %v1496
    %1765 = vmatpush.bf16.msra.mxu0 %v1492
    %1766 = vmatpush.bf16.msra.mxu0 %v1488
    %1767 = vmatpush.bf16.msra.mxu0 %v1484
    %1768 = vmatmul.bf16.gmra.mxu0 %v1745
    %v1769 = vpop.f32.mrf.mxu0
    %v1770 = vadd.f32 0.0, %v1769
    %v1771 = vpop.f32.mrf.mxu0
    %v1772 = vadd.f32 0.0, %v1771
    %1773 = vdwg.mxu0
    %1774 = vmatpush.bf16.msra.mxu0 %v1513
    %1775 = vmatpush.bf16.msra.mxu0 %v1509
    %1776 = vmatpush.bf16.msra.mxu0 %v1505
    %1777 = vmatpush.bf16.msra.mxu0 %v1501
    %1778 = vmatpush.bf16.msra.mxu0 %v1497
    %1779 = vmatpush.bf16.msra.mxu0 %v1493
    %1780 = vmatpush.bf16.msra.mxu0 %v1489
    %1781 = vmatpush.bf16.msra.mxu0 %v1485
    %1782 = vmatmul.bf16.gmra.mxu0 %v1745
    %v1783 = vpop.f32.mrf.mxu0
    %v1784 = vadd.f32 0.0, %v1783
    %v1785 = vpop.f32.mrf.mxu0
    %v1786 = vadd.f32 0.0, %v1785
    %1787 = vdwg.mxu0
    %1788 = vmatpush.bf16.msra.mxu0 %v1514
    %1789 = vmatpush.bf16.msra.mxu0 %v1510
    %1790 = vmatpush.bf16.msra.mxu0 %v1506
    %1791 = vmatpush.bf16.msra.mxu0 %v1502
    %1792 = vmatpush.bf16.msra.mxu0 %v1498
    %1793 = vmatpush.bf16.msra.mxu0 %v1494
    %1794 = vmatpush.bf16.msra.mxu0 %v1490
    %1795 = vmatpush.bf16.msra.mxu0 %v1486
    %1796 = vmatmul.bf16.gmra.mxu0 %v1745
    %v1797 = vpop.f32.mrf.mxu0
    %v1798 = vadd.f32 0.0, %v1797
    %v1799 = vpop.f32.mrf.mxu0
    %v1800 = vadd.f32 0.0, %v1799
    %1801 = vdwg.mxu0
    %v1802 = vadd.f32 %v1737, %v1756
    %v1803 = vadd.f32 %v1738, %v1770
    %v1804 = vadd.f32 %v1739, %v1784
    %v1805 = vadd.f32 %v1740, %v1798
    %v1806 = vadd.f32 %v1741, %v1758
    %v1807 = vadd.f32 %v1742, %v1772
    %v1808 = vadd.f32 %v1743, %v1786
    %v1809 = vadd.f32 %v1744, %v1800
    %v1810 = vxor.u32 %v1802, 2147483648
    %v1811 = vxor.u32 %v1806, 2147483648
    %v1812 = vmul.f32 %v1810, 1.442695
    %v1813 = vpow.pop %v1812
    %v1814 = vmul.f32 %v1811, 1.442695
    %v1815 = vpow.pop %v1814
    %v1816 = vadd.f32 %v1813, 1.0
    %v1817 = vadd.f32 %v1815, 1.0
    %v1818 = vrcp.pop %v1816
    %v1819 = vmul.f32 %v1816, %v1818
    %v1820 = vsub.f32 1.0, %v1819
    %v1821 = vmul.f32 %v1818, %v1820
    %v1822 = vadd.f32 %v1818, %v1821
    %vm1823 = vweird.f32 %v1816
    %vm1824 = vweird.f32 %v1818
    %vm1825 = vmor %vm1823, %vm1824
    %v1826 = vsel %vm1825, %v1818, %v1822
    %v1827 = vand.u32 2147483647, %v1816
    %vm1828 = vcmp.eq.f32.partialorder %v1827, 8.507059e+37
    %v1829 = vand.u32 %v1816, 2147483648
    %v1830 = vor.u32 1.1754944e-38, %v1829
    %v1831 = vsel %vm1828, %v1830, %v1826
    %v1832 = vmul.f32 1.0, %v1831
    %v1833 = vrcp.pop %v1817
    %v1834 = vmul.f32 %v1817, %v1833
    %v1835 = vsub.f32 1.0, %v1834
    %v1836 = vmul.f32 %v1833, %v1835
    %v1837 = vadd.f32 %v1833, %v1836
    %vm1838 = vweird.f32 %v1817
    %vm1839 = vweird.f32 %v1833
    %vm1840 = vmor %vm1838, %vm1839
    %v1841 = vsel %vm1840, %v1833, %v1837
    %v1842 = vand.u32 2147483647, %v1817
    %vm1843 = vcmp.eq.f32.partialorder %v1842, 8.507059e+37
    %v1844 = vand.u32 %v1817, 2147483648
    %v1845 = vor.u32 1.1754944e-38, %v1844
    %v1846 = vsel %vm1843, %v1845, %v1841
    %v1847 = vmul.f32 1.0, %v1846
    %v1848 = vxor.u32 %v1803, 2147483648
    %v1849 = vxor.u32 %v1807, 2147483648
    %v1850 = vmul.f32 %v1848, 1.442695
    %v1851 = vpow.pop %v1850
    %v1852 = vmul.f32 %v1849, 1.442695
    %v1853 = vpow.pop %v1852
    %v1854 = vadd.f32 %v1851, 1.0
    %v1855 = vadd.f32 %v1853, 1.0
    %v1856 = vrcp.pop %v1854
    %v1857 = vmul.f32 %v1854, %v1856
    %v1858 = vsub.f32 1.0, %v1857
    %v1859 = vmul.f32 %v1856, %v1858
    %v1860 = vadd.f32 %v1856, %v1859
    %vm1861 = vweird.f32 %v1854
    %vm1862 = vweird.f32 %v1856
    %vm1863 = vmor %vm1861, %vm1862
    %v1864 = vsel %vm1863, %v1856, %v1860
    %v1865 = vand.u32 2147483647, %v1854
    %vm1866 = vcmp.eq.f32.partialorder %v1865, 8.507059e+37
    %v1867 = vand.u32 %v1854, 2147483648
    %v1868 = vor.u32 1.1754944e-38, %v1867
    %v1869 = vsel %vm1866, %v1868, %v1864
    %v1870 = vmul.f32 1.0, %v1869
    %v1871 = vrcp.pop %v1855
    %v1872 = vmul.f32 %v1855, %v1871
    %v1873 = vsub.f32 1.0, %v1872
    %v1874 = vmul.f32 %v1871, %v1873
    %v1875 = vadd.f32 %v1871, %v1874
    %vm1876 = vweird.f32 %v1855
    %vm1877 = vweird.f32 %v1871
    %vm1878 = vmor %vm1876, %vm1877
    %v1879 = vsel %vm1878, %v1871, %v1875
    %v1880 = vand.u32 2147483647, %v1855
    %vm1881 = vcmp.eq.f32.partialorder %v1880, 8.507059e+37
    %v1882 = vand.u32 %v1855, 2147483648
    %v1883 = vor.u32 1.1754944e-38, %v1882
    %v1884 = vsel %vm1881, %v1883, %v1879
    %v1885 = vmul.f32 1.0, %v1884
    %v1886 = vtanh.pop %v1804
    %v1887 = vtanh.pop %v1808
    %v1888 = vxor.u32 %v1805, 2147483648
    %v1889 = vxor.u32 %v1809, 2147483648
    %v1890 = vmul.f32 %v1888, 1.442695
    %v1891 = vpow.pop %v1890
    %v1892 = vmul.f32 %v1889, 1.442695
    %v1893 = vpow.pop %v1892
    %v1894 = vadd.f32 %v1891, 1.0
    %v1895 = vadd.f32 %v1893, 1.0
    %v1896 = vrcp.pop %v1894
    %v1897 = vmul.f32 %v1894, %v1896
    %v1898 = vsub.f32 1.0, %v1897
    %v1899 = vmul.f32 %v1896, %v1898
    %v1900 = vadd.f32 %v1896, %v1899
    %vm1901 = vweird.f32 %v1894
    %vm1902 = vweird.f32 %v1896
    %vm1903 = vmor %vm1901, %vm1902
    %v1904 = vsel %vm1903, %v1896, %v1900
    %v1905 = vand.u32 2147483647, %v1894
    %vm1906 = vcmp.eq.f32.partialorder %v1905, 8.507059e+37
    %v1907 = vand.u32 %v1894, 2147483648
    %v1908 = vor.u32 1.1754944e-38, %v1907
    %v1909 = vsel %vm1906, %v1908, %v1904
    %v1910 = vmul.f32 1.0, %v1909
    %v1911 = vrcp.pop %v1895
    %v1912 = vmul.f32 %v1895, %v1911
    %v1913 = vsub.f32 1.0, %v1912
    %v1914 = vmul.f32 %v1911, %v1913
    %v1915 = vadd.f32 %v1911, %v1914
    %vm1916 = vweird.f32 %v1895
    %vm1917 = vweird.f32 %v1911
    %vm1918 = vmor %vm1916, %vm1917
    %v1919 = vsel %vm1918, %v1911, %v1915
    %v1920 = vand.u32 2147483647, %v1895
    %vm1921 = vcmp.eq.f32.partialorder %v1920, 8.507059e+37
    %v1922 = vand.u32 %v1895, 2147483648
    %v1923 = vor.u32 1.1754944e-38, %v1922
    %v1924 = vsel %vm1921, %v1923, %v1919
    %v1925 = vmul.f32 1.0, %v1924
    %v1926 = vmul.f32 %v1870, %v1731
    %v1927 = vmul.f32 %v1885, %v1732
    %v1928 = vmul.f32 %v1832, %v1886
    %v1929 = vmul.f32 %v1847, %v1887
    %v1930 = vadd.f32 %v1926, %v1928
    %v1931 = vadd.f32 %v1927, %v1929
    %v1932 = vtanh.pop %v1930
    %v1933 = vtanh.pop %v1931
    %v1934 = vmul.f32 %v1910, %v1932
    %v1935 = vmul.f32 %v1925, %v1933
    %v1936 = vld [vmem:[#allocation2 + $0x80] sm:$0xff]
    %v1937 = vld [vmem:[#allocation2 + $0x88] sm:$0xff]
    %v1938 = vld [vmem:[#allocation2 + $0x90] sm:$0xff]
    %v1939 = vld [vmem:[#allocation2 + $0x98] sm:$0xff]
    %v1940 = vld [vmem:[#allocation2 + $0xa0] sm:$0xff]
    %v1941 = vld [vmem:[#allocation2 + $0xa8] sm:$0xff]
    %v1942 = vld [vmem:[#allocation2 + $0xb0] sm:$0xff]
    %v1943 = vld [vmem:[#allocation2 + $0xb8] sm:$0xff]
    %v1944 = vpack.c.bf16 %v1935, %v1934
    %1945 = vmatpush.bf16.msra.mxu0 %v1511
    %1946 = vmatpush.bf16.msra.mxu0 %v1507
    %1947 = vmatpush.bf16.msra.mxu0 %v1503
    %1948 = vmatpush.bf16.msra.mxu0 %v1499
    %1949 = vmatpush.bf16.msra.mxu0 %v1495
    %1950 = vmatpush.bf16.msra.mxu0 %v1491
    %1951 = vmatpush.bf16.msra.mxu0 %v1487
    %1952 = vmatpush.bf16.msra.mxu0 %v1483
    %1953 = vmatmul.bf16.gmra.mxu0 %v1944
    %v1954 = vpop.f32.mrf.mxu0
    %v1955 = vadd.f32 0.0, %v1954
    %v1956 = vpop.f32.mrf.mxu0
    %v1957 = vadd.f32 0.0, %v1956
    %1958 = vdwg.mxu0
    %1959 = vmatpush.bf16.msra.mxu0 %v1512
    %1960 = vmatpush.bf16.msra.mxu0 %v1508
    %1961 = vmatpush.bf16.msra.mxu0 %v1504
    %1962 = vmatpush.bf16.msra.mxu0 %v1500
    %1963 = vmatpush.bf16.msra.mxu0 %v1496
    %1964 = vmatpush.bf16.msra.mxu0 %v1492
    %1965 = vmatpush.bf16.msra.mxu0 %v1488
    %1966 = vmatpush.bf16.msra.mxu0 %v1484
    %1967 = vmatmul.bf16.gmra.mxu0 %v1944
    %v1968 = vpop.f32.mrf.mxu0
    %v1969 = vadd.f32 0.0, %v1968
    %v1970 = vpop.f32.mrf.mxu0
    %v1971 = vadd.f32 0.0, %v1970
    %1972 = vdwg.mxu0
    %1973 = vmatpush.bf16.msra.mxu0 %v1513
    %1974 = vmatpush.bf16.msra.mxu0 %v1509
    %1975 = vmatpush.bf16.msra.mxu0 %v1505
    %1976 = vmatpush.bf16.msra.mxu0 %v1501
    %1977 = vmatpush.bf16.msra.mxu0 %v1497
    %1978 = vmatpush.bf16.msra.mxu0 %v1493
    %1979 = vmatpush.bf16.msra.mxu0 %v1489
    %1980 = vmatpush.bf16.msra.mxu0 %v1485
    %1981 = vmatmul.bf16.gmra.mxu0 %v1944
    %v1982 = vpop.f32.mrf.mxu0
    %v1983 = vadd.f32 0.0, %v1982
    %v1984 = vpop.f32.mrf.mxu0
    %v1985 = vadd.f32 0.0, %v1984
    %1986 = vdwg.mxu0
    %1987 = vmatpush.bf16.msra.mxu0 %v1514
    %1988 = vmatpush.bf16.msra.mxu0 %v1510
    %1989 = vmatpush.bf16.msra.mxu0 %v1506
    %1990 = vmatpush.bf16.msra.mxu0 %v1502
    %1991 = vmatpush.bf16.msra.mxu0 %v1498
    %1992 = vmatpush.bf16.msra.mxu0 %v1494
    %1993 = vmatpush.bf16.msra.mxu0 %v1490
    %1994 = vmatpush.bf16.msra.mxu0 %v1486
    %1995 = vmatmul.bf16.gmra.mxu0 %v1944
    %v1996 = vpop.f32.mrf.mxu0
    %v1997 = vadd.f32 0.0, %v1996
    %v1998 = vpop.f32.mrf.mxu0
    %v1999 = vadd.f32 0.0, %v1998
    %2000 = vdwg.mxu0
    %v2001 = vadd.f32 %v1936, %v1955
    %v2002 = vadd.f32 %v1937, %v1969
    %v2003 = vadd.f32 %v1938, %v1983
    %v2004 = vadd.f32 %v1939, %v1997
    %v2005 = vadd.f32 %v1940, %v1957
    %v2006 = vadd.f32 %v1941, %v1971
    %v2007 = vadd.f32 %v1942, %v1985
    %v2008 = vadd.f32 %v1943, %v1999
    %v2009 = vxor.u32 %v2001, 2147483648
    %v2010 = vxor.u32 %v2005, 2147483648
    %v2011 = vmul.f32 %v2009, 1.442695
    %v2012 = vpow.pop %v2011
    %v2013 = vmul.f32 %v2010, 1.442695
    %v2014 = vpow.pop %v2013
    %v2015 = vadd.f32 %v2012, 1.0
    %v2016 = vadd.f32 %v2014, 1.0
    %v2017 = vrcp.pop %v2015
    %v2018 = vmul.f32 %v2015, %v2017
    %v2019 = vsub.f32 1.0, %v2018
    %v2020 = vmul.f32 %v2017, %v2019
    %v2021 = vadd.f32 %v2017, %v2020
    %vm2022 = vweird.f32 %v2015
    %vm2023 = vweird.f32 %v2017
    %vm2024 = vmor %vm2022, %vm2023
    %v2025 = vsel %vm2024, %v2017, %v2021
    %v2026 = vand.u32 2147483647, %v2015
    %vm2027 = vcmp.eq.f32.partialorder %v2026, 8.507059e+37
    %v2028 = vand.u32 %v2015, 2147483648
    %v2029 = vor.u32 1.1754944e-38, %v2028
    %v2030 = vsel %vm2027, %v2029, %v2025
    %v2031 = vmul.f32 1.0, %v2030
    %v2032 = vrcp.pop %v2016
    %v2033 = vmul.f32 %v2016, %v2032
    %v2034 = vsub.f32 1.0, %v2033
    %v2035 = vmul.f32 %v2032, %v2034
    %v2036 = vadd.f32 %v2032, %v2035
    %vm2037 = vweird.f32 %v2016
    %vm2038 = vweird.f32 %v2032
    %vm2039 = vmor %vm2037, %vm2038
    %v2040 = vsel %vm2039, %v2032, %v2036
    %v2041 = vand.u32 2147483647, %v2016
    %vm2042 = vcmp.eq.f32.partialorder %v2041, 8.507059e+37
    %v2043 = vand.u32 %v2016, 2147483648
    %v2044 = vor.u32 1.1754944e-38, %v2043
    %v2045 = vsel %vm2042, %v2044, %v2040
    %v2046 = vmul.f32 1.0, %v2045
    %v2047 = vxor.u32 %v2002, 2147483648
    %v2048 = vxor.u32 %v2006, 2147483648
    %v2049 = vmul.f32 %v2047, 1.442695
    %v2050 = vpow.pop %v2049
    %v2051 = vmul.f32 %v2048, 1.442695
    %v2052 = vpow.pop %v2051
    %v2053 = vadd.f32 %v2050, 1.0
    %v2054 = vadd.f32 %v2052, 1.0
    %v2055 = vrcp.pop %v2053
    %v2056 = vmul.f32 %v2053, %v2055
    %v2057 = vsub.f32 1.0, %v2056
    %v2058 = vmul.f32 %v2055, %v2057
    %v2059 = vadd.f32 %v2055, %v2058
    %vm2060 = vweird.f32 %v2053
    %vm2061 = vweird.f32 %v2055
    %vm2062 = vmor %vm2060, %vm2061
    %v2063 = vsel %vm2062, %v2055, %v2059
    %v2064 = vand.u32 2147483647, %v2053
    %vm2065 = vcmp.eq.f32.partialorder %v2064, 8.507059e+37
    %v2066 = vand.u32 %v2053, 2147483648
    %v2067 = vor.u32 1.1754944e-38, %v2066
    %v2068 = vsel %vm2065, %v2067, %v2063
    %v2069 = vmul.f32 1.0, %v2068
    %v2070 = vrcp.pop %v2054
    %v2071 = vmul.f32 %v2054, %v2070
    %v2072 = vsub.f32 1.0, %v2071
    %v2073 = vmul.f32 %v2070, %v2072
    %v2074 = vadd.f32 %v2070, %v2073
    %vm2075 = vweird.f32 %v2054
    %vm2076 = vweird.f32 %v2070
    %vm2077 = vmor %vm2075, %vm2076
    %v2078 = vsel %vm2077, %v2070, %v2074
    %v2079 = vand.u32 2147483647, %v2054
    %vm2080 = vcmp.eq.f32.partialorder %v2079, 8.507059e+37
    %v2081 = vand.u32 %v2054, 2147483648
    %v2082 = vor.u32 1.1754944e-38, %v2081
    %v2083 = vsel %vm2080, %v2082, %v2078
    %v2084 = vmul.f32 1.0, %v2083
    %v2085 = vtanh.pop %v2003
    %v2086 = vtanh.pop %v2007
    %v2087 = vxor.u32 %v2004, 2147483648
    %v2088 = vxor.u32 %v2008, 2147483648
    %v2089 = vmul.f32 %v2087, 1.442695
    %v2090 = vpow.pop %v2089
    %v2091 = vmul.f32 %v2088, 1.442695
    %v2092 = vpow.pop %v2091
    %v2093 = vadd.f32 %v2090, 1.0
    %v2094 = vadd.f32 %v2092, 1.0
    %v2095 = vrcp.pop %v2093
    %v2096 = vmul.f32 %v2093, %v2095
    %v2097 = vsub.f32 1.0, %v2096
    %v2098 = vmul.f32 %v2095, %v2097
    %v2099 = vadd.f32 %v2095, %v2098
    %vm2100 = vweird.f32 %v2093
    %vm2101 = vweird.f32 %v2095
    %vm2102 = vmor %vm2100, %vm2101
    %v2103 = vsel %vm2102, %v2095, %v2099
    %v2104 = vand.u32 2147483647, %v2093
    %vm2105 = vcmp.eq.f32.partialorder %v2104, 8.507059e+37
    %v2106 = vand.u32 %v2093, 2147483648
    %v2107 = vor.u32 1.1754944e-38, %v2106
    %v2108 = vsel %vm2105, %v2107, %v2103
    %v2109 = vmul.f32 1.0, %v2108
    %v2110 = vrcp.pop %v2094
    %v2111 = vmul.f32 %v2094, %v2110
    %v2112 = vsub.f32 1.0, %v2111
    %v2113 = vmul.f32 %v2110, %v2112
    %v2114 = vadd.f32 %v2110, %v2113
    %vm2115 = vweird.f32 %v2094
    %vm2116 = vweird.f32 %v2110
    %vm2117 = vmor %vm2115, %vm2116
    %v2118 = vsel %vm2117, %v2110, %v2114
    %v2119 = vand.u32 2147483647, %v2094
    %vm2120 = vcmp.eq.f32.partialorder %v2119, 8.507059e+37
    %v2121 = vand.u32 %v2094, 2147483648
    %v2122 = vor.u32 1.1754944e-38, %v2121
    %v2123 = vsel %vm2120, %v2122, %v2118
    %v2124 = vmul.f32 1.0, %v2123
    %v2125 = vmul.f32 %v2069, %v1930
    %v2126 = vmul.f32 %v2084, %v1931
    %v2127 = vmul.f32 %v2031, %v2085
    %v2128 = vmul.f32 %v2046, %v2086
    %v2129 = vadd.f32 %v2125, %v2127
    %v2130 = vadd.f32 %v2126, %v2128
    %v2131 = vtanh.pop %v2129
    %v2132 = vtanh.pop %v2130
    %v2133 = vmul.f32 %v2109, %v2131
    %v2134 = vmul.f32 %v2124, %v2132
    %v2135 = vld [vmem:[#allocation2 + $0xc0] sm:$0xff]
    %v2136 = vld [vmem:[#allocation2 + $0xc8] sm:$0xff]
    %v2137 = vld [vmem:[#allocation2 + $0xd0] sm:$0xff]
    %v2138 = vld [vmem:[#allocation2 + $0xd8] sm:$0xff]
    %v2139 = vld [vmem:[#allocation2 + $0xe0] sm:$0xff]
    %v2140 = vld [vmem:[#allocation2 + $0xe8] sm:$0xff]
    %v2141 = vld [vmem:[#allocation2 + $0xf0] sm:$0xff]
    %v2142 = vld [vmem:[#allocation2 + $0xf8] sm:$0xff]
    %v2143 = vpack.c.bf16 %v2134, %v2133
    %2144 = vmatpush.bf16.msra.mxu0 %v1511
    %2145 = vmatpush.bf16.msra.mxu0 %v1507
    %2146 = vmatpush.bf16.msra.mxu0 %v1503
    %2147 = vmatpush.bf16.msra.mxu0 %v1499
    %2148 = vmatpush.bf16.msra.mxu0 %v1495
    %2149 = vmatpush.bf16.msra.mxu0 %v1491
    %2150 = vmatpush.bf16.msra.mxu0 %v1487
    %2151 = vmatpush.bf16.msra.mxu0 %v1483
    %2152 = vmatmul.bf16.gmra.mxu0 %v2143
    %v2153 = vpop.f32.mrf.mxu0
    %v2154 = vadd.f32 0.0, %v2153
    %v2155 = vpop.f32.mrf.mxu0
    %v2156 = vadd.f32 0.0, %v2155
    %2157 = vdwg.mxu0
    %2158 = vmatpush.bf16.msra.mxu0 %v1512
    %2159 = vmatpush.bf16.msra.mxu0 %v1508
    %2160 = vmatpush.bf16.msra.mxu0 %v1504
    %2161 = vmatpush.bf16.msra.mxu0 %v1500
    %2162 = vmatpush.bf16.msra.mxu0 %v1496
    %2163 = vmatpush.bf16.msra.mxu0 %v1492
    %2164 = vmatpush.bf16.msra.mxu0 %v1488
    %2165 = vmatpush.bf16.msra.mxu0 %v1484
    %2166 = vmatmul.bf16.gmra.mxu0 %v2143
    %v2167 = vpop.f32.mrf.mxu0
    %v2168 = vadd.f32 0.0, %v2167
    %v2169 = vpop.f32.mrf.mxu0
    %v2170 = vadd.f32 0.0, %v2169
    %2171 = vdwg.mxu0
    %2172 = vmatpush.bf16.msra.mxu0 %v1513
    %2173 = vmatpush.bf16.msra.mxu0 %v1509
    %2174 = vmatpush.bf16.msra.mxu0 %v1505
    %2175 = vmatpush.bf16.msra.mxu0 %v1501
    %2176 = vmatpush.bf16.msra.mxu0 %v1497
    %2177 = vmatpush.bf16.msra.mxu0 %v1493
    %2178 = vmatpush.bf16.msra.mxu0 %v1489
    %2179 = vmatpush.bf16.msra.mxu0 %v1485
    %2180 = vmatmul.bf16.gmra.mxu0 %v2143
    %v2181 = vpop.f32.mrf.mxu0
    %v2182 = vadd.f32 0.0, %v2181
    %v2183 = vpop.f32.mrf.mxu0
    %v2184 = vadd.f32 0.0, %v2183
    %2185 = vdwg.mxu0
    %2186 = vmatpush.bf16.msra.mxu0 %v1514
    %2187 = vmatpush.bf16.msra.mxu0 %v1510
    %2188 = vmatpush.bf16.msra.mxu0 %v1506
    %2189 = vmatpush.bf16.msra.mxu0 %v1502
    %2190 = vmatpush.bf16.msra.mxu0 %v1498
    %2191 = vmatpush.bf16.msra.mxu0 %v1494
    %2192 = vmatpush.bf16.msra.mxu0 %v1490
    %2193 = vmatpush.bf16.msra.mxu0 %v1486
    %2194 = vmatmul.bf16.gmra.mxu0 %v2143
    %v2195 = vpop.f32.mrf.mxu0
    %v2196 = vadd.f32 0.0, %v2195
    %v2197 = vpop.f32.mrf.mxu0
    %v2198 = vadd.f32 0.0, %v2197
    %2199 = vdwg.mxu0
    %v2200 = vadd.f32 %v2135, %v2154
    %v2201 = vadd.f32 %v2136, %v2168
    %v2202 = vadd.f32 %v2137, %v2182
    %v2203 = vadd.f32 %v2138, %v2196
    %v2204 = vadd.f32 %v2139, %v2156
    %v2205 = vadd.f32 %v2140, %v2170
    %v2206 = vadd.f32 %v2141, %v2184
    %v2207 = vadd.f32 %v2142, %v2198
    %v2208 = vxor.u32 %v2200, 2147483648
    %v2209 = vxor.u32 %v2204, 2147483648
    %v2210 = vmul.f32 %v2208, 1.442695
    %v2211 = vpow.pop %v2210
    %v2212 = vmul.f32 %v2209, 1.442695
    %v2213 = vpow.pop %v2212
    %v2214 = vadd.f32 %v2211, 1.0
    %v2215 = vadd.f32 %v2213, 1.0
    %v2216 = vrcp.pop %v2214
    %v2217 = vmul.f32 %v2214, %v2216
    %v2218 = vsub.f32 1.0, %v2217
    %v2219 = vmul.f32 %v2216, %v2218
    %v2220 = vadd.f32 %v2216, %v2219
    %vm2221 = vweird.f32 %v2214
    %vm2222 = vweird.f32 %v2216
    %vm2223 = vmor %vm2221, %vm2222
    %v2224 = vsel %vm2223, %v2216, %v2220
    %v2225 = vand.u32 2147483647, %v2214
    %vm2226 = vcmp.eq.f32.partialorder %v2225, 8.507059e+37
    %v2227 = vand.u32 %v2214, 2147483648
    %v2228 = vor.u32 1.1754944e-38, %v2227
    %v2229 = vsel %vm2226, %v2228, %v2224
    %v2230 = vmul.f32 1.0, %v2229
    %v2231 = vrcp.pop %v2215
    %v2232 = vmul.f32 %v2215, %v2231
    %v2233 = vsub.f32 1.0, %v2232
    %v2234 = vmul.f32 %v2231, %v2233
    %v2235 = vadd.f32 %v2231, %v2234
    %vm2236 = vweird.f32 %v2215
    %vm2237 = vweird.f32 %v2231
    %vm2238 = vmor %vm2236, %vm2237
    %v2239 = vsel %vm2238, %v2231, %v2235
    %v2240 = vand.u32 2147483647, %v2215
    %vm2241 = vcmp.eq.f32.partialorder %v2240, 8.507059e+37
    %v2242 = vand.u32 %v2215, 2147483648
    %v2243 = vor.u32 1.1754944e-38, %v2242
    %v2244 = vsel %vm2241, %v2243, %v2239
    %v2245 = vmul.f32 1.0, %v2244
    %v2246 = vxor.u32 %v2201, 2147483648
    %v2247 = vxor.u32 %v2205, 2147483648
    %v2248 = vmul.f32 %v2246, 1.442695
    %v2249 = vpow.pop %v2248
    %v2250 = vmul.f32 %v2247, 1.442695
    %v2251 = vpow.pop %v2250
    %v2252 = vadd.f32 %v2249, 1.0
    %v2253 = vadd.f32 %v2251, 1.0
    %v2254 = vrcp.pop %v2252
    %v2255 = vmul.f32 %v2252, %v2254
    %v2256 = vsub.f32 1.0, %v2255
    %v2257 = vmul.f32 %v2254, %v2256
    %v2258 = vadd.f32 %v2254, %v2257
    %vm2259 = vweird.f32 %v2252
    %vm2260 = vweird.f32 %v2254
    %vm2261 = vmor %vm2259, %vm2260
    %v2262 = vsel %vm2261, %v2254, %v2258
    %v2263 = vand.u32 2147483647, %v2252
    %vm2264 = vcmp.eq.f32.partialorder %v2263, 8.507059e+37
    %v2265 = vand.u32 %v2252, 2147483648
    %v2266 = vor.u32 1.1754944e-38, %v2265
    %v2267 = vsel %vm2264, %v2266, %v2262
    %v2268 = vmul.f32 1.0, %v2267
    %v2269 = vrcp.pop %v2253
    %v2270 = vmul.f32 %v2253, %v2269
    %v2271 = vsub.f32 1.0, %v2270
    %v2272 = vmul.f32 %v2269, %v2271
    %v2273 = vadd.f32 %v2269, %v2272
    %vm2274 = vweird.f32 %v2253
    %vm2275 = vweird.f32 %v2269
    %vm2276 = vmor %vm2274, %vm2275
    %v2277 = vsel %vm2276, %v2269, %v2273
    %v2278 = vand.u32 2147483647, %v2253
    %vm2279 = vcmp.eq.f32.partialorder %v2278, 8.507059e+37
    %v2280 = vand.u32 %v2253, 2147483648
    %v2281 = vor.u32 1.1754944e-38, %v2280
    %v2282 = vsel %vm2279, %v2281, %v2277
    %v2283 = vmul.f32 1.0, %v2282
    %v2284 = vtanh.pop %v2202
    %v2285 = vtanh.pop %v2206
    %v2286 = vxor.u32 %v2203, 2147483648
    %v2287 = vxor.u32 %v2207, 2147483648
    %v2288 = vmul.f32 %v2286, 1.442695
    %v2289 = vpow.pop %v2288
    %v2290 = vmul.f32 %v2287, 1.442695
    %v2291 = vpow.pop %v2290
    %v2292 = vadd.f32 %v2289, 1.0
    %v2293 = vadd.f32 %v2291, 1.0
    %v2294 = vrcp.pop %v2292
    %v2295 = vmul.f32 %v2292, %v2294
    %v2296 = vsub.f32 1.0, %v2295
    %v2297 = vmul.f32 %v2294, %v2296
    %v2298 = vadd.f32 %v2294, %v2297
    %vm2299 = vweird.f32 %v2292
    %vm2300 = vweird.f32 %v2294
    %vm2301 = vmor %vm2299, %vm2300
    %v2302 = vsel %vm2301, %v2294, %v2298
    %v2303 = vand.u32 2147483647, %v2292
    %vm2304 = vcmp.eq.f32.partialorder %v2303, 8.507059e+37
    %v2305 = vand.u32 %v2292, 2147483648
    %v2306 = vor.u32 1.1754944e-38, %v2305
    %v2307 = vsel %vm2304, %v2306, %v2302
    %v2308 = vmul.f32 1.0, %v2307
    %v2309 = vrcp.pop %v2293
    %v2310 = vmul.f32 %v2293, %v2309
    %v2311 = vsub.f32 1.0, %v2310
    %v2312 = vmul.f32 %v2309, %v2311
    %v2313 = vadd.f32 %v2309, %v2312
    %vm2314 = vweird.f32 %v2293
    %vm2315 = vweird.f32 %v2309
    %vm2316 = vmor %vm2314, %vm2315
    %v2317 = vsel %vm2316, %v2309, %v2313
    %v2318 = vand.u32 2147483647, %v2293
    %vm2319 = vcmp.eq.f32.partialorder %v2318, 8.507059e+37
    %v2320 = vand.u32 %v2293, 2147483648
    %v2321 = vor.u32 1.1754944e-38, %v2320
    %v2322 = vsel %vm2319, %v2321, %v2317
    %v2323 = vmul.f32 1.0, %v2322
    %v2324 = vmul.f32 %v2268, %v2129
    %v2325 = vmul.f32 %v2283, %v2130
    %v2326 = vmul.f32 %v2230, %v2284
    %v2327 = vmul.f32 %v2245, %v2285
    %v2328 = vadd.f32 %v2324, %v2326
    %v2329 = vadd.f32 %v2325, %v2327
    %v2330 = vtanh.pop %v2328
    %v2331 = vtanh.pop %v2329
    %v2332 = vmul.f32 %v2308, %v2330
    %v2333 = vmul.f32 %v2323, %v2331
    %v2334 = vld [vmem:[#allocation2 + $0x100] sm:$0xff]
    %v2335 = vld [vmem:[#allocation2 + $0x108] sm:$0xff]
    %v2336 = vld [vmem:[#allocation2 + $0x110] sm:$0xff]
    %v2337 = vld [vmem:[#allocation2 + $0x118] sm:$0xff]
    %v2338 = vld [vmem:[#allocation2 + $0x120] sm:$0xff]
    %v2339 = vld [vmem:[#allocation2 + $0x128] sm:$0xff]
    %v2340 = vld [vmem:[#allocation2 + $0x130] sm:$0xff]
    %v2341 = vld [vmem:[#allocation2 + $0x138] sm:$0xff]
    %v2342 = vpack.c.bf16 %v2333, %v2332
    %2343 = vmatpush.bf16.msra.mxu0 %v1511
    %2344 = vmatpush.bf16.msra.mxu0 %v1507
    %2345 = vmatpush.bf16.msra.mxu0 %v1503
    %2346 = vmatpush.bf16.msra.mxu0 %v1499
    %2347 = vmatpush.bf16.msra.mxu0 %v1495
    %2348 = vmatpush.bf16.msra.mxu0 %v1491
    %2349 = vmatpush.bf16.msra.mxu0 %v1487
    %2350 = vmatpush.bf16.msra.mxu0 %v1483
    %2351 = vmatmul.bf16.gmra.mxu0 %v2342
    %v2352 = vpop.f32.mrf.mxu0
    %v2353 = vadd.f32 0.0, %v2352
    %v2354 = vpop.f32.mrf.mxu0
    %v2355 = vadd.f32 0.0, %v2354
    %2356 = vdwg.mxu0
    %2357 = vmatpush.bf16.msra.mxu0 %v1512
    %2358 = vmatpush.bf16.msra.mxu0 %v1508
    %2359 = vmatpush.bf16.msra.mxu0 %v1504
    %2360 = vmatpush.bf16.msra.mxu0 %v1500
    %2361 = vmatpush.bf16.msra.mxu0 %v1496
    %2362 = vmatpush.bf16.msra.mxu0 %v1492
    %2363 = vmatpush.bf16.msra.mxu0 %v1488
    %2364 = vmatpush.bf16.msra.mxu0 %v1484
    %2365 = vmatmul.bf16.gmra.mxu0 %v2342
    %v2366 = vpop.f32.mrf.mxu0
    %v2367 = vadd.f32 0.0, %v2366
    %v2368 = vpop.f32.mrf.mxu0
    %v2369 = vadd.f32 0.0, %v2368
    %2370 = vdwg.mxu0
    %2371 = vmatpush.bf16.msra.mxu0 %v1513
    %2372 = vmatpush.bf16.msra.mxu0 %v1509
    %2373 = vmatpush.bf16.msra.mxu0 %v1505
    %2374 = vmatpush.bf16.msra.mxu0 %v1501
    %2375 = vmatpush.bf16.msra.mxu0 %v1497
    %2376 = vmatpush.bf16.msra.mxu0 %v1493
    %2377 = vmatpush.bf16.msra.mxu0 %v1489
    %2378 = vmatpush.bf16.msra.mxu0 %v1485
    %2379 = vmatmul.bf16.gmra.mxu0 %v2342
    %v2380 = vpop.f32.mrf.mxu0
    %v2381 = vadd.f32 0.0, %v2380
    %v2382 = vpop.f32.mrf.mxu0
    %v2383 = vadd.f32 0.0, %v2382
    %2384 = vdwg.mxu0
    %2385 = vmatpush.bf16.msra.mxu0 %v1514
    %2386 = vmatpush.bf16.msra.mxu0 %v1510
    %2387 = vmatpush.bf16.msra.mxu0 %v1506
    %2388 = vmatpush.bf16.msra.mxu0 %v1502
    %2389 = vmatpush.bf16.msra.mxu0 %v1498
    %2390 = vmatpush.bf16.msra.mxu0 %v1494
    %2391 = vmatpush.bf16.msra.mxu0 %v1490
    %2392 = vmatpush.bf16.msra.mxu0 %v1486
    %2393 = vmatmul.bf16.gmra.mxu0 %v2342
    %v2394 = vpop.f32.mrf.mxu0
    %v2395 = vadd.f32 0.0, %v2394
    %v2396 = vpop.f32.mrf.mxu0
    %v2397 = vadd.f32 0.0, %v2396
    %2398 = vdwg.mxu0
    %v2399 = vadd.f32 %v2334, %v2353
    %v2400 = vadd.f32 %v2335, %v2367
    %v2401 = vadd.f32 %v2336, %v2381
    %v2402 = vadd.f32 %v2337, %v2395
    %v2403 = vadd.f32 %v2338, %v2355
    %v2404 = vadd.f32 %v2339, %v2369
    %v2405 = vadd.f32 %v2340, %v2383
    %v2406 = vadd.f32 %v2341, %v2397
    %v2407 = vxor.u32 %v2399, 2147483648
    %v2408 = vxor.u32 %v2403, 2147483648
    %v2409 = vmul.f32 %v2407, 1.442695
    %v2410 = vpow.pop %v2409
    %v2411 = vmul.f32 %v2408, 1.442695
    %v2412 = vpow.pop %v2411
    %v2413 = vadd.f32 %v2410, 1.0
    %v2414 = vadd.f32 %v2412, 1.0
    %v2415 = vrcp.pop %v2413
    %v2416 = vmul.f32 %v2413, %v2415
    %v2417 = vsub.f32 1.0, %v2416
    %v2418 = vmul.f32 %v2415, %v2417
    %v2419 = vadd.f32 %v2415, %v2418
    %vm2420 = vweird.f32 %v2413
    %vm2421 = vweird.f32 %v2415
    %vm2422 = vmor %vm2420, %vm2421
    %v2423 = vsel %vm2422, %v2415, %v2419
    %v2424 = vand.u32 2147483647, %v2413
    %vm2425 = vcmp.eq.f32.partialorder %v2424, 8.507059e+37
    %v2426 = vand.u32 %v2413, 2147483648
    %v2427 = vor.u32 1.1754944e-38, %v2426
    %v2428 = vsel %vm2425, %v2427, %v2423
    %v2429 = vmul.f32 1.0, %v2428
    %v2430 = vrcp.pop %v2414
    %v2431 = vmul.f32 %v2414, %v2430
    %v2432 = vsub.f32 1.0, %v2431
    %v2433 = vmul.f32 %v2430, %v2432
    %v2434 = vadd.f32 %v2430, %v2433
    %vm2435 = vweird.f32 %v2414
    %vm2436 = vweird.f32 %v2430
    %vm2437 = vmor %vm2435, %vm2436
    %v2438 = vsel %vm2437, %v2430, %v2434
    %v2439 = vand.u32 2147483647, %v2414
    %vm2440 = vcmp.eq.f32.partialorder %v2439, 8.507059e+37
    %v2441 = vand.u32 %v2414, 2147483648
    %v2442 = vor.u32 1.1754944e-38, %v2441
    %v2443 = vsel %vm2440, %v2442, %v2438
    %v2444 = vmul.f32 1.0, %v2443
    %v2445 = vxor.u32 %v2400, 2147483648
    %v2446 = vxor.u32 %v2404, 2147483648
    %v2447 = vmul.f32 %v2445, 1.442695
    %v2448 = vpow.pop %v2447
    %v2449 = vmul.f32 %v2446, 1.442695
    %v2450 = vpow.pop %v2449
    %v2451 = vadd.f32 %v2448, 1.0
    %v2452 = vadd.f32 %v2450, 1.0
    %v2453 = vrcp.pop %v2451
    %v2454 = vmul.f32 %v2451, %v2453
    %v2455 = vsub.f32 1.0, %v2454
    %v2456 = vmul.f32 %v2453, %v2455
    %v2457 = vadd.f32 %v2453, %v2456
    %vm2458 = vweird.f32 %v2451
    %vm2459 = vweird.f32 %v2453
    %vm2460 = vmor %vm2458, %vm2459
    %v2461 = vsel %vm2460, %v2453, %v2457
    %v2462 = vand.u32 2147483647, %v2451
    %vm2463 = vcmp.eq.f32.partialorder %v2462, 8.507059e+37
    %v2464 = vand.u32 %v2451, 2147483648
    %v2465 = vor.u32 1.1754944e-38, %v2464
    %v2466 = vsel %vm2463, %v2465, %v2461
    %v2467 = vmul.f32 1.0, %v2466
    %v2468 = vrcp.pop %v2452
    %v2469 = vmul.f32 %v2452, %v2468
    %v2470 = vsub.f32 1.0, %v2469
    %v2471 = vmul.f32 %v2468, %v2470
    %v2472 = vadd.f32 %v2468, %v2471
    %vm2473 = vweird.f32 %v2452
    %vm2474 = vweird.f32 %v2468
    %vm2475 = vmor %vm2473, %vm2474
    %v2476 = vsel %vm2475, %v2468, %v2472
    %v2477 = vand.u32 2147483647, %v2452
    %vm2478 = vcmp.eq.f32.partialorder %v2477, 8.507059e+37
    %v2479 = vand.u32 %v2452, 2147483648
    %v2480 = vor.u32 1.1754944e-38, %v2479
    %v2481 = vsel %vm2478, %v2480, %v2476
    %v2482 = vmul.f32 1.0, %v2481
    %v2483 = vtanh.pop %v2401
    %v2484 = vtanh.pop %v2405
    %v2485 = vxor.u32 %v2402, 2147483648
    %v2486 = vxor.u32 %v2406, 2147483648
    %v2487 = vmul.f32 %v2485, 1.442695
    %v2488 = vpow.pop %v2487
    %v2489 = vmul.f32 %v2486, 1.442695
    %v2490 = vpow.pop %v2489
    %v2491 = vadd.f32 %v2488, 1.0
    %v2492 = vadd.f32 %v2490, 1.0
    %v2493 = vrcp.pop %v2491
    %v2494 = vmul.f32 %v2491, %v2493
    %v2495 = vsub.f32 1.0, %v2494
    %v2496 = vmul.f32 %v2493, %v2495
    %v2497 = vadd.f32 %v2493, %v2496
    %vm2498 = vweird.f32 %v2491
    %vm2499 = vweird.f32 %v2493
    %vm2500 = vmor %vm2498, %vm2499
    %v2501 = vsel %vm2500, %v2493, %v2497
    %v2502 = vand.u32 2147483647, %v2491
    %vm2503 = vcmp.eq.f32.partialorder %v2502, 8.507059e+37
    %v2504 = vand.u32 %v2491, 2147483648
    %v2505 = vor.u32 1.1754944e-38, %v2504
    %v2506 = vsel %vm2503, %v2505, %v2501
    %v2507 = vmul.f32 1.0, %v2506
    %v2508 = vrcp.pop %v2492
    %v2509 = vmul.f32 %v2492, %v2508
    %v2510 = vsub.f32 1.0, %v2509
    %v2511 = vmul.f32 %v2508, %v2510
    %v2512 = vadd.f32 %v2508, %v2511
    %vm2513 = vweird.f32 %v2492
    %vm2514 = vweird.f32 %v2508
    %vm2515 = vmor %vm2513, %vm2514
    %v2516 = vsel %vm2515, %v2508, %v2512
    %v2517 = vand.u32 2147483647, %v2492
    %vm2518 = vcmp.eq.f32.partialorder %v2517, 8.507059e+37
    %v2519 = vand.u32 %v2492, 2147483648
    %v2520 = vor.u32 1.1754944e-38, %v2519
    %v2521 = vsel %vm2518, %v2520, %v2516
    %v2522 = vmul.f32 1.0, %v2521
    %v2523 = vmul.f32 %v2467, %v2328
    %v2524 = vmul.f32 %v2482, %v2329
    %v2525 = vmul.f32 %v2429, %v2483
    %v2526 = vmul.f32 %v2444, %v2484
    %v2527 = vadd.f32 %v2523, %v2525
    %v2528 = vadd.f32 %v2524, %v2526
    %v2529 = vtanh.pop %v2527
    %v2530 = vtanh.pop %v2528
    %v2531 = vmul.f32 %v2507, %v2529
    %v2532 = vmul.f32 %v2522, %v2530
    %v2533 = vld [vmem:[#allocation2 + $0x140] sm:$0xff]
    %v2534 = vld [vmem:[#allocation2 + $0x148] sm:$0xff]
    %v2535 = vld [vmem:[#allocation2 + $0x150] sm:$0xff]
    %v2536 = vld [vmem:[#allocation2 + $0x158] sm:$0xff]
    %v2537 = vld [vmem:[#allocation2 + $0x160] sm:$0xff]
    %v2538 = vld [vmem:[#allocation2 + $0x168] sm:$0xff]
    %v2539 = vld [vmem:[#allocation2 + $0x170] sm:$0xff]
    %v2540 = vld [vmem:[#allocation2 + $0x178] sm:$0xff]
    %v2541 = vpack.c.bf16 %v2532, %v2531
    %2542 = vmatpush.bf16.msra.mxu0 %v1511
    %2543 = vmatpush.bf16.msra.mxu0 %v1507
    %2544 = vmatpush.bf16.msra.mxu0 %v1503
    %2545 = vmatpush.bf16.msra.mxu0 %v1499
    %2546 = vmatpush.bf16.msra.mxu0 %v1495
    %2547 = vmatpush.bf16.msra.mxu0 %v1491
    %2548 = vmatpush.bf16.msra.mxu0 %v1487
    %2549 = vmatpush.bf16.msra.mxu0 %v1483
    %2550 = vmatmul.bf16.gmra.mxu0 %v2541
    %v2551 = vpop.f32.mrf.mxu0
    %v2552 = vadd.f32 0.0, %v2551
    %v2553 = vpop.f32.mrf.mxu0
    %v2554 = vadd.f32 0.0, %v2553
    %2555 = vdwg.mxu0
    %2556 = vmatpush.bf16.msra.mxu0 %v1512
    %2557 = vmatpush.bf16.msra.mxu0 %v1508
    %2558 = vmatpush.bf16.msra.mxu0 %v1504
    %2559 = vmatpush.bf16.msra.mxu0 %v1500
    %2560 = vmatpush.bf16.msra.mxu0 %v1496
    %2561 = vmatpush.bf16.msra.mxu0 %v1492
    %2562 = vmatpush.bf16.msra.mxu0 %v1488
    %2563 = vmatpush.bf16.msra.mxu0 %v1484
    %2564 = vmatmul.bf16.gmra.mxu0 %v2541
    %v2565 = vpop.f32.mrf.mxu0
    %v2566 = vadd.f32 0.0, %v2565
    %v2567 = vpop.f32.mrf.mxu0
    %v2568 = vadd.f32 0.0, %v2567
    %2569 = vdwg.mxu0
    %2570 = vmatpush.bf16.msra.mxu0 %v1513
    %2571 = vmatpush.bf16.msra.mxu0 %v1509
    %2572 = vmatpush.bf16.msra.mxu0 %v1505
    %2573 = vmatpush.bf16.msra.mxu0 %v1501
    %2574 = vmatpush.bf16.msra.mxu0 %v1497
    %2575 = vmatpush.bf16.msra.mxu0 %v1493
    %2576 = vmatpush.bf16.msra.mxu0 %v1489
    %2577 = vmatpush.bf16.msra.mxu0 %v1485
    %2578 = vmatmul.bf16.gmra.mxu0 %v2541
    %v2579 = vpop.f32.mrf.mxu0
    %v2580 = vadd.f32 0.0, %v2579
    %v2581 = vpop.f32.mrf.mxu0
    %v2582 = vadd.f32 0.0, %v2581
    %2583 = vdwg.mxu0
    %2584 = vmatpush.bf16.msra.mxu0 %v1514
    %2585 = vmatpush.bf16.msra.mxu0 %v1510
    %2586 = vmatpush.bf16.msra.mxu0 %v1506
    %2587 = vmatpush.bf16.msra.mxu0 %v1502
    %2588 = vmatpush.bf16.msra.mxu0 %v1498
    %2589 = vmatpush.bf16.msra.mxu0 %v1494
    %2590 = vmatpush.bf16.msra.mxu0 %v1490
    %2591 = vmatpush.bf16.msra.mxu0 %v1486
    %2592 = vmatmul.bf16.gmra.mxu0 %v2541
    %v2593 = vpop.f32.mrf.mxu0
    %v2594 = vadd.f32 0.0, %v2593
    %v2595 = vpop.f32.mrf.mxu0
    %v2596 = vadd.f32 0.0, %v2595
    %2597 = vdwg.mxu0
    %v2598 = vadd.f32 %v2533, %v2552
    %v2599 = vadd.f32 %v2534, %v2566
    %v2600 = vadd.f32 %v2535, %v2580
    %v2601 = vadd.f32 %v2536, %v2594
    %v2602 = vadd.f32 %v2537, %v2554
    %v2603 = vadd.f32 %v2538, %v2568
    %v2604 = vadd.f32 %v2539, %v2582
    %v2605 = vadd.f32 %v2540, %v2596
    %v2606 = vxor.u32 %v2598, 2147483648
    %v2607 = vxor.u32 %v2602, 2147483648
    %v2608 = vmul.f32 %v2606, 1.442695
    %v2609 = vpow.pop %v2608
    %v2610 = vmul.f32 %v2607, 1.442695
    %v2611 = vpow.pop %v2610
    %v2612 = vadd.f32 %v2609, 1.0
    %v2613 = vadd.f32 %v2611, 1.0
    %v2614 = vrcp.pop %v2612
    %v2615 = vmul.f32 %v2612, %v2614
    %v2616 = vsub.f32 1.0, %v2615
    %v2617 = vmul.f32 %v2614, %v2616
    %v2618 = vadd.f32 %v2614, %v2617
    %vm2619 = vweird.f32 %v2612
    %vm2620 = vweird.f32 %v2614
    %vm2621 = vmor %vm2619, %vm2620
    %v2622 = vsel %vm2621, %v2614, %v2618
    %v2623 = vand.u32 2147483647, %v2612
    %vm2624 = vcmp.eq.f32.partialorder %v2623, 8.507059e+37
    %v2625 = vand.u32 %v2612, 2147483648
    %v2626 = vor.u32 1.1754944e-38, %v2625
    %v2627 = vsel %vm2624, %v2626, %v2622
    %v2628 = vmul.f32 1.0, %v2627
    %v2629 = vrcp.pop %v2613
    %v2630 = vmul.f32 %v2613, %v2629
    %v2631 = vsub.f32 1.0, %v2630
    %v2632 = vmul.f32 %v2629, %v2631
    %v2633 = vadd.f32 %v2629, %v2632
    %vm2634 = vweird.f32 %v2613
    %vm2635 = vweird.f32 %v2629
    %vm2636 = vmor %vm2634, %vm2635
    %v2637 = vsel %vm2636, %v2629, %v2633
    %v2638 = vand.u32 2147483647, %v2613
    %vm2639 = vcmp.eq.f32.partialorder %v2638, 8.507059e+37
    %v2640 = vand.u32 %v2613, 2147483648
    %v2641 = vor.u32 1.1754944e-38, %v2640
    %v2642 = vsel %vm2639, %v2641, %v2637
    %v2643 = vmul.f32 1.0, %v2642
    %v2644 = vxor.u32 %v2599, 2147483648
    %v2645 = vxor.u32 %v2603, 2147483648
    %v2646 = vmul.f32 %v2644, 1.442695
    %v2647 = vpow.pop %v2646
    %v2648 = vmul.f32 %v2645, 1.442695
    %v2649 = vpow.pop %v2648
    %v2650 = vadd.f32 %v2647, 1.0
    %v2651 = vadd.f32 %v2649, 1.0
    %v2652 = vrcp.pop %v2650
    %v2653 = vmul.f32 %v2650, %v2652
    %v2654 = vsub.f32 1.0, %v2653
    %v2655 = vmul.f32 %v2652, %v2654
    %v2656 = vadd.f32 %v2652, %v2655
    %vm2657 = vweird.f32 %v2650
    %vm2658 = vweird.f32 %v2652
    %vm2659 = vmor %vm2657, %vm2658
    %v2660 = vsel %vm2659, %v2652, %v2656
    %v2661 = vand.u32 2147483647, %v2650
    %vm2662 = vcmp.eq.f32.partialorder %v2661, 8.507059e+37
    %v2663 = vand.u32 %v2650, 2147483648
    %v2664 = vor.u32 1.1754944e-38, %v2663
    %v2665 = vsel %vm2662, %v2664, %v2660
    %v2666 = vmul.f32 1.0, %v2665
    %v2667 = vrcp.pop %v2651
    %v2668 = vmul.f32 %v2651, %v2667
    %v2669 = vsub.f32 1.0, %v2668
    %v2670 = vmul.f32 %v2667, %v2669
    %v2671 = vadd.f32 %v2667, %v2670
    %vm2672 = vweird.f32 %v2651
    %vm2673 = vweird.f32 %v2667
    %vm2674 = vmor %vm2672, %vm2673
    %v2675 = vsel %vm2674, %v2667, %v2671
    %v2676 = vand.u32 2147483647, %v2651
    %vm2677 = vcmp.eq.f32.partialorder %v2676, 8.507059e+37
    %v2678 = vand.u32 %v2651, 2147483648
    %v2679 = vor.u32 1.1754944e-38, %v2678
    %v2680 = vsel %vm2677, %v2679, %v2675
    %v2681 = vmul.f32 1.0, %v2680
    %v2682 = vtanh.pop %v2600
    %v2683 = vtanh.pop %v2604
    %v2684 = vxor.u32 %v2601, 2147483648
    %v2685 = vxor.u32 %v2605, 2147483648
    %v2686 = vmul.f32 %v2684, 1.442695
    %v2687 = vpow.pop %v2686
    %v2688 = vmul.f32 %v2685, 1.442695
    %v2689 = vpow.pop %v2688
    %v2690 = vadd.f32 %v2687, 1.0
    %v2691 = vadd.f32 %v2689, 1.0
    %v2692 = vrcp.pop %v2690
    %v2693 = vmul.f32 %v2690, %v2692
    %v2694 = vsub.f32 1.0, %v2693
    %v2695 = vmul.f32 %v2692, %v2694
    %v2696 = vadd.f32 %v2692, %v2695
    %vm2697 = vweird.f32 %v2690
    %vm2698 = vweird.f32 %v2692
    %vm2699 = vmor %vm2697, %vm2698
    %v2700 = vsel %vm2699, %v2692, %v2696
    %v2701 = vand.u32 2147483647, %v2690
    %vm2702 = vcmp.eq.f32.partialorder %v2701, 8.507059e+37
    %v2703 = vand.u32 %v2690, 2147483648
    %v2704 = vor.u32 1.1754944e-38, %v2703
    %v2705 = vsel %vm2702, %v2704, %v2700
    %v2706 = vmul.f32 1.0, %v2705
    %v2707 = vrcp.pop %v2691
    %v2708 = vmul.f32 %v2691, %v2707
    %v2709 = vsub.f32 1.0, %v2708
    %v2710 = vmul.f32 %v2707, %v2709
    %v2711 = vadd.f32 %v2707, %v2710
    %vm2712 = vweird.f32 %v2691
    %vm2713 = vweird.f32 %v2707
    %vm2714 = vmor %vm2712, %vm2713
    %v2715 = vsel %vm2714, %v2707, %v2711
    %v2716 = vand.u32 2147483647, %v2691
    %vm2717 = vcmp.eq.f32.partialorder %v2716, 8.507059e+37
    %v2718 = vand.u32 %v2691, 2147483648
    %v2719 = vor.u32 1.1754944e-38, %v2718
    %v2720 = vsel %vm2717, %v2719, %v2715
    %v2721 = vmul.f32 1.0, %v2720
    %v2722 = vmul.f32 %v2666, %v2527
    %v2723 = vmul.f32 %v2681, %v2528
    %v2724 = vmul.f32 %v2628, %v2682
    %v2725 = vmul.f32 %v2643, %v2683
    %v2726 = vadd.f32 %v2722, %v2724
    %v2727 = vadd.f32 %v2723, %v2725
    %v2728 = vtanh.pop %v2726
    %v2729 = vtanh.pop %v2727
    %v2730 = vmul.f32 %v2706, %v2728
    %v2731 = vmul.f32 %v2721, %v2729
    %v2732 = vld [vmem:[#allocation2 + $0x180] sm:$0xff]
    %v2733 = vld [vmem:[#allocation2 + $0x188] sm:$0xff]
    %v2734 = vld [vmem:[#allocation2 + $0x190] sm:$0xff]
    %v2735 = vld [vmem:[#allocation2 + $0x198] sm:$0xff]
    %v2736 = vld [vmem:[#allocation2 + $0x1a0] sm:$0xff]
    %v2737 = vld [vmem:[#allocation2 + $0x1a8] sm:$0xff]
    %v2738 = vld [vmem:[#allocation2 + $0x1b0] sm:$0xff]
    %v2739 = vld [vmem:[#allocation2 + $0x1b8] sm:$0xff]
    %v2740 = vpack.c.bf16 %v2731, %v2730
    %2741 = vmatpush.bf16.msra.mxu0 %v1511
    %2742 = vmatpush.bf16.msra.mxu0 %v1507
    %2743 = vmatpush.bf16.msra.mxu0 %v1503
    %2744 = vmatpush.bf16.msra.mxu0 %v1499
    %2745 = vmatpush.bf16.msra.mxu0 %v1495
    %2746 = vmatpush.bf16.msra.mxu0 %v1491
    %2747 = vmatpush.bf16.msra.mxu0 %v1487
    %2748 = vmatpush.bf16.msra.mxu0 %v1483
    %2749 = vmatmul.bf16.gmra.mxu0 %v2740
    %v2750 = vpop.f32.mrf.mxu0
    %v2751 = vadd.f32 0.0, %v2750
    %v2752 = vpop.f32.mrf.mxu0
    %v2753 = vadd.f32 0.0, %v2752
    %2754 = vdwg.mxu0
    %2755 = vmatpush.bf16.msra.mxu0 %v1512
    %2756 = vmatpush.bf16.msra.mxu0 %v1508
    %2757 = vmatpush.bf16.msra.mxu0 %v1504
    %2758 = vmatpush.bf16.msra.mxu0 %v1500
    %2759 = vmatpush.bf16.msra.mxu0 %v1496
    %2760 = vmatpush.bf16.msra.mxu0 %v1492
    %2761 = vmatpush.bf16.msra.mxu0 %v1488
    %2762 = vmatpush.bf16.msra.mxu0 %v1484
    %2763 = vmatmul.bf16.gmra.mxu0 %v2740
    %v2764 = vpop.f32.mrf.mxu0
    %v2765 = vadd.f32 0.0, %v2764
    %v2766 = vpop.f32.mrf.mxu0
    %v2767 = vadd.f32 0.0, %v2766
    %2768 = vdwg.mxu0
    %2769 = vmatpush.bf16.msra.mxu0 %v1513
    %2770 = vmatpush.bf16.msra.mxu0 %v1509
    %2771 = vmatpush.bf16.msra.mxu0 %v1505
    %2772 = vmatpush.bf16.msra.mxu0 %v1501
    %2773 = vmatpush.bf16.msra.mxu0 %v1497
    %2774 = vmatpush.bf16.msra.mxu0 %v1493
    %2775 = vmatpush.bf16.msra.mxu0 %v1489
    %2776 = vmatpush.bf16.msra.mxu0 %v1485
    %2777 = vmatmul.bf16.gmra.mxu0 %v2740
    %v2778 = vpop.f32.mrf.mxu0
    %v2779 = vadd.f32 0.0, %v2778
    %v2780 = vpop.f32.mrf.mxu0
    %v2781 = vadd.f32 0.0, %v2780
    %2782 = vdwg.mxu0
    %2783 = vmatpush.bf16.msra.mxu0 %v1514
    %2784 = vmatpush.bf16.msra.mxu0 %v1510
    %2785 = vmatpush.bf16.msra.mxu0 %v1506
    %2786 = vmatpush.bf16.msra.mxu0 %v1502
    %2787 = vmatpush.bf16.msra.mxu0 %v1498
    %2788 = vmatpush.bf16.msra.mxu0 %v1494
    %2789 = vmatpush.bf16.msra.mxu0 %v1490
    %2790 = vmatpush.bf16.msra.mxu0 %v1486
    %2791 = vmatmul.bf16.gmra.mxu0 %v2740
    %v2792 = vpop.f32.mrf.mxu0
    %v2793 = vadd.f32 0.0, %v2792
    %v2794 = vpop.f32.mrf.mxu0
    %v2795 = vadd.f32 0.0, %v2794
    %2796 = vdwg.mxu0
    %v2797 = vadd.f32 %v2732, %v2751
    %v2798 = vadd.f32 %v2733, %v2765
    %v2799 = vadd.f32 %v2734, %v2779
    %v2800 = vadd.f32 %v2735, %v2793
    %v2801 = vadd.f32 %v2736, %v2753
    %v2802 = vadd.f32 %v2737, %v2767
    %v2803 = vadd.f32 %v2738, %v2781
    %v2804 = vadd.f32 %v2739, %v2795
    %v2805 = vxor.u32 %v2797, 2147483648
    %v2806 = vxor.u32 %v2801, 2147483648
    %v2807 = vmul.f32 %v2805, 1.442695
    %v2808 = vpow.pop %v2807
    %v2809 = vmul.f32 %v2806, 1.442695
    %v2810 = vpow.pop %v2809
    %v2811 = vadd.f32 %v2808, 1.0
    %v2812 = vadd.f32 %v2810, 1.0
    %v2813 = vrcp.pop %v2811
    %v2814 = vmul.f32 %v2811, %v2813
    %v2815 = vsub.f32 1.0, %v2814
    %v2816 = vmul.f32 %v2813, %v2815
    %v2817 = vadd.f32 %v2813, %v2816
    %vm2818 = vweird.f32 %v2811
    %vm2819 = vweird.f32 %v2813
    %vm2820 = vmor %vm2818, %vm2819
    %v2821 = vsel %vm2820, %v2813, %v2817
    %v2822 = vand.u32 2147483647, %v2811
    %vm2823 = vcmp.eq.f32.partialorder %v2822, 8.507059e+37
    %v2824 = vand.u32 %v2811, 2147483648
    %v2825 = vor.u32 1.1754944e-38, %v2824
    %v2826 = vsel %vm2823, %v2825, %v2821
    %v2827 = vmul.f32 1.0, %v2826
    %v2828 = vrcp.pop %v2812
    %v2829 = vmul.f32 %v2812, %v2828
    %v2830 = vsub.f32 1.0, %v2829
    %v2831 = vmul.f32 %v2828, %v2830
    %v2832 = vadd.f32 %v2828, %v2831
    %vm2833 = vweird.f32 %v2812
    %vm2834 = vweird.f32 %v2828
    %vm2835 = vmor %vm2833, %vm2834
    %v2836 = vsel %vm2835, %v2828, %v2832
    %v2837 = vand.u32 2147483647, %v2812
    %vm2838 = vcmp.eq.f32.partialorder %v2837, 8.507059e+37
    %v2839 = vand.u32 %v2812, 2147483648
    %v2840 = vor.u32 1.1754944e-38, %v2839
    %v2841 = vsel %vm2838, %v2840, %v2836
    %v2842 = vmul.f32 1.0, %v2841
    %v2843 = vxor.u32 %v2798, 2147483648
    %v2844 = vxor.u32 %v2802, 2147483648
    %v2845 = vmul.f32 %v2843, 1.442695
    %v2846 = vpow.pop %v2845
    %v2847 = vmul.f32 %v2844, 1.442695
    %v2848 = vpow.pop %v2847
    %v2849 = vadd.f32 %v2846, 1.0
    %v2850 = vadd.f32 %v2848, 1.0
    %v2851 = vrcp.pop %v2849
    %v2852 = vmul.f32 %v2849, %v2851
    %v2853 = vsub.f32 1.0, %v2852
    %v2854 = vmul.f32 %v2851, %v2853
    %v2855 = vadd.f32 %v2851, %v2854
    %vm2856 = vweird.f32 %v2849
    %vm2857 = vweird.f32 %v2851
    %vm2858 = vmor %vm2856, %vm2857
    %v2859 = vsel %vm2858, %v2851, %v2855
    %v2860 = vand.u32 2147483647, %v2849
    %vm2861 = vcmp.eq.f32.partialorder %v2860, 8.507059e+37
    %v2862 = vand.u32 %v2849, 2147483648
    %v2863 = vor.u32 1.1754944e-38, %v2862
    %v2864 = vsel %vm2861, %v2863, %v2859
    %v2865 = vmul.f32 1.0, %v2864
    %v2866 = vrcp.pop %v2850
    %v2867 = vmul.f32 %v2850, %v2866
    %v2868 = vsub.f32 1.0, %v2867
    %v2869 = vmul.f32 %v2866, %v2868
    %v2870 = vadd.f32 %v2866, %v2869
    %vm2871 = vweird.f32 %v2850
    %vm2872 = vweird.f32 %v2866
    %vm2873 = vmor %vm2871, %vm2872
    %v2874 = vsel %vm2873, %v2866, %v2870
    %v2875 = vand.u32 2147483647, %v2850
    %vm2876 = vcmp.eq.f32.partialorder %v2875, 8.507059e+37
    %v2877 = vand.u32 %v2850, 2147483648
    %v2878 = vor.u32 1.1754944e-38, %v2877
    %v2879 = vsel %vm2876, %v2878, %v2874
    %v2880 = vmul.f32 1.0, %v2879
    %v2881 = vtanh.pop %v2799
    %v2882 = vtanh.pop %v2803
    %v2883 = vxor.u32 %v2800, 2147483648
    %v2884 = vxor.u32 %v2804, 2147483648
    %v2885 = vmul.f32 %v2883, 1.442695
    %v2886 = vpow.pop %v2885
    %v2887 = vmul.f32 %v2884, 1.442695
    %v2888 = vpow.pop %v2887
    %v2889 = vadd.f32 %v2886, 1.0
    %v2890 = vadd.f32 %v2888, 1.0
    %v2891 = vrcp.pop %v2889
    %v2892 = vmul.f32 %v2889, %v2891
    %v2893 = vsub.f32 1.0, %v2892
    %v2894 = vmul.f32 %v2891, %v2893
    %v2895 = vadd.f32 %v2891, %v2894
    %vm2896 = vweird.f32 %v2889
    %vm2897 = vweird.f32 %v2891
    %vm2898 = vmor %vm2896, %vm2897
    %v2899 = vsel %vm2898, %v2891, %v2895
    %v2900 = vand.u32 2147483647, %v2889
    %vm2901 = vcmp.eq.f32.partialorder %v2900, 8.507059e+37
    %v2902 = vand.u32 %v2889, 2147483648
    %v2903 = vor.u32 1.1754944e-38, %v2902
    %v2904 = vsel %vm2901, %v2903, %v2899
    %v2905 = vmul.f32 1.0, %v2904
    %v2906 = vrcp.pop %v2890
    %v2907 = vmul.f32 %v2890, %v2906
    %v2908 = vsub.f32 1.0, %v2907
    %v2909 = vmul.f32 %v2906, %v2908
    %v2910 = vadd.f32 %v2906, %v2909
    %vm2911 = vweird.f32 %v2890
    %vm2912 = vweird.f32 %v2906
    %vm2913 = vmor %vm2911, %vm2912
    %v2914 = vsel %vm2913, %v2906, %v2910
    %v2915 = vand.u32 2147483647, %v2890
    %vm2916 = vcmp.eq.f32.partialorder %v2915, 8.507059e+37
    %v2917 = vand.u32 %v2890, 2147483648
    %v2918 = vor.u32 1.1754944e-38, %v2917
    %v2919 = vsel %vm2916, %v2918, %v2914
    %v2920 = vmul.f32 1.0, %v2919
    %v2921 = vmul.f32 %v2865, %v2726
    %v2922 = vmul.f32 %v2880, %v2727
    %v2923 = vmul.f32 %v2827, %v2881
    %v2924 = vmul.f32 %v2842, %v2882
    %v2925 = vadd.f32 %v2921, %v2923
    %v2926 = vadd.f32 %v2922, %v2924
    %v2927 = vtanh.pop %v2925
    %v2928 = vtanh.pop %v2926
    %v2929 = vmul.f32 %v2905, %v2927
    %v2930 = vmul.f32 %v2920, %v2928
    %v2931 = vld [vmem:[#allocation2 + $0x1c0] sm:$0xff]
    %v2932 = vld [vmem:[#allocation2 + $0x1c8] sm:$0xff]
    %v2933 = vld [vmem:[#allocation2 + $0x1d0] sm:$0xff]
    %v2934 = vld [vmem:[#allocation2 + $0x1d8] sm:$0xff]
    %v2935 = vld [vmem:[#allocation2 + $0x1e0] sm:$0xff]
    %v2936 = vld [vmem:[#allocation2 + $0x1e8] sm:$0xff]
    %v2937 = vld [vmem:[#allocation2 + $0x1f0] sm:$0xff]
    %v2938 = vld [vmem:[#allocation2 + $0x1f8] sm:$0xff]
    %v2939 = vpack.c.bf16 %v2930, %v2929
    %2940 = vmatpush.bf16.msra.mxu0 %v1511
    %2941 = vmatpush.bf16.msra.mxu0 %v1507
    %2942 = vmatpush.bf16.msra.mxu0 %v1503
    %2943 = vmatpush.bf16.msra.mxu0 %v1499
    %2944 = vmatpush.bf16.msra.mxu0 %v1495
    %2945 = vmatpush.bf16.msra.mxu0 %v1491
    %2946 = vmatpush.bf16.msra.mxu0 %v1487
    %2947 = vmatpush.bf16.msra.mxu0 %v1483
    %2948 = vmatmul.bf16.gmra.mxu0 %v2939
    %v2949 = vpop.f32.mrf.mxu0
    %v2950 = vadd.f32 0.0, %v2949
    %v2951 = vpop.f32.mrf.mxu0
    %v2952 = vadd.f32 0.0, %v2951
    %2953 = vdwg.mxu0
    %2954 = vmatpush.bf16.msra.mxu0 %v1512
    %2955 = vmatpush.bf16.msra.mxu0 %v1508
    %2956 = vmatpush.bf16.msra.mxu0 %v1504
    %2957 = vmatpush.bf16.msra.mxu0 %v1500
    %2958 = vmatpush.bf16.msra.mxu0 %v1496
    %2959 = vmatpush.bf16.msra.mxu0 %v1492
    %2960 = vmatpush.bf16.msra.mxu0 %v1488
    %2961 = vmatpush.bf16.msra.mxu0 %v1484
    %2962 = vmatmul.bf16.gmra.mxu0 %v2939
    %v2963 = vpop.f32.mrf.mxu0
    %v2964 = vadd.f32 0.0, %v2963
    %v2965 = vpop.f32.mrf.mxu0
    %v2966 = vadd.f32 0.0, %v2965
    %2967 = vdwg.mxu0
    %2968 = vmatpush.bf16.msra.mxu0 %v1513
    %2969 = vmatpush.bf16.msra.mxu0 %v1509
    %2970 = vmatpush.bf16.msra.mxu0 %v1505
    %2971 = vmatpush.bf16.msra.mxu0 %v1501
    %2972 = vmatpush.bf16.msra.mxu0 %v1497
    %2973 = vmatpush.bf16.msra.mxu0 %v1493
    %2974 = vmatpush.bf16.msra.mxu0 %v1489
    %2975 = vmatpush.bf16.msra.mxu0 %v1485
    %2976 = vmatmul.bf16.gmra.mxu0 %v2939
    %v2977 = vpop.f32.mrf.mxu0
    %v2978 = vadd.f32 0.0, %v2977
    %v2979 = vpop.f32.mrf.mxu0
    %v2980 = vadd.f32 0.0, %v2979
    %2981 = vdwg.mxu0
    %2982 = vmatpush.bf16.msra.mxu0 %v1514
    %2983 = vmatpush.bf16.msra.mxu0 %v1510
    %2984 = vmatpush.bf16.msra.mxu0 %v1506
    %2985 = vmatpush.bf16.msra.mxu0 %v1502
    %2986 = vmatpush.bf16.msra.mxu0 %v1498
    %2987 = vmatpush.bf16.msra.mxu0 %v1494
    %2988 = vmatpush.bf16.msra.mxu0 %v1490
    %2989 = vmatpush.bf16.msra.mxu0 %v1486
    %2990 = vmatmul.bf16.gmra.mxu0 %v2939
    %v2991 = vpop.f32.mrf.mxu0
    %v2992 = vadd.f32 0.0, %v2991
    %v2993 = vpop.f32.mrf.mxu0
    %v2994 = vadd.f32 0.0, %v2993
    %2995 = vdwg.mxu0
    %v2996 = vadd.f32 %v2931, %v2950
    %v2997 = vadd.f32 %v2932, %v2964
    %v2998 = vadd.f32 %v2933, %v2978
    %v2999 = vadd.f32 %v2934, %v2992
    %v3000 = vadd.f32 %v2935, %v2952
    %v3001 = vadd.f32 %v2936, %v2966
    %v3002 = vadd.f32 %v2937, %v2980
    %v3003 = vadd.f32 %v2938, %v2994
    %v3004 = vxor.u32 %v2996, 2147483648
    %v3005 = vxor.u32 %v3000, 2147483648
    %v3006 = vmul.f32 %v3004, 1.442695
    %v3007 = vpow.pop %v3006
    %v3008 = vmul.f32 %v3005, 1.442695
    %v3009 = vpow.pop %v3008
    %v3010 = vadd.f32 %v3007, 1.0
    %v3011 = vadd.f32 %v3009, 1.0
    %v3012 = vrcp.pop %v3010
    %v3013 = vmul.f32 %v3010, %v3012
    %v3014 = vsub.f32 1.0, %v3013
    %v3015 = vmul.f32 %v3012, %v3014
    %v3016 = vadd.f32 %v3012, %v3015
    %vm3017 = vweird.f32 %v3010
    %vm3018 = vweird.f32 %v3012
    %vm3019 = vmor %vm3017, %vm3018
    %v3020 = vsel %vm3019, %v3012, %v3016
    %v3021 = vand.u32 2147483647, %v3010
    %vm3022 = vcmp.eq.f32.partialorder %v3021, 8.507059e+37
    %v3023 = vand.u32 %v3010, 2147483648
    %v3024 = vor.u32 1.1754944e-38, %v3023
    %v3025 = vsel %vm3022, %v3024, %v3020
    %v3026 = vmul.f32 1.0, %v3025
    %v3027 = vrcp.pop %v3011
    %v3028 = vmul.f32 %v3011, %v3027
    %v3029 = vsub.f32 1.0, %v3028
    %v3030 = vmul.f32 %v3027, %v3029
    %v3031 = vadd.f32 %v3027, %v3030
    %vm3032 = vweird.f32 %v3011
    %vm3033 = vweird.f32 %v3027
    %vm3034 = vmor %vm3032, %vm3033
    %v3035 = vsel %vm3034, %v3027, %v3031
    %v3036 = vand.u32 2147483647, %v3011
    %vm3037 = vcmp.eq.f32.partialorder %v3036, 8.507059e+37
    %v3038 = vand.u32 %v3011, 2147483648
    %v3039 = vor.u32 1.1754944e-38, %v3038
    %v3040 = vsel %vm3037, %v3039, %v3035
    %v3041 = vmul.f32 1.0, %v3040
    %v3042 = vxor.u32 %v2997, 2147483648
    %v3043 = vxor.u32 %v3001, 2147483648
    %v3044 = vmul.f32 %v3042, 1.442695
    %v3045 = vpow.pop %v3044
    %v3046 = vmul.f32 %v3043, 1.442695
    %v3047 = vpow.pop %v3046
    %v3048 = vadd.f32 %v3045, 1.0
    %v3049 = vadd.f32 %v3047, 1.0
    %v3050 = vrcp.pop %v3048
    %v3051 = vmul.f32 %v3048, %v3050
    %v3052 = vsub.f32 1.0, %v3051
    %v3053 = vmul.f32 %v3050, %v3052
    %v3054 = vadd.f32 %v3050, %v3053
    %vm3055 = vweird.f32 %v3048
    %vm3056 = vweird.f32 %v3050
    %vm3057 = vmor %vm3055, %vm3056
    %v3058 = vsel %vm3057, %v3050, %v3054
    %v3059 = vand.u32 2147483647, %v3048
    %vm3060 = vcmp.eq.f32.partialorder %v3059, 8.507059e+37
    %v3061 = vand.u32 %v3048, 2147483648
    %v3062 = vor.u32 1.1754944e-38, %v3061
    %v3063 = vsel %vm3060, %v3062, %v3058
    %v3064 = vmul.f32 1.0, %v3063
    %v3065 = vrcp.pop %v3049
    %v3066 = vmul.f32 %v3049, %v3065
    %v3067 = vsub.f32 1.0, %v3066
    %v3068 = vmul.f32 %v3065, %v3067
    %v3069 = vadd.f32 %v3065, %v3068
    %vm3070 = vweird.f32 %v3049
    %vm3071 = vweird.f32 %v3065
    %vm3072 = vmor %vm3070, %vm3071
    %v3073 = vsel %vm3072, %v3065, %v3069
    %v3074 = vand.u32 2147483647, %v3049
    %vm3075 = vcmp.eq.f32.partialorder %v3074, 8.507059e+37
    %v3076 = vand.u32 %v3049, 2147483648
    %v3077 = vor.u32 1.1754944e-38, %v3076
    %v3078 = vsel %vm3075, %v3077, %v3073
    %v3079 = vmul.f32 1.0, %v3078
    %v3080 = vtanh.pop %v2998
    %v3081 = vtanh.pop %v3002
    %v3082 = vxor.u32 %v2999, 2147483648
    %v3083 = vxor.u32 %v3003, 2147483648
    %v3084 = vmul.f32 %v3082, 1.442695
    %v3085 = vpow.pop %v3084
    %v3086 = vmul.f32 %v3083, 1.442695
    %v3087 = vpow.pop %v3086
    %v3088 = vadd.f32 %v3085, 1.0
    %v3089 = vadd.f32 %v3087, 1.0
    %v3090 = vrcp.pop %v3088
    %v3091 = vmul.f32 %v3088, %v3090
    %v3092 = vsub.f32 1.0, %v3091
    %v3093 = vmul.f32 %v3090, %v3092
    %v3094 = vadd.f32 %v3090, %v3093
    %vm3095 = vweird.f32 %v3088
    %vm3096 = vweird.f32 %v3090
    %vm3097 = vmor %vm3095, %vm3096
    %v3098 = vsel %vm3097, %v3090, %v3094
    %v3099 = vand.u32 2147483647, %v3088
    %vm3100 = vcmp.eq.f32.partialorder %v3099, 8.507059e+37
    %v3101 = vand.u32 %v3088, 2147483648
    %v3102 = vor.u32 1.1754944e-38, %v3101
    %v3103 = vsel %vm3100, %v3102, %v3098
    %v3104 = vmul.f32 1.0, %v3103
    %v3105 = vrcp.pop %v3089
    %v3106 = vmul.f32 %v3089, %v3105
    %v3107 = vsub.f32 1.0, %v3106
    %v3108 = vmul.f32 %v3105, %v3107
    %v3109 = vadd.f32 %v3105, %v3108
    %vm3110 = vweird.f32 %v3089
    %vm3111 = vweird.f32 %v3105
    %vm3112 = vmor %vm3110, %vm3111
    %v3113 = vsel %vm3112, %v3105, %v3109
    %v3114 = vand.u32 2147483647, %v3089
    %vm3115 = vcmp.eq.f32.partialorder %v3114, 8.507059e+37
    %v3116 = vand.u32 %v3089, 2147483648
    %v3117 = vor.u32 1.1754944e-38, %v3116
    %v3118 = vsel %vm3115, %v3117, %v3113
    %v3119 = vmul.f32 1.0, %v3118
    %v3120 = vmul.f32 %v3064, %v2925
    %v3121 = vmul.f32 %v3079, %v2926
    %v3122 = vmul.f32 %v3026, %v3080
    %v3123 = vmul.f32 %v3041, %v3081
    %v3124 = vadd.f32 %v3120, %v3122
    %v3125 = vadd.f32 %v3121, %v3123
    %v3126 = vtanh.pop %v3124
    %v3127 = vtanh.pop %v3125
    %v3128 = vmul.f32 %v3104, %v3126
    %v3129 = vmul.f32 %v3119, %v3127
    %v3130 = vld [vmem:[#allocation2 + $0x200] sm:$0xff]
    %v3131 = vld [vmem:[#allocation2 + $0x208] sm:$0xff]
    %v3132 = vld [vmem:[#allocation2 + $0x210] sm:$0xff]
    %v3133 = vld [vmem:[#allocation2 + $0x218] sm:$0xff]
    %v3134 = vld [vmem:[#allocation2 + $0x220] sm:$0xff]
    %v3135 = vld [vmem:[#allocation2 + $0x228] sm:$0xff]
    %v3136 = vld [vmem:[#allocation2 + $0x230] sm:$0xff]
    %v3137 = vld [vmem:[#allocation2 + $0x238] sm:$0xff]
    %v3138 = vpack.c.bf16 %v3129, %v3128
    %3139 = vmatpush.bf16.msra.mxu0 %v1511
    %3140 = vmatpush.bf16.msra.mxu0 %v1507
    %3141 = vmatpush.bf16.msra.mxu0 %v1503
    %3142 = vmatpush.bf16.msra.mxu0 %v1499
    %3143 = vmatpush.bf16.msra.mxu0 %v1495
    %3144 = vmatpush.bf16.msra.mxu0 %v1491
    %3145 = vmatpush.bf16.msra.mxu0 %v1487
    %3146 = vmatpush.bf16.msra.mxu0 %v1483
    %3147 = vmatmul.bf16.gmra.mxu0 %v3138
    %v3148 = vpop.f32.mrf.mxu0
    %v3149 = vadd.f32 0.0, %v3148
    %v3150 = vpop.f32.mrf.mxu0
    %v3151 = vadd.f32 0.0, %v3150
    %3152 = vdwg.mxu0
    %3153 = vmatpush.bf16.msra.mxu0 %v1512
    %3154 = vmatpush.bf16.msra.mxu0 %v1508
    %3155 = vmatpush.bf16.msra.mxu0 %v1504
    %3156 = vmatpush.bf16.msra.mxu0 %v1500
    %3157 = vmatpush.bf16.msra.mxu0 %v1496
    %3158 = vmatpush.bf16.msra.mxu0 %v1492
    %3159 = vmatpush.bf16.msra.mxu0 %v1488
    %3160 = vmatpush.bf16.msra.mxu0 %v1484
    %3161 = vmatmul.bf16.gmra.mxu0 %v3138
    %v3162 = vpop.f32.mrf.mxu0
    %v3163 = vadd.f32 0.0, %v3162
    %v3164 = vpop.f32.mrf.mxu0
    %v3165 = vadd.f32 0.0, %v3164
    %3166 = vdwg.mxu0
    %3167 = vmatpush.bf16.msra.mxu0 %v1513
    %3168 = vmatpush.bf16.msra.mxu0 %v1509
    %3169 = vmatpush.bf16.msra.mxu0 %v1505
    %3170 = vmatpush.bf16.msra.mxu0 %v1501
    %3171 = vmatpush.bf16.msra.mxu0 %v1497
    %3172 = vmatpush.bf16.msra.mxu0 %v1493
    %3173 = vmatpush.bf16.msra.mxu0 %v1489
    %3174 = vmatpush.bf16.msra.mxu0 %v1485
    %3175 = vmatmul.bf16.gmra.mxu0 %v3138
    %v3176 = vpop.f32.mrf.mxu0
    %v3177 = vadd.f32 0.0, %v3176
    %v3178 = vpop.f32.mrf.mxu0
    %v3179 = vadd.f32 0.0, %v3178
    %3180 = vdwg.mxu0
    %3181 = vmatpush.bf16.msra.mxu0 %v1514
    %3182 = vmatpush.bf16.msra.mxu0 %v1510
    %3183 = vmatpush.bf16.msra.mxu0 %v1506
    %3184 = vmatpush.bf16.msra.mxu0 %v1502
    %3185 = vmatpush.bf16.msra.mxu0 %v1498
    %3186 = vmatpush.bf16.msra.mxu0 %v1494
    %3187 = vmatpush.bf16.msra.mxu0 %v1490
    %3188 = vmatpush.bf16.msra.mxu0 %v1486
    %3189 = vmatmul.bf16.gmra.mxu0 %v3138
    %v3190 = vpop.f32.mrf.mxu0
    %v3191 = vadd.f32 0.0, %v3190
    %v3192 = vpop.f32.mrf.mxu0
    %v3193 = vadd.f32 0.0, %v3192
    %3194 = vdwg.mxu0
    %v3195 = vadd.f32 %v3130, %v3149
    %v3196 = vadd.f32 %v3131, %v3163
    %v3197 = vadd.f32 %v3132, %v3177
    %v3198 = vadd.f32 %v3133, %v3191
    %v3199 = vadd.f32 %v3134, %v3151
    %v3200 = vadd.f32 %v3135, %v3165
    %v3201 = vadd.f32 %v3136, %v3179
    %v3202 = vadd.f32 %v3137, %v3193
    %v3203 = vxor.u32 %v3195, 2147483648
    %v3204 = vxor.u32 %v3199, 2147483648
    %v3205 = vmul.f32 %v3203, 1.442695
    %v3206 = vpow.pop %v3205
    %v3207 = vmul.f32 %v3204, 1.442695
    %v3208 = vpow.pop %v3207
    %v3209 = vadd.f32 %v3206, 1.0
    %v3210 = vadd.f32 %v3208, 1.0
    %v3211 = vrcp.pop %v3209
    %v3212 = vmul.f32 %v3209, %v3211
    %v3213 = vsub.f32 1.0, %v3212
    %v3214 = vmul.f32 %v3211, %v3213
    %v3215 = vadd.f32 %v3211, %v3214
    %vm3216 = vweird.f32 %v3209
    %vm3217 = vweird.f32 %v3211
    %vm3218 = vmor %vm3216, %vm3217
    %v3219 = vsel %vm3218, %v3211, %v3215
    %v3220 = vand.u32 2147483647, %v3209
    %vm3221 = vcmp.eq.f32.partialorder %v3220, 8.507059e+37
    %v3222 = vand.u32 %v3209, 2147483648
    %v3223 = vor.u32 1.1754944e-38, %v3222
    %v3224 = vsel %vm3221, %v3223, %v3219
    %v3225 = vmul.f32 1.0, %v3224
    %v3226 = vrcp.pop %v3210
    %v3227 = vmul.f32 %v3210, %v3226
    %v3228 = vsub.f32 1.0, %v3227
    %v3229 = vmul.f32 %v3226, %v3228
    %v3230 = vadd.f32 %v3226, %v3229
    %vm3231 = vweird.f32 %v3210
    %vm3232 = vweird.f32 %v3226
    %vm3233 = vmor %vm3231, %vm3232
    %v3234 = vsel %vm3233, %v3226, %v3230
    %v3235 = vand.u32 2147483647, %v3210
    %vm3236 = vcmp.eq.f32.partialorder %v3235, 8.507059e+37
    %v3237 = vand.u32 %v3210, 2147483648
    %v3238 = vor.u32 1.1754944e-38, %v3237
    %v3239 = vsel %vm3236, %v3238, %v3234
    %v3240 = vmul.f32 1.0, %v3239
    %v3241 = vxor.u32 %v3196, 2147483648
    %v3242 = vxor.u32 %v3200, 2147483648
    %v3243 = vmul.f32 %v3241, 1.442695
    %v3244 = vpow.pop %v3243
    %v3245 = vmul.f32 %v3242, 1.442695
    %v3246 = vpow.pop %v3245
    %v3247 = vadd.f32 %v3244, 1.0
    %v3248 = vadd.f32 %v3246, 1.0
    %v3249 = vrcp.pop %v3247
    %v3250 = vmul.f32 %v3247, %v3249
    %v3251 = vsub.f32 1.0, %v3250
    %v3252 = vmul.f32 %v3249, %v3251
    %v3253 = vadd.f32 %v3249, %v3252
    %vm3254 = vweird.f32 %v3247
    %vm3255 = vweird.f32 %v3249
    %vm3256 = vmor %vm3254, %vm3255
    %v3257 = vsel %vm3256, %v3249, %v3253
    %v3258 = vand.u32 2147483647, %v3247
    %vm3259 = vcmp.eq.f32.partialorder %v3258, 8.507059e+37
    %v3260 = vand.u32 %v3247, 2147483648
    %v3261 = vor.u32 1.1754944e-38, %v3260
    %v3262 = vsel %vm3259, %v3261, %v3257
    %v3263 = vmul.f32 1.0, %v3262
    %v3264 = vrcp.pop %v3248
    %v3265 = vmul.f32 %v3248, %v3264
    %v3266 = vsub.f32 1.0, %v3265
    %v3267 = vmul.f32 %v3264, %v3266
    %v3268 = vadd.f32 %v3264, %v3267
    %vm3269 = vweird.f32 %v3248
    %vm3270 = vweird.f32 %v3264
    %vm3271 = vmor %vm3269, %vm3270
    %v3272 = vsel %vm3271, %v3264, %v3268
    %v3273 = vand.u32 2147483647, %v3248
    %vm3274 = vcmp.eq.f32.partialorder %v3273, 8.507059e+37
    %v3275 = vand.u32 %v3248, 2147483648
    %v3276 = vor.u32 1.1754944e-38, %v3275
    %v3277 = vsel %vm3274, %v3276, %v3272
    %v3278 = vmul.f32 1.0, %v3277
    %v3279 = vtanh.pop %v3197
    %v3280 = vtanh.pop %v3201
    %v3281 = vxor.u32 %v3198, 2147483648
    %v3282 = vxor.u32 %v3202, 2147483648
    %v3283 = vmul.f32 %v3281, 1.442695
    %v3284 = vpow.pop %v3283
    %v3285 = vmul.f32 %v3282, 1.442695
    %v3286 = vpow.pop %v3285
    %v3287 = vadd.f32 %v3284, 1.0
    %v3288 = vadd.f32 %v3286, 1.0
    %v3289 = vrcp.pop %v3287
    %v3290 = vmul.f32 %v3287, %v3289
    %v3291 = vsub.f32 1.0, %v3290
    %v3292 = vmul.f32 %v3289, %v3291
    %v3293 = vadd.f32 %v3289, %v3292
    %vm3294 = vweird.f32 %v3287
    %vm3295 = vweird.f32 %v3289
    %vm3296 = vmor %vm3294, %vm3295
    %v3297 = vsel %vm3296, %v3289, %v3293
    %v3298 = vand.u32 2147483647, %v3287
    %vm3299 = vcmp.eq.f32.partialorder %v3298, 8.507059e+37
    %v3300 = vand.u32 %v3287, 2147483648
    %v3301 = vor.u32 1.1754944e-38, %v3300
    %v3302 = vsel %vm3299, %v3301, %v3297
    %v3303 = vmul.f32 1.0, %v3302
    %v3304 = vrcp.pop %v3288
    %v3305 = vmul.f32 %v3288, %v3304
    %v3306 = vsub.f32 1.0, %v3305
    %v3307 = vmul.f32 %v3304, %v3306
    %v3308 = vadd.f32 %v3304, %v3307
    %vm3309 = vweird.f32 %v3288
    %vm3310 = vweird.f32 %v3304
    %vm3311 = vmor %vm3309, %vm3310
    %v3312 = vsel %vm3311, %v3304, %v3308
    %v3313 = vand.u32 2147483647, %v3288
    %vm3314 = vcmp.eq.f32.partialorder %v3313, 8.507059e+37
    %v3315 = vand.u32 %v3288, 2147483648
    %v3316 = vor.u32 1.1754944e-38, %v3315
    %v3317 = vsel %vm3314, %v3316, %v3312
    %v3318 = vmul.f32 1.0, %v3317
    %v3319 = vmul.f32 %v3263, %v3124
    %v3320 = vmul.f32 %v3278, %v3125
    %v3321 = vmul.f32 %v3225, %v3279
    %v3322 = vmul.f32 %v3240, %v3280
    %v3323 = vadd.f32 %v3319, %v3321
    %v3324 = vadd.f32 %v3320, %v3322
    %v3325 = vtanh.pop %v3323
    %v3326 = vtanh.pop %v3324
    %v3327 = vmul.f32 %v3303, %v3325
    %v3328 = vmul.f32 %v3318, %v3326
    %v3329 = vld [vmem:[#allocation2 + $0x240] sm:$0xff]
    %v3330 = vld [vmem:[#allocation2 + $0x248] sm:$0xff]
    %v3331 = vld [vmem:[#allocation2 + $0x250] sm:$0xff]
    %v3332 = vld [vmem:[#allocation2 + $0x258] sm:$0xff]
    %v3333 = vld [vmem:[#allocation2 + $0x260] sm:$0xff]
    %v3334 = vld [vmem:[#allocation2 + $0x268] sm:$0xff]
    %v3335 = vld [vmem:[#allocation2 + $0x270] sm:$0xff]
    %v3336 = vld [vmem:[#allocation2 + $0x278] sm:$0xff]
    %v3337 = vpack.c.bf16 %v3328, %v3327
    %3338 = vmatpush.bf16.msra.mxu0 %v1511
    %3339 = vmatpush.bf16.msra.mxu0 %v1507
    %3340 = vmatpush.bf16.msra.mxu0 %v1503
    %3341 = vmatpush.bf16.msra.mxu0 %v1499
    %3342 = vmatpush.bf16.msra.mxu0 %v1495
    %3343 = vmatpush.bf16.msra.mxu0 %v1491
    %3344 = vmatpush.bf16.msra.mxu0 %v1487
    %3345 = vmatpush.bf16.msra.mxu0 %v1483
    %3346 = vmatmul.bf16.gmra.mxu0 %v3337
    %v3347 = vpop.f32.mrf.mxu0
    %v3348 = vadd.f32 0.0, %v3347
    %v3349 = vpop.f32.mrf.mxu0
    %v3350 = vadd.f32 0.0, %v3349
    %3351 = vdwg.mxu0
    %3352 = vmatpush.bf16.msra.mxu0 %v1512
    %3353 = vmatpush.bf16.msra.mxu0 %v1508
    %3354 = vmatpush.bf16.msra.mxu0 %v1504
    %3355 = vmatpush.bf16.msra.mxu0 %v1500
    %3356 = vmatpush.bf16.msra.mxu0 %v1496
    %3357 = vmatpush.bf16.msra.mxu0 %v1492
    %3358 = vmatpush.bf16.msra.mxu0 %v1488
    %3359 = vmatpush.bf16.msra.mxu0 %v1484
    %3360 = vmatmul.bf16.gmra.mxu0 %v3337
    %v3361 = vpop.f32.mrf.mxu0
    %v3362 = vadd.f32 0.0, %v3361
    %v3363 = vpop.f32.mrf.mxu0
    %v3364 = vadd.f32 0.0, %v3363
    %3365 = vdwg.mxu0
    %3366 = vmatpush.bf16.msra.mxu0 %v1513
    %3367 = vmatpush.bf16.msra.mxu0 %v1509
    %3368 = vmatpush.bf16.msra.mxu0 %v1505
    %3369 = vmatpush.bf16.msra.mxu0 %v1501
    %3370 = vmatpush.bf16.msra.mxu0 %v1497
    %3371 = vmatpush.bf16.msra.mxu0 %v1493
    %3372 = vmatpush.bf16.msra.mxu0 %v1489
    %3373 = vmatpush.bf16.msra.mxu0 %v1485
    %3374 = vmatmul.bf16.gmra.mxu0 %v3337
    %v3375 = vpop.f32.mrf.mxu0
    %v3376 = vadd.f32 0.0, %v3375
    %v3377 = vpop.f32.mrf.mxu0
    %v3378 = vadd.f32 0.0, %v3377
    %3379 = vdwg.mxu0
    %3380 = vmatpush.bf16.msra.mxu0 %v1514
    %3381 = vmatpush.bf16.msra.mxu0 %v1510
    %3382 = vmatpush.bf16.msra.mxu0 %v1506
    %3383 = vmatpush.bf16.msra.mxu0 %v1502
    %3384 = vmatpush.bf16.msra.mxu0 %v1498
    %3385 = vmatpush.bf16.msra.mxu0 %v1494
    %3386 = vmatpush.bf16.msra.mxu0 %v1490
    %3387 = vmatpush.bf16.msra.mxu0 %v1486
    %3388 = vmatmul.bf16.gmra.mxu0 %v3337
    %v3389 = vpop.f32.mrf.mxu0
    %v3390 = vadd.f32 0.0, %v3389
    %v3391 = vpop.f32.mrf.mxu0
    %v3392 = vadd.f32 0.0, %v3391
    %3393 = vdwg.mxu0
    %v3394 = vadd.f32 %v3329, %v3348
    %v3395 = vadd.f32 %v3330, %v3362
    %v3396 = vadd.f32 %v3331, %v3376
    %v3397 = vadd.f32 %v3332, %v3390
    %v3398 = vadd.f32 %v3333, %v3350
    %v3399 = vadd.f32 %v3334, %v3364
    %v3400 = vadd.f32 %v3335, %v3378
    %v3401 = vadd.f32 %v3336, %v3392
    %v3402 = vxor.u32 %v3394, 2147483648
    %v3403 = vxor.u32 %v3398, 2147483648
    %v3404 = vmul.f32 %v3402, 1.442695
    %v3405 = vpow.pop %v3404
    %v3406 = vmul.f32 %v3403, 1.442695
    %v3407 = vpow.pop %v3406
    %v3408 = vadd.f32 %v3405, 1.0
    %v3409 = vadd.f32 %v3407, 1.0
    %v3410 = vrcp.pop %v3408
    %v3411 = vmul.f32 %v3408, %v3410
    %v3412 = vsub.f32 1.0, %v3411
    %v3413 = vmul.f32 %v3410, %v3412
    %v3414 = vadd.f32 %v3410, %v3413
    %vm3415 = vweird.f32 %v3408
    %vm3416 = vweird.f32 %v3410
    %vm3417 = vmor %vm3415, %vm3416
    %v3418 = vsel %vm3417, %v3410, %v3414
    %v3419 = vand.u32 2147483647, %v3408
    %vm3420 = vcmp.eq.f32.partialorder %v3419, 8.507059e+37
    %v3421 = vand.u32 %v3408, 2147483648
    %v3422 = vor.u32 1.1754944e-38, %v3421
    %v3423 = vsel %vm3420, %v3422, %v3418
    %v3424 = vmul.f32 1.0, %v3423
    %v3425 = vrcp.pop %v3409
    %v3426 = vmul.f32 %v3409, %v3425
    %v3427 = vsub.f32 1.0, %v3426
    %v3428 = vmul.f32 %v3425, %v3427
    %v3429 = vadd.f32 %v3425, %v3428
    %vm3430 = vweird.f32 %v3409
    %vm3431 = vweird.f32 %v3425
    %vm3432 = vmor %vm3430, %vm3431
    %v3433 = vsel %vm3432, %v3425, %v3429
    %v3434 = vand.u32 2147483647, %v3409
    %vm3435 = vcmp.eq.f32.partialorder %v3434, 8.507059e+37
    %v3436 = vand.u32 %v3409, 2147483648
    %v3437 = vor.u32 1.1754944e-38, %v3436
    %v3438 = vsel %vm3435, %v3437, %v3433
    %v3439 = vmul.f32 1.0, %v3438
    %v3440 = vxor.u32 %v3395, 2147483648
    %v3441 = vxor.u32 %v3399, 2147483648
    %v3442 = vmul.f32 %v3440, 1.442695
    %v3443 = vpow.pop %v3442
    %v3444 = vmul.f32 %v3441, 1.442695
    %v3445 = vpow.pop %v3444
    %v3446 = vadd.f32 %v3443, 1.0
    %v3447 = vadd.f32 %v3445, 1.0
    %v3448 = vrcp.pop %v3446
    %v3449 = vmul.f32 %v3446, %v3448
    %v3450 = vsub.f32 1.0, %v3449
    %v3451 = vmul.f32 %v3448, %v3450
    %v3452 = vadd.f32 %v3448, %v3451
    %vm3453 = vweird.f32 %v3446
    %vm3454 = vweird.f32 %v3448
    %vm3455 = vmor %vm3453, %vm3454
    %v3456 = vsel %vm3455, %v3448, %v3452
    %v3457 = vand.u32 2147483647, %v3446
    %vm3458 = vcmp.eq.f32.partialorder %v3457, 8.507059e+37
    %v3459 = vand.u32 %v3446, 2147483648
    %v3460 = vor.u32 1.1754944e-38, %v3459
    %v3461 = vsel %vm3458, %v3460, %v3456
    %v3462 = vmul.f32 1.0, %v3461
    %v3463 = vrcp.pop %v3447
    %v3464 = vmul.f32 %v3447, %v3463
    %v3465 = vsub.f32 1.0, %v3464
    %v3466 = vmul.f32 %v3463, %v3465
    %v3467 = vadd.f32 %v3463, %v3466
    %vm3468 = vweird.f32 %v3447
    %vm3469 = vweird.f32 %v3463
    %vm3470 = vmor %vm3468, %vm3469
    %v3471 = vsel %vm3470, %v3463, %v3467
    %v3472 = vand.u32 2147483647, %v3447
    %vm3473 = vcmp.eq.f32.partialorder %v3472, 8.507059e+37
    %v3474 = vand.u32 %v3447, 2147483648
    %v3475 = vor.u32 1.1754944e-38, %v3474
    %v3476 = vsel %vm3473, %v3475, %v3471
    %v3477 = vmul.f32 1.0, %v3476
    %v3478 = vtanh.pop %v3396
    %v3479 = vtanh.pop %v3400
    %v3480 = vxor.u32 %v3397, 2147483648
    %v3481 = vxor.u32 %v3401, 2147483648
    %v3482 = vmul.f32 %v3480, 1.442695
    %v3483 = vpow.pop %v3482
    %v3484 = vmul.f32 %v3481, 1.442695
    %v3485 = vpow.pop %v3484
    %v3486 = vadd.f32 %v3483, 1.0
    %v3487 = vadd.f32 %v3485, 1.0
    %v3488 = vrcp.pop %v3486
    %v3489 = vmul.f32 %v3486, %v3488
    %v3490 = vsub.f32 1.0, %v3489
    %v3491 = vmul.f32 %v3488, %v3490
    %v3492 = vadd.f32 %v3488, %v3491
    %vm3493 = vweird.f32 %v3486
    %vm3494 = vweird.f32 %v3488
    %vm3495 = vmor %vm3493, %vm3494
    %v3496 = vsel %vm3495, %v3488, %v3492
    %v3497 = vand.u32 2147483647, %v3486
    %vm3498 = vcmp.eq.f32.partialorder %v3497, 8.507059e+37
    %v3499 = vand.u32 %v3486, 2147483648
    %v3500 = vor.u32 1.1754944e-38, %v3499
    %v3501 = vsel %vm3498, %v3500, %v3496
    %v3502 = vmul.f32 1.0, %v3501
    %v3503 = vrcp.pop %v3487
    %v3504 = vmul.f32 %v3487, %v3503
    %v3505 = vsub.f32 1.0, %v3504
    %v3506 = vmul.f32 %v3503, %v3505
    %v3507 = vadd.f32 %v3503, %v3506
    %vm3508 = vweird.f32 %v3487
    %vm3509 = vweird.f32 %v3503
    %vm3510 = vmor %vm3508, %vm3509
    %v3511 = vsel %vm3510, %v3503, %v3507
    %v3512 = vand.u32 2147483647, %v3487
    %vm3513 = vcmp.eq.f32.partialorder %v3512, 8.507059e+37
    %v3514 = vand.u32 %v3487, 2147483648
    %v3515 = vor.u32 1.1754944e-38, %v3514
    %v3516 = vsel %vm3513, %v3515, %v3511
    %v3517 = vmul.f32 1.0, %v3516
    %v3518 = vmul.f32 %v3462, %v3323
    %v3519 = vmul.f32 %v3477, %v3324
    %v3520 = vmul.f32 %v3424, %v3478
    %v3521 = vmul.f32 %v3439, %v3479
    %v3522 = vadd.f32 %v3518, %v3520
    %v3523 = vadd.f32 %v3519, %v3521
    %v3524 = vtanh.pop %v3522
    %v3525 = vtanh.pop %v3523
    %v3526 = vmul.f32 %v3502, %v3524
    %v3527 = vmul.f32 %v3517, %v3525
    %v3528 = vld [vmem:[#allocation2 + $0x280] sm:$0xff]
    %v3529 = vld [vmem:[#allocation2 + $0x288] sm:$0xff]
    %v3530 = vld [vmem:[#allocation2 + $0x290] sm:$0xff]
    %v3531 = vld [vmem:[#allocation2 + $0x298] sm:$0xff]
    %v3532 = vld [vmem:[#allocation2 + $0x2a0] sm:$0xff]
    %v3533 = vld [vmem:[#allocation2 + $0x2a8] sm:$0xff]
    %v3534 = vld [vmem:[#allocation2 + $0x2b0] sm:$0xff]
    %v3535 = vld [vmem:[#allocation2 + $0x2b8] sm:$0xff]
    %v3536 = vpack.c.bf16 %v3527, %v3526
    %3537 = vmatpush.bf16.msra.mxu0 %v1511
    %3538 = vmatpush.bf16.msra.mxu0 %v1507
    %3539 = vmatpush.bf16.msra.mxu0 %v1503
    %3540 = vmatpush.bf16.msra.mxu0 %v1499
    %3541 = vmatpush.bf16.msra.mxu0 %v1495
    %3542 = vmatpush.bf16.msra.mxu0 %v1491
    %3543 = vmatpush.bf16.msra.mxu0 %v1487
    %3544 = vmatpush.bf16.msra.mxu0 %v1483
    %3545 = vmatmul.bf16.gmra.mxu0 %v3536
    %v3546 = vpop.f32.mrf.mxu0
    %v3547 = vadd.f32 0.0, %v3546
    %v3548 = vpop.f32.mrf.mxu0
    %v3549 = vadd.f32 0.0, %v3548
    %3550 = vdwg.mxu0
    %3551 = vmatpush.bf16.msra.mxu0 %v1512
    %3552 = vmatpush.bf16.msra.mxu0 %v1508
    %3553 = vmatpush.bf16.msra.mxu0 %v1504
    %3554 = vmatpush.bf16.msra.mxu0 %v1500
    %3555 = vmatpush.bf16.msra.mxu0 %v1496
    %3556 = vmatpush.bf16.msra.mxu0 %v1492
    %3557 = vmatpush.bf16.msra.mxu0 %v1488
    %3558 = vmatpush.bf16.msra.mxu0 %v1484
    %3559 = vmatmul.bf16.gmra.mxu0 %v3536
    %v3560 = vpop.f32.mrf.mxu0
    %v3561 = vadd.f32 0.0, %v3560
    %v3562 = vpop.f32.mrf.mxu0
    %v3563 = vadd.f32 0.0, %v3562
    %3564 = vdwg.mxu0
    %3565 = vmatpush.bf16.msra.mxu0 %v1513
    %3566 = vmatpush.bf16.msra.mxu0 %v1509
    %3567 = vmatpush.bf16.msra.mxu0 %v1505
    %3568 = vmatpush.bf16.msra.mxu0 %v1501
    %3569 = vmatpush.bf16.msra.mxu0 %v1497
    %3570 = vmatpush.bf16.msra.mxu0 %v1493
    %3571 = vmatpush.bf16.msra.mxu0 %v1489
    %3572 = vmatpush.bf16.msra.mxu0 %v1485
    %3573 = vmatmul.bf16.gmra.mxu0 %v3536
    %v3574 = vpop.f32.mrf.mxu0
    %v3575 = vadd.f32 0.0, %v3574
    %v3576 = vpop.f32.mrf.mxu0
    %v3577 = vadd.f32 0.0, %v3576
    %3578 = vdwg.mxu0
    %3579 = vmatpush.bf16.msra.mxu0 %v1514
    %3580 = vmatpush.bf16.msra.mxu0 %v1510
    %3581 = vmatpush.bf16.msra.mxu0 %v1506
    %3582 = vmatpush.bf16.msra.mxu0 %v1502
    %3583 = vmatpush.bf16.msra.mxu0 %v1498
    %3584 = vmatpush.bf16.msra.mxu0 %v1494
    %3585 = vmatpush.bf16.msra.mxu0 %v1490
    %3586 = vmatpush.bf16.msra.mxu0 %v1486
    %3587 = vmatmul.bf16.gmra.mxu0 %v3536
    %v3588 = vpop.f32.mrf.mxu0
    %v3589 = vadd.f32 0.0, %v3588
    %v3590 = vpop.f32.mrf.mxu0
    %v3591 = vadd.f32 0.0, %v3590
    %3592 = vdwg.mxu0
    %v3593 = vadd.f32 %v3528, %v3547
    %v3594 = vadd.f32 %v3529, %v3561
    %v3595 = vadd.f32 %v3530, %v3575
    %v3596 = vadd.f32 %v3531, %v3589
    %v3597 = vadd.f32 %v3532, %v3549
    %v3598 = vadd.f32 %v3533, %v3563
    %v3599 = vadd.f32 %v3534, %v3577
    %v3600 = vadd.f32 %v3535, %v3591
    %v3601 = vxor.u32 %v3593, 2147483648
    %v3602 = vxor.u32 %v3597, 2147483648
    %v3603 = vmul.f32 %v3601, 1.442695
    %v3604 = vpow.pop %v3603
    %v3605 = vmul.f32 %v3602, 1.442695
    %v3606 = vpow.pop %v3605
    %v3607 = vadd.f32 %v3604, 1.0
    %v3608 = vadd.f32 %v3606, 1.0
    %v3609 = vrcp.pop %v3607
    %v3610 = vmul.f32 %v3607, %v3609
    %v3611 = vsub.f32 1.0, %v3610
    %v3612 = vmul.f32 %v3609, %v3611
    %v3613 = vadd.f32 %v3609, %v3612
    %vm3614 = vweird.f32 %v3607
    %vm3615 = vweird.f32 %v3609
    %vm3616 = vmor %vm3614, %vm3615
    %v3617 = vsel %vm3616, %v3609, %v3613
    %v3618 = vand.u32 2147483647, %v3607
    %vm3619 = vcmp.eq.f32.partialorder %v3618, 8.507059e+37
    %v3620 = vand.u32 %v3607, 2147483648
    %v3621 = vor.u32 1.1754944e-38, %v3620
    %v3622 = vsel %vm3619, %v3621, %v3617
    %v3623 = vmul.f32 1.0, %v3622
    %v3624 = vrcp.pop %v3608
    %v3625 = vmul.f32 %v3608, %v3624
    %v3626 = vsub.f32 1.0, %v3625
    %v3627 = vmul.f32 %v3624, %v3626
    %v3628 = vadd.f32 %v3624, %v3627
    %vm3629 = vweird.f32 %v3608
    %vm3630 = vweird.f32 %v3624
    %vm3631 = vmor %vm3629, %vm3630
    %v3632 = vsel %vm3631, %v3624, %v3628
    %v3633 = vand.u32 2147483647, %v3608
    %vm3634 = vcmp.eq.f32.partialorder %v3633, 8.507059e+37
    %v3635 = vand.u32 %v3608, 2147483648
    %v3636 = vor.u32 1.1754944e-38, %v3635
    %v3637 = vsel %vm3634, %v3636, %v3632
    %v3638 = vmul.f32 1.0, %v3637
    %v3639 = vxor.u32 %v3594, 2147483648
    %v3640 = vxor.u32 %v3598, 2147483648
    %v3641 = vmul.f32 %v3639, 1.442695
    %v3642 = vpow.pop %v3641
    %v3643 = vmul.f32 %v3640, 1.442695
    %v3644 = vpow.pop %v3643
    %v3645 = vadd.f32 %v3642, 1.0
    %v3646 = vadd.f32 %v3644, 1.0
    %v3647 = vrcp.pop %v3645
    %v3648 = vmul.f32 %v3645, %v3647
    %v3649 = vsub.f32 1.0, %v3648
    %v3650 = vmul.f32 %v3647, %v3649
    %v3651 = vadd.f32 %v3647, %v3650
    %vm3652 = vweird.f32 %v3645
    %vm3653 = vweird.f32 %v3647
    %vm3654 = vmor %vm3652, %vm3653
    %v3655 = vsel %vm3654, %v3647, %v3651
    %v3656 = vand.u32 2147483647, %v3645
    %vm3657 = vcmp.eq.f32.partialorder %v3656, 8.507059e+37
    %v3658 = vand.u32 %v3645, 2147483648
    %v3659 = vor.u32 1.1754944e-38, %v3658
    %v3660 = vsel %vm3657, %v3659, %v3655
    %v3661 = vmul.f32 1.0, %v3660
    %v3662 = vrcp.pop %v3646
    %v3663 = vmul.f32 %v3646, %v3662
    %v3664 = vsub.f32 1.0, %v3663
    %v3665 = vmul.f32 %v3662, %v3664
    %v3666 = vadd.f32 %v3662, %v3665
    %vm3667 = vweird.f32 %v3646
    %vm3668 = vweird.f32 %v3662
    %vm3669 = vmor %vm3667, %vm3668
    %v3670 = vsel %vm3669, %v3662, %v3666
    %v3671 = vand.u32 2147483647, %v3646
    %vm3672 = vcmp.eq.f32.partialorder %v3671, 8.507059e+37
    %v3673 = vand.u32 %v3646, 2147483648
    %v3674 = vor.u32 1.1754944e-38, %v3673
    %v3675 = vsel %vm3672, %v3674, %v3670
    %v3676 = vmul.f32 1.0, %v3675
    %v3677 = vtanh.pop %v3595
    %v3678 = vtanh.pop %v3599
    %v3679 = vxor.u32 %v3596, 2147483648
    %v3680 = vxor.u32 %v3600, 2147483648
    %v3681 = vmul.f32 %v3679, 1.442695
    %v3682 = vpow.pop %v3681
    %v3683 = vmul.f32 %v3680, 1.442695
    %v3684 = vpow.pop %v3683
    %v3685 = vadd.f32 %v3682, 1.0
    %v3686 = vadd.f32 %v3684, 1.0
    %v3687 = vrcp.pop %v3685
    %v3688 = vmul.f32 %v3685, %v3687
    %v3689 = vsub.f32 1.0, %v3688
    %v3690 = vmul.f32 %v3687, %v3689
    %v3691 = vadd.f32 %v3687, %v3690
    %vm3692 = vweird.f32 %v3685
    %vm3693 = vweird.f32 %v3687
    %vm3694 = vmor %vm3692, %vm3693
    %v3695 = vsel %vm3694, %v3687, %v3691
    %v3696 = vand.u32 2147483647, %v3685
    %vm3697 = vcmp.eq.f32.partialorder %v3696, 8.507059e+37
    %v3698 = vand.u32 %v3685, 2147483648
    %v3699 = vor.u32 1.1754944e-38, %v3698
    %v3700 = vsel %vm3697, %v3699, %v3695
    %v3701 = vmul.f32 1.0, %v3700
    %v3702 = vrcp.pop %v3686
    %v3703 = vmul.f32 %v3686, %v3702
    %v3704 = vsub.f32 1.0, %v3703
    %v3705 = vmul.f32 %v3702, %v3704
    %v3706 = vadd.f32 %v3702, %v3705
    %vm3707 = vweird.f32 %v3686
    %vm3708 = vweird.f32 %v3702
    %vm3709 = vmor %vm3707, %vm3708
    %v3710 = vsel %vm3709, %v3702, %v3706
    %v3711 = vand.u32 2147483647, %v3686
    %vm3712 = vcmp.eq.f32.partialorder %v3711, 8.507059e+37
    %v3713 = vand.u32 %v3686, 2147483648
    %v3714 = vor.u32 1.1754944e-38, %v3713
    %v3715 = vsel %vm3712, %v3714, %v3710
    %v3716 = vmul.f32 1.0, %v3715
    %v3717 = vmul.f32 %v3661, %v3522
    %v3718 = vmul.f32 %v3676, %v3523
    %v3719 = vmul.f32 %v3623, %v3677
    %v3720 = vmul.f32 %v3638, %v3678
    %v3721 = vadd.f32 %v3717, %v3719
    %v3722 = vadd.f32 %v3718, %v3720
    %v3723 = vtanh.pop %v3721
    %v3724 = vtanh.pop %v3722
    %v3725 = vmul.f32 %v3701, %v3723
    %v3726 = vmul.f32 %v3716, %v3724
    %v3727 = vld [vmem:[#allocation2 + $0x2c0] sm:$0xff]
    %v3728 = vld [vmem:[#allocation2 + $0x2c8] sm:$0xff]
    %v3729 = vld [vmem:[#allocation2 + $0x2d0] sm:$0xff]
    %v3730 = vld [vmem:[#allocation2 + $0x2d8] sm:$0xff]
    %v3731 = vld [vmem:[#allocation2 + $0x2e0] sm:$0xff]
    %v3732 = vld [vmem:[#allocation2 + $0x2e8] sm:$0xff]
    %v3733 = vld [vmem:[#allocation2 + $0x2f0] sm:$0xff]
    %v3734 = vld [vmem:[#allocation2 + $0x2f8] sm:$0xff]
    %v3735 = vpack.c.bf16 %v3726, %v3725
    %3736 = vmatpush.bf16.msra.mxu0 %v1511
    %3737 = vmatpush.bf16.msra.mxu0 %v1507
    %3738 = vmatpush.bf16.msra.mxu0 %v1503
    %3739 = vmatpush.bf16.msra.mxu0 %v1499
    %3740 = vmatpush.bf16.msra.mxu0 %v1495
    %3741 = vmatpush.bf16.msra.mxu0 %v1491
    %3742 = vmatpush.bf16.msra.mxu0 %v1487
    %3743 = vmatpush.bf16.msra.mxu0 %v1483
    %3744 = vmatmul.bf16.gmra.mxu0 %v3735
    %v3745 = vpop.f32.mrf.mxu0
    %v3746 = vadd.f32 0.0, %v3745
    %v3747 = vpop.f32.mrf.mxu0
    %v3748 = vadd.f32 0.0, %v3747
    %3749 = vdwg.mxu0
    %3750 = vmatpush.bf16.msra.mxu0 %v1512
    %3751 = vmatpush.bf16.msra.mxu0 %v1508
    %3752 = vmatpush.bf16.msra.mxu0 %v1504
    %3753 = vmatpush.bf16.msra.mxu0 %v1500
    %3754 = vmatpush.bf16.msra.mxu0 %v1496
    %3755 = vmatpush.bf16.msra.mxu0 %v1492
    %3756 = vmatpush.bf16.msra.mxu0 %v1488
    %3757 = vmatpush.bf16.msra.mxu0 %v1484
    %3758 = vmatmul.bf16.gmra.mxu0 %v3735
    %v3759 = vpop.f32.mrf.mxu0
    %v3760 = vadd.f32 0.0, %v3759
    %v3761 = vpop.f32.mrf.mxu0
    %v3762 = vadd.f32 0.0, %v3761
    %3763 = vdwg.mxu0
    %3764 = vmatpush.bf16.msra.mxu0 %v1513
    %3765 = vmatpush.bf16.msra.mxu0 %v1509
    %3766 = vmatpush.bf16.msra.mxu0 %v1505
    %3767 = vmatpush.bf16.msra.mxu0 %v1501
    %3768 = vmatpush.bf16.msra.mxu0 %v1497
    %3769 = vmatpush.bf16.msra.mxu0 %v1493
    %3770 = vmatpush.bf16.msra.mxu0 %v1489
    %3771 = vmatpush.bf16.msra.mxu0 %v1485
    %3772 = vmatmul.bf16.gmra.mxu0 %v3735
    %v3773 = vpop.f32.mrf.mxu0
    %v3774 = vadd.f32 0.0, %v3773
    %v3775 = vpop.f32.mrf.mxu0
    %v3776 = vadd.f32 0.0, %v3775
    %3777 = vdwg.mxu0
    %3778 = vmatpush.bf16.msra.mxu0 %v1514
    %3779 = vmatpush.bf16.msra.mxu0 %v1510
    %3780 = vmatpush.bf16.msra.mxu0 %v1506
    %3781 = vmatpush.bf16.msra.mxu0 %v1502
    %3782 = vmatpush.bf16.msra.mxu0 %v1498
    %3783 = vmatpush.bf16.msra.mxu0 %v1494
    %3784 = vmatpush.bf16.msra.mxu0 %v1490
    %3785 = vmatpush.bf16.msra.mxu0 %v1486
    %3786 = vmatmul.bf16.gmra.mxu0 %v3735
    %v3787 = vpop.f32.mrf.mxu0
    %v3788 = vadd.f32 0.0, %v3787
    %v3789 = vpop.f32.mrf.mxu0
    %v3790 = vadd.f32 0.0, %v3789
    %3791 = vdwg.mxu0
    %v3792 = vadd.f32 %v3727, %v3746
    %v3793 = vadd.f32 %v3728, %v3760
    %v3794 = vadd.f32 %v3729, %v3774
    %v3795 = vadd.f32 %v3730, %v3788
    %v3796 = vadd.f32 %v3731, %v3748
    %v3797 = vadd.f32 %v3732, %v3762
    %v3798 = vadd.f32 %v3733, %v3776
    %v3799 = vadd.f32 %v3734, %v3790
    %v3800 = vxor.u32 %v3792, 2147483648
    %v3801 = vxor.u32 %v3796, 2147483648
    %v3802 = vmul.f32 %v3800, 1.442695
    %v3803 = vpow.pop %v3802
    %v3804 = vmul.f32 %v3801, 1.442695
    %v3805 = vpow.pop %v3804
    %v3806 = vadd.f32 %v3803, 1.0
    %v3807 = vadd.f32 %v3805, 1.0
    %v3808 = vrcp.pop %v3806
    %v3809 = vmul.f32 %v3806, %v3808
    %v3810 = vsub.f32 1.0, %v3809
    %v3811 = vmul.f32 %v3808, %v3810
    %v3812 = vadd.f32 %v3808, %v3811
    %vm3813 = vweird.f32 %v3806
    %vm3814 = vweird.f32 %v3808
    %vm3815 = vmor %vm3813, %vm3814
    %v3816 = vsel %vm3815, %v3808, %v3812
    %v3817 = vand.u32 2147483647, %v3806
    %vm3818 = vcmp.eq.f32.partialorder %v3817, 8.507059e+37
    %v3819 = vand.u32 %v3806, 2147483648
    %v3820 = vor.u32 1.1754944e-38, %v3819
    %v3821 = vsel %vm3818, %v3820, %v3816
    %v3822 = vmul.f32 1.0, %v3821
    %v3823 = vrcp.pop %v3807
    %v3824 = vmul.f32 %v3807, %v3823
    %v3825 = vsub.f32 1.0, %v3824
    %v3826 = vmul.f32 %v3823, %v3825
    %v3827 = vadd.f32 %v3823, %v3826
    %vm3828 = vweird.f32 %v3807
    %vm3829 = vweird.f32 %v3823
    %vm3830 = vmor %vm3828, %vm3829
    %v3831 = vsel %vm3830, %v3823, %v3827
    %v3832 = vand.u32 2147483647, %v3807
    %vm3833 = vcmp.eq.f32.partialorder %v3832, 8.507059e+37
    %v3834 = vand.u32 %v3807, 2147483648
    %v3835 = vor.u32 1.1754944e-38, %v3834
    %v3836 = vsel %vm3833, %v3835, %v3831
    %v3837 = vmul.f32 1.0, %v3836
    %v3838 = vxor.u32 %v3793, 2147483648
    %v3839 = vxor.u32 %v3797, 2147483648
    %v3840 = vmul.f32 %v3838, 1.442695
    %v3841 = vpow.pop %v3840
    %v3842 = vmul.f32 %v3839, 1.442695
    %v3843 = vpow.pop %v3842
    %v3844 = vadd.f32 %v3841, 1.0
    %v3845 = vadd.f32 %v3843, 1.0
    %v3846 = vrcp.pop %v3844
    %v3847 = vmul.f32 %v3844, %v3846
    %v3848 = vsub.f32 1.0, %v3847
    %v3849 = vmul.f32 %v3846, %v3848
    %v3850 = vadd.f32 %v3846, %v3849
    %vm3851 = vweird.f32 %v3844
    %vm3852 = vweird.f32 %v3846
    %vm3853 = vmor %vm3851, %vm3852
    %v3854 = vsel %vm3853, %v3846, %v3850
    %v3855 = vand.u32 2147483647, %v3844
    %vm3856 = vcmp.eq.f32.partialorder %v3855, 8.507059e+37
    %v3857 = vand.u32 %v3844, 2147483648
    %v3858 = vor.u32 1.1754944e-38, %v3857
    %v3859 = vsel %vm3856, %v3858, %v3854
    %v3860 = vmul.f32 1.0, %v3859
    %v3861 = vrcp.pop %v3845
    %v3862 = vmul.f32 %v3845, %v3861
    %v3863 = vsub.f32 1.0, %v3862
    %v3864 = vmul.f32 %v3861, %v3863
    %v3865 = vadd.f32 %v3861, %v3864
    %vm3866 = vweird.f32 %v3845
    %vm3867 = vweird.f32 %v3861
    %vm3868 = vmor %vm3866, %vm3867
    %v3869 = vsel %vm3868, %v3861, %v3865
    %v3870 = vand.u32 2147483647, %v3845
    %vm3871 = vcmp.eq.f32.partialorder %v3870, 8.507059e+37
    %v3872 = vand.u32 %v3845, 2147483648
    %v3873 = vor.u32 1.1754944e-38, %v3872
    %v3874 = vsel %vm3871, %v3873, %v3869
    %v3875 = vmul.f32 1.0, %v3874
    %v3876 = vtanh.pop %v3794
    %v3877 = vtanh.pop %v3798
    %v3878 = vxor.u32 %v3795, 2147483648
    %v3879 = vxor.u32 %v3799, 2147483648
    %v3880 = vmul.f32 %v3878, 1.442695
    %v3881 = vpow.pop %v3880
    %v3882 = vmul.f32 %v3879, 1.442695
    %v3883 = vpow.pop %v3882
    %v3884 = vadd.f32 %v3881, 1.0
    %v3885 = vadd.f32 %v3883, 1.0
    %v3886 = vrcp.pop %v3884
    %v3887 = vmul.f32 %v3884, %v3886
    %v3888 = vsub.f32 1.0, %v3887
    %v3889 = vmul.f32 %v3886, %v3888
    %v3890 = vadd.f32 %v3886, %v3889
    %vm3891 = vweird.f32 %v3884
    %vm3892 = vweird.f32 %v3886
    %vm3893 = vmor %vm3891, %vm3892
    %v3894 = vsel %vm3893, %v3886, %v3890
    %v3895 = vand.u32 2147483647, %v3884
    %vm3896 = vcmp.eq.f32.partialorder %v3895, 8.507059e+37
    %v3897 = vand.u32 %v3884, 2147483648
    %v3898 = vor.u32 1.1754944e-38, %v3897
    %v3899 = vsel %vm3896, %v3898, %v3894
    %v3900 = vmul.f32 1.0, %v3899
    %v3901 = vrcp.pop %v3885
    %v3902 = vmul.f32 %v3885, %v3901
    %v3903 = vsub.f32 1.0, %v3902
    %v3904 = vmul.f32 %v3901, %v3903
    %v3905 = vadd.f32 %v3901, %v3904
    %vm3906 = vweird.f32 %v3885
    %vm3907 = vweird.f32 %v3901
    %vm3908 = vmor %vm3906, %vm3907
    %v3909 = vsel %vm3908, %v3901, %v3905
    %v3910 = vand.u32 2147483647, %v3885
    %vm3911 = vcmp.eq.f32.partialorder %v3910, 8.507059e+37
    %v3912 = vand.u32 %v3885, 2147483648
    %v3913 = vor.u32 1.1754944e-38, %v3912
    %v3914 = vsel %vm3911, %v3913, %v3909
    %v3915 = vmul.f32 1.0, %v3914
    %v3916 = vmul.f32 %v3860, %v3721
    %v3917 = vmul.f32 %v3875, %v3722
    %v3918 = vmul.f32 %v3822, %v3876
    %v3919 = vmul.f32 %v3837, %v3877
    %v3920 = vadd.f32 %v3916, %v3918
    %v3921 = vadd.f32 %v3917, %v3919
    %v3922 = vtanh.pop %v3920
    %v3923 = vtanh.pop %v3921
    %v3924 = vmul.f32 %v3900, %v3922
    %v3925 = vmul.f32 %v3915, %v3923
    %v3926 = vld [vmem:[#allocation2 + $0x300] sm:$0xff]
    %v3927 = vld [vmem:[#allocation2 + $0x308] sm:$0xff]
    %v3928 = vld [vmem:[#allocation2 + $0x310] sm:$0xff]
    %v3929 = vld [vmem:[#allocation2 + $0x318] sm:$0xff]
    %v3930 = vld [vmem:[#allocation2 + $0x320] sm:$0xff]
    %v3931 = vld [vmem:[#allocation2 + $0x328] sm:$0xff]
    %v3932 = vld [vmem:[#allocation2 + $0x330] sm:$0xff]
    %v3933 = vld [vmem:[#allocation2 + $0x338] sm:$0xff]
    %v3934 = vpack.c.bf16 %v3925, %v3924
    %3935 = vmatpush.bf16.msra.mxu0 %v1511
    %3936 = vmatpush.bf16.msra.mxu0 %v1507
    %3937 = vmatpush.bf16.msra.mxu0 %v1503
    %3938 = vmatpush.bf16.msra.mxu0 %v1499
    %3939 = vmatpush.bf16.msra.mxu0 %v1495
    %3940 = vmatpush.bf16.msra.mxu0 %v1491
    %3941 = vmatpush.bf16.msra.mxu0 %v1487
    %3942 = vmatpush.bf16.msra.mxu0 %v1483
    %3943 = vmatmul.bf16.gmra.mxu0 %v3934
    %v3944 = vpop.f32.mrf.mxu0
    %v3945 = vadd.f32 0.0, %v3944
    %v3946 = vpop.f32.mrf.mxu0
    %v3947 = vadd.f32 0.0, %v3946
    %3948 = vdwg.mxu0
    %3949 = vmatpush.bf16.msra.mxu0 %v1512
    %3950 = vmatpush.bf16.msra.mxu0 %v1508
    %3951 = vmatpush.bf16.msra.mxu0 %v1504
    %3952 = vmatpush.bf16.msra.mxu0 %v1500
    %3953 = vmatpush.bf16.msra.mxu0 %v1496
    %3954 = vmatpush.bf16.msra.mxu0 %v1492
    %3955 = vmatpush.bf16.msra.mxu0 %v1488
    %3956 = vmatpush.bf16.msra.mxu0 %v1484
    %3957 = vmatmul.bf16.gmra.mxu0 %v3934
    %v3958 = vpop.f32.mrf.mxu0
    %v3959 = vadd.f32 0.0, %v3958
    %v3960 = vpop.f32.mrf.mxu0
    %v3961 = vadd.f32 0.0, %v3960
    %3962 = vdwg.mxu0
    %3963 = vmatpush.bf16.msra.mxu0 %v1513
    %3964 = vmatpush.bf16.msra.mxu0 %v1509
    %3965 = vmatpush.bf16.msra.mxu0 %v1505
    %3966 = vmatpush.bf16.msra.mxu0 %v1501
    %3967 = vmatpush.bf16.msra.mxu0 %v1497
    %3968 = vmatpush.bf16.msra.mxu0 %v1493
    %3969 = vmatpush.bf16.msra.mxu0 %v1489
    %3970 = vmatpush.bf16.msra.mxu0 %v1485
    %3971 = vmatmul.bf16.gmra.mxu0 %v3934
    %v3972 = vpop.f32.mrf.mxu0
    %v3973 = vadd.f32 0.0, %v3972
    %v3974 = vpop.f32.mrf.mxu0
    %v3975 = vadd.f32 0.0, %v3974
    %3976 = vdwg.mxu0
    %3977 = vmatpush.bf16.msra.mxu0 %v1514
    %3978 = vmatpush.bf16.msra.mxu0 %v1510
    %3979 = vmatpush.bf16.msra.mxu0 %v1506
    %3980 = vmatpush.bf16.msra.mxu0 %v1502
    %3981 = vmatpush.bf16.msra.mxu0 %v1498
    %3982 = vmatpush.bf16.msra.mxu0 %v1494
    %3983 = vmatpush.bf16.msra.mxu0 %v1490
    %3984 = vmatpush.bf16.msra.mxu0 %v1486
    %3985 = vmatmul.bf16.gmra.mxu0 %v3934
    %v3986 = vpop.f32.mrf.mxu0
    %v3987 = vadd.f32 0.0, %v3986
    %v3988 = vpop.f32.mrf.mxu0
    %v3989 = vadd.f32 0.0, %v3988
    %3990 = vdwg.mxu0
    %v3991 = vadd.f32 %v3926, %v3945
    %v3992 = vadd.f32 %v3927, %v3959
    %v3993 = vadd.f32 %v3928, %v3973
    %v3994 = vadd.f32 %v3929, %v3987
    %v3995 = vadd.f32 %v3930, %v3947
    %v3996 = vadd.f32 %v3931, %v3961
    %v3997 = vadd.f32 %v3932, %v3975
    %v3998 = vadd.f32 %v3933, %v3989
    %v3999 = vxor.u32 %v3991, 2147483648
    %v4000 = vxor.u32 %v3995, 2147483648
    %v4001 = vmul.f32 %v3999, 1.442695
    %v4002 = vpow.pop %v4001
    %v4003 = vmul.f32 %v4000, 1.442695
    %v4004 = vpow.pop %v4003
    %v4005 = vadd.f32 %v4002, 1.0
    %v4006 = vadd.f32 %v4004, 1.0
    %v4007 = vrcp.pop %v4005
    %v4008 = vmul.f32 %v4005, %v4007
    %v4009 = vsub.f32 1.0, %v4008
    %v4010 = vmul.f32 %v4007, %v4009
    %v4011 = vadd.f32 %v4007, %v4010
    %vm4012 = vweird.f32 %v4005
    %vm4013 = vweird.f32 %v4007
    %vm4014 = vmor %vm4012, %vm4013
    %v4015 = vsel %vm4014, %v4007, %v4011
    %v4016 = vand.u32 2147483647, %v4005
    %vm4017 = vcmp.eq.f32.partialorder %v4016, 8.507059e+37
    %v4018 = vand.u32 %v4005, 2147483648
    %v4019 = vor.u32 1.1754944e-38, %v4018
    %v4020 = vsel %vm4017, %v4019, %v4015
    %v4021 = vmul.f32 1.0, %v4020
    %v4022 = vrcp.pop %v4006
    %v4023 = vmul.f32 %v4006, %v4022
    %v4024 = vsub.f32 1.0, %v4023
    %v4025 = vmul.f32 %v4022, %v4024
    %v4026 = vadd.f32 %v4022, %v4025
    %vm4027 = vweird.f32 %v4006
    %vm4028 = vweird.f32 %v4022
    %vm4029 = vmor %vm4027, %vm4028
    %v4030 = vsel %vm4029, %v4022, %v4026
    %v4031 = vand.u32 2147483647, %v4006
    %vm4032 = vcmp.eq.f32.partialorder %v4031, 8.507059e+37
    %v4033 = vand.u32 %v4006, 2147483648
    %v4034 = vor.u32 1.1754944e-38, %v4033
    %v4035 = vsel %vm4032, %v4034, %v4030
    %v4036 = vmul.f32 1.0, %v4035
    %v4037 = vxor.u32 %v3992, 2147483648
    %v4038 = vxor.u32 %v3996, 2147483648
    %v4039 = vmul.f32 %v4037, 1.442695
    %v4040 = vpow.pop %v4039
    %v4041 = vmul.f32 %v4038, 1.442695
    %v4042 = vpow.pop %v4041
    %v4043 = vadd.f32 %v4040, 1.0
    %v4044 = vadd.f32 %v4042, 1.0
    %v4045 = vrcp.pop %v4043
    %v4046 = vmul.f32 %v4043, %v4045
    %v4047 = vsub.f32 1.0, %v4046
    %v4048 = vmul.f32 %v4045, %v4047
    %v4049 = vadd.f32 %v4045, %v4048
    %vm4050 = vweird.f32 %v4043
    %vm4051 = vweird.f32 %v4045
    %vm4052 = vmor %vm4050, %vm4051
    %v4053 = vsel %vm4052, %v4045, %v4049
    %v4054 = vand.u32 2147483647, %v4043
    %vm4055 = vcmp.eq.f32.partialorder %v4054, 8.507059e+37
    %v4056 = vand.u32 %v4043, 2147483648
    %v4057 = vor.u32 1.1754944e-38, %v4056
    %v4058 = vsel %vm4055, %v4057, %v4053
    %v4059 = vmul.f32 1.0, %v4058
    %v4060 = vrcp.pop %v4044
    %v4061 = vmul.f32 %v4044, %v4060
    %v4062 = vsub.f32 1.0, %v4061
    %v4063 = vmul.f32 %v4060, %v4062
    %v4064 = vadd.f32 %v4060, %v4063
    %vm4065 = vweird.f32 %v4044
    %vm4066 = vweird.f32 %v4060
    %vm4067 = vmor %vm4065, %vm4066
    %v4068 = vsel %vm4067, %v4060, %v4064
    %v4069 = vand.u32 2147483647, %v4044
    %vm4070 = vcmp.eq.f32.partialorder %v4069, 8.507059e+37
    %v4071 = vand.u32 %v4044, 2147483648
    %v4072 = vor.u32 1.1754944e-38, %v4071
    %v4073 = vsel %vm4070, %v4072, %v4068
    %v4074 = vmul.f32 1.0, %v4073
    %v4075 = vtanh.pop %v3993
    %v4076 = vtanh.pop %v3997
    %v4077 = vxor.u32 %v3994, 2147483648
    %v4078 = vxor.u32 %v3998, 2147483648
    %v4079 = vmul.f32 %v4077, 1.442695
    %v4080 = vpow.pop %v4079
    %v4081 = vmul.f32 %v4078, 1.442695
    %v4082 = vpow.pop %v4081
    %v4083 = vadd.f32 %v4080, 1.0
    %v4084 = vadd.f32 %v4082, 1.0
    %v4085 = vrcp.pop %v4083
    %v4086 = vmul.f32 %v4083, %v4085
    %v4087 = vsub.f32 1.0, %v4086
    %v4088 = vmul.f32 %v4085, %v4087
    %v4089 = vadd.f32 %v4085, %v4088
    %vm4090 = vweird.f32 %v4083
    %vm4091 = vweird.f32 %v4085
    %vm4092 = vmor %vm4090, %vm4091
    %v4093 = vsel %vm4092, %v4085, %v4089
    %v4094 = vand.u32 2147483647, %v4083
    %vm4095 = vcmp.eq.f32.partialorder %v4094, 8.507059e+37
    %v4096 = vand.u32 %v4083, 2147483648
    %v4097 = vor.u32 1.1754944e-38, %v4096
    %v4098 = vsel %vm4095, %v4097, %v4093
    %v4099 = vmul.f32 1.0, %v4098
    %v4100 = vrcp.pop %v4084
    %v4101 = vmul.f32 %v4084, %v4100
    %v4102 = vsub.f32 1.0, %v4101
    %v4103 = vmul.f32 %v4100, %v4102
    %v4104 = vadd.f32 %v4100, %v4103
    %vm4105 = vweird.f32 %v4084
    %vm4106 = vweird.f32 %v4100
    %vm4107 = vmor %vm4105, %vm4106
    %v4108 = vsel %vm4107, %v4100, %v4104
    %v4109 = vand.u32 2147483647, %v4084
    %vm4110 = vcmp.eq.f32.partialorder %v4109, 8.507059e+37
    %v4111 = vand.u32 %v4084, 2147483648
    %v4112 = vor.u32 1.1754944e-38, %v4111
    %v4113 = vsel %vm4110, %v4112, %v4108
    %v4114 = vmul.f32 1.0, %v4113
    %v4115 = vmul.f32 %v4059, %v3920
    %v4116 = vmul.f32 %v4074, %v3921
    %v4117 = vmul.f32 %v4021, %v4075
    %v4118 = vmul.f32 %v4036, %v4076
    %v4119 = vadd.f32 %v4115, %v4117
    %v4120 = vadd.f32 %v4116, %v4118
    %v4121 = vtanh.pop %v4119
    %v4122 = vtanh.pop %v4120
    %v4123 = vmul.f32 %v4099, %v4121
    %v4124 = vmul.f32 %v4114, %v4122
    %v4125 = vld [vmem:[#allocation2 + $0x340] sm:$0xff]
    %v4126 = vld [vmem:[#allocation2 + $0x348] sm:$0xff]
    %v4127 = vld [vmem:[#allocation2 + $0x350] sm:$0xff]
    %v4128 = vld [vmem:[#allocation2 + $0x358] sm:$0xff]
    %v4129 = vld [vmem:[#allocation2 + $0x360] sm:$0xff]
    %v4130 = vld [vmem:[#allocation2 + $0x368] sm:$0xff]
    %v4131 = vld [vmem:[#allocation2 + $0x370] sm:$0xff]
    %v4132 = vld [vmem:[#allocation2 + $0x378] sm:$0xff]
    %v4133 = vpack.c.bf16 %v4124, %v4123
    %4134 = vmatpush.bf16.msra.mxu0 %v1511
    %4135 = vmatpush.bf16.msra.mxu0 %v1507
    %4136 = vmatpush.bf16.msra.mxu0 %v1503
    %4137 = vmatpush.bf16.msra.mxu0 %v1499
    %4138 = vmatpush.bf16.msra.mxu0 %v1495
    %4139 = vmatpush.bf16.msra.mxu0 %v1491
    %4140 = vmatpush.bf16.msra.mxu0 %v1487
    %4141 = vmatpush.bf16.msra.mxu0 %v1483
    %4142 = vmatmul.bf16.gmra.mxu0 %v4133
    %v4143 = vpop.f32.mrf.mxu0
    %v4144 = vadd.f32 0.0, %v4143
    %v4145 = vpop.f32.mrf.mxu0
    %v4146 = vadd.f32 0.0, %v4145
    %4147 = vdwg.mxu0
    %4148 = vmatpush.bf16.msra.mxu0 %v1512
    %4149 = vmatpush.bf16.msra.mxu0 %v1508
    %4150 = vmatpush.bf16.msra.mxu0 %v1504
    %4151 = vmatpush.bf16.msra.mxu0 %v1500
    %4152 = vmatpush.bf16.msra.mxu0 %v1496
    %4153 = vmatpush.bf16.msra.mxu0 %v1492
    %4154 = vmatpush.bf16.msra.mxu0 %v1488
    %4155 = vmatpush.bf16.msra.mxu0 %v1484
    %4156 = vmatmul.bf16.gmra.mxu0 %v4133
    %v4157 = vpop.f32.mrf.mxu0
    %v4158 = vadd.f32 0.0, %v4157
    %v4159 = vpop.f32.mrf.mxu0
    %v4160 = vadd.f32 0.0, %v4159
    %4161 = vdwg.mxu0
    %4162 = vmatpush.bf16.msra.mxu0 %v1513
    %4163 = vmatpush.bf16.msra.mxu0 %v1509
    %4164 = vmatpush.bf16.msra.mxu0 %v1505
    %4165 = vmatpush.bf16.msra.mxu0 %v1501
    %4166 = vmatpush.bf16.msra.mxu0 %v1497
    %4167 = vmatpush.bf16.msra.mxu0 %v1493
    %4168 = vmatpush.bf16.msra.mxu0 %v1489
    %4169 = vmatpush.bf16.msra.mxu0 %v1485
    %4170 = vmatmul.bf16.gmra.mxu0 %v4133
    %v4171 = vpop.f32.mrf.mxu0
    %v4172 = vadd.f32 0.0, %v4171
    %v4173 = vpop.f32.mrf.mxu0
    %v4174 = vadd.f32 0.0, %v4173
    %4175 = vdwg.mxu0
    %4176 = vmatpush.bf16.msra.mxu0 %v1514
    %4177 = vmatpush.bf16.msra.mxu0 %v1510
    %4178 = vmatpush.bf16.msra.mxu0 %v1506
    %4179 = vmatpush.bf16.msra.mxu0 %v1502
    %4180 = vmatpush.bf16.msra.mxu0 %v1498
    %4181 = vmatpush.bf16.msra.mxu0 %v1494
    %4182 = vmatpush.bf16.msra.mxu0 %v1490
    %4183 = vmatpush.bf16.msra.mxu0 %v1486
    %4184 = vmatmul.bf16.gmra.mxu0 %v4133
    %v4185 = vpop.f32.mrf.mxu0
    %v4186 = vadd.f32 0.0, %v4185
    %v4187 = vpop.f32.mrf.mxu0
    %v4188 = vadd.f32 0.0, %v4187
    %4189 = vdwg.mxu0
    %v4190 = vadd.f32 %v4125, %v4144
    %v4191 = vadd.f32 %v4126, %v4158
    %v4192 = vadd.f32 %v4127, %v4172
    %v4193 = vadd.f32 %v4128, %v4186
    %v4194 = vadd.f32 %v4129, %v4146
    %v4195 = vadd.f32 %v4130, %v4160
    %v4196 = vadd.f32 %v4131, %v4174
    %v4197 = vadd.f32 %v4132, %v4188
    %v4198 = vxor.u32 %v4190, 2147483648
    %v4199 = vxor.u32 %v4194, 2147483648
    %v4200 = vmul.f32 %v4198, 1.442695
    %v4201 = vpow.pop %v4200
    %v4202 = vmul.f32 %v4199, 1.442695
    %v4203 = vpow.pop %v4202
    %v4204 = vadd.f32 %v4201, 1.0
    %v4205 = vadd.f32 %v4203, 1.0
    %v4206 = vrcp.pop %v4204
    %v4207 = vmul.f32 %v4204, %v4206
    %v4208 = vsub.f32 1.0, %v4207
    %v4209 = vmul.f32 %v4206, %v4208
    %v4210 = vadd.f32 %v4206, %v4209
    %vm4211 = vweird.f32 %v4204
    %vm4212 = vweird.f32 %v4206
    %vm4213 = vmor %vm4211, %vm4212
    %v4214 = vsel %vm4213, %v4206, %v4210
    %v4215 = vand.u32 2147483647, %v4204
    %vm4216 = vcmp.eq.f32.partialorder %v4215, 8.507059e+37
    %v4217 = vand.u32 %v4204, 2147483648
    %v4218 = vor.u32 1.1754944e-38, %v4217
    %v4219 = vsel %vm4216, %v4218, %v4214
    %v4220 = vmul.f32 1.0, %v4219
    %v4221 = vrcp.pop %v4205
    %v4222 = vmul.f32 %v4205, %v4221
    %v4223 = vsub.f32 1.0, %v4222
    %v4224 = vmul.f32 %v4221, %v4223
    %v4225 = vadd.f32 %v4221, %v4224
    %vm4226 = vweird.f32 %v4205
    %vm4227 = vweird.f32 %v4221
    %vm4228 = vmor %vm4226, %vm4227
    %v4229 = vsel %vm4228, %v4221, %v4225
    %v4230 = vand.u32 2147483647, %v4205
    %vm4231 = vcmp.eq.f32.partialorder %v4230, 8.507059e+37
    %v4232 = vand.u32 %v4205, 2147483648
    %v4233 = vor.u32 1.1754944e-38, %v4232
    %v4234 = vsel %vm4231, %v4233, %v4229
    %v4235 = vmul.f32 1.0, %v4234
    %v4236 = vxor.u32 %v4191, 2147483648
    %v4237 = vxor.u32 %v4195, 2147483648
    %v4238 = vmul.f32 %v4236, 1.442695
    %v4239 = vpow.pop %v4238
    %v4240 = vmul.f32 %v4237, 1.442695
    %v4241 = vpow.pop %v4240
    %v4242 = vadd.f32 %v4239, 1.0
    %v4243 = vadd.f32 %v4241, 1.0
    %v4244 = vrcp.pop %v4242
    %v4245 = vmul.f32 %v4242, %v4244
    %v4246 = vsub.f32 1.0, %v4245
    %v4247 = vmul.f32 %v4244, %v4246
    %v4248 = vadd.f32 %v4244, %v4247
    %vm4249 = vweird.f32 %v4242
    %vm4250 = vweird.f32 %v4244
    %vm4251 = vmor %vm4249, %vm4250
    %v4252 = vsel %vm4251, %v4244, %v4248
    %v4253 = vand.u32 2147483647, %v4242
    %vm4254 = vcmp.eq.f32.partialorder %v4253, 8.507059e+37
    %v4255 = vand.u32 %v4242, 2147483648
    %v4256 = vor.u32 1.1754944e-38, %v4255
    %v4257 = vsel %vm4254, %v4256, %v4252
    %v4258 = vmul.f32 1.0, %v4257
    %v4259 = vrcp.pop %v4243
    %v4260 = vmul.f32 %v4243, %v4259
    %v4261 = vsub.f32 1.0, %v4260
    %v4262 = vmul.f32 %v4259, %v4261
    %v4263 = vadd.f32 %v4259, %v4262
    %vm4264 = vweird.f32 %v4243
    %vm4265 = vweird.f32 %v4259
    %vm4266 = vmor %vm4264, %vm4265
    %v4267 = vsel %vm4266, %v4259, %v4263
    %v4268 = vand.u32 2147483647, %v4243
    %vm4269 = vcmp.eq.f32.partialorder %v4268, 8.507059e+37
    %v4270 = vand.u32 %v4243, 2147483648
    %v4271 = vor.u32 1.1754944e-38, %v4270
    %v4272 = vsel %vm4269, %v4271, %v4267
    %v4273 = vmul.f32 1.0, %v4272
    %v4274 = vtanh.pop %v4192
    %v4275 = vtanh.pop %v4196
    %v4276 = vxor.u32 %v4193, 2147483648
    %v4277 = vxor.u32 %v4197, 2147483648
    %v4278 = vmul.f32 %v4276, 1.442695
    %v4279 = vpow.pop %v4278
    %v4280 = vmul.f32 %v4277, 1.442695
    %v4281 = vpow.pop %v4280
    %v4282 = vadd.f32 %v4279, 1.0
    %v4283 = vadd.f32 %v4281, 1.0
    %v4284 = vrcp.pop %v4282
    %v4285 = vmul.f32 %v4282, %v4284
    %v4286 = vsub.f32 1.0, %v4285
    %v4287 = vmul.f32 %v4284, %v4286
    %v4288 = vadd.f32 %v4284, %v4287
    %vm4289 = vweird.f32 %v4282
    %vm4290 = vweird.f32 %v4284
    %vm4291 = vmor %vm4289, %vm4290
    %v4292 = vsel %vm4291, %v4284, %v4288
    %v4293 = vand.u32 2147483647, %v4282
    %vm4294 = vcmp.eq.f32.partialorder %v4293, 8.507059e+37
    %v4295 = vand.u32 %v4282, 2147483648
    %v4296 = vor.u32 1.1754944e-38, %v4295
    %v4297 = vsel %vm4294, %v4296, %v4292
    %v4298 = vmul.f32 1.0, %v4297
    %v4299 = vrcp.pop %v4283
    %v4300 = vmul.f32 %v4283, %v4299
    %v4301 = vsub.f32 1.0, %v4300
    %v4302 = vmul.f32 %v4299, %v4301
    %v4303 = vadd.f32 %v4299, %v4302
    %vm4304 = vweird.f32 %v4283
    %vm4305 = vweird.f32 %v4299
    %vm4306 = vmor %vm4304, %vm4305
    %v4307 = vsel %vm4306, %v4299, %v4303
    %v4308 = vand.u32 2147483647, %v4283
    %vm4309 = vcmp.eq.f32.partialorder %v4308, 8.507059e+37
    %v4310 = vand.u32 %v4283, 2147483648
    %v4311 = vor.u32 1.1754944e-38, %v4310
    %v4312 = vsel %vm4309, %v4311, %v4307
    %v4313 = vmul.f32 1.0, %v4312
    %v4314 = vmul.f32 %v4258, %v4119
    %v4315 = vmul.f32 %v4273, %v4120
    %v4316 = vmul.f32 %v4220, %v4274
    %v4317 = vmul.f32 %v4235, %v4275
    %v4318 = vadd.f32 %v4314, %v4316
    %v4319 = vadd.f32 %v4315, %v4317
    %v4320 = vtanh.pop %v4318
    %v4321 = vtanh.pop %v4319
    %v4322 = vmul.f32 %v4298, %v4320
    %v4323 = vmul.f32 %v4313, %v4321
    %v4324 = vld [vmem:[#allocation2 + $0x380] sm:$0xff]
    %v4325 = vld [vmem:[#allocation2 + $0x388] sm:$0xff]
    %v4326 = vld [vmem:[#allocation2 + $0x390] sm:$0xff]
    %v4327 = vld [vmem:[#allocation2 + $0x398] sm:$0xff]
    %v4328 = vld [vmem:[#allocation2 + $0x3a0] sm:$0xff]
    %v4329 = vld [vmem:[#allocation2 + $0x3a8] sm:$0xff]
    %v4330 = vld [vmem:[#allocation2 + $0x3b0] sm:$0xff]
    %v4331 = vld [vmem:[#allocation2 + $0x3b8] sm:$0xff]
    %v4332 = vpack.c.bf16 %v4323, %v4322
    %4333 = vmatpush.bf16.msra.mxu0 %v1511
    %4334 = vmatpush.bf16.msra.mxu0 %v1507
    %4335 = vmatpush.bf16.msra.mxu0 %v1503
    %4336 = vmatpush.bf16.msra.mxu0 %v1499
    %4337 = vmatpush.bf16.msra.mxu0 %v1495
    %4338 = vmatpush.bf16.msra.mxu0 %v1491
    %4339 = vmatpush.bf16.msra.mxu0 %v1487
    %4340 = vmatpush.bf16.msra.mxu0 %v1483
    %4341 = vmatmul.bf16.gmra.mxu0 %v4332
    %v4342 = vpop.f32.mrf.mxu0
    %v4343 = vadd.f32 0.0, %v4342
    %v4344 = vpop.f32.mrf.mxu0
    %v4345 = vadd.f32 0.0, %v4344
    %4346 = vdwg.mxu0
    %4347 = vmatpush.bf16.msra.mxu0 %v1512
    %4348 = vmatpush.bf16.msra.mxu0 %v1508
    %4349 = vmatpush.bf16.msra.mxu0 %v1504
    %4350 = vmatpush.bf16.msra.mxu0 %v1500
    %4351 = vmatpush.bf16.msra.mxu0 %v1496
    %4352 = vmatpush.bf16.msra.mxu0 %v1492
    %4353 = vmatpush.bf16.msra.mxu0 %v1488
    %4354 = vmatpush.bf16.msra.mxu0 %v1484
    %4355 = vmatmul.bf16.gmra.mxu0 %v4332
    %v4356 = vpop.f32.mrf.mxu0
    %v4357 = vadd.f32 0.0, %v4356
    %v4358 = vpop.f32.mrf.mxu0
    %v4359 = vadd.f32 0.0, %v4358
    %4360 = vdwg.mxu0
    %4361 = vmatpush.bf16.msra.mxu0 %v1513
    %4362 = vmatpush.bf16.msra.mxu0 %v1509
    %4363 = vmatpush.bf16.msra.mxu0 %v1505
    %4364 = vmatpush.bf16.msra.mxu0 %v1501
    %4365 = vmatpush.bf16.msra.mxu0 %v1497
    %4366 = vmatpush.bf16.msra.mxu0 %v1493
    %4367 = vmatpush.bf16.msra.mxu0 %v1489
    %4368 = vmatpush.bf16.msra.mxu0 %v1485
    %4369 = vmatmul.bf16.gmra.mxu0 %v4332
    %v4370 = vpop.f32.mrf.mxu0
    %v4371 = vadd.f32 0.0, %v4370
    %v4372 = vpop.f32.mrf.mxu0
    %v4373 = vadd.f32 0.0, %v4372
    %4374 = vdwg.mxu0
    %4375 = vmatpush.bf16.msra.mxu0 %v1514
    %4376 = vmatpush.bf16.msra.mxu0 %v1510
    %4377 = vmatpush.bf16.msra.mxu0 %v1506
    %4378 = vmatpush.bf16.msra.mxu0 %v1502
    %4379 = vmatpush.bf16.msra.mxu0 %v1498
    %4380 = vmatpush.bf16.msra.mxu0 %v1494
    %4381 = vmatpush.bf16.msra.mxu0 %v1490
    %4382 = vmatpush.bf16.msra.mxu0 %v1486
    %4383 = vmatmul.bf16.gmra.mxu0 %v4332
    %v4384 = vpop.f32.mrf.mxu0
    %v4385 = vadd.f32 0.0, %v4384
    %v4386 = vpop.f32.mrf.mxu0
    %v4387 = vadd.f32 0.0, %v4386
    %4388 = vdwg.mxu0
    %v4389 = vadd.f32 %v4324, %v4343
    %v4390 = vadd.f32 %v4325, %v4357
    %v4391 = vadd.f32 %v4326, %v4371
    %v4392 = vadd.f32 %v4327, %v4385
    %v4393 = vadd.f32 %v4328, %v4345
    %v4394 = vadd.f32 %v4329, %v4359
    %v4395 = vadd.f32 %v4330, %v4373
    %v4396 = vadd.f32 %v4331, %v4387
    %v4397 = vxor.u32 %v4389, 2147483648
    %v4398 = vxor.u32 %v4393, 2147483648
    %v4399 = vmul.f32 %v4397, 1.442695
    %v4400 = vpow.pop %v4399
    %v4401 = vmul.f32 %v4398, 1.442695
    %v4402 = vpow.pop %v4401
    %v4403 = vadd.f32 %v4400, 1.0
    %v4404 = vadd.f32 %v4402, 1.0
    %v4405 = vrcp.pop %v4403
    %v4406 = vmul.f32 %v4403, %v4405
    %v4407 = vsub.f32 1.0, %v4406
    %v4408 = vmul.f32 %v4405, %v4407
    %v4409 = vadd.f32 %v4405, %v4408
    %vm4410 = vweird.f32 %v4403
    %vm4411 = vweird.f32 %v4405
    %vm4412 = vmor %vm4410, %vm4411
    %v4413 = vsel %vm4412, %v4405, %v4409
    %v4414 = vand.u32 2147483647, %v4403
    %vm4415 = vcmp.eq.f32.partialorder %v4414, 8.507059e+37
    %v4416 = vand.u32 %v4403, 2147483648
    %v4417 = vor.u32 1.1754944e-38, %v4416
    %v4418 = vsel %vm4415, %v4417, %v4413
    %v4419 = vmul.f32 1.0, %v4418
    %v4420 = vrcp.pop %v4404
    %v4421 = vmul.f32 %v4404, %v4420
    %v4422 = vsub.f32 1.0, %v4421
    %v4423 = vmul.f32 %v4420, %v4422
    %v4424 = vadd.f32 %v4420, %v4423
    %vm4425 = vweird.f32 %v4404
    %vm4426 = vweird.f32 %v4420
    %vm4427 = vmor %vm4425, %vm4426
    %v4428 = vsel %vm4427, %v4420, %v4424
    %v4429 = vand.u32 2147483647, %v4404
    %vm4430 = vcmp.eq.f32.partialorder %v4429, 8.507059e+37
    %v4431 = vand.u32 %v4404, 2147483648
    %v4432 = vor.u32 1.1754944e-38, %v4431
    %v4433 = vsel %vm4430, %v4432, %v4428
    %v4434 = vmul.f32 1.0, %v4433
    %v4435 = vxor.u32 %v4390, 2147483648
    %v4436 = vxor.u32 %v4394, 2147483648
    %v4437 = vmul.f32 %v4435, 1.442695
    %v4438 = vpow.pop %v4437
    %v4439 = vmul.f32 %v4436, 1.442695
    %v4440 = vpow.pop %v4439
    %v4441 = vadd.f32 %v4438, 1.0
    %v4442 = vadd.f32 %v4440, 1.0
    %v4443 = vrcp.pop %v4441
    %v4444 = vmul.f32 %v4441, %v4443
    %v4445 = vsub.f32 1.0, %v4444
    %v4446 = vmul.f32 %v4443, %v4445
    %v4447 = vadd.f32 %v4443, %v4446
    %vm4448 = vweird.f32 %v4441
    %vm4449 = vweird.f32 %v4443
    %vm4450 = vmor %vm4448, %vm4449
    %v4451 = vsel %vm4450, %v4443, %v4447
    %v4452 = vand.u32 2147483647, %v4441
    %vm4453 = vcmp.eq.f32.partialorder %v4452, 8.507059e+37
    %v4454 = vand.u32 %v4441, 2147483648
    %v4455 = vor.u32 1.1754944e-38, %v4454
    %v4456 = vsel %vm4453, %v4455, %v4451
    %v4457 = vmul.f32 1.0, %v4456
    %v4458 = vrcp.pop %v4442
    %v4459 = vmul.f32 %v4442, %v4458
    %v4460 = vsub.f32 1.0, %v4459
    %v4461 = vmul.f32 %v4458, %v4460
    %v4462 = vadd.f32 %v4458, %v4461
    %vm4463 = vweird.f32 %v4442
    %vm4464 = vweird.f32 %v4458
    %vm4465 = vmor %vm4463, %vm4464
    %v4466 = vsel %vm4465, %v4458, %v4462
    %v4467 = vand.u32 2147483647, %v4442
    %vm4468 = vcmp.eq.f32.partialorder %v4467, 8.507059e+37
    %v4469 = vand.u32 %v4442, 2147483648
    %v4470 = vor.u32 1.1754944e-38, %v4469
    %v4471 = vsel %vm4468, %v4470, %v4466
    %v4472 = vmul.f32 1.0, %v4471
    %v4473 = vtanh.pop %v4391
    %v4474 = vtanh.pop %v4395
    %v4475 = vxor.u32 %v4392, 2147483648
    %v4476 = vxor.u32 %v4396, 2147483648
    %v4477 = vmul.f32 %v4475, 1.442695
    %v4478 = vpow.pop %v4477
    %v4479 = vmul.f32 %v4476, 1.442695
    %v4480 = vpow.pop %v4479
    %v4481 = vadd.f32 %v4478, 1.0
    %v4482 = vadd.f32 %v4480, 1.0
    %v4483 = vrcp.pop %v4481
    %v4484 = vmul.f32 %v4481, %v4483
    %v4485 = vsub.f32 1.0, %v4484
    %v4486 = vmul.f32 %v4483, %v4485
    %v4487 = vadd.f32 %v4483, %v4486
    %vm4488 = vweird.f32 %v4481
    %vm4489 = vweird.f32 %v4483
    %vm4490 = vmor %vm4488, %vm4489
    %v4491 = vsel %vm4490, %v4483, %v4487
    %v4492 = vand.u32 2147483647, %v4481
    %vm4493 = vcmp.eq.f32.partialorder %v4492, 8.507059e+37
    %v4494 = vand.u32 %v4481, 2147483648
    %v4495 = vor.u32 1.1754944e-38, %v4494
    %v4496 = vsel %vm4493, %v4495, %v4491
    %v4497 = vmul.f32 1.0, %v4496
    %v4498 = vrcp.pop %v4482
    %v4499 = vmul.f32 %v4482, %v4498
    %v4500 = vsub.f32 1.0, %v4499
    %v4501 = vmul.f32 %v4498, %v4500
    %v4502 = vadd.f32 %v4498, %v4501
    %vm4503 = vweird.f32 %v4482
    %vm4504 = vweird.f32 %v4498
    %vm4505 = vmor %vm4503, %vm4504
    %v4506 = vsel %vm4505, %v4498, %v4502
    %v4507 = vand.u32 2147483647, %v4482
    %vm4508 = vcmp.eq.f32.partialorder %v4507, 8.507059e+37
    %v4509 = vand.u32 %v4482, 2147483648
    %v4510 = vor.u32 1.1754944e-38, %v4509
    %v4511 = vsel %vm4508, %v4510, %v4506
    %v4512 = vmul.f32 1.0, %v4511
    %v4513 = vmul.f32 %v4457, %v4318
    %v4514 = vmul.f32 %v4472, %v4319
    %v4515 = vmul.f32 %v4419, %v4473
    %v4516 = vmul.f32 %v4434, %v4474
    %v4517 = vadd.f32 %v4513, %v4515
    %v4518 = vadd.f32 %v4514, %v4516
    %v4519 = vtanh.pop %v4517
    %v4520 = vtanh.pop %v4518
    %v4521 = vmul.f32 %v4497, %v4519
    %v4522 = vmul.f32 %v4512, %v4520
    %v4523 = vld [vmem:[#allocation2 + $0x3c0] sm:$0xff]
    %v4524 = vld [vmem:[#allocation2 + $0x3c8] sm:$0xff]
    %v4525 = vld [vmem:[#allocation2 + $0x3d0] sm:$0xff]
    %v4526 = vld [vmem:[#allocation2 + $0x3d8] sm:$0xff]
    %v4527 = vld [vmem:[#allocation2 + $0x3e0] sm:$0xff]
    %v4528 = vld [vmem:[#allocation2 + $0x3e8] sm:$0xff]
    %v4529 = vld [vmem:[#allocation2 + $0x3f0] sm:$0xff]
    %v4530 = vld [vmem:[#allocation2 + $0x3f8] sm:$0xff]
    %v4531 = vpack.c.bf16 %v4522, %v4521
    %4532 = vmatpush.bf16.msra.mxu0 %v1511
    %4533 = vmatpush.bf16.msra.mxu0 %v1507
    %4534 = vmatpush.bf16.msra.mxu0 %v1503
    %4535 = vmatpush.bf16.msra.mxu0 %v1499
    %4536 = vmatpush.bf16.msra.mxu0 %v1495
    %4537 = vmatpush.bf16.msra.mxu0 %v1491
    %4538 = vmatpush.bf16.msra.mxu0 %v1487
    %4539 = vmatpush.bf16.msra.mxu0 %v1483
    %4540 = vmatmul.bf16.gmra.mxu0 %v4531
    %v4541 = vpop.f32.mrf.mxu0
    %v4542 = vadd.f32 0.0, %v4541
    %v4543 = vpop.f32.mrf.mxu0
    %v4544 = vadd.f32 0.0, %v4543
    %4545 = vdwg.mxu0
    %4546 = vmatpush.bf16.msra.mxu0 %v1512
    %4547 = vmatpush.bf16.msra.mxu0 %v1508
    %4548 = vmatpush.bf16.msra.mxu0 %v1504
    %4549 = vmatpush.bf16.msra.mxu0 %v1500
    %4550 = vmatpush.bf16.msra.mxu0 %v1496
    %4551 = vmatpush.bf16.msra.mxu0 %v1492
    %4552 = vmatpush.bf16.msra.mxu0 %v1488
    %4553 = vmatpush.bf16.msra.mxu0 %v1484
    %4554 = vmatmul.bf16.gmra.mxu0 %v4531
    %v4555 = vpop.f32.mrf.mxu0
    %v4556 = vadd.f32 0.0, %v4555
    %v4557 = vpop.f32.mrf.mxu0
    %v4558 = vadd.f32 0.0, %v4557
    %4559 = vdwg.mxu0
    %4560 = vmatpush.bf16.msra.mxu0 %v1513
    %4561 = vmatpush.bf16.msra.mxu0 %v1509
    %4562 = vmatpush.bf16.msra.mxu0 %v1505
    %4563 = vmatpush.bf16.msra.mxu0 %v1501
    %4564 = vmatpush.bf16.msra.mxu0 %v1497
    %4565 = vmatpush.bf16.msra.mxu0 %v1493
    %4566 = vmatpush.bf16.msra.mxu0 %v1489
    %4567 = vmatpush.bf16.msra.mxu0 %v1485
    %4568 = vmatmul.bf16.gmra.mxu0 %v4531
    %v4569 = vpop.f32.mrf.mxu0
    %v4570 = vadd.f32 0.0, %v4569
    %v4571 = vpop.f32.mrf.mxu0
    %v4572 = vadd.f32 0.0, %v4571
    %4573 = vdwg.mxu0
    %4574 = vmatpush.bf16.msra.mxu0 %v1514
    %4575 = vmatpush.bf16.msra.mxu0 %v1510
    %4576 = vmatpush.bf16.msra.mxu0 %v1506
    %4577 = vmatpush.bf16.msra.mxu0 %v1502
    %4578 = vmatpush.bf16.msra.mxu0 %v1498
    %4579 = vmatpush.bf16.msra.mxu0 %v1494
    %4580 = vmatpush.bf16.msra.mxu0 %v1490
    %4581 = vmatpush.bf16.msra.mxu0 %v1486
    %4582 = vmatmul.bf16.gmra.mxu0 %v4531
    %v4583 = vpop.f32.mrf.mxu0
    %v4584 = vadd.f32 0.0, %v4583
    %v4585 = vpop.f32.mrf.mxu0
    %v4586 = vadd.f32 0.0, %v4585
    %4587 = vdwg.mxu0
    %v4588 = vadd.f32 %v4523, %v4542
    %v4589 = vadd.f32 %v4524, %v4556
    %v4590 = vadd.f32 %v4525, %v4570
    %v4591 = vadd.f32 %v4526, %v4584
    %v4592 = vadd.f32 %v4527, %v4544
    %v4593 = vadd.f32 %v4528, %v4558
    %v4594 = vadd.f32 %v4529, %v4572
    %v4595 = vadd.f32 %v4530, %v4586
    %v4596 = vxor.u32 %v4588, 2147483648
    %v4597 = vxor.u32 %v4592, 2147483648
    %v4598 = vmul.f32 %v4596, 1.442695
    %v4599 = vpow.pop %v4598
    %v4600 = vmul.f32 %v4597, 1.442695
    %v4601 = vpow.pop %v4600
    %v4602 = vadd.f32 %v4599, 1.0
    %v4603 = vadd.f32 %v4601, 1.0
    %v4604 = vrcp.pop %v4602
    %v4605 = vmul.f32 %v4602, %v4604
    %v4606 = vsub.f32 1.0, %v4605
    %v4607 = vmul.f32 %v4604, %v4606
    %v4608 = vadd.f32 %v4604, %v4607
    %vm4609 = vweird.f32 %v4602
    %vm4610 = vweird.f32 %v4604
    %vm4611 = vmor %vm4609, %vm4610
    %v4612 = vsel %vm4611, %v4604, %v4608
    %v4613 = vand.u32 2147483647, %v4602
    %vm4614 = vcmp.eq.f32.partialorder %v4613, 8.507059e+37
    %v4615 = vand.u32 %v4602, 2147483648
    %v4616 = vor.u32 1.1754944e-38, %v4615
    %v4617 = vsel %vm4614, %v4616, %v4612
    %v4618 = vmul.f32 1.0, %v4617
    %v4619 = vrcp.pop %v4603
    %v4620 = vmul.f32 %v4603, %v4619
    %v4621 = vsub.f32 1.0, %v4620
    %v4622 = vmul.f32 %v4619, %v4621
    %v4623 = vadd.f32 %v4619, %v4622
    %vm4624 = vweird.f32 %v4603
    %vm4625 = vweird.f32 %v4619
    %vm4626 = vmor %vm4624, %vm4625
    %v4627 = vsel %vm4626, %v4619, %v4623
    %v4628 = vand.u32 2147483647, %v4603
    %vm4629 = vcmp.eq.f32.partialorder %v4628, 8.507059e+37
    %v4630 = vand.u32 %v4603, 2147483648
    %v4631 = vor.u32 1.1754944e-38, %v4630
    %v4632 = vsel %vm4629, %v4631, %v4627
    %v4633 = vmul.f32 1.0, %v4632
    %v4634 = vxor.u32 %v4589, 2147483648
    %v4635 = vxor.u32 %v4593, 2147483648
    %v4636 = vmul.f32 %v4634, 1.442695
    %v4637 = vpow.pop %v4636
    %v4638 = vmul.f32 %v4635, 1.442695
    %v4639 = vpow.pop %v4638
    %v4640 = vadd.f32 %v4637, 1.0
    %v4641 = vadd.f32 %v4639, 1.0
    %v4642 = vrcp.pop %v4640
    %v4643 = vmul.f32 %v4640, %v4642
    %v4644 = vsub.f32 1.0, %v4643
    %v4645 = vmul.f32 %v4642, %v4644
    %v4646 = vadd.f32 %v4642, %v4645
    %vm4647 = vweird.f32 %v4640
    %vm4648 = vweird.f32 %v4642
    %vm4649 = vmor %vm4647, %vm4648
    %v4650 = vsel %vm4649, %v4642, %v4646
    %v4651 = vand.u32 2147483647, %v4640
    %vm4652 = vcmp.eq.f32.partialorder %v4651, 8.507059e+37
    %v4653 = vand.u32 %v4640, 2147483648
    %v4654 = vor.u32 1.1754944e-38, %v4653
    %v4655 = vsel %vm4652, %v4654, %v4650
    %v4656 = vmul.f32 1.0, %v4655
    %v4657 = vrcp.pop %v4641
    %v4658 = vmul.f32 %v4641, %v4657
    %v4659 = vsub.f32 1.0, %v4658
    %v4660 = vmul.f32 %v4657, %v4659
    %v4661 = vadd.f32 %v4657, %v4660
    %vm4662 = vweird.f32 %v4641
    %vm4663 = vweird.f32 %v4657
    %vm4664 = vmor %vm4662, %vm4663
    %v4665 = vsel %vm4664, %v4657, %v4661
    %v4666 = vand.u32 2147483647, %v4641
    %vm4667 = vcmp.eq.f32.partialorder %v4666, 8.507059e+37
    %v4668 = vand.u32 %v4641, 2147483648
    %v4669 = vor.u32 1.1754944e-38, %v4668
    %v4670 = vsel %vm4667, %v4669, %v4665
    %v4671 = vmul.f32 1.0, %v4670
    %v4672 = vtanh.pop %v4590
    %v4673 = vtanh.pop %v4594
    %v4674 = vxor.u32 %v4591, 2147483648
    %v4675 = vxor.u32 %v4595, 2147483648
    %v4676 = vmul.f32 %v4674, 1.442695
    %v4677 = vpow.pop %v4676
    %v4678 = vmul.f32 %v4675, 1.442695
    %v4679 = vpow.pop %v4678
    %v4680 = vadd.f32 %v4677, 1.0
    %v4681 = vadd.f32 %v4679, 1.0
    %v4682 = vrcp.pop %v4680
    %v4683 = vmul.f32 %v4680, %v4682
    %v4684 = vsub.f32 1.0, %v4683
    %v4685 = vmul.f32 %v4682, %v4684
    %v4686 = vadd.f32 %v4682, %v4685
    %vm4687 = vweird.f32 %v4680
    %vm4688 = vweird.f32 %v4682
    %vm4689 = vmor %vm4687, %vm4688
    %v4690 = vsel %vm4689, %v4682, %v4686
    %v4691 = vand.u32 2147483647, %v4680
    %vm4692 = vcmp.eq.f32.partialorder %v4691, 8.507059e+37
    %v4693 = vand.u32 %v4680, 2147483648
    %v4694 = vor.u32 1.1754944e-38, %v4693
    %v4695 = vsel %vm4692, %v4694, %v4690
    %v4696 = vmul.f32 1.0, %v4695
    %v4697 = vrcp.pop %v4681
    %v4698 = vmul.f32 %v4681, %v4697
    %v4699 = vsub.f32 1.0, %v4698
    %v4700 = vmul.f32 %v4697, %v4699
    %v4701 = vadd.f32 %v4697, %v4700
    %vm4702 = vweird.f32 %v4681
    %vm4703 = vweird.f32 %v4697
    %vm4704 = vmor %vm4702, %vm4703
    %v4705 = vsel %vm4704, %v4697, %v4701
    %v4706 = vand.u32 2147483647, %v4681
    %vm4707 = vcmp.eq.f32.partialorder %v4706, 8.507059e+37
    %v4708 = vand.u32 %v4681, 2147483648
    %v4709 = vor.u32 1.1754944e-38, %v4708
    %v4710 = vsel %vm4707, %v4709, %v4705
    %v4711 = vmul.f32 1.0, %v4710
    %v4712 = vmul.f32 %v4656, %v4517
    %v4713 = vmul.f32 %v4671, %v4518
    %v4714 = vmul.f32 %v4618, %v4672
    %v4715 = vmul.f32 %v4633, %v4673
    %v4716 = vadd.f32 %v4712, %v4714
    %v4717 = vadd.f32 %v4713, %v4715
    %v4718 = vtanh.pop %v4716
    %v4719 = vtanh.pop %v4717
    %v4720 = vmul.f32 %v4696, %v4718
    %v4721 = vmul.f32 %v4711, %v4719
    %v4722 = vld [vmem:[#allocation2 + $0x400] sm:$0xff]
    %v4723 = vld [vmem:[#allocation2 + $0x408] sm:$0xff]
    %v4724 = vld [vmem:[#allocation2 + $0x410] sm:$0xff]
    %v4725 = vld [vmem:[#allocation2 + $0x418] sm:$0xff]
    %v4726 = vld [vmem:[#allocation2 + $0x420] sm:$0xff]
    %v4727 = vld [vmem:[#allocation2 + $0x428] sm:$0xff]
    %v4728 = vld [vmem:[#allocation2 + $0x430] sm:$0xff]
    %v4729 = vld [vmem:[#allocation2 + $0x438] sm:$0xff]
    %v4730 = vpack.c.bf16 %v4721, %v4720
    %4731 = vmatpush.bf16.msra.mxu0 %v1511
    %4732 = vmatpush.bf16.msra.mxu0 %v1507
    %4733 = vmatpush.bf16.msra.mxu0 %v1503
    %4734 = vmatpush.bf16.msra.mxu0 %v1499
    %4735 = vmatpush.bf16.msra.mxu0 %v1495
    %4736 = vmatpush.bf16.msra.mxu0 %v1491
    %4737 = vmatpush.bf16.msra.mxu0 %v1487
    %4738 = vmatpush.bf16.msra.mxu0 %v1483
    %4739 = vmatmul.bf16.gmra.mxu0 %v4730
    %v4740 = vpop.f32.mrf.mxu0
    %v4741 = vadd.f32 0.0, %v4740
    %v4742 = vpop.f32.mrf.mxu0
    %v4743 = vadd.f32 0.0, %v4742
    %4744 = vdwg.mxu0
    %4745 = vmatpush.bf16.msra.mxu0 %v1512
    %4746 = vmatpush.bf16.msra.mxu0 %v1508
    %4747 = vmatpush.bf16.msra.mxu0 %v1504
    %4748 = vmatpush.bf16.msra.mxu0 %v1500
    %4749 = vmatpush.bf16.msra.mxu0 %v1496
    %4750 = vmatpush.bf16.msra.mxu0 %v1492
    %4751 = vmatpush.bf16.msra.mxu0 %v1488
    %4752 = vmatpush.bf16.msra.mxu0 %v1484
    %4753 = vmatmul.bf16.gmra.mxu0 %v4730
    %v4754 = vpop.f32.mrf.mxu0
    %v4755 = vadd.f32 0.0, %v4754
    %v4756 = vpop.f32.mrf.mxu0
    %v4757 = vadd.f32 0.0, %v4756
    %4758 = vdwg.mxu0
    %4759 = vmatpush.bf16.msra.mxu0 %v1513
    %4760 = vmatpush.bf16.msra.mxu0 %v1509
    %4761 = vmatpush.bf16.msra.mxu0 %v1505
    %4762 = vmatpush.bf16.msra.mxu0 %v1501
    %4763 = vmatpush.bf16.msra.mxu0 %v1497
    %4764 = vmatpush.bf16.msra.mxu0 %v1493
    %4765 = vmatpush.bf16.msra.mxu0 %v1489
    %4766 = vmatpush.bf16.msra.mxu0 %v1485
    %4767 = vmatmul.bf16.gmra.mxu0 %v4730
    %v4768 = vpop.f32.mrf.mxu0
    %v4769 = vadd.f32 0.0, %v4768
    %v4770 = vpop.f32.mrf.mxu0
    %v4771 = vadd.f32 0.0, %v4770
    %4772 = vdwg.mxu0
    %4773 = vmatpush.bf16.msra.mxu0 %v1514
    %4774 = vmatpush.bf16.msra.mxu0 %v1510
    %4775 = vmatpush.bf16.msra.mxu0 %v1506
    %4776 = vmatpush.bf16.msra.mxu0 %v1502
    %4777 = vmatpush.bf16.msra.mxu0 %v1498
    %4778 = vmatpush.bf16.msra.mxu0 %v1494
    %4779 = vmatpush.bf16.msra.mxu0 %v1490
    %4780 = vmatpush.bf16.msra.mxu0 %v1486
    %4781 = vmatmul.bf16.gmra.mxu0 %v4730
    %v4782 = vpop.f32.mrf.mxu0
    %v4783 = vadd.f32 0.0, %v4782
    %v4784 = vpop.f32.mrf.mxu0
    %v4785 = vadd.f32 0.0, %v4784
    %4786 = vdwg.mxu0
    %v4787 = vadd.f32 %v4722, %v4741
    %v4788 = vadd.f32 %v4723, %v4755
    %v4789 = vadd.f32 %v4724, %v4769
    %v4790 = vadd.f32 %v4725, %v4783
    %v4791 = vadd.f32 %v4726, %v4743
    %v4792 = vadd.f32 %v4727, %v4757
    %v4793 = vadd.f32 %v4728, %v4771
    %v4794 = vadd.f32 %v4729, %v4785
    %v4795 = vxor.u32 %v4787, 2147483648
    %v4796 = vxor.u32 %v4791, 2147483648
    %v4797 = vmul.f32 %v4795, 1.442695
    %v4798 = vpow.pop %v4797
    %v4799 = vmul.f32 %v4796, 1.442695
    %v4800 = vpow.pop %v4799
    %v4801 = vadd.f32 %v4798, 1.0
    %v4802 = vadd.f32 %v4800, 1.0
    %v4803 = vrcp.pop %v4801
    %v4804 = vmul.f32 %v4801, %v4803
    %v4805 = vsub.f32 1.0, %v4804
    %v4806 = vmul.f32 %v4803, %v4805
    %v4807 = vadd.f32 %v4803, %v4806
    %vm4808 = vweird.f32 %v4801
    %vm4809 = vweird.f32 %v4803
    %vm4810 = vmor %vm4808, %vm4809
    %v4811 = vsel %vm4810, %v4803, %v4807
    %v4812 = vand.u32 2147483647, %v4801
    %vm4813 = vcmp.eq.f32.partialorder %v4812, 8.507059e+37
    %v4814 = vand.u32 %v4801, 2147483648
    %v4815 = vor.u32 1.1754944e-38, %v4814
    %v4816 = vsel %vm4813, %v4815, %v4811
    %v4817 = vmul.f32 1.0, %v4816
    %v4818 = vrcp.pop %v4802
    %v4819 = vmul.f32 %v4802, %v4818
    %v4820 = vsub.f32 1.0, %v4819
    %v4821 = vmul.f32 %v4818, %v4820
    %v4822 = vadd.f32 %v4818, %v4821
    %vm4823 = vweird.f32 %v4802
    %vm4824 = vweird.f32 %v4818
    %vm4825 = vmor %vm4823, %vm4824
    %v4826 = vsel %vm4825, %v4818, %v4822
    %v4827 = vand.u32 2147483647, %v4802
    %vm4828 = vcmp.eq.f32.partialorder %v4827, 8.507059e+37
    %v4829 = vand.u32 %v4802, 2147483648
    %v4830 = vor.u32 1.1754944e-38, %v4829
    %v4831 = vsel %vm4828, %v4830, %v4826
    %v4832 = vmul.f32 1.0, %v4831
    %v4833 = vxor.u32 %v4788, 2147483648
    %v4834 = vxor.u32 %v4792, 2147483648
    %v4835 = vmul.f32 %v4833, 1.442695
    %v4836 = vpow.pop %v4835
    %v4837 = vmul.f32 %v4834, 1.442695
    %v4838 = vpow.pop %v4837
    %v4839 = vadd.f32 %v4836, 1.0
    %v4840 = vadd.f32 %v4838, 1.0
    %v4841 = vrcp.pop %v4839
    %v4842 = vmul.f32 %v4839, %v4841
    %v4843 = vsub.f32 1.0, %v4842
    %v4844 = vmul.f32 %v4841, %v4843
    %v4845 = vadd.f32 %v4841, %v4844
    %vm4846 = vweird.f32 %v4839
    %vm4847 = vweird.f32 %v4841
    %vm4848 = vmor %vm4846, %vm4847
    %v4849 = vsel %vm4848, %v4841, %v4845
    %v4850 = vand.u32 2147483647, %v4839
    %vm4851 = vcmp.eq.f32.partialorder %v4850, 8.507059e+37
    %v4852 = vand.u32 %v4839, 2147483648
    %v4853 = vor.u32 1.1754944e-38, %v4852
    %v4854 = vsel %vm4851, %v4853, %v4849
    %v4855 = vmul.f32 1.0, %v4854
    %v4856 = vrcp.pop %v4840
    %v4857 = vmul.f32 %v4840, %v4856
    %v4858 = vsub.f32 1.0, %v4857
    %v4859 = vmul.f32 %v4856, %v4858
    %v4860 = vadd.f32 %v4856, %v4859
    %vm4861 = vweird.f32 %v4840
    %vm4862 = vweird.f32 %v4856
    %vm4863 = vmor %vm4861, %vm4862
    %v4864 = vsel %vm4863, %v4856, %v4860
    %v4865 = vand.u32 2147483647, %v4840
    %vm4866 = vcmp.eq.f32.partialorder %v4865, 8.507059e+37
    %v4867 = vand.u32 %v4840, 2147483648
    %v4868 = vor.u32 1.1754944e-38, %v4867
    %v4869 = vsel %vm4866, %v4868, %v4864
    %v4870 = vmul.f32 1.0, %v4869
    %v4871 = vtanh.pop %v4789
    %v4872 = vtanh.pop %v4793
    %v4873 = vxor.u32 %v4790, 2147483648
    %v4874 = vxor.u32 %v4794, 2147483648
    %v4875 = vmul.f32 %v4873, 1.442695
    %v4876 = vpow.pop %v4875
    %v4877 = vmul.f32 %v4874, 1.442695
    %v4878 = vpow.pop %v4877
    %v4879 = vadd.f32 %v4876, 1.0
    %v4880 = vadd.f32 %v4878, 1.0
    %v4881 = vrcp.pop %v4879
    %v4882 = vmul.f32 %v4879, %v4881
    %v4883 = vsub.f32 1.0, %v4882
    %v4884 = vmul.f32 %v4881, %v4883
    %v4885 = vadd.f32 %v4881, %v4884
    %vm4886 = vweird.f32 %v4879
    %vm4887 = vweird.f32 %v4881
    %vm4888 = vmor %vm4886, %vm4887
    %v4889 = vsel %vm4888, %v4881, %v4885
    %v4890 = vand.u32 2147483647, %v4879
    %vm4891 = vcmp.eq.f32.partialorder %v4890, 8.507059e+37
    %v4892 = vand.u32 %v4879, 2147483648
    %v4893 = vor.u32 1.1754944e-38, %v4892
    %v4894 = vsel %vm4891, %v4893, %v4889
    %v4895 = vmul.f32 1.0, %v4894
    %v4896 = vrcp.pop %v4880
    %v4897 = vmul.f32 %v4880, %v4896
    %v4898 = vsub.f32 1.0, %v4897
    %v4899 = vmul.f32 %v4896, %v4898
    %v4900 = vadd.f32 %v4896, %v4899
    %vm4901 = vweird.f32 %v4880
    %vm4902 = vweird.f32 %v4896
    %vm4903 = vmor %vm4901, %vm4902
    %v4904 = vsel %vm4903, %v4896, %v4900
    %v4905 = vand.u32 2147483647, %v4880
    %vm4906 = vcmp.eq.f32.partialorder %v4905, 8.507059e+37
    %v4907 = vand.u32 %v4880, 2147483648
    %v4908 = vor.u32 1.1754944e-38, %v4907
    %v4909 = vsel %vm4906, %v4908, %v4904
    %v4910 = vmul.f32 1.0, %v4909
    %v4911 = vmul.f32 %v4855, %v4716
    %v4912 = vmul.f32 %v4870, %v4717
    %v4913 = vmul.f32 %v4817, %v4871
    %v4914 = vmul.f32 %v4832, %v4872
    %v4915 = vadd.f32 %v4911, %v4913
    %v4916 = vadd.f32 %v4912, %v4914
    %v4917 = vtanh.pop %v4915
    %v4918 = vtanh.pop %v4916
    %v4919 = vmul.f32 %v4895, %v4917
    %v4920 = vmul.f32 %v4910, %v4918
    %v4921 = vld [vmem:[#allocation2 + $0x440] sm:$0xff]
    %v4922 = vld [vmem:[#allocation2 + $0x448] sm:$0xff]
    %v4923 = vld [vmem:[#allocation2 + $0x450] sm:$0xff]
    %v4924 = vld [vmem:[#allocation2 + $0x458] sm:$0xff]
    %v4925 = vld [vmem:[#allocation2 + $0x460] sm:$0xff]
    %v4926 = vld [vmem:[#allocation2 + $0x468] sm:$0xff]
    %v4927 = vld [vmem:[#allocation2 + $0x470] sm:$0xff]
    %v4928 = vld [vmem:[#allocation2 + $0x478] sm:$0xff]
    %v4929 = vpack.c.bf16 %v4920, %v4919
    %4930 = vmatpush.bf16.msra.mxu0 %v1511
    %4931 = vmatpush.bf16.msra.mxu0 %v1507
    %4932 = vmatpush.bf16.msra.mxu0 %v1503
    %4933 = vmatpush.bf16.msra.mxu0 %v1499
    %4934 = vmatpush.bf16.msra.mxu0 %v1495
    %4935 = vmatpush.bf16.msra.mxu0 %v1491
    %4936 = vmatpush.bf16.msra.mxu0 %v1487
    %4937 = vmatpush.bf16.msra.mxu0 %v1483
    %4938 = vmatmul.bf16.gmra.mxu0 %v4929
    %v4939 = vpop.f32.mrf.mxu0
    %v4940 = vadd.f32 0.0, %v4939
    %v4941 = vpop.f32.mrf.mxu0
    %v4942 = vadd.f32 0.0, %v4941
    %4943 = vdwg.mxu0
    %4944 = vmatpush.bf16.msra.mxu0 %v1512
    %4945 = vmatpush.bf16.msra.mxu0 %v1508
    %4946 = vmatpush.bf16.msra.mxu0 %v1504
    %4947 = vmatpush.bf16.msra.mxu0 %v1500
    %4948 = vmatpush.bf16.msra.mxu0 %v1496
    %4949 = vmatpush.bf16.msra.mxu0 %v1492
    %4950 = vmatpush.bf16.msra.mxu0 %v1488
    %4951 = vmatpush.bf16.msra.mxu0 %v1484
    %4952 = vmatmul.bf16.gmra.mxu0 %v4929
    %v4953 = vpop.f32.mrf.mxu0
    %v4954 = vadd.f32 0.0, %v4953
    %v4955 = vpop.f32.mrf.mxu0
    %v4956 = vadd.f32 0.0, %v4955
    %4957 = vdwg.mxu0
    %4958 = vmatpush.bf16.msra.mxu0 %v1513
    %4959 = vmatpush.bf16.msra.mxu0 %v1509
    %4960 = vmatpush.bf16.msra.mxu0 %v1505
    %4961 = vmatpush.bf16.msra.mxu0 %v1501
    %4962 = vmatpush.bf16.msra.mxu0 %v1497
    %4963 = vmatpush.bf16.msra.mxu0 %v1493
    %4964 = vmatpush.bf16.msra.mxu0 %v1489
    %4965 = vmatpush.bf16.msra.mxu0 %v1485
    %4966 = vmatmul.bf16.gmra.mxu0 %v4929
    %v4967 = vpop.f32.mrf.mxu0
    %v4968 = vadd.f32 0.0, %v4967
    %v4969 = vpop.f32.mrf.mxu0
    %v4970 = vadd.f32 0.0, %v4969
    %4971 = vdwg.mxu0
    %4972 = vmatpush.bf16.msra.mxu0 %v1514
    %4973 = vmatpush.bf16.msra.mxu0 %v1510
    %4974 = vmatpush.bf16.msra.mxu0 %v1506
    %4975 = vmatpush.bf16.msra.mxu0 %v1502
    %4976 = vmatpush.bf16.msra.mxu0 %v1498
    %4977 = vmatpush.bf16.msra.mxu0 %v1494
    %4978 = vmatpush.bf16.msra.mxu0 %v1490
    %4979 = vmatpush.bf16.msra.mxu0 %v1486
    %4980 = vmatmul.bf16.gmra.mxu0 %v4929
    %v4981 = vpop.f32.mrf.mxu0
    %v4982 = vadd.f32 0.0, %v4981
    %v4983 = vpop.f32.mrf.mxu0
    %v4984 = vadd.f32 0.0, %v4983
    %4985 = vdwg.mxu0
    %v4986 = vadd.f32 %v4921, %v4940
    %v4987 = vadd.f32 %v4922, %v4954
    %v4988 = vadd.f32 %v4923, %v4968
    %v4989 = vadd.f32 %v4924, %v4982
    %v4990 = vadd.f32 %v4925, %v4942
    %v4991 = vadd.f32 %v4926, %v4956
    %v4992 = vadd.f32 %v4927, %v4970
    %v4993 = vadd.f32 %v4928, %v4984
    %v4994 = vxor.u32 %v4986, 2147483648
    %v4995 = vxor.u32 %v4990, 2147483648
    %v4996 = vmul.f32 %v4994, 1.442695
    %v4997 = vpow.pop %v4996
    %v4998 = vmul.f32 %v4995, 1.442695
    %v4999 = vpow.pop %v4998
    %v5000 = vadd.f32 %v4997, 1.0
    %v5001 = vadd.f32 %v4999, 1.0
    %v5002 = vrcp.pop %v5000
    %v5003 = vmul.f32 %v5000, %v5002
    %v5004 = vsub.f32 1.0, %v5003
    %v5005 = vmul.f32 %v5002, %v5004
    %v5006 = vadd.f32 %v5002, %v5005
    %vm5007 = vweird.f32 %v5000
    %vm5008 = vweird.f32 %v5002
    %vm5009 = vmor %vm5007, %vm5008
    %v5010 = vsel %vm5009, %v5002, %v5006
    %v5011 = vand.u32 2147483647, %v5000
    %vm5012 = vcmp.eq.f32.partialorder %v5011, 8.507059e+37
    %v5013 = vand.u32 %v5000, 2147483648
    %v5014 = vor.u32 1.1754944e-38, %v5013
    %v5015 = vsel %vm5012, %v5014, %v5010
    %v5016 = vmul.f32 1.0, %v5015
    %v5017 = vrcp.pop %v5001
    %v5018 = vmul.f32 %v5001, %v5017
    %v5019 = vsub.f32 1.0, %v5018
    %v5020 = vmul.f32 %v5017, %v5019
    %v5021 = vadd.f32 %v5017, %v5020
    %vm5022 = vweird.f32 %v5001
    %vm5023 = vweird.f32 %v5017
    %vm5024 = vmor %vm5022, %vm5023
    %v5025 = vsel %vm5024, %v5017, %v5021
    %v5026 = vand.u32 2147483647, %v5001
    %vm5027 = vcmp.eq.f32.partialorder %v5026, 8.507059e+37
    %v5028 = vand.u32 %v5001, 2147483648
    %v5029 = vor.u32 1.1754944e-38, %v5028
    %v5030 = vsel %vm5027, %v5029, %v5025
    %v5031 = vmul.f32 1.0, %v5030
    %v5032 = vxor.u32 %v4987, 2147483648
    %v5033 = vxor.u32 %v4991, 2147483648
    %v5034 = vmul.f32 %v5032, 1.442695
    %v5035 = vpow.pop %v5034
    %v5036 = vmul.f32 %v5033, 1.442695
    %v5037 = vpow.pop %v5036
    %v5038 = vadd.f32 %v5035, 1.0
    %v5039 = vadd.f32 %v5037, 1.0
    %v5040 = vrcp.pop %v5038
    %v5041 = vmul.f32 %v5038, %v5040
    %v5042 = vsub.f32 1.0, %v5041
    %v5043 = vmul.f32 %v5040, %v5042
    %v5044 = vadd.f32 %v5040, %v5043
    %vm5045 = vweird.f32 %v5038
    %vm5046 = vweird.f32 %v5040
    %vm5047 = vmor %vm5045, %vm5046
    %v5048 = vsel %vm5047, %v5040, %v5044
    %v5049 = vand.u32 2147483647, %v5038
    %vm5050 = vcmp.eq.f32.partialorder %v5049, 8.507059e+37
    %v5051 = vand.u32 %v5038, 2147483648
    %v5052 = vor.u32 1.1754944e-38, %v5051
    %v5053 = vsel %vm5050, %v5052, %v5048
    %v5054 = vmul.f32 1.0, %v5053
    %v5055 = vrcp.pop %v5039
    %v5056 = vmul.f32 %v5039, %v5055
    %v5057 = vsub.f32 1.0, %v5056
    %v5058 = vmul.f32 %v5055, %v5057
    %v5059 = vadd.f32 %v5055, %v5058
    %vm5060 = vweird.f32 %v5039
    %vm5061 = vweird.f32 %v5055
    %vm5062 = vmor %vm5060, %vm5061
    %v5063 = vsel %vm5062, %v5055, %v5059
    %v5064 = vand.u32 2147483647, %v5039
    %vm5065 = vcmp.eq.f32.partialorder %v5064, 8.507059e+37
    %v5066 = vand.u32 %v5039, 2147483648
    %v5067 = vor.u32 1.1754944e-38, %v5066
    %v5068 = vsel %vm5065, %v5067, %v5063
    %v5069 = vmul.f32 1.0, %v5068
    %v5070 = vtanh.pop %v4988
    %v5071 = vtanh.pop %v4992
    %v5072 = vxor.u32 %v4989, 2147483648
    %v5073 = vxor.u32 %v4993, 2147483648
    %v5074 = vmul.f32 %v5072, 1.442695
    %v5075 = vpow.pop %v5074
    %v5076 = vmul.f32 %v5073, 1.442695
    %v5077 = vpow.pop %v5076
    %v5078 = vadd.f32 %v5075, 1.0
    %v5079 = vadd.f32 %v5077, 1.0
    %v5080 = vrcp.pop %v5078
    %v5081 = vmul.f32 %v5078, %v5080
    %v5082 = vsub.f32 1.0, %v5081
    %v5083 = vmul.f32 %v5080, %v5082
    %v5084 = vadd.f32 %v5080, %v5083
    %vm5085 = vweird.f32 %v5078
    %vm5086 = vweird.f32 %v5080
    %vm5087 = vmor %vm5085, %vm5086
    %v5088 = vsel %vm5087, %v5080, %v5084
    %v5089 = vand.u32 2147483647, %v5078
    %vm5090 = vcmp.eq.f32.partialorder %v5089, 8.507059e+37
    %v5091 = vand.u32 %v5078, 2147483648
    %v5092 = vor.u32 1.1754944e-38, %v5091
    %v5093 = vsel %vm5090, %v5092, %v5088
    %v5094 = vmul.f32 1.0, %v5093
    %v5095 = vrcp.pop %v5079
    %v5096 = vmul.f32 %v5079, %v5095
    %v5097 = vsub.f32 1.0, %v5096
    %v5098 = vmul.f32 %v5095, %v5097
    %v5099 = vadd.f32 %v5095, %v5098
    %vm5100 = vweird.f32 %v5079
    %vm5101 = vweird.f32 %v5095
    %vm5102 = vmor %vm5100, %vm5101
    %v5103 = vsel %vm5102, %v5095, %v5099
    %v5104 = vand.u32 2147483647, %v5079
    %vm5105 = vcmp.eq.f32.partialorder %v5104, 8.507059e+37
    %v5106 = vand.u32 %v5079, 2147483648
    %v5107 = vor.u32 1.1754944e-38, %v5106
    %v5108 = vsel %vm5105, %v5107, %v5103
    %v5109 = vmul.f32 1.0, %v5108
    %v5110 = vmul.f32 %v5054, %v4915
    %v5111 = vmul.f32 %v5069, %v4916
    %v5112 = vmul.f32 %v5016, %v5070
    %v5113 = vmul.f32 %v5031, %v5071
    %v5114 = vadd.f32 %v5110, %v5112
    %v5115 = vadd.f32 %v5111, %v5113
    %v5116 = vtanh.pop %v5114
    %v5117 = vtanh.pop %v5115
    %v5118 = vmul.f32 %v5094, %v5116
    %v5119 = vmul.f32 %v5109, %v5117
    %v5120 = vld [vmem:[#allocation2 + $0x480] sm:$0xff]
    %v5121 = vld [vmem:[#allocation2 + $0x488] sm:$0xff]
    %v5122 = vld [vmem:[#allocation2 + $0x490] sm:$0xff]
    %v5123 = vld [vmem:[#allocation2 + $0x498] sm:$0xff]
    %v5124 = vld [vmem:[#allocation2 + $0x4a0] sm:$0xff]
    %v5125 = vld [vmem:[#allocation2 + $0x4a8] sm:$0xff]
    %v5126 = vld [vmem:[#allocation2 + $0x4b0] sm:$0xff]
    %v5127 = vld [vmem:[#allocation2 + $0x4b8] sm:$0xff]
    %v5128 = vpack.c.bf16 %v5119, %v5118
    %5129 = vmatpush.bf16.msra.mxu0 %v1511
    %5130 = vmatpush.bf16.msra.mxu0 %v1507
    %5131 = vmatpush.bf16.msra.mxu0 %v1503
    %5132 = vmatpush.bf16.msra.mxu0 %v1499
    %5133 = vmatpush.bf16.msra.mxu0 %v1495
    %5134 = vmatpush.bf16.msra.mxu0 %v1491
    %5135 = vmatpush.bf16.msra.mxu0 %v1487
    %5136 = vmatpush.bf16.msra.mxu0 %v1483
    %5137 = vmatmul.bf16.gmra.mxu0 %v5128
    %v5138 = vpop.f32.mrf.mxu0
    %v5139 = vadd.f32 0.0, %v5138
    %v5140 = vpop.f32.mrf.mxu0
    %v5141 = vadd.f32 0.0, %v5140
    %5142 = vdwg.mxu0
    %5143 = vmatpush.bf16.msra.mxu0 %v1512
    %5144 = vmatpush.bf16.msra.mxu0 %v1508
    %5145 = vmatpush.bf16.msra.mxu0 %v1504
    %5146 = vmatpush.bf16.msra.mxu0 %v1500
    %5147 = vmatpush.bf16.msra.mxu0 %v1496
    %5148 = vmatpush.bf16.msra.mxu0 %v1492
    %5149 = vmatpush.bf16.msra.mxu0 %v1488
    %5150 = vmatpush.bf16.msra.mxu0 %v1484
    %5151 = vmatmul.bf16.gmra.mxu0 %v5128
    %v5152 = vpop.f32.mrf.mxu0
    %v5153 = vadd.f32 0.0, %v5152
    %v5154 = vpop.f32.mrf.mxu0
    %v5155 = vadd.f32 0.0, %v5154
    %5156 = vdwg.mxu0
    %5157 = vmatpush.bf16.msra.mxu0 %v1513
    %5158 = vmatpush.bf16.msra.mxu0 %v1509
    %5159 = vmatpush.bf16.msra.mxu0 %v1505
    %5160 = vmatpush.bf16.msra.mxu0 %v1501
    %5161 = vmatpush.bf16.msra.mxu0 %v1497
    %5162 = vmatpush.bf16.msra.mxu0 %v1493
    %5163 = vmatpush.bf16.msra.mxu0 %v1489
    %5164 = vmatpush.bf16.msra.mxu0 %v1485
    %5165 = vmatmul.bf16.gmra.mxu0 %v5128
    %v5166 = vpop.f32.mrf.mxu0
    %v5167 = vadd.f32 0.0, %v5166
    %v5168 = vpop.f32.mrf.mxu0
    %v5169 = vadd.f32 0.0, %v5168
    %5170 = vdwg.mxu0
    %5171 = vmatpush.bf16.msra.mxu0 %v1514
    %5172 = vmatpush.bf16.msra.mxu0 %v1510
    %5173 = vmatpush.bf16.msra.mxu0 %v1506
    %5174 = vmatpush.bf16.msra.mxu0 %v1502
    %5175 = vmatpush.bf16.msra.mxu0 %v1498
    %5176 = vmatpush.bf16.msra.mxu0 %v1494
    %5177 = vmatpush.bf16.msra.mxu0 %v1490
    %5178 = vmatpush.bf16.msra.mxu0 %v1486
    %5179 = vmatmul.bf16.gmra.mxu0 %v5128
    %v5180 = vpop.f32.mrf.mxu0
    %v5181 = vadd.f32 0.0, %v5180
    %v5182 = vpop.f32.mrf.mxu0
    %v5183 = vadd.f32 0.0, %v5182
    %5184 = vdwg.mxu0
    %v5185 = vadd.f32 %v5120, %v5139
    %v5186 = vadd.f32 %v5121, %v5153
    %v5187 = vadd.f32 %v5122, %v5167
    %v5188 = vadd.f32 %v5123, %v5181
    %v5189 = vadd.f32 %v5124, %v5141
    %v5190 = vadd.f32 %v5125, %v5155
    %v5191 = vadd.f32 %v5126, %v5169
    %v5192 = vadd.f32 %v5127, %v5183
    %v5193 = vxor.u32 %v5185, 2147483648
    %v5194 = vxor.u32 %v5189, 2147483648
    %v5195 = vmul.f32 %v5193, 1.442695
    %v5196 = vpow.pop %v5195
    %v5197 = vmul.f32 %v5194, 1.442695
    %v5198 = vpow.pop %v5197
    %v5199 = vadd.f32 %v5196, 1.0
    %v5200 = vadd.f32 %v5198, 1.0
    %v5201 = vrcp.pop %v5199
    %v5202 = vmul.f32 %v5199, %v5201
    %v5203 = vsub.f32 1.0, %v5202
    %v5204 = vmul.f32 %v5201, %v5203
    %v5205 = vadd.f32 %v5201, %v5204
    %vm5206 = vweird.f32 %v5199
    %vm5207 = vweird.f32 %v5201
    %vm5208 = vmor %vm5206, %vm5207
    %v5209 = vsel %vm5208, %v5201, %v5205
    %v5210 = vand.u32 2147483647, %v5199
    %vm5211 = vcmp.eq.f32.partialorder %v5210, 8.507059e+37
    %v5212 = vand.u32 %v5199, 2147483648
    %v5213 = vor.u32 1.1754944e-38, %v5212
    %v5214 = vsel %vm5211, %v5213, %v5209
    %v5215 = vmul.f32 1.0, %v5214
    %v5216 = vrcp.pop %v5200
    %v5217 = vmul.f32 %v5200, %v5216
    %v5218 = vsub.f32 1.0, %v5217
    %v5219 = vmul.f32 %v5216, %v5218
    %v5220 = vadd.f32 %v5216, %v5219
    %vm5221 = vweird.f32 %v5200
    %vm5222 = vweird.f32 %v5216
    %vm5223 = vmor %vm5221, %vm5222
    %v5224 = vsel %vm5223, %v5216, %v5220
    %v5225 = vand.u32 2147483647, %v5200
    %vm5226 = vcmp.eq.f32.partialorder %v5225, 8.507059e+37
    %v5227 = vand.u32 %v5200, 2147483648
    %v5228 = vor.u32 1.1754944e-38, %v5227
    %v5229 = vsel %vm5226, %v5228, %v5224
    %v5230 = vmul.f32 1.0, %v5229
    %v5231 = vxor.u32 %v5186, 2147483648
    %v5232 = vxor.u32 %v5190, 2147483648
    %v5233 = vmul.f32 %v5231, 1.442695
    %v5234 = vpow.pop %v5233
    %v5235 = vmul.f32 %v5232, 1.442695
    %v5236 = vpow.pop %v5235
    %v5237 = vadd.f32 %v5234, 1.0
    %v5238 = vadd.f32 %v5236, 1.0
    %v5239 = vrcp.pop %v5237
    %v5240 = vmul.f32 %v5237, %v5239
    %v5241 = vsub.f32 1.0, %v5240
    %v5242 = vmul.f32 %v5239, %v5241
    %v5243 = vadd.f32 %v5239, %v5242
    %vm5244 = vweird.f32 %v5237
    %vm5245 = vweird.f32 %v5239
    %vm5246 = vmor %vm5244, %vm5245
    %v5247 = vsel %vm5246, %v5239, %v5243
    %v5248 = vand.u32 2147483647, %v5237
    %vm5249 = vcmp.eq.f32.partialorder %v5248, 8.507059e+37
    %v5250 = vand.u32 %v5237, 2147483648
    %v5251 = vor.u32 1.1754944e-38, %v5250
    %v5252 = vsel %vm5249, %v5251, %v5247
    %v5253 = vmul.f32 1.0, %v5252
    %v5254 = vrcp.pop %v5238
    %v5255 = vmul.f32 %v5238, %v5254
    %v5256 = vsub.f32 1.0, %v5255
    %v5257 = vmul.f32 %v5254, %v5256
    %v5258 = vadd.f32 %v5254, %v5257
    %vm5259 = vweird.f32 %v5238
    %vm5260 = vweird.f32 %v5254
    %vm5261 = vmor %vm5259, %vm5260
    %v5262 = vsel %vm5261, %v5254, %v5258
    %v5263 = vand.u32 2147483647, %v5238
    %vm5264 = vcmp.eq.f32.partialorder %v5263, 8.507059e+37
    %v5265 = vand.u32 %v5238, 2147483648
    %v5266 = vor.u32 1.1754944e-38, %v5265
    %v5267 = vsel %vm5264, %v5266, %v5262
    %v5268 = vmul.f32 1.0, %v5267
    %v5269 = vtanh.pop %v5187
    %v5270 = vtanh.pop %v5191
    %v5271 = vxor.u32 %v5188, 2147483648
    %v5272 = vxor.u32 %v5192, 2147483648
    %v5273 = vmul.f32 %v5271, 1.442695
    %v5274 = vpow.pop %v5273
    %v5275 = vmul.f32 %v5272, 1.442695
    %v5276 = vpow.pop %v5275
    %v5277 = vadd.f32 %v5274, 1.0
    %v5278 = vadd.f32 %v5276, 1.0
    %v5279 = vrcp.pop %v5277
    %v5280 = vmul.f32 %v5277, %v5279
    %v5281 = vsub.f32 1.0, %v5280
    %v5282 = vmul.f32 %v5279, %v5281
    %v5283 = vadd.f32 %v5279, %v5282
    %vm5284 = vweird.f32 %v5277
    %vm5285 = vweird.f32 %v5279
    %vm5286 = vmor %vm5284, %vm5285
    %v5287 = vsel %vm5286, %v5279, %v5283
    %v5288 = vand.u32 2147483647, %v5277
    %vm5289 = vcmp.eq.f32.partialorder %v5288, 8.507059e+37
    %v5290 = vand.u32 %v5277, 2147483648
    %v5291 = vor.u32 1.1754944e-38, %v5290
    %v5292 = vsel %vm5289, %v5291, %v5287
    %v5293 = vmul.f32 1.0, %v5292
    %v5294 = vrcp.pop %v5278
    %v5295 = vmul.f32 %v5278, %v5294
    %v5296 = vsub.f32 1.0, %v5295
    %v5297 = vmul.f32 %v5294, %v5296
    %v5298 = vadd.f32 %v5294, %v5297
    %vm5299 = vweird.f32 %v5278
    %vm5300 = vweird.f32 %v5294
    %vm5301 = vmor %vm5299, %vm5300
    %v5302 = vsel %vm5301, %v5294, %v5298
    %v5303 = vand.u32 2147483647, %v5278
    %vm5304 = vcmp.eq.f32.partialorder %v5303, 8.507059e+37
    %v5305 = vand.u32 %v5278, 2147483648
    %v5306 = vor.u32 1.1754944e-38, %v5305
    %v5307 = vsel %vm5304, %v5306, %v5302
    %v5308 = vmul.f32 1.0, %v5307
    %v5309 = vmul.f32 %v5253, %v5114
    %v5310 = vmul.f32 %v5268, %v5115
    %v5311 = vmul.f32 %v5215, %v5269
    %v5312 = vmul.f32 %v5230, %v5270
    %v5313 = vadd.f32 %v5309, %v5311
    %v5314 = vadd.f32 %v5310, %v5312
    %v5315 = vtanh.pop %v5313
    %v5316 = vtanh.pop %v5314
    %v5317 = vmul.f32 %v5293, %v5315
    %v5318 = vmul.f32 %v5308, %v5316
    %v5319 = vld [vmem:[#allocation2 + $0x4c0] sm:$0xff]
    %v5320 = vld [vmem:[#allocation2 + $0x4c8] sm:$0xff]
    %v5321 = vld [vmem:[#allocation2 + $0x4d0] sm:$0xff]
    %v5322 = vld [vmem:[#allocation2 + $0x4d8] sm:$0xff]
    %v5323 = vld [vmem:[#allocation2 + $0x4e0] sm:$0xff]
    %v5324 = vld [vmem:[#allocation2 + $0x4e8] sm:$0xff]
    %v5325 = vld [vmem:[#allocation2 + $0x4f0] sm:$0xff]
    %v5326 = vld [vmem:[#allocation2 + $0x4f8] sm:$0xff]
    %v5327 = vpack.c.bf16 %v5318, %v5317
    %5328 = vmatpush.bf16.msra.mxu0 %v1511
    %5329 = vmatpush.bf16.msra.mxu0 %v1507
    %5330 = vmatpush.bf16.msra.mxu0 %v1503
    %5331 = vmatpush.bf16.msra.mxu0 %v1499
    %5332 = vmatpush.bf16.msra.mxu0 %v1495
    %5333 = vmatpush.bf16.msra.mxu0 %v1491
    %5334 = vmatpush.bf16.msra.mxu0 %v1487
    %5335 = vmatpush.bf16.msra.mxu0 %v1483
    %5336 = vmatmul.bf16.gmra.mxu0 %v5327
    %v5337 = vpop.f32.mrf.mxu0
    %v5338 = vadd.f32 0.0, %v5337
    %v5339 = vpop.f32.mrf.mxu0
    %v5340 = vadd.f32 0.0, %v5339
    %5341 = vdwg.mxu0
    %5342 = vmatpush.bf16.msra.mxu0 %v1512
    %5343 = vmatpush.bf16.msra.mxu0 %v1508
    %5344 = vmatpush.bf16.msra.mxu0 %v1504
    %5345 = vmatpush.bf16.msra.mxu0 %v1500
    %5346 = vmatpush.bf16.msra.mxu0 %v1496
    %5347 = vmatpush.bf16.msra.mxu0 %v1492
    %5348 = vmatpush.bf16.msra.mxu0 %v1488
    %5349 = vmatpush.bf16.msra.mxu0 %v1484
    %5350 = vmatmul.bf16.gmra.mxu0 %v5327
    %v5351 = vpop.f32.mrf.mxu0
    %v5352 = vadd.f32 0.0, %v5351
    %v5353 = vpop.f32.mrf.mxu0
    %v5354 = vadd.f32 0.0, %v5353
    %5355 = vdwg.mxu0
    %5356 = vmatpush.bf16.msra.mxu0 %v1513
    %5357 = vmatpush.bf16.msra.mxu0 %v1509
    %5358 = vmatpush.bf16.msra.mxu0 %v1505
    %5359 = vmatpush.bf16.msra.mxu0 %v1501
    %5360 = vmatpush.bf16.msra.mxu0 %v1497
    %5361 = vmatpush.bf16.msra.mxu0 %v1493
    %5362 = vmatpush.bf16.msra.mxu0 %v1489
    %5363 = vmatpush.bf16.msra.mxu0 %v1485
    %5364 = vmatmul.bf16.gmra.mxu0 %v5327
    %v5365 = vpop.f32.mrf.mxu0
    %v5366 = vadd.f32 0.0, %v5365
    %v5367 = vpop.f32.mrf.mxu0
    %v5368 = vadd.f32 0.0, %v5367
    %5369 = vdwg.mxu0
    %5370 = vmatpush.bf16.msra.mxu0 %v1514
    %5371 = vmatpush.bf16.msra.mxu0 %v1510
    %5372 = vmatpush.bf16.msra.mxu0 %v1506
    %5373 = vmatpush.bf16.msra.mxu0 %v1502
    %5374 = vmatpush.bf16.msra.mxu0 %v1498
    %5375 = vmatpush.bf16.msra.mxu0 %v1494
    %5376 = vmatpush.bf16.msra.mxu0 %v1490
    %5377 = vmatpush.bf16.msra.mxu0 %v1486
    %5378 = vmatmul.bf16.gmra.mxu0 %v5327
    %v5379 = vpop.f32.mrf.mxu0
    %v5380 = vadd.f32 0.0, %v5379
    %v5381 = vpop.f32.mrf.mxu0
    %v5382 = vadd.f32 0.0, %v5381
    %5383 = vdwg.mxu0
    %v5384 = vadd.f32 %v5319, %v5338
    %v5385 = vadd.f32 %v5320, %v5352
    %v5386 = vadd.f32 %v5321, %v5366
    %v5387 = vadd.f32 %v5322, %v5380
    %v5388 = vadd.f32 %v5323, %v5340
    %v5389 = vadd.f32 %v5324, %v5354
    %v5390 = vadd.f32 %v5325, %v5368
    %v5391 = vadd.f32 %v5326, %v5382
    %v5392 = vxor.u32 %v5384, 2147483648
    %v5393 = vxor.u32 %v5388, 2147483648
    %v5394 = vmul.f32 %v5392, 1.442695
    %v5395 = vpow.pop %v5394
    %v5396 = vmul.f32 %v5393, 1.442695
    %v5397 = vpow.pop %v5396
    %v5398 = vadd.f32 %v5395, 1.0
    %v5399 = vadd.f32 %v5397, 1.0
    %v5400 = vrcp.pop %v5398
    %v5401 = vmul.f32 %v5398, %v5400
    %v5402 = vsub.f32 1.0, %v5401
    %v5403 = vmul.f32 %v5400, %v5402
    %v5404 = vadd.f32 %v5400, %v5403
    %vm5405 = vweird.f32 %v5398
    %vm5406 = vweird.f32 %v5400
    %vm5407 = vmor %vm5405, %vm5406
    %v5408 = vsel %vm5407, %v5400, %v5404
    %v5409 = vand.u32 2147483647, %v5398
    %vm5410 = vcmp.eq.f32.partialorder %v5409, 8.507059e+37
    %v5411 = vand.u32 %v5398, 2147483648
    %v5412 = vor.u32 1.1754944e-38, %v5411
    %v5413 = vsel %vm5410, %v5412, %v5408
    %v5414 = vmul.f32 1.0, %v5413
    %v5415 = vrcp.pop %v5399
    %v5416 = vmul.f32 %v5399, %v5415
    %v5417 = vsub.f32 1.0, %v5416
    %v5418 = vmul.f32 %v5415, %v5417
    %v5419 = vadd.f32 %v5415, %v5418
    %vm5420 = vweird.f32 %v5399
    %vm5421 = vweird.f32 %v5415
    %vm5422 = vmor %vm5420, %vm5421
    %v5423 = vsel %vm5422, %v5415, %v5419
    %v5424 = vand.u32 2147483647, %v5399
    %vm5425 = vcmp.eq.f32.partialorder %v5424, 8.507059e+37
    %v5426 = vand.u32 %v5399, 2147483648
    %v5427 = vor.u32 1.1754944e-38, %v5426
    %v5428 = vsel %vm5425, %v5427, %v5423
    %v5429 = vmul.f32 1.0, %v5428
    %v5430 = vxor.u32 %v5385, 2147483648
    %v5431 = vxor.u32 %v5389, 2147483648
    %v5432 = vmul.f32 %v5430, 1.442695
    %v5433 = vpow.pop %v5432
    %v5434 = vmul.f32 %v5431, 1.442695
    %v5435 = vpow.pop %v5434
    %v5436 = vadd.f32 %v5433, 1.0
    %v5437 = vadd.f32 %v5435, 1.0
    %v5438 = vrcp.pop %v5436
    %v5439 = vmul.f32 %v5436, %v5438
    %v5440 = vsub.f32 1.0, %v5439
    %v5441 = vmul.f32 %v5438, %v5440
    %v5442 = vadd.f32 %v5438, %v5441
    %vm5443 = vweird.f32 %v5436
    %vm5444 = vweird.f32 %v5438
    %vm5445 = vmor %vm5443, %vm5444
    %v5446 = vsel %vm5445, %v5438, %v5442
    %v5447 = vand.u32 2147483647, %v5436
    %vm5448 = vcmp.eq.f32.partialorder %v5447, 8.507059e+37
    %v5449 = vand.u32 %v5436, 2147483648
    %v5450 = vor.u32 1.1754944e-38, %v5449
    %v5451 = vsel %vm5448, %v5450, %v5446
    %v5452 = vmul.f32 1.0, %v5451
    %v5453 = vrcp.pop %v5437
    %v5454 = vmul.f32 %v5437, %v5453
    %v5455 = vsub.f32 1.0, %v5454
    %v5456 = vmul.f32 %v5453, %v5455
    %v5457 = vadd.f32 %v5453, %v5456
    %vm5458 = vweird.f32 %v5437
    %vm5459 = vweird.f32 %v5453
    %vm5460 = vmor %vm5458, %vm5459
    %v5461 = vsel %vm5460, %v5453, %v5457
    %v5462 = vand.u32 2147483647, %v5437
    %vm5463 = vcmp.eq.f32.partialorder %v5462, 8.507059e+37
    %v5464 = vand.u32 %v5437, 2147483648
    %v5465 = vor.u32 1.1754944e-38, %v5464
    %v5466 = vsel %vm5463, %v5465, %v5461
    %v5467 = vmul.f32 1.0, %v5466
    %v5468 = vtanh.pop %v5386
    %v5469 = vtanh.pop %v5390
    %v5470 = vxor.u32 %v5387, 2147483648
    %v5471 = vxor.u32 %v5391, 2147483648
    %v5472 = vmul.f32 %v5470, 1.442695
    %v5473 = vpow.pop %v5472
    %v5474 = vmul.f32 %v5471, 1.442695
    %v5475 = vpow.pop %v5474
    %v5476 = vadd.f32 %v5473, 1.0
    %v5477 = vadd.f32 %v5475, 1.0
    %v5478 = vrcp.pop %v5476
    %v5479 = vmul.f32 %v5476, %v5478
    %v5480 = vsub.f32 1.0, %v5479
    %v5481 = vmul.f32 %v5478, %v5480
    %v5482 = vadd.f32 %v5478, %v5481
    %vm5483 = vweird.f32 %v5476
    %vm5484 = vweird.f32 %v5478
    %vm5485 = vmor %vm5483, %vm5484
    %v5486 = vsel %vm5485, %v5478, %v5482
    %v5487 = vand.u32 2147483647, %v5476
    %vm5488 = vcmp.eq.f32.partialorder %v5487, 8.507059e+37
    %v5489 = vand.u32 %v5476, 2147483648
    %v5490 = vor.u32 1.1754944e-38, %v5489
    %v5491 = vsel %vm5488, %v5490, %v5486
    %v5492 = vmul.f32 1.0, %v5491
    %v5493 = vrcp.pop %v5477
    %v5494 = vmul.f32 %v5477, %v5493
    %v5495 = vsub.f32 1.0, %v5494
    %v5496 = vmul.f32 %v5493, %v5495
    %v5497 = vadd.f32 %v5493, %v5496
    %vm5498 = vweird.f32 %v5477
    %vm5499 = vweird.f32 %v5493
    %vm5500 = vmor %vm5498, %vm5499
    %v5501 = vsel %vm5500, %v5493, %v5497
    %v5502 = vand.u32 2147483647, %v5477
    %vm5503 = vcmp.eq.f32.partialorder %v5502, 8.507059e+37
    %v5504 = vand.u32 %v5477, 2147483648
    %v5505 = vor.u32 1.1754944e-38, %v5504
    %v5506 = vsel %vm5503, %v5505, %v5501
    %v5507 = vmul.f32 1.0, %v5506
    %v5508 = vmul.f32 %v5452, %v5313
    %v5509 = vmul.f32 %v5467, %v5314
    %v5510 = vmul.f32 %v5414, %v5468
    %v5511 = vmul.f32 %v5429, %v5469
    %v5512 = vadd.f32 %v5508, %v5510
    %v5513 = vadd.f32 %v5509, %v5511
    %v5514 = vtanh.pop %v5512
    %v5515 = vtanh.pop %v5513
    %v5516 = vmul.f32 %v5492, %v5514
    %v5517 = vmul.f32 %v5507, %v5515
    %v5518 = vld [vmem:[#allocation2 + $0x500] sm:$0xff]
    %v5519 = vld [vmem:[#allocation2 + $0x508] sm:$0xff]
    %v5520 = vld [vmem:[#allocation2 + $0x510] sm:$0xff]
    %v5521 = vld [vmem:[#allocation2 + $0x518] sm:$0xff]
    %v5522 = vld [vmem:[#allocation2 + $0x520] sm:$0xff]
    %v5523 = vld [vmem:[#allocation2 + $0x528] sm:$0xff]
    %v5524 = vld [vmem:[#allocation2 + $0x530] sm:$0xff]
    %v5525 = vld [vmem:[#allocation2 + $0x538] sm:$0xff]
    %v5526 = vpack.c.bf16 %v5517, %v5516
    %5527 = vmatpush.bf16.msra.mxu0 %v1511
    %5528 = vmatpush.bf16.msra.mxu0 %v1507
    %5529 = vmatpush.bf16.msra.mxu0 %v1503
    %5530 = vmatpush.bf16.msra.mxu0 %v1499
    %5531 = vmatpush.bf16.msra.mxu0 %v1495
    %5532 = vmatpush.bf16.msra.mxu0 %v1491
    %5533 = vmatpush.bf16.msra.mxu0 %v1487
    %5534 = vmatpush.bf16.msra.mxu0 %v1483
    %5535 = vmatmul.bf16.gmra.mxu0 %v5526
    %v5536 = vpop.f32.mrf.mxu0
    %v5537 = vadd.f32 0.0, %v5536
    %v5538 = vpop.f32.mrf.mxu0
    %v5539 = vadd.f32 0.0, %v5538
    %5540 = vdwg.mxu0
    %5541 = vmatpush.bf16.msra.mxu0 %v1512
    %5542 = vmatpush.bf16.msra.mxu0 %v1508
    %5543 = vmatpush.bf16.msra.mxu0 %v1504
    %5544 = vmatpush.bf16.msra.mxu0 %v1500
    %5545 = vmatpush.bf16.msra.mxu0 %v1496
    %5546 = vmatpush.bf16.msra.mxu0 %v1492
    %5547 = vmatpush.bf16.msra.mxu0 %v1488
    %5548 = vmatpush.bf16.msra.mxu0 %v1484
    %5549 = vmatmul.bf16.gmra.mxu0 %v5526
    %v5550 = vpop.f32.mrf.mxu0
    %v5551 = vadd.f32 0.0, %v5550
    %v5552 = vpop.f32.mrf.mxu0
    %v5553 = vadd.f32 0.0, %v5552
    %5554 = vdwg.mxu0
    %5555 = vmatpush.bf16.msra.mxu0 %v1513
    %5556 = vmatpush.bf16.msra.mxu0 %v1509
    %5557 = vmatpush.bf16.msra.mxu0 %v1505
    %5558 = vmatpush.bf16.msra.mxu0 %v1501
    %5559 = vmatpush.bf16.msra.mxu0 %v1497
    %5560 = vmatpush.bf16.msra.mxu0 %v1493
    %5561 = vmatpush.bf16.msra.mxu0 %v1489
    %5562 = vmatpush.bf16.msra.mxu0 %v1485
    %5563 = vmatmul.bf16.gmra.mxu0 %v5526
    %v5564 = vpop.f32.mrf.mxu0
    %v5565 = vadd.f32 0.0, %v5564
    %v5566 = vpop.f32.mrf.mxu0
    %v5567 = vadd.f32 0.0, %v5566
    %5568 = vdwg.mxu0
    %5569 = vmatpush.bf16.msra.mxu0 %v1514
    %5570 = vmatpush.bf16.msra.mxu0 %v1510
    %5571 = vmatpush.bf16.msra.mxu0 %v1506
    %5572 = vmatpush.bf16.msra.mxu0 %v1502
    %5573 = vmatpush.bf16.msra.mxu0 %v1498
    %5574 = vmatpush.bf16.msra.mxu0 %v1494
    %5575 = vmatpush.bf16.msra.mxu0 %v1490
    %5576 = vmatpush.bf16.msra.mxu0 %v1486
    %5577 = vmatmul.bf16.gmra.mxu0 %v5526
    %v5578 = vpop.f32.mrf.mxu0
    %v5579 = vadd.f32 0.0, %v5578
    %v5580 = vpop.f32.mrf.mxu0
    %v5581 = vadd.f32 0.0, %v5580
    %5582 = vdwg.mxu0
    %v5583 = vadd.f32 %v5518, %v5537
    %v5584 = vadd.f32 %v5519, %v5551
    %v5585 = vadd.f32 %v5520, %v5565
    %v5586 = vadd.f32 %v5521, %v5579
    %v5587 = vadd.f32 %v5522, %v5539
    %v5588 = vadd.f32 %v5523, %v5553
    %v5589 = vadd.f32 %v5524, %v5567
    %v5590 = vadd.f32 %v5525, %v5581
    %v5591 = vxor.u32 %v5583, 2147483648
    %v5592 = vxor.u32 %v5587, 2147483648
    %v5593 = vmul.f32 %v5591, 1.442695
    %v5594 = vpow.pop %v5593
    %v5595 = vmul.f32 %v5592, 1.442695
    %v5596 = vpow.pop %v5595
    %v5597 = vadd.f32 %v5594, 1.0
    %v5598 = vadd.f32 %v5596, 1.0
    %v5599 = vrcp.pop %v5597
    %v5600 = vmul.f32 %v5597, %v5599
    %v5601 = vsub.f32 1.0, %v5600
    %v5602 = vmul.f32 %v5599, %v5601
    %v5603 = vadd.f32 %v5599, %v5602
    %vm5604 = vweird.f32 %v5597
    %vm5605 = vweird.f32 %v5599
    %vm5606 = vmor %vm5604, %vm5605
    %v5607 = vsel %vm5606, %v5599, %v5603
    %v5608 = vand.u32 2147483647, %v5597
    %vm5609 = vcmp.eq.f32.partialorder %v5608, 8.507059e+37
    %v5610 = vand.u32 %v5597, 2147483648
    %v5611 = vor.u32 1.1754944e-38, %v5610
    %v5612 = vsel %vm5609, %v5611, %v5607
    %v5613 = vmul.f32 1.0, %v5612
    %v5614 = vrcp.pop %v5598
    %v5615 = vmul.f32 %v5598, %v5614
    %v5616 = vsub.f32 1.0, %v5615
    %v5617 = vmul.f32 %v5614, %v5616
    %v5618 = vadd.f32 %v5614, %v5617
    %vm5619 = vweird.f32 %v5598
    %vm5620 = vweird.f32 %v5614
    %vm5621 = vmor %vm5619, %vm5620
    %v5622 = vsel %vm5621, %v5614, %v5618
    %v5623 = vand.u32 2147483647, %v5598
    %vm5624 = vcmp.eq.f32.partialorder %v5623, 8.507059e+37
    %v5625 = vand.u32 %v5598, 2147483648
    %v5626 = vor.u32 1.1754944e-38, %v5625
    %v5627 = vsel %vm5624, %v5626, %v5622
    %v5628 = vmul.f32 1.0, %v5627
    %v5629 = vxor.u32 %v5584, 2147483648
    %v5630 = vxor.u32 %v5588, 2147483648
    %v5631 = vmul.f32 %v5629, 1.442695
    %v5632 = vpow.pop %v5631
    %v5633 = vmul.f32 %v5630, 1.442695
    %v5634 = vpow.pop %v5633
    %v5635 = vadd.f32 %v5632, 1.0
    %v5636 = vadd.f32 %v5634, 1.0
    %v5637 = vrcp.pop %v5635
    %v5638 = vmul.f32 %v5635, %v5637
    %v5639 = vsub.f32 1.0, %v5638
    %v5640 = vmul.f32 %v5637, %v5639
    %v5641 = vadd.f32 %v5637, %v5640
    %vm5642 = vweird.f32 %v5635
    %vm5643 = vweird.f32 %v5637
    %vm5644 = vmor %vm5642, %vm5643
    %v5645 = vsel %vm5644, %v5637, %v5641
    %v5646 = vand.u32 2147483647, %v5635
    %vm5647 = vcmp.eq.f32.partialorder %v5646, 8.507059e+37
    %v5648 = vand.u32 %v5635, 2147483648
    %v5649 = vor.u32 1.1754944e-38, %v5648
    %v5650 = vsel %vm5647, %v5649, %v5645
    %v5651 = vmul.f32 1.0, %v5650
    %v5652 = vrcp.pop %v5636
    %v5653 = vmul.f32 %v5636, %v5652
    %v5654 = vsub.f32 1.0, %v5653
    %v5655 = vmul.f32 %v5652, %v5654
    %v5656 = vadd.f32 %v5652, %v5655
    %vm5657 = vweird.f32 %v5636
    %vm5658 = vweird.f32 %v5652
    %vm5659 = vmor %vm5657, %vm5658
    %v5660 = vsel %vm5659, %v5652, %v5656
    %v5661 = vand.u32 2147483647, %v5636
    %vm5662 = vcmp.eq.f32.partialorder %v5661, 8.507059e+37
    %v5663 = vand.u32 %v5636, 2147483648
    %v5664 = vor.u32 1.1754944e-38, %v5663
    %v5665 = vsel %vm5662, %v5664, %v5660
    %v5666 = vmul.f32 1.0, %v5665
    %v5667 = vtanh.pop %v5585
    %v5668 = vtanh.pop %v5589
    %v5669 = vxor.u32 %v5586, 2147483648
    %v5670 = vxor.u32 %v5590, 2147483648
    %v5671 = vmul.f32 %v5669, 1.442695
    %v5672 = vpow.pop %v5671
    %v5673 = vmul.f32 %v5670, 1.442695
    %v5674 = vpow.pop %v5673
    %v5675 = vadd.f32 %v5672, 1.0
    %v5676 = vadd.f32 %v5674, 1.0
    %v5677 = vrcp.pop %v5675
    %v5678 = vmul.f32 %v5675, %v5677
    %v5679 = vsub.f32 1.0, %v5678
    %v5680 = vmul.f32 %v5677, %v5679
    %v5681 = vadd.f32 %v5677, %v5680
    %vm5682 = vweird.f32 %v5675
    %vm5683 = vweird.f32 %v5677
    %vm5684 = vmor %vm5682, %vm5683
    %v5685 = vsel %vm5684, %v5677, %v5681
    %v5686 = vand.u32 2147483647, %v5675
    %vm5687 = vcmp.eq.f32.partialorder %v5686, 8.507059e+37
    %v5688 = vand.u32 %v5675, 2147483648
    %v5689 = vor.u32 1.1754944e-38, %v5688
    %v5690 = vsel %vm5687, %v5689, %v5685
    %v5691 = vmul.f32 1.0, %v5690
    %v5692 = vrcp.pop %v5676
    %v5693 = vmul.f32 %v5676, %v5692
    %v5694 = vsub.f32 1.0, %v5693
    %v5695 = vmul.f32 %v5692, %v5694
    %v5696 = vadd.f32 %v5692, %v5695
    %vm5697 = vweird.f32 %v5676
    %vm5698 = vweird.f32 %v5692
    %vm5699 = vmor %vm5697, %vm5698
    %v5700 = vsel %vm5699, %v5692, %v5696
    %v5701 = vand.u32 2147483647, %v5676
    %vm5702 = vcmp.eq.f32.partialorder %v5701, 8.507059e+37
    %v5703 = vand.u32 %v5676, 2147483648
    %v5704 = vor.u32 1.1754944e-38, %v5703
    %v5705 = vsel %vm5702, %v5704, %v5700
    %v5706 = vmul.f32 1.0, %v5705
    %v5707 = vmul.f32 %v5651, %v5512
    %v5708 = vmul.f32 %v5666, %v5513
    %v5709 = vmul.f32 %v5613, %v5667
    %v5710 = vmul.f32 %v5628, %v5668
    %v5711 = vadd.f32 %v5707, %v5709
    %v5712 = vadd.f32 %v5708, %v5710
    %v5713 = vtanh.pop %v5711
    %v5714 = vtanh.pop %v5712
    %v5715 = vmul.f32 %v5691, %v5713
    %v5716 = vmul.f32 %v5706, %v5714
    %v5717 = vld [vmem:[#allocation2 + $0x540] sm:$0xff]
    %v5718 = vld [vmem:[#allocation2 + $0x548] sm:$0xff]
    %v5719 = vld [vmem:[#allocation2 + $0x550] sm:$0xff]
    %v5720 = vld [vmem:[#allocation2 + $0x558] sm:$0xff]
    %v5721 = vld [vmem:[#allocation2 + $0x560] sm:$0xff]
    %v5722 = vld [vmem:[#allocation2 + $0x568] sm:$0xff]
    %v5723 = vld [vmem:[#allocation2 + $0x570] sm:$0xff]
    %v5724 = vld [vmem:[#allocation2 + $0x578] sm:$0xff]
    %v5725 = vpack.c.bf16 %v5716, %v5715
    %5726 = vmatpush.bf16.msra.mxu0 %v1511
    %5727 = vmatpush.bf16.msra.mxu0 %v1507
    %5728 = vmatpush.bf16.msra.mxu0 %v1503
    %5729 = vmatpush.bf16.msra.mxu0 %v1499
    %5730 = vmatpush.bf16.msra.mxu0 %v1495
    %5731 = vmatpush.bf16.msra.mxu0 %v1491
    %5732 = vmatpush.bf16.msra.mxu0 %v1487
    %5733 = vmatpush.bf16.msra.mxu0 %v1483
    %5734 = vmatmul.bf16.gmra.mxu0 %v5725
    %v5735 = vpop.f32.mrf.mxu0
    %v5736 = vadd.f32 0.0, %v5735
    %v5737 = vpop.f32.mrf.mxu0
    %v5738 = vadd.f32 0.0, %v5737
    %5739 = vdwg.mxu0
    %5740 = vmatpush.bf16.msra.mxu0 %v1512
    %5741 = vmatpush.bf16.msra.mxu0 %v1508
    %5742 = vmatpush.bf16.msra.mxu0 %v1504
    %5743 = vmatpush.bf16.msra.mxu0 %v1500
    %5744 = vmatpush.bf16.msra.mxu0 %v1496
    %5745 = vmatpush.bf16.msra.mxu0 %v1492
    %5746 = vmatpush.bf16.msra.mxu0 %v1488
    %5747 = vmatpush.bf16.msra.mxu0 %v1484
    %5748 = vmatmul.bf16.gmra.mxu0 %v5725
    %v5749 = vpop.f32.mrf.mxu0
    %v5750 = vadd.f32 0.0, %v5749
    %v5751 = vpop.f32.mrf.mxu0
    %v5752 = vadd.f32 0.0, %v5751
    %5753 = vdwg.mxu0
    %5754 = vmatpush.bf16.msra.mxu0 %v1513
    %5755 = vmatpush.bf16.msra.mxu0 %v1509
    %5756 = vmatpush.bf16.msra.mxu0 %v1505
    %5757 = vmatpush.bf16.msra.mxu0 %v1501
    %5758 = vmatpush.bf16.msra.mxu0 %v1497
    %5759 = vmatpush.bf16.msra.mxu0 %v1493
    %5760 = vmatpush.bf16.msra.mxu0 %v1489
    %5761 = vmatpush.bf16.msra.mxu0 %v1485
    %5762 = vmatmul.bf16.gmra.mxu0 %v5725
    %v5763 = vpop.f32.mrf.mxu0
    %v5764 = vadd.f32 0.0, %v5763
    %v5765 = vpop.f32.mrf.mxu0
    %v5766 = vadd.f32 0.0, %v5765
    %5767 = vdwg.mxu0
    %5768 = vmatpush.bf16.msra.mxu0 %v1514
    %5769 = vmatpush.bf16.msra.mxu0 %v1510
    %5770 = vmatpush.bf16.msra.mxu0 %v1506
    %5771 = vmatpush.bf16.msra.mxu0 %v1502
    %5772 = vmatpush.bf16.msra.mxu0 %v1498
    %5773 = vmatpush.bf16.msra.mxu0 %v1494
    %5774 = vmatpush.bf16.msra.mxu0 %v1490
    %5775 = vmatpush.bf16.msra.mxu0 %v1486
    %5776 = vmatmul.bf16.gmra.mxu0 %v5725
    %v5777 = vpop.f32.mrf.mxu0
    %v5778 = vadd.f32 0.0, %v5777
    %v5779 = vpop.f32.mrf.mxu0
    %v5780 = vadd.f32 0.0, %v5779
    %5781 = vdwg.mxu0
    %v5782 = vadd.f32 %v5717, %v5736
    %v5783 = vadd.f32 %v5718, %v5750
    %v5784 = vadd.f32 %v5719, %v5764
    %v5785 = vadd.f32 %v5720, %v5778
    %v5786 = vadd.f32 %v5721, %v5738
    %v5787 = vadd.f32 %v5722, %v5752
    %v5788 = vadd.f32 %v5723, %v5766
    %v5789 = vadd.f32 %v5724, %v5780
    %v5790 = vxor.u32 %v5782, 2147483648
    %v5791 = vxor.u32 %v5786, 2147483648
    %v5792 = vmul.f32 %v5790, 1.442695
    %v5793 = vpow.pop %v5792
    %v5794 = vmul.f32 %v5791, 1.442695
    %v5795 = vpow.pop %v5794
    %v5796 = vadd.f32 %v5793, 1.0
    %v5797 = vadd.f32 %v5795, 1.0
    %v5798 = vrcp.pop %v5796
    %v5799 = vmul.f32 %v5796, %v5798
    %v5800 = vsub.f32 1.0, %v5799
    %v5801 = vmul.f32 %v5798, %v5800
    %v5802 = vadd.f32 %v5798, %v5801
    %vm5803 = vweird.f32 %v5796
    %vm5804 = vweird.f32 %v5798
    %vm5805 = vmor %vm5803, %vm5804
    %v5806 = vsel %vm5805, %v5798, %v5802
    %v5807 = vand.u32 2147483647, %v5796
    %vm5808 = vcmp.eq.f32.partialorder %v5807, 8.507059e+37
    %v5809 = vand.u32 %v5796, 2147483648
    %v5810 = vor.u32 1.1754944e-38, %v5809
    %v5811 = vsel %vm5808, %v5810, %v5806
    %v5812 = vmul.f32 1.0, %v5811
    %v5813 = vrcp.pop %v5797
    %v5814 = vmul.f32 %v5797, %v5813
    %v5815 = vsub.f32 1.0, %v5814
    %v5816 = vmul.f32 %v5813, %v5815
    %v5817 = vadd.f32 %v5813, %v5816
    %vm5818 = vweird.f32 %v5797
    %vm5819 = vweird.f32 %v5813
    %vm5820 = vmor %vm5818, %vm5819
    %v5821 = vsel %vm5820, %v5813, %v5817
    %v5822 = vand.u32 2147483647, %v5797
    %vm5823 = vcmp.eq.f32.partialorder %v5822, 8.507059e+37
    %v5824 = vand.u32 %v5797, 2147483648
    %v5825 = vor.u32 1.1754944e-38, %v5824
    %v5826 = vsel %vm5823, %v5825, %v5821
    %v5827 = vmul.f32 1.0, %v5826
    %v5828 = vxor.u32 %v5783, 2147483648
    %v5829 = vxor.u32 %v5787, 2147483648
    %v5830 = vmul.f32 %v5828, 1.442695
    %v5831 = vpow.pop %v5830
    %v5832 = vmul.f32 %v5829, 1.442695
    %v5833 = vpow.pop %v5832
    %v5834 = vadd.f32 %v5831, 1.0
    %v5835 = vadd.f32 %v5833, 1.0
    %v5836 = vrcp.pop %v5834
    %v5837 = vmul.f32 %v5834, %v5836
    %v5838 = vsub.f32 1.0, %v5837
    %v5839 = vmul.f32 %v5836, %v5838
    %v5840 = vadd.f32 %v5836, %v5839
    %vm5841 = vweird.f32 %v5834
    %vm5842 = vweird.f32 %v5836
    %vm5843 = vmor %vm5841, %vm5842
    %v5844 = vsel %vm5843, %v5836, %v5840
    %v5845 = vand.u32 2147483647, %v5834
    %vm5846 = vcmp.eq.f32.partialorder %v5845, 8.507059e+37
    %v5847 = vand.u32 %v5834, 2147483648
    %v5848 = vor.u32 1.1754944e-38, %v5847
    %v5849 = vsel %vm5846, %v5848, %v5844
    %v5850 = vmul.f32 1.0, %v5849
    %v5851 = vrcp.pop %v5835
    %v5852 = vmul.f32 %v5835, %v5851
    %v5853 = vsub.f32 1.0, %v5852
    %v5854 = vmul.f32 %v5851, %v5853
    %v5855 = vadd.f32 %v5851, %v5854
    %vm5856 = vweird.f32 %v5835
    %vm5857 = vweird.f32 %v5851
    %vm5858 = vmor %vm5856, %vm5857
    %v5859 = vsel %vm5858, %v5851, %v5855
    %v5860 = vand.u32 2147483647, %v5835
    %vm5861 = vcmp.eq.f32.partialorder %v5860, 8.507059e+37
    %v5862 = vand.u32 %v5835, 2147483648
    %v5863 = vor.u32 1.1754944e-38, %v5862
    %v5864 = vsel %vm5861, %v5863, %v5859
    %v5865 = vmul.f32 1.0, %v5864
    %v5866 = vtanh.pop %v5784
    %v5867 = vtanh.pop %v5788
    %v5868 = vxor.u32 %v5785, 2147483648
    %v5869 = vxor.u32 %v5789, 2147483648
    %v5870 = vmul.f32 %v5868, 1.442695
    %v5871 = vpow.pop %v5870
    %v5872 = vmul.f32 %v5869, 1.442695
    %v5873 = vpow.pop %v5872
    %v5874 = vadd.f32 %v5871, 1.0
    %v5875 = vadd.f32 %v5873, 1.0
    %v5876 = vrcp.pop %v5874
    %v5877 = vmul.f32 %v5874, %v5876
    %v5878 = vsub.f32 1.0, %v5877
    %v5879 = vmul.f32 %v5876, %v5878
    %v5880 = vadd.f32 %v5876, %v5879
    %vm5881 = vweird.f32 %v5874
    %vm5882 = vweird.f32 %v5876
    %vm5883 = vmor %vm5881, %vm5882
    %v5884 = vsel %vm5883, %v5876, %v5880
    %v5885 = vand.u32 2147483647, %v5874
    %vm5886 = vcmp.eq.f32.partialorder %v5885, 8.507059e+37
    %v5887 = vand.u32 %v5874, 2147483648
    %v5888 = vor.u32 1.1754944e-38, %v5887
    %v5889 = vsel %vm5886, %v5888, %v5884
    %v5890 = vmul.f32 1.0, %v5889
    %v5891 = vrcp.pop %v5875
    %v5892 = vmul.f32 %v5875, %v5891
    %v5893 = vsub.f32 1.0, %v5892
    %v5894 = vmul.f32 %v5891, %v5893
    %v5895 = vadd.f32 %v5891, %v5894
    %vm5896 = vweird.f32 %v5875
    %vm5897 = vweird.f32 %v5891
    %vm5898 = vmor %vm5896, %vm5897
    %v5899 = vsel %vm5898, %v5891, %v5895
    %v5900 = vand.u32 2147483647, %v5875
    %vm5901 = vcmp.eq.f32.partialorder %v5900, 8.507059e+37
    %v5902 = vand.u32 %v5875, 2147483648
    %v5903 = vor.u32 1.1754944e-38, %v5902
    %v5904 = vsel %vm5901, %v5903, %v5899
    %v5905 = vmul.f32 1.0, %v5904
    %v5906 = vmul.f32 %v5850, %v5711
    %v5907 = vmul.f32 %v5865, %v5712
    %v5908 = vmul.f32 %v5812, %v5866
    %v5909 = vmul.f32 %v5827, %v5867
    %v5910 = vadd.f32 %v5906, %v5908
    %v5911 = vadd.f32 %v5907, %v5909
    %v5912 = vtanh.pop %v5910
    %v5913 = vtanh.pop %v5911
    %v5914 = vmul.f32 %v5890, %v5912
    %v5915 = vmul.f32 %v5905, %v5913
    %v5916 = vld [vmem:[#allocation2 + $0x580] sm:$0xff]
    %v5917 = vld [vmem:[#allocation2 + $0x588] sm:$0xff]
    %v5918 = vld [vmem:[#allocation2 + $0x590] sm:$0xff]
    %v5919 = vld [vmem:[#allocation2 + $0x598] sm:$0xff]
    %v5920 = vld [vmem:[#allocation2 + $0x5a0] sm:$0xff]
    %v5921 = vld [vmem:[#allocation2 + $0x5a8] sm:$0xff]
    %v5922 = vld [vmem:[#allocation2 + $0x5b0] sm:$0xff]
    %v5923 = vld [vmem:[#allocation2 + $0x5b8] sm:$0xff]
    %v5924 = vpack.c.bf16 %v5915, %v5914
    %5925 = vmatpush.bf16.msra.mxu0 %v1511
    %5926 = vmatpush.bf16.msra.mxu0 %v1507
    %5927 = vmatpush.bf16.msra.mxu0 %v1503
    %5928 = vmatpush.bf16.msra.mxu0 %v1499
    %5929 = vmatpush.bf16.msra.mxu0 %v1495
    %5930 = vmatpush.bf16.msra.mxu0 %v1491
    %5931 = vmatpush.bf16.msra.mxu0 %v1487
    %5932 = vmatpush.bf16.msra.mxu0 %v1483
    %5933 = vmatmul.bf16.gmra.mxu0 %v5924
    %v5934 = vpop.f32.mrf.mxu0
    %v5935 = vadd.f32 0.0, %v5934
    %v5936 = vpop.f32.mrf.mxu0
    %v5937 = vadd.f32 0.0, %v5936
    %5938 = vdwg.mxu0
    %5939 = vmatpush.bf16.msra.mxu0 %v1512
    %5940 = vmatpush.bf16.msra.mxu0 %v1508
    %5941 = vmatpush.bf16.msra.mxu0 %v1504
    %5942 = vmatpush.bf16.msra.mxu0 %v1500
    %5943 = vmatpush.bf16.msra.mxu0 %v1496
    %5944 = vmatpush.bf16.msra.mxu0 %v1492
    %5945 = vmatpush.bf16.msra.mxu0 %v1488
    %5946 = vmatpush.bf16.msra.mxu0 %v1484
    %5947 = vmatmul.bf16.gmra.mxu0 %v5924
    %v5948 = vpop.f32.mrf.mxu0
    %v5949 = vadd.f32 0.0, %v5948
    %v5950 = vpop.f32.mrf.mxu0
    %v5951 = vadd.f32 0.0, %v5950
    %5952 = vdwg.mxu0
    %5953 = vmatpush.bf16.msra.mxu0 %v1513
    %5954 = vmatpush.bf16.msra.mxu0 %v1509
    %5955 = vmatpush.bf16.msra.mxu0 %v1505
    %5956 = vmatpush.bf16.msra.mxu0 %v1501
    %5957 = vmatpush.bf16.msra.mxu0 %v1497
    %5958 = vmatpush.bf16.msra.mxu0 %v1493
    %5959 = vmatpush.bf16.msra.mxu0 %v1489
    %5960 = vmatpush.bf16.msra.mxu0 %v1485
    %5961 = vmatmul.bf16.gmra.mxu0 %v5924
    %v5962 = vpop.f32.mrf.mxu0
    %v5963 = vadd.f32 0.0, %v5962
    %v5964 = vpop.f32.mrf.mxu0
    %v5965 = vadd.f32 0.0, %v5964
    %5966 = vdwg.mxu0
    %5967 = vmatpush.bf16.msra.mxu0 %v1514
    %5968 = vmatpush.bf16.msra.mxu0 %v1510
    %5969 = vmatpush.bf16.msra.mxu0 %v1506
    %5970 = vmatpush.bf16.msra.mxu0 %v1502
    %5971 = vmatpush.bf16.msra.mxu0 %v1498
    %5972 = vmatpush.bf16.msra.mxu0 %v1494
    %5973 = vmatpush.bf16.msra.mxu0 %v1490
    %5974 = vmatpush.bf16.msra.mxu0 %v1486
    %5975 = vmatmul.bf16.gmra.mxu0 %v5924
    %v5976 = vpop.f32.mrf.mxu0
    %v5977 = vadd.f32 0.0, %v5976
    %v5978 = vpop.f32.mrf.mxu0
    %v5979 = vadd.f32 0.0, %v5978
    %5980 = vdwg.mxu0
    %v5981 = vadd.f32 %v5916, %v5935
    %v5982 = vadd.f32 %v5917, %v5949
    %v5983 = vadd.f32 %v5918, %v5963
    %v5984 = vadd.f32 %v5919, %v5977
    %v5985 = vadd.f32 %v5920, %v5937
    %v5986 = vadd.f32 %v5921, %v5951
    %v5987 = vadd.f32 %v5922, %v5965
    %v5988 = vadd.f32 %v5923, %v5979
    %v5989 = vxor.u32 %v5981, 2147483648
    %v5990 = vxor.u32 %v5985, 2147483648
    %v5991 = vmul.f32 %v5989, 1.442695
    %v5992 = vpow.pop %v5991
    %v5993 = vmul.f32 %v5990, 1.442695
    %v5994 = vpow.pop %v5993
    %v5995 = vadd.f32 %v5992, 1.0
    %v5996 = vadd.f32 %v5994, 1.0
    %v5997 = vrcp.pop %v5995
    %v5998 = vmul.f32 %v5995, %v5997
    %v5999 = vsub.f32 1.0, %v5998
    %v6000 = vmul.f32 %v5997, %v5999
    %v6001 = vadd.f32 %v5997, %v6000
    %vm6002 = vweird.f32 %v5995
    %vm6003 = vweird.f32 %v5997
    %vm6004 = vmor %vm6002, %vm6003
    %v6005 = vsel %vm6004, %v5997, %v6001
    %v6006 = vand.u32 2147483647, %v5995
    %vm6007 = vcmp.eq.f32.partialorder %v6006, 8.507059e+37
    %v6008 = vand.u32 %v5995, 2147483648
    %v6009 = vor.u32 1.1754944e-38, %v6008
    %v6010 = vsel %vm6007, %v6009, %v6005
    %v6011 = vmul.f32 1.0, %v6010
    %v6012 = vrcp.pop %v5996
    %v6013 = vmul.f32 %v5996, %v6012
    %v6014 = vsub.f32 1.0, %v6013
    %v6015 = vmul.f32 %v6012, %v6014
    %v6016 = vadd.f32 %v6012, %v6015
    %vm6017 = vweird.f32 %v5996
    %vm6018 = vweird.f32 %v6012
    %vm6019 = vmor %vm6017, %vm6018
    %v6020 = vsel %vm6019, %v6012, %v6016
    %v6021 = vand.u32 2147483647, %v5996
    %vm6022 = vcmp.eq.f32.partialorder %v6021, 8.507059e+37
    %v6023 = vand.u32 %v5996, 2147483648
    %v6024 = vor.u32 1.1754944e-38, %v6023
    %v6025 = vsel %vm6022, %v6024, %v6020
    %v6026 = vmul.f32 1.0, %v6025
    %v6027 = vxor.u32 %v5982, 2147483648
    %v6028 = vxor.u32 %v5986, 2147483648
    %v6029 = vmul.f32 %v6027, 1.442695
    %v6030 = vpow.pop %v6029
    %v6031 = vmul.f32 %v6028, 1.442695
    %v6032 = vpow.pop %v6031
    %v6033 = vadd.f32 %v6030, 1.0
    %v6034 = vadd.f32 %v6032, 1.0
    %v6035 = vrcp.pop %v6033
    %v6036 = vmul.f32 %v6033, %v6035
    %v6037 = vsub.f32 1.0, %v6036
    %v6038 = vmul.f32 %v6035, %v6037
    %v6039 = vadd.f32 %v6035, %v6038
    %vm6040 = vweird.f32 %v6033
    %vm6041 = vweird.f32 %v6035
    %vm6042 = vmor %vm6040, %vm6041
    %v6043 = vsel %vm6042, %v6035, %v6039
    %v6044 = vand.u32 2147483647, %v6033
    %vm6045 = vcmp.eq.f32.partialorder %v6044, 8.507059e+37
    %v6046 = vand.u32 %v6033, 2147483648
    %v6047 = vor.u32 1.1754944e-38, %v6046
    %v6048 = vsel %vm6045, %v6047, %v6043
    %v6049 = vmul.f32 1.0, %v6048
    %v6050 = vrcp.pop %v6034
    %v6051 = vmul.f32 %v6034, %v6050
    %v6052 = vsub.f32 1.0, %v6051
    %v6053 = vmul.f32 %v6050, %v6052
    %v6054 = vadd.f32 %v6050, %v6053
    %vm6055 = vweird.f32 %v6034
    %vm6056 = vweird.f32 %v6050
    %vm6057 = vmor %vm6055, %vm6056
    %v6058 = vsel %vm6057, %v6050, %v6054
    %v6059 = vand.u32 2147483647, %v6034
    %vm6060 = vcmp.eq.f32.partialorder %v6059, 8.507059e+37
    %v6061 = vand.u32 %v6034, 2147483648
    %v6062 = vor.u32 1.1754944e-38, %v6061
    %v6063 = vsel %vm6060, %v6062, %v6058
    %v6064 = vmul.f32 1.0, %v6063
    %v6065 = vtanh.pop %v5983
    %v6066 = vtanh.pop %v5987
    %v6067 = vxor.u32 %v5984, 2147483648
    %v6068 = vxor.u32 %v5988, 2147483648
    %v6069 = vmul.f32 %v6067, 1.442695
    %v6070 = vpow.pop %v6069
    %v6071 = vmul.f32 %v6068, 1.442695
    %v6072 = vpow.pop %v6071
    %v6073 = vadd.f32 %v6070, 1.0
    %v6074 = vadd.f32 %v6072, 1.0
    %v6075 = vrcp.pop %v6073
    %v6076 = vmul.f32 %v6073, %v6075
    %v6077 = vsub.f32 1.0, %v6076
    %v6078 = vmul.f32 %v6075, %v6077
    %v6079 = vadd.f32 %v6075, %v6078
    %vm6080 = vweird.f32 %v6073
    %vm6081 = vweird.f32 %v6075
    %vm6082 = vmor %vm6080, %vm6081
    %v6083 = vsel %vm6082, %v6075, %v6079
    %v6084 = vand.u32 2147483647, %v6073
    %vm6085 = vcmp.eq.f32.partialorder %v6084, 8.507059e+37
    %v6086 = vand.u32 %v6073, 2147483648
    %v6087 = vor.u32 1.1754944e-38, %v6086
    %v6088 = vsel %vm6085, %v6087, %v6083
    %v6089 = vmul.f32 1.0, %v6088
    %v6090 = vrcp.pop %v6074
    %v6091 = vmul.f32 %v6074, %v6090
    %v6092 = vsub.f32 1.0, %v6091
    %v6093 = vmul.f32 %v6090, %v6092
    %v6094 = vadd.f32 %v6090, %v6093
    %vm6095 = vweird.f32 %v6074
    %vm6096 = vweird.f32 %v6090
    %vm6097 = vmor %vm6095, %vm6096
    %v6098 = vsel %vm6097, %v6090, %v6094
    %v6099 = vand.u32 2147483647, %v6074
    %vm6100 = vcmp.eq.f32.partialorder %v6099, 8.507059e+37
    %v6101 = vand.u32 %v6074, 2147483648
    %v6102 = vor.u32 1.1754944e-38, %v6101
    %v6103 = vsel %vm6100, %v6102, %v6098
    %v6104 = vmul.f32 1.0, %v6103
    %v6105 = vmul.f32 %v6049, %v5910
    %v6106 = vmul.f32 %v6064, %v5911
    %v6107 = vmul.f32 %v6011, %v6065
    %v6108 = vmul.f32 %v6026, %v6066
    %v6109 = vadd.f32 %v6105, %v6107
    %v6110 = vadd.f32 %v6106, %v6108
    %v6111 = vtanh.pop %v6109
    %v6112 = vtanh.pop %v6110
    %v6113 = vmul.f32 %v6089, %v6111
    %v6114 = vmul.f32 %v6104, %v6112
    %v6115 = vld [vmem:[#allocation2 + $0x5c0] sm:$0xff]
    %v6116 = vld [vmem:[#allocation2 + $0x5c8] sm:$0xff]
    %v6117 = vld [vmem:[#allocation2 + $0x5d0] sm:$0xff]
    %v6118 = vld [vmem:[#allocation2 + $0x5d8] sm:$0xff]
    %v6119 = vld [vmem:[#allocation2 + $0x5e0] sm:$0xff]
    %v6120 = vld [vmem:[#allocation2 + $0x5e8] sm:$0xff]
    %v6121 = vld [vmem:[#allocation2 + $0x5f0] sm:$0xff]
    %v6122 = vld [vmem:[#allocation2 + $0x5f8] sm:$0xff]
    %v6123 = vpack.c.bf16 %v6114, %v6113
    %6124 = vmatpush.bf16.msra.mxu0 %v1511
    %6125 = vmatpush.bf16.msra.mxu0 %v1507
    %6126 = vmatpush.bf16.msra.mxu0 %v1503
    %6127 = vmatpush.bf16.msra.mxu0 %v1499
    %6128 = vmatpush.bf16.msra.mxu0 %v1495
    %6129 = vmatpush.bf16.msra.mxu0 %v1491
    %6130 = vmatpush.bf16.msra.mxu0 %v1487
    %6131 = vmatpush.bf16.msra.mxu0 %v1483
    %6132 = vmatmul.bf16.gmra.mxu0 %v6123
    %v6133 = vpop.f32.mrf.mxu0
    %v6134 = vadd.f32 0.0, %v6133
    %v6135 = vpop.f32.mrf.mxu0
    %v6136 = vadd.f32 0.0, %v6135
    %6137 = vdwg.mxu0
    %6138 = vmatpush.bf16.msra.mxu0 %v1512
    %6139 = vmatpush.bf16.msra.mxu0 %v1508
    %6140 = vmatpush.bf16.msra.mxu0 %v1504
    %6141 = vmatpush.bf16.msra.mxu0 %v1500
    %6142 = vmatpush.bf16.msra.mxu0 %v1496
    %6143 = vmatpush.bf16.msra.mxu0 %v1492
    %6144 = vmatpush.bf16.msra.mxu0 %v1488
    %6145 = vmatpush.bf16.msra.mxu0 %v1484
    %6146 = vmatmul.bf16.gmra.mxu0 %v6123
    %v6147 = vpop.f32.mrf.mxu0
    %v6148 = vadd.f32 0.0, %v6147
    %v6149 = vpop.f32.mrf.mxu0
    %v6150 = vadd.f32 0.0, %v6149
    %6151 = vdwg.mxu0
    %6152 = vmatpush.bf16.msra.mxu0 %v1513
    %6153 = vmatpush.bf16.msra.mxu0 %v1509
    %6154 = vmatpush.bf16.msra.mxu0 %v1505
    %6155 = vmatpush.bf16.msra.mxu0 %v1501
    %6156 = vmatpush.bf16.msra.mxu0 %v1497
    %6157 = vmatpush.bf16.msra.mxu0 %v1493
    %6158 = vmatpush.bf16.msra.mxu0 %v1489
    %6159 = vmatpush.bf16.msra.mxu0 %v1485
    %6160 = vmatmul.bf16.gmra.mxu0 %v6123
    %v6161 = vpop.f32.mrf.mxu0
    %v6162 = vadd.f32 0.0, %v6161
    %v6163 = vpop.f32.mrf.mxu0
    %v6164 = vadd.f32 0.0, %v6163
    %6165 = vdwg.mxu0
    %6166 = vmatpush.bf16.msra.mxu0 %v1514
    %6167 = vmatpush.bf16.msra.mxu0 %v1510
    %6168 = vmatpush.bf16.msra.mxu0 %v1506
    %6169 = vmatpush.bf16.msra.mxu0 %v1502
    %6170 = vmatpush.bf16.msra.mxu0 %v1498
    %6171 = vmatpush.bf16.msra.mxu0 %v1494
    %6172 = vmatpush.bf16.msra.mxu0 %v1490
    %6173 = vmatpush.bf16.msra.mxu0 %v1486
    %6174 = vmatmul.bf16.gmra.mxu0 %v6123
    %v6175 = vpop.f32.mrf.mxu0
    %v6176 = vadd.f32 0.0, %v6175
    %v6177 = vpop.f32.mrf.mxu0
    %v6178 = vadd.f32 0.0, %v6177
    %6179 = vdwg.mxu0
    %v6180 = vadd.f32 %v6115, %v6134
    %v6181 = vadd.f32 %v6116, %v6148
    %v6182 = vadd.f32 %v6117, %v6162
    %v6183 = vadd.f32 %v6118, %v6176
    %v6184 = vadd.f32 %v6119, %v6136
    %v6185 = vadd.f32 %v6120, %v6150
    %v6186 = vadd.f32 %v6121, %v6164
    %v6187 = vadd.f32 %v6122, %v6178
    %v6188 = vxor.u32 %v6180, 2147483648
    %v6189 = vxor.u32 %v6184, 2147483648
    %v6190 = vmul.f32 %v6188, 1.442695
    %v6191 = vpow.pop %v6190
    %v6192 = vmul.f32 %v6189, 1.442695
    %v6193 = vpow.pop %v6192
    %v6194 = vadd.f32 %v6191, 1.0
    %v6195 = vadd.f32 %v6193, 1.0
    %v6196 = vrcp.pop %v6194
    %v6197 = vmul.f32 %v6194, %v6196
    %v6198 = vsub.f32 1.0, %v6197
    %v6199 = vmul.f32 %v6196, %v6198
    %v6200 = vadd.f32 %v6196, %v6199
    %vm6201 = vweird.f32 %v6194
    %vm6202 = vweird.f32 %v6196
    %vm6203 = vmor %vm6201, %vm6202
    %v6204 = vsel %vm6203, %v6196, %v6200
    %v6205 = vand.u32 2147483647, %v6194
    %vm6206 = vcmp.eq.f32.partialorder %v6205, 8.507059e+37
    %v6207 = vand.u32 %v6194, 2147483648
    %v6208 = vor.u32 1.1754944e-38, %v6207
    %v6209 = vsel %vm6206, %v6208, %v6204
    %v6210 = vmul.f32 1.0, %v6209
    %v6211 = vrcp.pop %v6195
    %v6212 = vmul.f32 %v6195, %v6211
    %v6213 = vsub.f32 1.0, %v6212
    %v6214 = vmul.f32 %v6211, %v6213
    %v6215 = vadd.f32 %v6211, %v6214
    %vm6216 = vweird.f32 %v6195
    %vm6217 = vweird.f32 %v6211
    %vm6218 = vmor %vm6216, %vm6217
    %v6219 = vsel %vm6218, %v6211, %v6215
    %v6220 = vand.u32 2147483647, %v6195
    %vm6221 = vcmp.eq.f32.partialorder %v6220, 8.507059e+37
    %v6222 = vand.u32 %v6195, 2147483648
    %v6223 = vor.u32 1.1754944e-38, %v6222
    %v6224 = vsel %vm6221, %v6223, %v6219
    %v6225 = vmul.f32 1.0, %v6224
    %v6226 = vxor.u32 %v6181, 2147483648
    %v6227 = vxor.u32 %v6185, 2147483648
    %v6228 = vmul.f32 %v6226, 1.442695
    %v6229 = vpow.pop %v6228
    %v6230 = vmul.f32 %v6227, 1.442695
    %v6231 = vpow.pop %v6230
    %v6232 = vadd.f32 %v6229, 1.0
    %v6233 = vadd.f32 %v6231, 1.0
    %v6234 = vrcp.pop %v6232
    %v6235 = vmul.f32 %v6232, %v6234
    %v6236 = vsub.f32 1.0, %v6235
    %v6237 = vmul.f32 %v6234, %v6236
    %v6238 = vadd.f32 %v6234, %v6237
    %vm6239 = vweird.f32 %v6232
    %vm6240 = vweird.f32 %v6234
    %vm6241 = vmor %vm6239, %vm6240
    %v6242 = vsel %vm6241, %v6234, %v6238
    %v6243 = vand.u32 2147483647, %v6232
    %vm6244 = vcmp.eq.f32.partialorder %v6243, 8.507059e+37
    %v6245 = vand.u32 %v6232, 2147483648
    %v6246 = vor.u32 1.1754944e-38, %v6245
    %v6247 = vsel %vm6244, %v6246, %v6242
    %v6248 = vmul.f32 1.0, %v6247
    %v6249 = vrcp.pop %v6233
    %v6250 = vmul.f32 %v6233, %v6249
    %v6251 = vsub.f32 1.0, %v6250
    %v6252 = vmul.f32 %v6249, %v6251
    %v6253 = vadd.f32 %v6249, %v6252
    %vm6254 = vweird.f32 %v6233
    %vm6255 = vweird.f32 %v6249
    %vm6256 = vmor %vm6254, %vm6255
    %v6257 = vsel %vm6256, %v6249, %v6253
    %v6258 = vand.u32 2147483647, %v6233
    %vm6259 = vcmp.eq.f32.partialorder %v6258, 8.507059e+37
    %v6260 = vand.u32 %v6233, 2147483648
    %v6261 = vor.u32 1.1754944e-38, %v6260
    %v6262 = vsel %vm6259, %v6261, %v6257
    %v6263 = vmul.f32 1.0, %v6262
    %v6264 = vtanh.pop %v6182
    %v6265 = vtanh.pop %v6186
    %v6266 = vxor.u32 %v6183, 2147483648
    %v6267 = vxor.u32 %v6187, 2147483648
    %v6268 = vmul.f32 %v6266, 1.442695
    %v6269 = vpow.pop %v6268
    %v6270 = vmul.f32 %v6267, 1.442695
    %v6271 = vpow.pop %v6270
    %v6272 = vadd.f32 %v6269, 1.0
    %v6273 = vadd.f32 %v6271, 1.0
    %v6274 = vrcp.pop %v6272
    %v6275 = vmul.f32 %v6272, %v6274
    %v6276 = vsub.f32 1.0, %v6275
    %v6277 = vmul.f32 %v6274, %v6276
    %v6278 = vadd.f32 %v6274, %v6277
    %vm6279 = vweird.f32 %v6272
    %vm6280 = vweird.f32 %v6274
    %vm6281 = vmor %vm6279, %vm6280
    %v6282 = vsel %vm6281, %v6274, %v6278
    %v6283 = vand.u32 2147483647, %v6272
    %vm6284 = vcmp.eq.f32.partialorder %v6283, 8.507059e+37
    %v6285 = vand.u32 %v6272, 2147483648
    %v6286 = vor.u32 1.1754944e-38, %v6285
    %v6287 = vsel %vm6284, %v6286, %v6282
    %v6288 = vmul.f32 1.0, %v6287
    %v6289 = vrcp.pop %v6273
    %v6290 = vmul.f32 %v6273, %v6289
    %v6291 = vsub.f32 1.0, %v6290
    %v6292 = vmul.f32 %v6289, %v6291
    %v6293 = vadd.f32 %v6289, %v6292
    %vm6294 = vweird.f32 %v6273
    %vm6295 = vweird.f32 %v6289
    %vm6296 = vmor %vm6294, %vm6295
    %v6297 = vsel %vm6296, %v6289, %v6293
    %v6298 = vand.u32 2147483647, %v6273
    %vm6299 = vcmp.eq.f32.partialorder %v6298, 8.507059e+37
    %v6300 = vand.u32 %v6273, 2147483648
    %v6301 = vor.u32 1.1754944e-38, %v6300
    %v6302 = vsel %vm6299, %v6301, %v6297
    %v6303 = vmul.f32 1.0, %v6302
    %v6304 = vmul.f32 %v6248, %v6109
    %v6305 = vmul.f32 %v6263, %v6110
    %v6306 = vmul.f32 %v6210, %v6264
    %v6307 = vmul.f32 %v6225, %v6265
    %v6308 = vadd.f32 %v6304, %v6306
    %v6309 = vadd.f32 %v6305, %v6307
    %v6310 = vtanh.pop %v6308
    %v6311 = vtanh.pop %v6309
    %v6312 = vmul.f32 %v6288, %v6310
    %v6313 = vmul.f32 %v6303, %v6311
    %v6314 = vld [vmem:[#allocation2 + $0x600] sm:$0xff]
    %v6315 = vld [vmem:[#allocation2 + $0x608] sm:$0xff]
    %v6316 = vld [vmem:[#allocation2 + $0x610] sm:$0xff]
    %v6317 = vld [vmem:[#allocation2 + $0x618] sm:$0xff]
    %v6318 = vld [vmem:[#allocation2 + $0x620] sm:$0xff]
    %v6319 = vld [vmem:[#allocation2 + $0x628] sm:$0xff]
    %v6320 = vld [vmem:[#allocation2 + $0x630] sm:$0xff]
    %v6321 = vld [vmem:[#allocation2 + $0x638] sm:$0xff]
    %v6322 = vpack.c.bf16 %v6313, %v6312
    %6323 = vmatpush.bf16.msra.mxu0 %v1511
    %6324 = vmatpush.bf16.msra.mxu0 %v1507
    %6325 = vmatpush.bf16.msra.mxu0 %v1503
    %6326 = vmatpush.bf16.msra.mxu0 %v1499
    %6327 = vmatpush.bf16.msra.mxu0 %v1495
    %6328 = vmatpush.bf16.msra.mxu0 %v1491
    %6329 = vmatpush.bf16.msra.mxu0 %v1487
    %6330 = vmatpush.bf16.msra.mxu0 %v1483
    %6331 = vmatmul.bf16.gmra.mxu0 %v6322
    %v6332 = vpop.f32.mrf.mxu0
    %v6333 = vadd.f32 0.0, %v6332
    %v6334 = vpop.f32.mrf.mxu0
    %v6335 = vadd.f32 0.0, %v6334
    %6336 = vdwg.mxu0
    %6337 = vmatpush.bf16.msra.mxu0 %v1512
    %6338 = vmatpush.bf16.msra.mxu0 %v1508
    %6339 = vmatpush.bf16.msra.mxu0 %v1504
    %6340 = vmatpush.bf16.msra.mxu0 %v1500
    %6341 = vmatpush.bf16.msra.mxu0 %v1496
    %6342 = vmatpush.bf16.msra.mxu0 %v1492
    %6343 = vmatpush.bf16.msra.mxu0 %v1488
    %6344 = vmatpush.bf16.msra.mxu0 %v1484
    %6345 = vmatmul.bf16.gmra.mxu0 %v6322
    %v6346 = vpop.f32.mrf.mxu0
    %v6347 = vadd.f32 0.0, %v6346
    %v6348 = vpop.f32.mrf.mxu0
    %v6349 = vadd.f32 0.0, %v6348
    %6350 = vdwg.mxu0
    %6351 = vmatpush.bf16.msra.mxu0 %v1513
    %6352 = vmatpush.bf16.msra.mxu0 %v1509
    %6353 = vmatpush.bf16.msra.mxu0 %v1505
    %6354 = vmatpush.bf16.msra.mxu0 %v1501
    %6355 = vmatpush.bf16.msra.mxu0 %v1497
    %6356 = vmatpush.bf16.msra.mxu0 %v1493
    %6357 = vmatpush.bf16.msra.mxu0 %v1489
    %6358 = vmatpush.bf16.msra.mxu0 %v1485
    %6359 = vmatmul.bf16.gmra.mxu0 %v6322
    %v6360 = vpop.f32.mrf.mxu0
    %v6361 = vadd.f32 0.0, %v6360
    %v6362 = vpop.f32.mrf.mxu0
    %v6363 = vadd.f32 0.0, %v6362
    %6364 = vdwg.mxu0
    %6365 = vmatpush.bf16.msra.mxu0 %v1514
    %6366 = vmatpush.bf16.msra.mxu0 %v1510
    %6367 = vmatpush.bf16.msra.mxu0 %v1506
    %6368 = vmatpush.bf16.msra.mxu0 %v1502
    %6369 = vmatpush.bf16.msra.mxu0 %v1498
    %6370 = vmatpush.bf16.msra.mxu0 %v1494
    %6371 = vmatpush.bf16.msra.mxu0 %v1490
    %6372 = vmatpush.bf16.msra.mxu0 %v1486
    %6373 = vmatmul.bf16.gmra.mxu0 %v6322
    %v6374 = vpop.f32.mrf.mxu0
    %v6375 = vadd.f32 0.0, %v6374
    %v6376 = vpop.f32.mrf.mxu0
    %v6377 = vadd.f32 0.0, %v6376
    %6378 = vdwg.mxu0
    %v6379 = vadd.f32 %v6314, %v6333
    %v6380 = vadd.f32 %v6315, %v6347
    %v6381 = vadd.f32 %v6316, %v6361
    %v6382 = vadd.f32 %v6317, %v6375
    %v6383 = vadd.f32 %v6318, %v6335
    %v6384 = vadd.f32 %v6319, %v6349
    %v6385 = vadd.f32 %v6320, %v6363
    %v6386 = vadd.f32 %v6321, %v6377
    %v6387 = vxor.u32 %v6379, 2147483648
    %v6388 = vxor.u32 %v6383, 2147483648
    %v6389 = vmul.f32 %v6387, 1.442695
    %v6390 = vpow.pop %v6389
    %v6391 = vmul.f32 %v6388, 1.442695
    %v6392 = vpow.pop %v6391
    %v6393 = vadd.f32 %v6390, 1.0
    %v6394 = vadd.f32 %v6392, 1.0
    %v6395 = vrcp.pop %v6393
    %v6396 = vmul.f32 %v6393, %v6395
    %v6397 = vsub.f32 1.0, %v6396
    %v6398 = vmul.f32 %v6395, %v6397
    %v6399 = vadd.f32 %v6395, %v6398
    %vm6400 = vweird.f32 %v6393
    %vm6401 = vweird.f32 %v6395
    %vm6402 = vmor %vm6400, %vm6401
    %v6403 = vsel %vm6402, %v6395, %v6399
    %v6404 = vand.u32 2147483647, %v6393
    %vm6405 = vcmp.eq.f32.partialorder %v6404, 8.507059e+37
    %v6406 = vand.u32 %v6393, 2147483648
    %v6407 = vor.u32 1.1754944e-38, %v6406
    %v6408 = vsel %vm6405, %v6407, %v6403
    %v6409 = vmul.f32 1.0, %v6408
    %v6410 = vrcp.pop %v6394
    %v6411 = vmul.f32 %v6394, %v6410
    %v6412 = vsub.f32 1.0, %v6411
    %v6413 = vmul.f32 %v6410, %v6412
    %v6414 = vadd.f32 %v6410, %v6413
    %vm6415 = vweird.f32 %v6394
    %vm6416 = vweird.f32 %v6410
    %vm6417 = vmor %vm6415, %vm6416
    %v6418 = vsel %vm6417, %v6410, %v6414
    %v6419 = vand.u32 2147483647, %v6394
    %vm6420 = vcmp.eq.f32.partialorder %v6419, 8.507059e+37
    %v6421 = vand.u32 %v6394, 2147483648
    %v6422 = vor.u32 1.1754944e-38, %v6421
    %v6423 = vsel %vm6420, %v6422, %v6418
    %v6424 = vmul.f32 1.0, %v6423
    %v6425 = vxor.u32 %v6380, 2147483648
    %v6426 = vxor.u32 %v6384, 2147483648
    %v6427 = vmul.f32 %v6425, 1.442695
    %v6428 = vpow.pop %v6427
    %v6429 = vmul.f32 %v6426, 1.442695
    %v6430 = vpow.pop %v6429
    %v6431 = vadd.f32 %v6428, 1.0
    %v6432 = vadd.f32 %v6430, 1.0
    %v6433 = vrcp.pop %v6431
    %v6434 = vmul.f32 %v6431, %v6433
    %v6435 = vsub.f32 1.0, %v6434
    %v6436 = vmul.f32 %v6433, %v6435
    %v6437 = vadd.f32 %v6433, %v6436
    %vm6438 = vweird.f32 %v6431
    %vm6439 = vweird.f32 %v6433
    %vm6440 = vmor %vm6438, %vm6439
    %v6441 = vsel %vm6440, %v6433, %v6437
    %v6442 = vand.u32 2147483647, %v6431
    %vm6443 = vcmp.eq.f32.partialorder %v6442, 8.507059e+37
    %v6444 = vand.u32 %v6431, 2147483648
    %v6445 = vor.u32 1.1754944e-38, %v6444
    %v6446 = vsel %vm6443, %v6445, %v6441
    %v6447 = vmul.f32 1.0, %v6446
    %v6448 = vrcp.pop %v6432
    %v6449 = vmul.f32 %v6432, %v6448
    %v6450 = vsub.f32 1.0, %v6449
    %v6451 = vmul.f32 %v6448, %v6450
    %v6452 = vadd.f32 %v6448, %v6451
    %vm6453 = vweird.f32 %v6432
    %vm6454 = vweird.f32 %v6448
    %vm6455 = vmor %vm6453, %vm6454
    %v6456 = vsel %vm6455, %v6448, %v6452
    %v6457 = vand.u32 2147483647, %v6432
    %vm6458 = vcmp.eq.f32.partialorder %v6457, 8.507059e+37
    %v6459 = vand.u32 %v6432, 2147483648
    %v6460 = vor.u32 1.1754944e-38, %v6459
    %v6461 = vsel %vm6458, %v6460, %v6456
    %v6462 = vmul.f32 1.0, %v6461
    %v6463 = vtanh.pop %v6381
    %v6464 = vtanh.pop %v6385
    %v6465 = vxor.u32 %v6382, 2147483648
    %v6466 = vxor.u32 %v6386, 2147483648
    %v6467 = vmul.f32 %v6465, 1.442695
    %v6468 = vpow.pop %v6467
    %v6469 = vmul.f32 %v6466, 1.442695
    %v6470 = vpow.pop %v6469
    %v6471 = vadd.f32 %v6468, 1.0
    %v6472 = vadd.f32 %v6470, 1.0
    %v6473 = vrcp.pop %v6471
    %v6474 = vmul.f32 %v6471, %v6473
    %v6475 = vsub.f32 1.0, %v6474
    %v6476 = vmul.f32 %v6473, %v6475
    %v6477 = vadd.f32 %v6473, %v6476
    %vm6478 = vweird.f32 %v6471
    %vm6479 = vweird.f32 %v6473
    %vm6480 = vmor %vm6478, %vm6479
    %v6481 = vsel %vm6480, %v6473, %v6477
    %v6482 = vand.u32 2147483647, %v6471
    %vm6483 = vcmp.eq.f32.partialorder %v6482, 8.507059e+37
    %v6484 = vand.u32 %v6471, 2147483648
    %v6485 = vor.u32 1.1754944e-38, %v6484
    %v6486 = vsel %vm6483, %v6485, %v6481
    %v6487 = vmul.f32 1.0, %v6486
    %v6488 = vrcp.pop %v6472
    %v6489 = vmul.f32 %v6472, %v6488
    %v6490 = vsub.f32 1.0, %v6489
    %v6491 = vmul.f32 %v6488, %v6490
    %v6492 = vadd.f32 %v6488, %v6491
    %vm6493 = vweird.f32 %v6472
    %vm6494 = vweird.f32 %v6488
    %vm6495 = vmor %vm6493, %vm6494
    %v6496 = vsel %vm6495, %v6488, %v6492
    %v6497 = vand.u32 2147483647, %v6472
    %vm6498 = vcmp.eq.f32.partialorder %v6497, 8.507059e+37
    %v6499 = vand.u32 %v6472, 2147483648
    %v6500 = vor.u32 1.1754944e-38, %v6499
    %v6501 = vsel %vm6498, %v6500, %v6496
    %v6502 = vmul.f32 1.0, %v6501
    %v6503 = vmul.f32 %v6447, %v6308
    %v6504 = vmul.f32 %v6462, %v6309
    %v6505 = vmul.f32 %v6409, %v6463
    %v6506 = vmul.f32 %v6424, %v6464
    %v6507 = vadd.f32 %v6503, %v6505
    %v6508 = vadd.f32 %v6504, %v6506
    %v6509 = vtanh.pop %v6507
    %v6510 = vtanh.pop %v6508
    %v6511 = vmul.f32 %v6487, %v6509
    %v6512 = vmul.f32 %v6502, %v6510
    %v6513 = vld [vmem:[#allocation2 + $0x640] sm:$0xff]
    %v6514 = vld [vmem:[#allocation2 + $0x648] sm:$0xff]
    %v6515 = vld [vmem:[#allocation2 + $0x650] sm:$0xff]
    %v6516 = vld [vmem:[#allocation2 + $0x658] sm:$0xff]
    %v6517 = vld [vmem:[#allocation2 + $0x660] sm:$0xff]
    %v6518 = vld [vmem:[#allocation2 + $0x668] sm:$0xff]
    %v6519 = vld [vmem:[#allocation2 + $0x670] sm:$0xff]
    %v6520 = vld [vmem:[#allocation2 + $0x678] sm:$0xff]
    %v6521 = vpack.c.bf16 %v6512, %v6511
    %6522 = vmatpush.bf16.msra.mxu0 %v1511
    %6523 = vmatpush.bf16.msra.mxu0 %v1507
    %6524 = vmatpush.bf16.msra.mxu0 %v1503
    %6525 = vmatpush.bf16.msra.mxu0 %v1499
    %6526 = vmatpush.bf16.msra.mxu0 %v1495
    %6527 = vmatpush.bf16.msra.mxu0 %v1491
    %6528 = vmatpush.bf16.msra.mxu0 %v1487
    %6529 = vmatpush.bf16.msra.mxu0 %v1483
    %6530 = vmatmul.bf16.gmra.mxu0 %v6521
    %v6531 = vpop.f32.mrf.mxu0
    %v6532 = vadd.f32 0.0, %v6531
    %v6533 = vpop.f32.mrf.mxu0
    %v6534 = vadd.f32 0.0, %v6533
    %6535 = vdwg.mxu0
    %6536 = vmatpush.bf16.msra.mxu0 %v1512
    %6537 = vmatpush.bf16.msra.mxu0 %v1508
    %6538 = vmatpush.bf16.msra.mxu0 %v1504
    %6539 = vmatpush.bf16.msra.mxu0 %v1500
    %6540 = vmatpush.bf16.msra.mxu0 %v1496
    %6541 = vmatpush.bf16.msra.mxu0 %v1492
    %6542 = vmatpush.bf16.msra.mxu0 %v1488
    %6543 = vmatpush.bf16.msra.mxu0 %v1484
    %6544 = vmatmul.bf16.gmra.mxu0 %v6521
    %v6545 = vpop.f32.mrf.mxu0
    %v6546 = vadd.f32 0.0, %v6545
    %v6547 = vpop.f32.mrf.mxu0
    %v6548 = vadd.f32 0.0, %v6547
    %6549 = vdwg.mxu0
    %6550 = vmatpush.bf16.msra.mxu0 %v1513
    %6551 = vmatpush.bf16.msra.mxu0 %v1509
    %6552 = vmatpush.bf16.msra.mxu0 %v1505
    %6553 = vmatpush.bf16.msra.mxu0 %v1501
    %6554 = vmatpush.bf16.msra.mxu0 %v1497
    %6555 = vmatpush.bf16.msra.mxu0 %v1493
    %6556 = vmatpush.bf16.msra.mxu0 %v1489
    %6557 = vmatpush.bf16.msra.mxu0 %v1485
    %6558 = vmatmul.bf16.gmra.mxu0 %v6521
    %v6559 = vpop.f32.mrf.mxu0
    %v6560 = vadd.f32 0.0, %v6559
    %v6561 = vpop.f32.mrf.mxu0
    %v6562 = vadd.f32 0.0, %v6561
    %6563 = vdwg.mxu0
    %6564 = vmatpush.bf16.msra.mxu0 %v1514
    %6565 = vmatpush.bf16.msra.mxu0 %v1510
    %6566 = vmatpush.bf16.msra.mxu0 %v1506
    %6567 = vmatpush.bf16.msra.mxu0 %v1502
    %6568 = vmatpush.bf16.msra.mxu0 %v1498
    %6569 = vmatpush.bf16.msra.mxu0 %v1494
    %6570 = vmatpush.bf16.msra.mxu0 %v1490
    %6571 = vmatpush.bf16.msra.mxu0 %v1486
    %6572 = vmatmul.bf16.gmra.mxu0 %v6521
    %v6573 = vpop.f32.mrf.mxu0
    %v6574 = vadd.f32 0.0, %v6573
    %v6575 = vpop.f32.mrf.mxu0
    %v6576 = vadd.f32 0.0, %v6575
    %6577 = vdwg.mxu0
    %v6578 = vadd.f32 %v6513, %v6532
    %v6579 = vadd.f32 %v6514, %v6546
    %v6580 = vadd.f32 %v6515, %v6560
    %v6581 = vadd.f32 %v6516, %v6574
    %v6582 = vadd.f32 %v6517, %v6534
    %v6583 = vadd.f32 %v6518, %v6548
    %v6584 = vadd.f32 %v6519, %v6562
    %v6585 = vadd.f32 %v6520, %v6576
    %v6586 = vxor.u32 %v6578, 2147483648
    %v6587 = vxor.u32 %v6582, 2147483648
    %v6588 = vmul.f32 %v6586, 1.442695
    %v6589 = vpow.pop %v6588
    %v6590 = vmul.f32 %v6587, 1.442695
    %v6591 = vpow.pop %v6590
    %v6592 = vadd.f32 %v6589, 1.0
    %v6593 = vadd.f32 %v6591, 1.0
    %v6594 = vrcp.pop %v6592
    %v6595 = vmul.f32 %v6592, %v6594
    %v6596 = vsub.f32 1.0, %v6595
    %v6597 = vmul.f32 %v6594, %v6596
    %v6598 = vadd.f32 %v6594, %v6597
    %vm6599 = vweird.f32 %v6592
    %vm6600 = vweird.f32 %v6594
    %vm6601 = vmor %vm6599, %vm6600
    %v6602 = vsel %vm6601, %v6594, %v6598
    %v6603 = vand.u32 2147483647, %v6592
    %vm6604 = vcmp.eq.f32.partialorder %v6603, 8.507059e+37
    %v6605 = vand.u32 %v6592, 2147483648
    %v6606 = vor.u32 1.1754944e-38, %v6605
    %v6607 = vsel %vm6604, %v6606, %v6602
    %v6608 = vmul.f32 1.0, %v6607
    %v6609 = vrcp.pop %v6593
    %v6610 = vmul.f32 %v6593, %v6609
    %v6611 = vsub.f32 1.0, %v6610
    %v6612 = vmul.f32 %v6609, %v6611
    %v6613 = vadd.f32 %v6609, %v6612
    %vm6614 = vweird.f32 %v6593
    %vm6615 = vweird.f32 %v6609
    %vm6616 = vmor %vm6614, %vm6615
    %v6617 = vsel %vm6616, %v6609, %v6613
    %v6618 = vand.u32 2147483647, %v6593
    %vm6619 = vcmp.eq.f32.partialorder %v6618, 8.507059e+37
    %v6620 = vand.u32 %v6593, 2147483648
    %v6621 = vor.u32 1.1754944e-38, %v6620
    %v6622 = vsel %vm6619, %v6621, %v6617
    %v6623 = vmul.f32 1.0, %v6622
    %v6624 = vxor.u32 %v6579, 2147483648
    %v6625 = vxor.u32 %v6583, 2147483648
    %v6626 = vmul.f32 %v6624, 1.442695
    %v6627 = vpow.pop %v6626
    %v6628 = vmul.f32 %v6625, 1.442695
    %v6629 = vpow.pop %v6628
    %v6630 = vadd.f32 %v6627, 1.0
    %v6631 = vadd.f32 %v6629, 1.0
    %v6632 = vrcp.pop %v6630
    %v6633 = vmul.f32 %v6630, %v6632
    %v6634 = vsub.f32 1.0, %v6633
    %v6635 = vmul.f32 %v6632, %v6634
    %v6636 = vadd.f32 %v6632, %v6635
    %vm6637 = vweird.f32 %v6630
    %vm6638 = vweird.f32 %v6632
    %vm6639 = vmor %vm6637, %vm6638
    %v6640 = vsel %vm6639, %v6632, %v6636
    %v6641 = vand.u32 2147483647, %v6630
    %vm6642 = vcmp.eq.f32.partialorder %v6641, 8.507059e+37
    %v6643 = vand.u32 %v6630, 2147483648
    %v6644 = vor.u32 1.1754944e-38, %v6643
    %v6645 = vsel %vm6642, %v6644, %v6640
    %v6646 = vmul.f32 1.0, %v6645
    %v6647 = vrcp.pop %v6631
    %v6648 = vmul.f32 %v6631, %v6647
    %v6649 = vsub.f32 1.0, %v6648
    %v6650 = vmul.f32 %v6647, %v6649
    %v6651 = vadd.f32 %v6647, %v6650
    %vm6652 = vweird.f32 %v6631
    %vm6653 = vweird.f32 %v6647
    %vm6654 = vmor %vm6652, %vm6653
    %v6655 = vsel %vm6654, %v6647, %v6651
    %v6656 = vand.u32 2147483647, %v6631
    %vm6657 = vcmp.eq.f32.partialorder %v6656, 8.507059e+37
    %v6658 = vand.u32 %v6631, 2147483648
    %v6659 = vor.u32 1.1754944e-38, %v6658
    %v6660 = vsel %vm6657, %v6659, %v6655
    %v6661 = vmul.f32 1.0, %v6660
    %v6662 = vtanh.pop %v6580
    %v6663 = vtanh.pop %v6584
    %v6664 = vxor.u32 %v6581, 2147483648
    %v6665 = vxor.u32 %v6585, 2147483648
    %v6666 = vmul.f32 %v6664, 1.442695
    %v6667 = vpow.pop %v6666
    %v6668 = vmul.f32 %v6665, 1.442695
    %v6669 = vpow.pop %v6668
    %v6670 = vadd.f32 %v6667, 1.0
    %v6671 = vadd.f32 %v6669, 1.0
    %v6672 = vrcp.pop %v6670
    %v6673 = vmul.f32 %v6670, %v6672
    %v6674 = vsub.f32 1.0, %v6673
    %v6675 = vmul.f32 %v6672, %v6674
    %v6676 = vadd.f32 %v6672, %v6675
    %vm6677 = vweird.f32 %v6670
    %vm6678 = vweird.f32 %v6672
    %vm6679 = vmor %vm6677, %vm6678
    %v6680 = vsel %vm6679, %v6672, %v6676
    %v6681 = vand.u32 2147483647, %v6670
    %vm6682 = vcmp.eq.f32.partialorder %v6681, 8.507059e+37
    %v6683 = vand.u32 %v6670, 2147483648
    %v6684 = vor.u32 1.1754944e-38, %v6683
    %v6685 = vsel %vm6682, %v6684, %v6680
    %v6686 = vmul.f32 1.0, %v6685
    %v6687 = vrcp.pop %v6671
    %v6688 = vmul.f32 %v6671, %v6687
    %v6689 = vsub.f32 1.0, %v6688
    %v6690 = vmul.f32 %v6687, %v6689
    %v6691 = vadd.f32 %v6687, %v6690
    %vm6692 = vweird.f32 %v6671
    %vm6693 = vweird.f32 %v6687
    %vm6694 = vmor %vm6692, %vm6693
    %v6695 = vsel %vm6694, %v6687, %v6691
    %v6696 = vand.u32 2147483647, %v6671
    %vm6697 = vcmp.eq.f32.partialorder %v6696, 8.507059e+37
    %v6698 = vand.u32 %v6671, 2147483648
    %v6699 = vor.u32 1.1754944e-38, %v6698
    %v6700 = vsel %vm6697, %v6699, %v6695
    %v6701 = vmul.f32 1.0, %v6700
    %v6702 = vmul.f32 %v6646, %v6507
    %v6703 = vmul.f32 %v6661, %v6508
    %v6704 = vmul.f32 %v6608, %v6662
    %v6705 = vmul.f32 %v6623, %v6663
    %v6706 = vadd.f32 %v6702, %v6704
    %v6707 = vadd.f32 %v6703, %v6705
    %v6708 = vtanh.pop %v6706
    %v6709 = vtanh.pop %v6707
    %v6710 = vmul.f32 %v6686, %v6708
    %v6711 = vmul.f32 %v6701, %v6709
    %v6712 = vld [vmem:[#allocation2 + $0x680] sm:$0xff]
    %v6713 = vld [vmem:[#allocation2 + $0x688] sm:$0xff]
    %v6714 = vld [vmem:[#allocation2 + $0x690] sm:$0xff]
    %v6715 = vld [vmem:[#allocation2 + $0x698] sm:$0xff]
    %v6716 = vld [vmem:[#allocation2 + $0x6a0] sm:$0xff]
    %v6717 = vld [vmem:[#allocation2 + $0x6a8] sm:$0xff]
    %v6718 = vld [vmem:[#allocation2 + $0x6b0] sm:$0xff]
    %v6719 = vld [vmem:[#allocation2 + $0x6b8] sm:$0xff]
    %v6720 = vpack.c.bf16 %v6711, %v6710
    %6721 = vmatpush.bf16.msra.mxu0 %v1511
    %6722 = vmatpush.bf16.msra.mxu0 %v1507
    %6723 = vmatpush.bf16.msra.mxu0 %v1503
    %6724 = vmatpush.bf16.msra.mxu0 %v1499
    %6725 = vmatpush.bf16.msra.mxu0 %v1495
    %6726 = vmatpush.bf16.msra.mxu0 %v1491
    %6727 = vmatpush.bf16.msra.mxu0 %v1487
    %6728 = vmatpush.bf16.msra.mxu0 %v1483
    %6729 = vmatmul.bf16.gmra.mxu0 %v6720
    %v6730 = vpop.f32.mrf.mxu0
    %v6731 = vadd.f32 0.0, %v6730
    %v6732 = vpop.f32.mrf.mxu0
    %v6733 = vadd.f32 0.0, %v6732
    %6734 = vdwg.mxu0
    %6735 = vmatpush.bf16.msra.mxu0 %v1512
    %6736 = vmatpush.bf16.msra.mxu0 %v1508
    %6737 = vmatpush.bf16.msra.mxu0 %v1504
    %6738 = vmatpush.bf16.msra.mxu0 %v1500
    %6739 = vmatpush.bf16.msra.mxu0 %v1496
    %6740 = vmatpush.bf16.msra.mxu0 %v1492
    %6741 = vmatpush.bf16.msra.mxu0 %v1488
    %6742 = vmatpush.bf16.msra.mxu0 %v1484
    %6743 = vmatmul.bf16.gmra.mxu0 %v6720
    %v6744 = vpop.f32.mrf.mxu0
    %v6745 = vadd.f32 0.0, %v6744
    %v6746 = vpop.f32.mrf.mxu0
    %v6747 = vadd.f32 0.0, %v6746
    %6748 = vdwg.mxu0
    %6749 = vmatpush.bf16.msra.mxu0 %v1513
    %6750 = vmatpush.bf16.msra.mxu0 %v1509
    %6751 = vmatpush.bf16.msra.mxu0 %v1505
    %6752 = vmatpush.bf16.msra.mxu0 %v1501
    %6753 = vmatpush.bf16.msra.mxu0 %v1497
    %6754 = vmatpush.bf16.msra.mxu0 %v1493
    %6755 = vmatpush.bf16.msra.mxu0 %v1489
    %6756 = vmatpush.bf16.msra.mxu0 %v1485
    %6757 = vmatmul.bf16.gmra.mxu0 %v6720
    %v6758 = vpop.f32.mrf.mxu0
    %v6759 = vadd.f32 0.0, %v6758
    %v6760 = vpop.f32.mrf.mxu0
    %v6761 = vadd.f32 0.0, %v6760
    %6762 = vdwg.mxu0
    %6763 = vmatpush.bf16.msra.mxu0 %v1514
    %6764 = vmatpush.bf16.msra.mxu0 %v1510
    %6765 = vmatpush.bf16.msra.mxu0 %v1506
    %6766 = vmatpush.bf16.msra.mxu0 %v1502
    %6767 = vmatpush.bf16.msra.mxu0 %v1498
    %6768 = vmatpush.bf16.msra.mxu0 %v1494
    %6769 = vmatpush.bf16.msra.mxu0 %v1490
    %6770 = vmatpush.bf16.msra.mxu0 %v1486
    %6771 = vmatmul.bf16.gmra.mxu0 %v6720
    %v6772 = vpop.f32.mrf.mxu0
    %v6773 = vadd.f32 0.0, %v6772
    %v6774 = vpop.f32.mrf.mxu0
    %v6775 = vadd.f32 0.0, %v6774
    %6776 = vdwg.mxu0
    %v6777 = vadd.f32 %v6712, %v6731
    %v6778 = vadd.f32 %v6713, %v6745
    %v6779 = vadd.f32 %v6714, %v6759
    %v6780 = vadd.f32 %v6715, %v6773
    %v6781 = vadd.f32 %v6716, %v6733
    %v6782 = vadd.f32 %v6717, %v6747
    %v6783 = vadd.f32 %v6718, %v6761
    %v6784 = vadd.f32 %v6719, %v6775
    %v6785 = vxor.u32 %v6777, 2147483648
    %v6786 = vxor.u32 %v6781, 2147483648
    %v6787 = vmul.f32 %v6785, 1.442695
    %v6788 = vpow.pop %v6787
    %v6789 = vmul.f32 %v6786, 1.442695
    %v6790 = vpow.pop %v6789
    %v6791 = vadd.f32 %v6788, 1.0
    %v6792 = vadd.f32 %v6790, 1.0
    %v6793 = vrcp.pop %v6791
    %v6794 = vmul.f32 %v6791, %v6793
    %v6795 = vsub.f32 1.0, %v6794
    %v6796 = vmul.f32 %v6793, %v6795
    %v6797 = vadd.f32 %v6793, %v6796
    %vm6798 = vweird.f32 %v6791
    %vm6799 = vweird.f32 %v6793
    %vm6800 = vmor %vm6798, %vm6799
    %v6801 = vsel %vm6800, %v6793, %v6797
    %v6802 = vand.u32 2147483647, %v6791
    %vm6803 = vcmp.eq.f32.partialorder %v6802, 8.507059e+37
    %v6804 = vand.u32 %v6791, 2147483648
    %v6805 = vor.u32 1.1754944e-38, %v6804
    %v6806 = vsel %vm6803, %v6805, %v6801
    %v6807 = vmul.f32 1.0, %v6806
    %v6808 = vrcp.pop %v6792
    %v6809 = vmul.f32 %v6792, %v6808
    %v6810 = vsub.f32 1.0, %v6809
    %v6811 = vmul.f32 %v6808, %v6810
    %v6812 = vadd.f32 %v6808, %v6811
    %vm6813 = vweird.f32 %v6792
    %vm6814 = vweird.f32 %v6808
    %vm6815 = vmor %vm6813, %vm6814
    %v6816 = vsel %vm6815, %v6808, %v6812
    %v6817 = vand.u32 2147483647, %v6792
    %vm6818 = vcmp.eq.f32.partialorder %v6817, 8.507059e+37
    %v6819 = vand.u32 %v6792, 2147483648
    %v6820 = vor.u32 1.1754944e-38, %v6819
    %v6821 = vsel %vm6818, %v6820, %v6816
    %v6822 = vmul.f32 1.0, %v6821
    %v6823 = vxor.u32 %v6778, 2147483648
    %v6824 = vxor.u32 %v6782, 2147483648
    %v6825 = vmul.f32 %v6823, 1.442695
    %v6826 = vpow.pop %v6825
    %v6827 = vmul.f32 %v6824, 1.442695
    %v6828 = vpow.pop %v6827
    %v6829 = vadd.f32 %v6826, 1.0
    %v6830 = vadd.f32 %v6828, 1.0
    %v6831 = vrcp.pop %v6829
    %v6832 = vmul.f32 %v6829, %v6831
    %v6833 = vsub.f32 1.0, %v6832
    %v6834 = vmul.f32 %v6831, %v6833
    %v6835 = vadd.f32 %v6831, %v6834
    %vm6836 = vweird.f32 %v6829
    %vm6837 = vweird.f32 %v6831
    %vm6838 = vmor %vm6836, %vm6837
    %v6839 = vsel %vm6838, %v6831, %v6835
    %v6840 = vand.u32 2147483647, %v6829
    %vm6841 = vcmp.eq.f32.partialorder %v6840, 8.507059e+37
    %v6842 = vand.u32 %v6829, 2147483648
    %v6843 = vor.u32 1.1754944e-38, %v6842
    %v6844 = vsel %vm6841, %v6843, %v6839
    %v6845 = vmul.f32 1.0, %v6844
    %v6846 = vrcp.pop %v6830
    %v6847 = vmul.f32 %v6830, %v6846
    %v6848 = vsub.f32 1.0, %v6847
    %v6849 = vmul.f32 %v6846, %v6848
    %v6850 = vadd.f32 %v6846, %v6849
    %vm6851 = vweird.f32 %v6830
    %vm6852 = vweird.f32 %v6846
    %vm6853 = vmor %vm6851, %vm6852
    %v6854 = vsel %vm6853, %v6846, %v6850
    %v6855 = vand.u32 2147483647, %v6830
    %vm6856 = vcmp.eq.f32.partialorder %v6855, 8.507059e+37
    %v6857 = vand.u32 %v6830, 2147483648
    %v6858 = vor.u32 1.1754944e-38, %v6857
    %v6859 = vsel %vm6856, %v6858, %v6854
    %v6860 = vmul.f32 1.0, %v6859
    %v6861 = vtanh.pop %v6779
    %v6862 = vtanh.pop %v6783
    %v6863 = vxor.u32 %v6780, 2147483648
    %v6864 = vxor.u32 %v6784, 2147483648
    %v6865 = vmul.f32 %v6863, 1.442695
    %v6866 = vpow.pop %v6865
    %v6867 = vmul.f32 %v6864, 1.442695
    %v6868 = vpow.pop %v6867
    %v6869 = vadd.f32 %v6866, 1.0
    %v6870 = vadd.f32 %v6868, 1.0
    %v6871 = vrcp.pop %v6869
    %v6872 = vmul.f32 %v6869, %v6871
    %v6873 = vsub.f32 1.0, %v6872
    %v6874 = vmul.f32 %v6871, %v6873
    %v6875 = vadd.f32 %v6871, %v6874
    %vm6876 = vweird.f32 %v6869
    %vm6877 = vweird.f32 %v6871
    %vm6878 = vmor %vm6876, %vm6877
    %v6879 = vsel %vm6878, %v6871, %v6875
    %v6880 = vand.u32 2147483647, %v6869
    %vm6881 = vcmp.eq.f32.partialorder %v6880, 8.507059e+37
    %v6882 = vand.u32 %v6869, 2147483648
    %v6883 = vor.u32 1.1754944e-38, %v6882
    %v6884 = vsel %vm6881, %v6883, %v6879
    %v6885 = vmul.f32 1.0, %v6884
    %v6886 = vrcp.pop %v6870
    %v6887 = vmul.f32 %v6870, %v6886
    %v6888 = vsub.f32 1.0, %v6887
    %v6889 = vmul.f32 %v6886, %v6888
    %v6890 = vadd.f32 %v6886, %v6889
    %vm6891 = vweird.f32 %v6870
    %vm6892 = vweird.f32 %v6886
    %vm6893 = vmor %vm6891, %vm6892
    %v6894 = vsel %vm6893, %v6886, %v6890
    %v6895 = vand.u32 2147483647, %v6870
    %vm6896 = vcmp.eq.f32.partialorder %v6895, 8.507059e+37
    %v6897 = vand.u32 %v6870, 2147483648
    %v6898 = vor.u32 1.1754944e-38, %v6897
    %v6899 = vsel %vm6896, %v6898, %v6894
    %v6900 = vmul.f32 1.0, %v6899
    %v6901 = vmul.f32 %v6845, %v6706
    %v6902 = vmul.f32 %v6860, %v6707
    %v6903 = vmul.f32 %v6807, %v6861
    %v6904 = vmul.f32 %v6822, %v6862
    %v6905 = vadd.f32 %v6901, %v6903
    %v6906 = vadd.f32 %v6902, %v6904
    %v6907 = vtanh.pop %v6905
    %v6908 = vtanh.pop %v6906
    %v6909 = vmul.f32 %v6885, %v6907
    %v6910 = vmul.f32 %v6900, %v6908
    %v6911 = vld [vmem:[#allocation2 + $0x6c0] sm:$0xff]
    %v6912 = vld [vmem:[#allocation2 + $0x6c8] sm:$0xff]
    %v6913 = vld [vmem:[#allocation2 + $0x6d0] sm:$0xff]
    %v6914 = vld [vmem:[#allocation2 + $0x6d8] sm:$0xff]
    %v6915 = vld [vmem:[#allocation2 + $0x6e0] sm:$0xff]
    %v6916 = vld [vmem:[#allocation2 + $0x6e8] sm:$0xff]
    %v6917 = vld [vmem:[#allocation2 + $0x6f0] sm:$0xff]
    %v6918 = vld [vmem:[#allocation2 + $0x6f8] sm:$0xff]
    %v6919 = vpack.c.bf16 %v6910, %v6909
    %6920 = vmatpush.bf16.msra.mxu0 %v1511
    %6921 = vmatpush.bf16.msra.mxu0 %v1507
    %6922 = vmatpush.bf16.msra.mxu0 %v1503
    %6923 = vmatpush.bf16.msra.mxu0 %v1499
    %6924 = vmatpush.bf16.msra.mxu0 %v1495
    %6925 = vmatpush.bf16.msra.mxu0 %v1491
    %6926 = vmatpush.bf16.msra.mxu0 %v1487
    %6927 = vmatpush.bf16.msra.mxu0 %v1483
    %6928 = vmatmul.bf16.gmra.mxu0 %v6919
    %v6929 = vpop.f32.mrf.mxu0
    %v6930 = vadd.f32 0.0, %v6929
    %v6931 = vpop.f32.mrf.mxu0
    %v6932 = vadd.f32 0.0, %v6931
    %6933 = vdwg.mxu0
    %6934 = vmatpush.bf16.msra.mxu0 %v1512
    %6935 = vmatpush.bf16.msra.mxu0 %v1508
    %6936 = vmatpush.bf16.msra.mxu0 %v1504
    %6937 = vmatpush.bf16.msra.mxu0 %v1500
    %6938 = vmatpush.bf16.msra.mxu0 %v1496
    %6939 = vmatpush.bf16.msra.mxu0 %v1492
    %6940 = vmatpush.bf16.msra.mxu0 %v1488
    %6941 = vmatpush.bf16.msra.mxu0 %v1484
    %6942 = vmatmul.bf16.gmra.mxu0 %v6919
    %v6943 = vpop.f32.mrf.mxu0
    %v6944 = vadd.f32 0.0, %v6943
    %v6945 = vpop.f32.mrf.mxu0
    %v6946 = vadd.f32 0.0, %v6945
    %6947 = vdwg.mxu0
    %6948 = vmatpush.bf16.msra.mxu0 %v1513
    %6949 = vmatpush.bf16.msra.mxu0 %v1509
    %6950 = vmatpush.bf16.msra.mxu0 %v1505
    %6951 = vmatpush.bf16.msra.mxu0 %v1501
    %6952 = vmatpush.bf16.msra.mxu0 %v1497
    %6953 = vmatpush.bf16.msra.mxu0 %v1493
    %6954 = vmatpush.bf16.msra.mxu0 %v1489
    %6955 = vmatpush.bf16.msra.mxu0 %v1485
    %6956 = vmatmul.bf16.gmra.mxu0 %v6919
    %v6957 = vpop.f32.mrf.mxu0
    %v6958 = vadd.f32 0.0, %v6957
    %v6959 = vpop.f32.mrf.mxu0
    %v6960 = vadd.f32 0.0, %v6959
    %6961 = vdwg.mxu0
    %6962 = vmatpush.bf16.msra.mxu0 %v1514
    %6963 = vmatpush.bf16.msra.mxu0 %v1510
    %6964 = vmatpush.bf16.msra.mxu0 %v1506
    %6965 = vmatpush.bf16.msra.mxu0 %v1502
    %6966 = vmatpush.bf16.msra.mxu0 %v1498
    %6967 = vmatpush.bf16.msra.mxu0 %v1494
    %6968 = vmatpush.bf16.msra.mxu0 %v1490
    %6969 = vmatpush.bf16.msra.mxu0 %v1486
    %6970 = vmatmul.bf16.gmra.mxu0 %v6919
    %v6971 = vpop.f32.mrf.mxu0
    %v6972 = vadd.f32 0.0, %v6971
    %v6973 = vpop.f32.mrf.mxu0
    %v6974 = vadd.f32 0.0, %v6973
    %6975 = vdwg.mxu0
    %v6976 = vadd.f32 %v6911, %v6930
    %v6977 = vadd.f32 %v6912, %v6944
    %v6978 = vadd.f32 %v6913, %v6958
    %v6979 = vadd.f32 %v6914, %v6972
    %v6980 = vadd.f32 %v6915, %v6932
    %v6981 = vadd.f32 %v6916, %v6946
    %v6982 = vadd.f32 %v6917, %v6960
    %v6983 = vadd.f32 %v6918, %v6974
    %v6984 = vxor.u32 %v6976, 2147483648
    %v6985 = vxor.u32 %v6980, 2147483648
    %v6986 = vmul.f32 %v6984, 1.442695
    %v6987 = vpow.pop %v6986
    %v6988 = vmul.f32 %v6985, 1.442695
    %v6989 = vpow.pop %v6988
    %v6990 = vadd.f32 %v6987, 1.0
    %v6991 = vadd.f32 %v6989, 1.0
    %v6992 = vrcp.pop %v6990
    %v6993 = vmul.f32 %v6990, %v6992
    %v6994 = vsub.f32 1.0, %v6993
    %v6995 = vmul.f32 %v6992, %v6994
    %v6996 = vadd.f32 %v6992, %v6995
    %vm6997 = vweird.f32 %v6990
    %vm6998 = vweird.f32 %v6992
    %vm6999 = vmor %vm6997, %vm6998
    %v7000 = vsel %vm6999, %v6992, %v6996
    %v7001 = vand.u32 2147483647, %v6990
    %vm7002 = vcmp.eq.f32.partialorder %v7001, 8.507059e+37
    %v7003 = vand.u32 %v6990, 2147483648
    %v7004 = vor.u32 1.1754944e-38, %v7003
    %v7005 = vsel %vm7002, %v7004, %v7000
    %v7006 = vmul.f32 1.0, %v7005
    %v7007 = vrcp.pop %v6991
    %v7008 = vmul.f32 %v6991, %v7007
    %v7009 = vsub.f32 1.0, %v7008
    %v7010 = vmul.f32 %v7007, %v7009
    %v7011 = vadd.f32 %v7007, %v7010
    %vm7012 = vweird.f32 %v6991
    %vm7013 = vweird.f32 %v7007
    %vm7014 = vmor %vm7012, %vm7013
    %v7015 = vsel %vm7014, %v7007, %v7011
    %v7016 = vand.u32 2147483647, %v6991
    %vm7017 = vcmp.eq.f32.partialorder %v7016, 8.507059e+37
    %v7018 = vand.u32 %v6991, 2147483648
    %v7019 = vor.u32 1.1754944e-38, %v7018
    %v7020 = vsel %vm7017, %v7019, %v7015
    %v7021 = vmul.f32 1.0, %v7020
    %v7022 = vxor.u32 %v6977, 2147483648
    %v7023 = vxor.u32 %v6981, 2147483648
    %v7024 = vmul.f32 %v7022, 1.442695
    %v7025 = vpow.pop %v7024
    %v7026 = vmul.f32 %v7023, 1.442695
    %v7027 = vpow.pop %v7026
    %v7028 = vadd.f32 %v7025, 1.0
    %v7029 = vadd.f32 %v7027, 1.0
    %v7030 = vrcp.pop %v7028
    %v7031 = vmul.f32 %v7028, %v7030
    %v7032 = vsub.f32 1.0, %v7031
    %v7033 = vmul.f32 %v7030, %v7032
    %v7034 = vadd.f32 %v7030, %v7033
    %vm7035 = vweird.f32 %v7028
    %vm7036 = vweird.f32 %v7030
    %vm7037 = vmor %vm7035, %vm7036
    %v7038 = vsel %vm7037, %v7030, %v7034
    %v7039 = vand.u32 2147483647, %v7028
    %vm7040 = vcmp.eq.f32.partialorder %v7039, 8.507059e+37
    %v7041 = vand.u32 %v7028, 2147483648
    %v7042 = vor.u32 1.1754944e-38, %v7041
    %v7043 = vsel %vm7040, %v7042, %v7038
    %v7044 = vmul.f32 1.0, %v7043
    %v7045 = vrcp.pop %v7029
    %v7046 = vmul.f32 %v7029, %v7045
    %v7047 = vsub.f32 1.0, %v7046
    %v7048 = vmul.f32 %v7045, %v7047
    %v7049 = vadd.f32 %v7045, %v7048
    %vm7050 = vweird.f32 %v7029
    %vm7051 = vweird.f32 %v7045
    %vm7052 = vmor %vm7050, %vm7051
    %v7053 = vsel %vm7052, %v7045, %v7049
    %v7054 = vand.u32 2147483647, %v7029
    %vm7055 = vcmp.eq.f32.partialorder %v7054, 8.507059e+37
    %v7056 = vand.u32 %v7029, 2147483648
    %v7057 = vor.u32 1.1754944e-38, %v7056
    %v7058 = vsel %vm7055, %v7057, %v7053
    %v7059 = vmul.f32 1.0, %v7058
    %v7060 = vtanh.pop %v6978
    %v7061 = vtanh.pop %v6982
    %v7062 = vxor.u32 %v6979, 2147483648
    %v7063 = vxor.u32 %v6983, 2147483648
    %v7064 = vmul.f32 %v7062, 1.442695
    %v7065 = vpow.pop %v7064
    %v7066 = vmul.f32 %v7063, 1.442695
    %v7067 = vpow.pop %v7066
    %v7068 = vadd.f32 %v7065, 1.0
    %v7069 = vadd.f32 %v7067, 1.0
    %v7070 = vrcp.pop %v7068
    %v7071 = vmul.f32 %v7068, %v7070
    %v7072 = vsub.f32 1.0, %v7071
    %v7073 = vmul.f32 %v7070, %v7072
    %v7074 = vadd.f32 %v7070, %v7073
    %vm7075 = vweird.f32 %v7068
    %vm7076 = vweird.f32 %v7070
    %vm7077 = vmor %vm7075, %vm7076
    %v7078 = vsel %vm7077, %v7070, %v7074
    %v7079 = vand.u32 2147483647, %v7068
    %vm7080 = vcmp.eq.f32.partialorder %v7079, 8.507059e+37
    %v7081 = vand.u32 %v7068, 2147483648
    %v7082 = vor.u32 1.1754944e-38, %v7081
    %v7083 = vsel %vm7080, %v7082, %v7078
    %v7084 = vmul.f32 1.0, %v7083
    %v7085 = vrcp.pop %v7069
    %v7086 = vmul.f32 %v7069, %v7085
    %v7087 = vsub.f32 1.0, %v7086
    %v7088 = vmul.f32 %v7085, %v7087
    %v7089 = vadd.f32 %v7085, %v7088
    %vm7090 = vweird.f32 %v7069
    %vm7091 = vweird.f32 %v7085
    %vm7092 = vmor %vm7090, %vm7091
    %v7093 = vsel %vm7092, %v7085, %v7089
    %v7094 = vand.u32 2147483647, %v7069
    %vm7095 = vcmp.eq.f32.partialorder %v7094, 8.507059e+37
    %v7096 = vand.u32 %v7069, 2147483648
    %v7097 = vor.u32 1.1754944e-38, %v7096
    %v7098 = vsel %vm7095, %v7097, %v7093
    %v7099 = vmul.f32 1.0, %v7098
    %v7100 = vmul.f32 %v7044, %v6905
    %v7101 = vmul.f32 %v7059, %v6906
    %v7102 = vmul.f32 %v7006, %v7060
    %v7103 = vmul.f32 %v7021, %v7061
    %v7104 = vadd.f32 %v7100, %v7102
    %v7105 = vadd.f32 %v7101, %v7103
    %v7106 = vtanh.pop %v7104
    %v7107 = vtanh.pop %v7105
    %v7108 = vmul.f32 %v7084, %v7106
    %v7109 = vmul.f32 %v7099, %v7107
    %v7110 = vpack.c.bf16 %v7109, %v7108
    %v7111 = vld [vmem:[#allocation11] sm:$0xf]
    %v7112 = vld [vmem:[#allocation11 + $0x4] sm:$0xf]
    %v7113 = vld [vmem:[#allocation11 + $0x8] sm:$0xf]
    %v7114 = vld [vmem:[#allocation11 + $0xc] sm:$0xf]
    %v7115 = vld [vmem:[#allocation11 + $0x10] sm:$0xf]
    %v7116 = vld [vmem:[#allocation11 + $0x14] sm:$0xf]
    %v7117 = vld [vmem:[#allocation11 + $0x18] sm:$0xf]
    %v7118 = vld [vmem:[#allocation11 + $0x1c] sm:$0xf]
    %v7119 = vld [vmem:[#allocation11 + $0x20] sm:$0xf]
    %v7120 = vld [vmem:[#allocation11 + $0x24] sm:$0xf]
    %v7121 = vld [vmem:[#allocation11 + $0x28] sm:$0xf]
    %v7122 = vld [vmem:[#allocation11 + $0x2c] sm:$0xf]
    %v7123 = vld [vmem:[#allocation11 + $0x30] sm:$0xf]
    %v7124 = vld [vmem:[#allocation11 + $0x34] sm:$0xf]
    %v7125 = vld [vmem:[#allocation11 + $0x38] sm:$0xf]
    %v7126 = vld [vmem:[#allocation11 + $0x3c] sm:$0xf]
    %v7127 = vld [vmem:[%s5] sm:$0x1]
    %v7129 = vperm.slane %v7127, 0
    %v7147 = vunpack.c.l.b16 %v7111
    %v7148 = vunpack.c.l.b16 %v7112
    %v7149 = vunpack.c.l.b16 %v7113
    %v7150 = vunpack.c.l.b16 %v7114
    %v7151 = vunpack.c.l.b16 %v7115
    %v7152 = vunpack.c.l.b16 %v7116
    %v7153 = vunpack.c.l.b16 %v7117
    %v7154 = vunpack.c.l.b16 %v7118
    %v7155 = vunpack.c.l.b16 %v7119
    %v7156 = vunpack.c.l.b16 %v7120
    %v7157 = vunpack.c.l.b16 %v7121
    %v7158 = vunpack.c.l.b16 %v7122
    %v7159 = vunpack.c.l.b16 %v7123
    %v7160 = vunpack.c.l.b16 %v7124
    %v7161 = vunpack.c.l.b16 %v7125
    %v7162 = vunpack.c.l.b16 %v7126
    %v7163 = vpack.c.b16 %v7148, %v7147
    %v7164 = vpack.c.b16 %v7150, %v7149
    %v7165 = vpack.c.b16 %v7152, %v7151
    %v7166 = vpack.c.b16 %v7154, %v7153
    %v7167 = vpack.c.b16 %v7156, %v7155
    %v7168 = vpack.c.b16 %v7158, %v7157
    %v7169 = vpack.c.b16 %v7160, %v7159
    %v7170 = vpack.c.b16 %v7162, %v7161
    %7179 = vmatpush.bf16.msra.mxu0 %v7170
    %7180 = vmatpush.bf16.msra.mxu0 %v7169
    %7181 = vmatpush.bf16.msra.mxu0 %v7168
    %7182 = vmatpush.bf16.msra.mxu0 %v7167
    %7183 = vmatpush.bf16.msra.mxu0 %v7166
    %7184 = vmatpush.bf16.msra.mxu0 %v7165
    %7185 = vmatpush.bf16.msra.mxu0 %v7164
    %7186 = vmatpush.bf16.msra.mxu0 %v7163
    %7187 = vmatmul.bf16.gmra.mxu0 %v7110
    %v7188 = vpop.f32.mrf.mxu0
    %v7189 = vadd.f32 %v7129, %v7188
    %v7190 = vpop.f32.mrf.mxu0
    %v7191 = vadd.f32 %v7129, %v7190
    %7192 = vdwg.mxu0
    %7193 = vst [vmem:[#allocation12] sm:$0xff] %v7189
    %7194 = vst [vmem:[#allocation12 + $0x8] sm:$0xff] %v7191
    // Predicated region
    $region46: #{tpu_custom_call.1} parent=1 // pred_check
      _
    $region47: #{tpu_custom_call.1} parent=1 // pred_check_branch
      %7196 = sbr.rel (0) target = $region49
    $region48: #{tpu_custom_call.1} parent=1 // pred_region
      %7198 = vsyncadd [#allocation5], 0
      %s7199 = sshll.u32 [#allocation12], 4
      %s7200 = int_to_ptr.vmem [resolvable:$true] %s7199
      %s7201 = sshll.u32 %s6, 4
      %s7202 = int_to_ptr.hbm [resolvable:$true] %s7201
      %7207 = dma.vmem_to_hbm [thread:$0]  %s7200, 256, %s7202, [#allocation5], 128, 128, 8
    $region49: #{tpu_custom_call.1} parent=1 // pred_fallthru
      _
    // Predicated region
    $region50: #{tpu_custom_call.1} parent=1 // pred_check
      _
    $region51: #{tpu_custom_call.1} parent=1 // pred_check_branch
      %7209 = sbr.rel (0) target = $region53
    $region52: #{tpu_custom_call.1} parent=1 // pred_region
      %7211 = dma.done [#allocation5], 256
    $region53: #{tpu_custom_call.1} parent=1 // pred_fallthru
      _
    %7212 = vsyncpa [#allocation4], 1
    %7213 = vsyncpa [#allocation7], 1
    %7214 = vsyncpa [#allocation10], 1
    %7215 = vsyncpa [#allocation5], 1

</llo_original>
